<compile_context>
chip_gen: v6e
topology: v6e:2x2x1
jax: 0.10.0
libtpu: 0.0.40
codegen_flags: <defaults>
</compile_context>

<pallas_src>
import math

import jax
import jax.numpy as jnp
import numpy as np
from jax import lax
from jax.experimental import pallas as pl
from jax.experimental.pallas import tpu as pltpu

# ----------------------------- configuration (small, consistent with module)
BATCH = 2
LATENT_DIM = 8
VOCAB_SIZE = 16
EXPR_LENGTH = 8
HIDDEN = 32            # must be divisible by NUM_HEADS
NUM_LAYERS = 3
NUM_HEADS = 4
DIM_FF = 64
HEAD_DIM = HIDDEN // NUM_HEADS
V_PAD = 128            # lane-dense padded vocab for the output store
NEG = -1e30            # additive mask value; exp() underflows to exactly 0


# ----------------------------- the Pallas kernel (one batch-block per step)
def _make_decoder_kernel(n_rows):
    """Kernel for a batch-block of `n_rows` = bb * EXPR_LENGTH folded rows."""
    H, F, NH, HD, L = HIDDEN, DIM_FF, NUM_HEADS, HEAD_DIM, EXPR_LENGTH
    N = n_rows
    NHN = NH * N
    BB = N // L
    scale = 1.0 / math.sqrt(HD)
    f32 = jnp.float32

    def kernel(xm_ref, w_attn_ref, w_ff1_ref, w_ff2_ref, small_ref,
               unembed_ref, out_ref):
        x = xm_ref[0]            # (N, H) decoder input embeddings
        mem = xm_ref[1]          # (N, H) memory rows (latent projection)

        # ---- masks / biases generated in-kernel (no DMA), traced ONCE -------
        # 0/1 head-block masks for the lane/sublane-tiled K^T and V expansions.
        col_h = lax.broadcasted_iota(jnp.int32, (N, H), 1)
        m_v = jnp.concatenate(
            [jnp.where((col_h >= h * HD) & (col_h < (h + 1) * HD), 1.0, 0.0)
             for h in range(NH)], axis=0).astype(f32)            # (NHN, H)
        row_h = lax.broadcasted_iota(jnp.int32, (H, N), 0)
        m_kT = jnp.concatenate(
            [jnp.where((row_h >= h * HD) & (row_h < (h + 1) * HD), 1.0, 0.0)
             for h in range(NH)], axis=1).astype(f32)            # (H, NHN)
        # block-diagonal ones: per-head segmented row-sum as one MXU matmul.
        col_b = lax.broadcasted_iota(jnp.int32, (N, NHN), 1)
        bd_ones = jnp.concatenate(
            [jnp.where((col_b >= h * N) & (col_b < (h + 1) * N), 1.0, 0.0)
             for h in range(NH)], axis=0).astype(f32)            # (NHN, NHN)
        # additive score biases in the wide (N, NH*N) layout.
        qi = lax.broadcasted_iota(jnp.int32, (N, N), 0)
        kj = lax.broadcasted_iota(jnp.int32, (N, N), 1)
        same = (qi < L) & (kj < L)
        for s in range(1, BB):
            lo, hi = s * L, (s + 1) * L
            same = same | ((qi >= lo) & (qi < hi) & (kj >= lo) & (kj < hi))
        sb = jnp.where(same & (qi >= kj), 0.0, NEG).astype(f32)  # causal+sample
        cb = jnp.where(same, 0.0, NEG).astype(f32)               # sample only
        sbias = jnp.concatenate([sb] * NH, axis=1)               # (N, NHN)
        cbias = jnp.concatenate([cb] * NH, axis=1)               # (N, NHN)

        def softmax_rows(s_wide):
            # Masked entries are exp(-1e30) == 0 and live scores are tiny, so
            # the row-max subtraction is skipped (perf review).
            p = jnp.exp(s_wide)
            denom = jnp.dot(p, bd_ones, preferred_element_type=f32)
            r = pl.reciprocal(denom, approx=True)
            r = r * (2.0 - denom * r)        # one Newton step -> f32 accuracy
            return p * r

        def attend(q, k, v, w_out, b_out, bias):
            # All heads in one shot: K^T / V tiled NH times and masked
            # block-diagonally -> plain 2-D matmuls, no per-head slicing, and
            # the context comes out directly in (N, H) layout (no untall).
            kexp = jnp.concatenate([k.T] * NH, axis=1) * m_kT    # (H, NHN)
            vexp = jnp.concatenate([v] * NH, axis=0) * m_v       # (NHN, H)
            s_wide = jnp.dot(q * scale, kexp,
                             preferred_element_type=f32) + bias  # (N, NHN)
            p = softmax_rows(s_wide)
            ctx = jnp.dot(p, vexp, preferred_element_type=f32)   # (N, H)
            return jnp.dot(ctx, w_out, preferred_element_type=f32) + b_out

        def layernorm(t, w, b, eps=1e-5):
            mu = jnp.mean(t, axis=-1, keepdims=True)
            var = jnp.mean((t - mu) ** 2, axis=-1, keepdims=True)
            return (t - mu) * lax.rsqrt(var + eps) * w + b

        for l in range(NUM_LAYERS):
            sm = small_ref[l]                # (16, F): biases + LN params
            base = 8 * l

            def brow(i, _sm=sm):             # (1, H) bias / LN row
                return _sm[i:i + 1, 0:H]

            def proj(t, idx, _sm=sm, _base=base):
                return (jnp.dot(t, w_attn_ref[_base + idx],
                                preferred_element_type=f32)
                        + _sm[idx:idx + 1, 0:H])

            # --- masked multi-head self-attention + residual + post-LayerNorm
            sa = attend(proj(x, 0), proj(x, 1), proj(x, 2),
                        w_attn_ref[base + 3], brow(3), sbias)
            x = layernorm(x + sa, brow(10), brow(11))

            # --- cross-attention over memory + residual + post-LayerNorm
            ca = attend(proj(x, 4), proj(mem, 5), proj(mem, 6),
                        w_attn_ref[base + 7], brow(7), cbias)
            x = layernorm(x + ca, brow(12), brow(13))

            # --- position-wise feed-forward (relu) + residual + LayerNorm
            h1 = jnp.maximum(
                jnp.dot(x, w_ff1_ref[l], preferred_element_type=f32)
                + sm[8:9, :], 0.0)
            ff = (jnp.dot(h1, w_ff2_ref[l], preferred_element_type=f32)
                  + brow(9))
            x = layernorm(x + ff, brow(14), brow(15))

        # lane-dense (128-wide) logits; pad columns are zero, sliced outside.
        out_ref[...] = jnp.dot(x, unembed_ref[...], preferred_element_type=f32)

    return kernel


# ----------------------------- wrapper helpers
def _num_batch_blocks(B):
    """Split the folded (B*L, H) rows into grid steps only when each step still
    carries >= 128 rows (perf review).  At B=2 the whole problem is one step on
    one TensorCore; at large B this pipelines x/memory/out via BlockSpec and
    lets multi-core parts share the 'parallel' axis."""
    min_rows = 128
    for cand in range(B, 0, -1):
        if B % cand == 0 and (B // cand) * EXPR_LENGTH >= min_rows:
            return cand
    return 1


def _pack_params(params):
    """Per-projection (H, H) weights in (in,out) layout + one small bias slab."""
    H, F, NL, V = HIDDEN, DIM_FF, NUM_LAYERS, VOCAB_SIZE

    def pad_row(v, width=DIM_FF):
        return jnp.zeros((width,), jnp.float32).at[:v.shape[0]].set(v)

    w_blocks, small = [], []
    for l in range(NL):
        sa_w, ca_w = params['sa_in_w'][l], params['ca_in_w'][l]   # (3H, H)
        w_blocks += [
            sa_w[0:H].T, sa_w[H:2 * H].T, sa_w[2 * H:3 * H].T,    # self q,k,v
            params['sa_out_w'][l].T,                              # self out
            ca_w[0:H].T, ca_w[H:2 * H].T, ca_w[2 * H:3 * H].T,    # cross q,k,v
            params['ca_out_w'][l].T,                              # cross out
        ]
        sa_b, ca_b = params['sa_in_b'][l], params['ca_in_b'][l]
        small.append(jnp.stack([
            pad_row(sa_b[0:H]), pad_row(sa_b[H:2 * H]), pad_row(sa_b[2 * H:3 * H]),
            pad_row(params['sa_out_b'][l]),
            pad_row(ca_b[0:H]), pad_row(ca_b[H:2 * H]), pad_row(ca_b[2 * H:3 * H]),
            pad_row(params['ca_out_b'][l]),
            pad_row(params['ff1_b'][l]),                          # full F lanes
            pad_row(params['ff2_b'][l]),
            pad_row(params['ln1_w'][l]), pad_row(params['ln1_b'][l]),
            pad_row(params['ln2_w'][l]), pad_row(params['ln2_b'][l]),
            pad_row(params['ln3_w'][l]), pad_row(params['ln3_b'][l]),
        ]))                                                       # (16, F)
    return dict(
        w_attn=jnp.stack(w_blocks).astype(jnp.float32),           # (NL*8, H, H)
        w_ff1=jnp.transpose(params['ff1_w'], (0, 2, 1)).astype(jnp.float32),
        w_ff2=jnp.transpose(params['ff2_w'], (0, 2, 1)).astype(jnp.float32),
        small=jnp.stack(small).astype(jnp.float32),               # (NL, 16, F)
        unembed_pad=jnp.zeros((HIDDEN, V_PAD), jnp.float32)
                       .at[:, :V].set(params['unembed']),         # (H, 128)
    )


# ----------------------------- wrapper
def vae_transformer_decoder(z, params):
    B = z.shape[0]
    L, H, V = EXPR_LENGTH, HIDDEN, VOCAB_SIZE
    NL, F = NUM_LAYERS, DIM_FF

    nb = _num_batch_blocks(B)
    n_rows = (B // nb) * L

    # Glue (plain XLA): decoder input embeddings + memory rows.
    # tokens are always zeros -> embed of tokens[:, :-1] is (L-1) copies of
    # embedding row 0; prepend the zero start-token embedding; add pos enc.
    tok0 = params['tok_emb'][0]
    embed_1 = jnp.concatenate(
        [jnp.zeros((1, H), jnp.float32),
         jnp.broadcast_to(tok0[None, :], (L - 1, H))], axis=0)
    embed_1 = embed_1 + params['pos_emb'][:L]
    x0 = jnp.tile(embed_1, (B, 1)).astype(jnp.float32)            # (B*L, H)

    mem_rows = (z.astype(jnp.float32) @ params['w_mem'].T + params['b_mem'])
    memory = jnp.repeat(mem_rows, L, axis=0).astype(jnp.float32)  # (B*L, H)
    xm = jnp.stack([x0, memory], axis=0)                          # (2, B*L, H)

    packed = _pack_params(params)
    kernel = _make_decoder_kernel(n_rows)

    def inv_spec(shape):
        nd = len(shape)
        return pl.BlockSpec(shape, lambda i, nd=nd: (0,) * nd)

    in_specs = [
        pl.BlockSpec((2, n_rows, H), lambda i: (0, i, 0)),        # x0 | memory
        inv_spec((NL * 8, H, H)),                                 # attn weights
        inv_spec((NL, H, F)),                                     # ff1 weights
        inv_spec((NL, F, H)),                                     # ff2 weights
        inv_spec((NL, 16, F)),                                    # biases + LN
        inv_spec((H, V_PAD)),                                     # padded unembed
    ]
    out_specs = pl.BlockSpec((n_rows, V_PAD), lambda i: (i, 0))

    out = pl.pallas_call(
        kernel,
        out_shape=jax.ShapeDtypeStruct((B * L, V_PAD), jnp.float32),
        grid_spec=pltpu.PrefetchScalarGridSpec(
            num_scalar_prefetch=0,
            grid=(nb,),
            in_specs=in_specs,
            out_specs=out_specs,
        ),
        compiler_params=pltpu.CompilerParams(
            dimension_semantics=("parallel",)),
    )(xm, packed['w_attn'], packed['w_ff1'], packed['w_ff2'],
      packed['small'], packed['unembed_pad'])

    return out.reshape(B, L, V_PAD)[:, :, :V]


# ----------------------------- deterministic parameter init (PyTorch layout)
def init_params(key):
    ks = iter(jax.random.split(key, 32))

    def nrm(shape, scale=0.05):
        return scale * jax.random.normal(next(ks), shape, jnp.float32)

    H, V, L, D, F, NL = HIDDEN, VOCAB_SIZE, EXPR_LENGTH, LATENT_DIM, DIM_FF, NUM_LAYERS
    return dict(
        tok_emb=nrm((V, H), 0.1),          # decoder_token_embedding.weight
        pos_emb=nrm((L, H), 0.1),          # decoder_position_encoding.weight
        unembed=nrm((H, V), 0.1),          # decoder_token_unembedding
        w_mem=nrm((H, D), 0.1),            # latent_to_initial_input.weight
        b_mem=nrm((1, H), 0.05),           # latent_to_initial_input.bias
        sa_in_w=nrm((NL, 3 * H, H)),       # self_attn.in_proj_weight
        sa_in_b=nrm((NL, 3 * H)),
        sa_out_w=nrm((NL, H, H)),          # self_attn.out_proj
        sa_out_b=nrm((NL, H)),
        ca_in_w=nrm((NL, 3 * H, H)),       # multihead_attn.in_proj_weight
        ca_in_b=nrm((NL, 3 * H)),
        ca_out_w=nrm((NL, H, H)),
        ca_out_b=nrm((NL, H)),
        ln1_w=1.0 + nrm((NL, H), 0.01), ln1_b=nrm((NL, H), 0.01),
        ln2_w=1.0 + nrm((NL, H), 0.01), ln2_b=nrm((NL, H), 0.01),
        ln3_w=1.0 + nrm((NL, H), 0.01), ln3_b=nrm((NL, H), 0.01),
        ff1_w=nrm((NL, F, H)),             # linear1
        ff1_b=nrm((NL, F)),
        ff2_w=nrm((NL, H, F)),             # linear2
        ff2_b=nrm((NL, H)),
    )


# ----------------------------- pure-JAX reference (faithful PyTorch port)
def reference_forward(z, params):
    B = z.shape[0]
    L, H = EXPR_LENGTH, HIDDEN
    mem_row = z @ params['w_mem'].T + params['b_mem']                 # (B, H)
    memory = jnp.broadcast_to(mem_row[:, None, :], (B, L, H))

    tok0 = params['tok_emb'][0]
    embed = jnp.concatenate(
        [jnp.zeros((1, H)), jnp.broadcast_to(tok0[None], (L - 1, H))], 0)
    embed = embed + params['pos_emb'][:L]
    x = jnp.broadcast_to(embed[None], (B, L, H))

    row = jnp.arange(L)[:, None]
    col = jnp.arange(L)[None, :]
    causal = (row >= col)[None, None]                                 # (1,1,L,L)

    def mha(q_in, kv_in, in_w, in_b, out_w, out_b, mask):
        q = q_in @ in_w[:H].T + in_b[:H]
        k = kv_in @ in_w[H:2 * H].T + in_b[H:2 * H]
        v = kv_in @ in_w[2 * H:].T + in_b[2 * H:]

        def split(t):
            b, l, _ = t.shape
            return t.reshape(b, l, NUM_HEADS, HEAD_DIM).transpose(0, 2, 1, 3)

        qh, kh, vh = split(q), split(k), split(v)
        scores = jnp.einsum('bhqd,bhkd->bhqk', qh, kh) / math.sqrt(HEAD_DIM)
        if mask is not None:
            scores = jnp.where(mask, scores, -jnp.inf)
        p = jax.nn.softmax(scores, axis=-1)
        o = jnp.einsum('bhqk,bhkd->bhqd', p, vh)
        o = o.transpose(0, 2, 1, 3).reshape(q.shape)
        return o @ out_w.T + out_b

    def layernorm(t, w, b, eps=1e-5):
        mu = t.mean(-1, keepdims=True)
        var = ((t - mu) ** 2).mean(-1, keepdims=True)
        return (t - mu) * jax.lax.rsqrt(var + eps) * w + b

    for l in range(NUM_LAYERS):
        sa = mha(x, x, params['sa_in_w'][l], params['sa_in_b'][l],
                 params['sa_out_w'][l], params['sa_out_b'][l], causal)
        x = layernorm(x + sa, params['ln1_w'][l], params['ln1_b'][l])
        ca = mha(x, memory, params['ca_in_w'][l], params['ca_in_b'][l],
                 params['ca_out_w'][l], params['ca_out_b'][l], None)
        x = layernorm(x + ca, params['ln2_w'][l], params['ln2_b'][l])
        h = jax.nn.relu(x @ params['ff1_w'][l].T + params['ff1_b'][l])
        ff = h @ params['ff2_w'][l].T + params['ff2_b'][l]
        x = layernorm(x + ff, params['ln3_w'][l], params['ln3_b'][l])

    return x @ params['unembed']


# ----------------------------- main
if __name__ == "__main__":
    key = jax.random.PRNGKey(0)
    params = init_params(key)
    z = jax.random.normal(jax.random.fold_in(key, 1234),
                          (BATCH, LATENT_DIM), jnp.float32)

    logits = vae_transformer_decoder(z, params)
    logits = jax.block_until_ready(logits)

    assert logits.shape == (BATCH, EXPR_LENGTH, VOCAB_SIZE)

    ref = reference_forward(z, params)
    np.testing.assert_allclose(np.asarray(logits), np.asarray(ref),
                               atol=2e-4, rtol=2e-4)
    print("KERNEL_OK")
</pallas_src>

<mosaic_0001>
module attributes {stable_mosaic.version = 11 : i64} {
  func.func @kernel(%arg0: i32, %arg1: memref<2x16x32xf32, #tpu.memory_space<vmem>>, %arg2: memref<24x32x32xf32, #tpu.memory_space<vmem>>, %arg3: memref<3x32x64xf32, #tpu.memory_space<vmem>>, %arg4: memref<3x64x32xf32, #tpu.memory_space<vmem>>, %arg5: memref<3x16x64xf32, #tpu.memory_space<vmem>>, %arg6: memref<32x128xf32, #tpu.memory_space<vmem>>, %arg7: memref<16x128xf32, #tpu.memory_space<vmem>>) attributes {dimension_semantics = [#tpu.dimension_semantics<parallel>], iteration_bounds = array<i64: 1>, scalar_prefetch = 0 : i64, scratch_operands = 0 : i64, tpu.core_type = #tpu.core_type<tc>, window_params = [{transform_indices = @transform_0, window_bounds = array<i64: 2, 16, 32>}, {pipeline_mode = #tpu.pipeline_mode<synchronous>, transform_indices = @transform_1, window_bounds = array<i64: 24, 32, 32>}, {pipeline_mode = #tpu.pipeline_mode<synchronous>, transform_indices = @transform_2, window_bounds = array<i64: 3, 32, 64>}, {pipeline_mode = #tpu.pipeline_mode<synchronous>, transform_indices = @transform_3, window_bounds = array<i64: 3, 64, 32>}, {pipeline_mode = #tpu.pipeline_mode<synchronous>, transform_indices = @transform_4, window_bounds = array<i64: 3, 16, 64>}, {pipeline_mode = #tpu.pipeline_mode<synchronous>, transform_indices = @transform_5, window_bounds = array<i64: 32, 128>}, {transform_indices = @transform_6, window_bounds = array<i64: 16, 128>}]} {
    %c0 = arith.constant 0 : index
    %c0_0 = arith.constant 0 : index
    %c0_1 = arith.constant 0 : index
    %0 = vector.load %arg1[%c0, %c0_0, %c0_1] : memref<2x16x32xf32, #tpu.memory_space<vmem>>, vector<1x16x32xf32>
    %1 = vector.shape_cast %0 : vector<1x16x32xf32> to vector<16x32xf32>
    %c1 = arith.constant 1 : index
    %c0_2 = arith.constant 0 : index
    %c0_3 = arith.constant 0 : index
    %2 = vector.load %arg1[%c1, %c0_2, %c0_3] : memref<2x16x32xf32, #tpu.memory_space<vmem>>, vector<1x16x32xf32>
    %3 = vector.shape_cast %2 : vector<1x16x32xf32> to vector<16x32xf32>
    %4 = tpu.iota {dimensions = array<i32: 1>} : vector<16x32xi32>
    %c0_i32 = arith.constant 0 : i32
    %5 = vector.broadcast %c0_i32 : i32 to vector<16x32xi32>
    %6 = arith.cmpi sge, %4, %5 : vector<16x32xi32>
    %c8_i32 = arith.constant 8 : i32
    %7 = vector.broadcast %c8_i32 : i32 to vector<16x32xi32>
    %8 = arith.cmpi slt, %4, %7 : vector<16x32xi32>
    %9 = arith.andi %6, %8 : vector<16x32xi1>
    %cst = arith.constant 1.000000e+00 : f32
    %cst_4 = arith.constant 0.000000e+00 : f32
    %10 = vector.broadcast %cst : f32 to vector<16x32xf32>
    %11 = vector.broadcast %cst_4 : f32 to vector<16x32xf32>
    %12 = arith.select %9, %10, %11 : vector<16x32xi1>, vector<16x32xf32>
    %c8_i32_5 = arith.constant 8 : i32
    %13 = vector.broadcast %c8_i32_5 : i32 to vector<16x32xi32>
    %14 = arith.cmpi sge, %4, %13 : vector<16x32xi32>
    %c16_i32 = arith.constant 16 : i32
    %15 = vector.broadcast %c16_i32 : i32 to vector<16x32xi32>
    %16 = arith.cmpi slt, %4, %15 : vector<16x32xi32>
    %17 = arith.andi %14, %16 : vector<16x32xi1>
    %cst_6 = arith.constant 1.000000e+00 : f32
    %cst_7 = arith.constant 0.000000e+00 : f32
    %18 = vector.broadcast %cst_6 : f32 to vector<16x32xf32>
    %19 = vector.broadcast %cst_7 : f32 to vector<16x32xf32>
    %20 = arith.select %17, %18, %19 : vector<16x32xi1>, vector<16x32xf32>
    %c16_i32_8 = arith.constant 16 : i32
    %21 = vector.broadcast %c16_i32_8 : i32 to vector<16x32xi32>
    %22 = arith.cmpi sge, %4, %21 : vector<16x32xi32>
    %c24_i32 = arith.constant 24 : i32
    %23 = vector.broadcast %c24_i32 : i32 to vector<16x32xi32>
    %24 = arith.cmpi slt, %4, %23 : vector<16x32xi32>
    %25 = arith.andi %22, %24 : vector<16x32xi1>
    %cst_9 = arith.constant 1.000000e+00 : f32
    %cst_10 = arith.constant 0.000000e+00 : f32
    %26 = vector.broadcast %cst_9 : f32 to vector<16x32xf32>
    %27 = vector.broadcast %cst_10 : f32 to vector<16x32xf32>
    %28 = arith.select %25, %26, %27 : vector<16x32xi1>, vector<16x32xf32>
    %c24_i32_11 = arith.constant 24 : i32
    %29 = vector.broadcast %c24_i32_11 : i32 to vector<16x32xi32>
    %30 = arith.cmpi sge, %4, %29 : vector<16x32xi32>
    %c32_i32 = arith.constant 32 : i32
    %31 = vector.broadcast %c32_i32 : i32 to vector<16x32xi32>
    %32 = arith.cmpi slt, %4, %31 : vector<16x32xi32>
    %33 = arith.andi %30, %32 : vector<16x32xi1>
    %cst_12 = arith.constant 1.000000e+00 : f32
    %cst_13 = arith.constant 0.000000e+00 : f32
    %34 = vector.broadcast %cst_12 : f32 to vector<16x32xf32>
    %35 = vector.broadcast %cst_13 : f32 to vector<16x32xf32>
    %36 = arith.select %33, %34, %35 : vector<16x32xi1>, vector<16x32xf32>
    %37 = tpu.concatenate %12, %20, %28, %36 in 0 : vector<16x32xf32>, vector<16x32xf32>, vector<16x32xf32>, vector<16x32xf32> -> vector<64x32xf32>
    %38 = tpu.iota {dimensions = array<i32: 0>} : vector<32x16xi32>
    %c0_i32_14 = arith.constant 0 : i32
    %39 = vector.broadcast %c0_i32_14 : i32 to vector<32x16xi32>
    %40 = arith.cmpi sge, %38, %39 : vector<32x16xi32>
    %c8_i32_15 = arith.constant 8 : i32
    %41 = vector.broadcast %c8_i32_15 : i32 to vector<32x16xi32>
    %42 = arith.cmpi slt, %38, %41 : vector<32x16xi32>
    %43 = arith.andi %40, %42 : vector<32x16xi1>
    %cst_16 = arith.constant 1.000000e+00 : f32
    %cst_17 = arith.constant 0.000000e+00 : f32
    %44 = vector.broadcast %cst_16 : f32 to vector<32x16xf32>
    %45 = vector.broadcast %cst_17 : f32 to vector<32x16xf32>
    %46 = arith.select %43, %44, %45 : vector<32x16xi1>, vector<32x16xf32>
    %c8_i32_18 = arith.constant 8 : i32
    %47 = vector.broadcast %c8_i32_18 : i32 to vector<32x16xi32>
    %48 = arith.cmpi sge, %38, %47 : vector<32x16xi32>
    %c16_i32_19 = arith.constant 16 : i32
    %49 = vector.broadcast %c16_i32_19 : i32 to vector<32x16xi32>
    %50 = arith.cmpi slt, %38, %49 : vector<32x16xi32>
    %51 = arith.andi %48, %50 : vector<32x16xi1>
    %cst_20 = arith.constant 1.000000e+00 : f32
    %cst_21 = arith.constant 0.000000e+00 : f32
    %52 = vector.broadcast %cst_20 : f32 to vector<32x16xf32>
    %53 = vector.broadcast %cst_21 : f32 to vector<32x16xf32>
    %54 = arith.select %51, %52, %53 : vector<32x16xi1>, vector<32x16xf32>
    %c16_i32_22 = arith.constant 16 : i32
    %55 = vector.broadcast %c16_i32_22 : i32 to vector<32x16xi32>
    %56 = arith.cmpi sge, %38, %55 : vector<32x16xi32>
    %c24_i32_23 = arith.constant 24 : i32
    %57 = vector.broadcast %c24_i32_23 : i32 to vector<32x16xi32>
    %58 = arith.cmpi slt, %38, %57 : vector<32x16xi32>
    %59 = arith.andi %56, %58 : vector<32x16xi1>
    %cst_24 = arith.constant 1.000000e+00 : f32
    %cst_25 = arith.constant 0.000000e+00 : f32
    %60 = vector.broadcast %cst_24 : f32 to vector<32x16xf32>
    %61 = vector.broadcast %cst_25 : f32 to vector<32x16xf32>
    %62 = arith.select %59, %60, %61 : vector<32x16xi1>, vector<32x16xf32>
    %c24_i32_26 = arith.constant 24 : i32
    %63 = vector.broadcast %c24_i32_26 : i32 to vector<32x16xi32>
    %64 = arith.cmpi sge, %38, %63 : vector<32x16xi32>
    %c32_i32_27 = arith.constant 32 : i32
    %65 = vector.broadcast %c32_i32_27 : i32 to vector<32x16xi32>
    %66 = arith.cmpi slt, %38, %65 : vector<32x16xi32>
    %67 = arith.andi %64, %66 : vector<32x16xi1>
    %cst_28 = arith.constant 1.000000e+00 : f32
    %cst_29 = arith.constant 0.000000e+00 : f32
    %68 = vector.broadcast %cst_28 : f32 to vector<32x16xf32>
    %69 = vector.broadcast %cst_29 : f32 to vector<32x16xf32>
    %70 = arith.select %67, %68, %69 : vector<32x16xi1>, vector<32x16xf32>
    %71 = tpu.concatenate %46, %54, %62, %70 in 1 : vector<32x16xf32>, vector<32x16xf32>, vector<32x16xf32>, vector<32x16xf32> -> vector<32x64xf32>
    %72 = tpu.iota {dimensions = array<i32: 1>} : vector<16x64xi32>
    %c0_i32_30 = arith.constant 0 : i32
    %73 = vector.broadcast %c0_i32_30 : i32 to vector<16x64xi32>
    %74 = arith.cmpi sge, %72, %73 : vector<16x64xi32>
    %c16_i32_31 = arith.constant 16 : i32
    %75 = vector.broadcast %c16_i32_31 : i32 to vector<16x64xi32>
    %76 = arith.cmpi slt, %72, %75 : vector<16x64xi32>
    %77 = arith.andi %74, %76 : vector<16x64xi1>
    %cst_32 = arith.constant 1.000000e+00 : f32
    %cst_33 = arith.constant 0.000000e+00 : f32
    %78 = vector.broadcast %cst_32 : f32 to vector<16x64xf32>
    %79 = vector.broadcast %cst_33 : f32 to vector<16x64xf32>
    %80 = arith.select %77, %78, %79 : vector<16x64xi1>, vector<16x64xf32>
    %c16_i32_34 = arith.constant 16 : i32
    %81 = vector.broadcast %c16_i32_34 : i32 to vector<16x64xi32>
    %82 = arith.cmpi sge, %72, %81 : vector<16x64xi32>
    %c32_i32_35 = arith.constant 32 : i32
    %83 = vector.broadcast %c32_i32_35 : i32 to vector<16x64xi32>
    %84 = arith.cmpi slt, %72, %83 : vector<16x64xi32>
    %85 = arith.andi %82, %84 : vector<16x64xi1>
    %cst_36 = arith.constant 1.000000e+00 : f32
    %cst_37 = arith.constant 0.000000e+00 : f32
    %86 = vector.broadcast %cst_36 : f32 to vector<16x64xf32>
    %87 = vector.broadcast %cst_37 : f32 to vector<16x64xf32>
    %88 = arith.select %85, %86, %87 : vector<16x64xi1>, vector<16x64xf32>
    %c32_i32_38 = arith.constant 32 : i32
    %89 = vector.broadcast %c32_i32_38 : i32 to vector<16x64xi32>
    %90 = arith.cmpi sge, %72, %89 : vector<16x64xi32>
    %c48_i32 = arith.constant 48 : i32
    %91 = vector.broadcast %c48_i32 : i32 to vector<16x64xi32>
    %92 = arith.cmpi slt, %72, %91 : vector<16x64xi32>
    %93 = arith.andi %90, %92 : vector<16x64xi1>
    %cst_39 = arith.constant 1.000000e+00 : f32
    %cst_40 = arith.constant 0.000000e+00 : f32
    %94 = vector.broadcast %cst_39 : f32 to vector<16x64xf32>
    %95 = vector.broadcast %cst_40 : f32 to vector<16x64xf32>
    %96 = arith.select %93, %94, %95 : vector<16x64xi1>, vector<16x64xf32>
    %c48_i32_41 = arith.constant 48 : i32
    %97 = vector.broadcast %c48_i32_41 : i32 to vector<16x64xi32>
    %98 = arith.cmpi sge, %72, %97 : vector<16x64xi32>
    %c64_i32 = arith.constant 64 : i32
    %99 = vector.broadcast %c64_i32 : i32 to vector<16x64xi32>
    %100 = arith.cmpi slt, %72, %99 : vector<16x64xi32>
    %101 = arith.andi %98, %100 : vector<16x64xi1>
    %cst_42 = arith.constant 1.000000e+00 : f32
    %cst_43 = arith.constant 0.000000e+00 : f32
    %102 = vector.broadcast %cst_42 : f32 to vector<16x64xf32>
    %103 = vector.broadcast %cst_43 : f32 to vector<16x64xf32>
    %104 = arith.select %101, %102, %103 : vector<16x64xi1>, vector<16x64xf32>
    %105 = tpu.concatenate %80, %88, %96, %104 in 0 : vector<16x64xf32>, vector<16x64xf32>, vector<16x64xf32>, vector<16x64xf32> -> vector<64x64xf32>
    %106 = tpu.iota {dimensions = array<i32: 0>} : vector<16x16xi32>
    %107 = tpu.iota {dimensions = array<i32: 1>} : vector<16x16xi32>
    %c8_i32_44 = arith.constant 8 : i32
    %108 = vector.broadcast %c8_i32_44 : i32 to vector<16x16xi32>
    %109 = arith.cmpi slt, %106, %108 : vector<16x16xi32>
    %c8_i32_45 = arith.constant 8 : i32
    %110 = vector.broadcast %c8_i32_45 : i32 to vector<16x16xi32>
    %111 = arith.cmpi slt, %107, %110 : vector<16x16xi32>
    %112 = arith.andi %109, %111 : vector<16x16xi1>
    %c8_i32_46 = arith.constant 8 : i32
    %113 = vector.broadcast %c8_i32_46 : i32 to vector<16x16xi32>
    %114 = arith.cmpi sge, %106, %113 : vector<16x16xi32>
    %c16_i32_47 = arith.constant 16 : i32
    %115 = vector.broadcast %c16_i32_47 : i32 to vector<16x16xi32>
    %116 = arith.cmpi slt, %106, %115 : vector<16x16xi32>
    %117 = arith.andi %114, %116 : vector<16x16xi1>
    %c8_i32_48 = arith.constant 8 : i32
    %118 = vector.broadcast %c8_i32_48 : i32 to vector<16x16xi32>
    %119 = arith.cmpi sge, %107, %118 : vector<16x16xi32>
    %120 = arith.andi %117, %119 : vector<16x16xi1>
    %c16_i32_49 = arith.constant 16 : i32
    %121 = vector.broadcast %c16_i32_49 : i32 to vector<16x16xi32>
    %122 = arith.cmpi slt, %107, %121 : vector<16x16xi32>
    %123 = arith.andi %120, %122 : vector<16x16xi1>
    %124 = arith.ori %112, %123 : vector<16x16xi1>
    %125 = arith.cmpi sge, %106, %107 : vector<16x16xi32>
    %126 = arith.andi %124, %125 : vector<16x16xi1>
    %cst_50 = arith.constant 0.000000e+00 : f32
    %cst_51 = arith.constant -1.000000e+30 : f32
    %127 = vector.broadcast %cst_50 : f32 to vector<16x16xf32>
    %128 = vector.broadcast %cst_51 : f32 to vector<16x16xf32>
    %129 = arith.select %126, %127, %128 : vector<16x16xi1>, vector<16x16xf32>
    %cst_52 = arith.constant 0.000000e+00 : f32
    %cst_53 = arith.constant -1.000000e+30 : f32
    %130 = vector.broadcast %cst_52 : f32 to vector<16x16xf32>
    %131 = vector.broadcast %cst_53 : f32 to vector<16x16xf32>
    %132 = arith.select %124, %130, %131 : vector<16x16xi1>, vector<16x16xf32>
    %133 = tpu.concatenate %129, %129, %129, %129 in 1 : vector<16x16xf32>, vector<16x16xf32>, vector<16x16xf32>, vector<16x16xf32> -> vector<16x64xf32>
    %134 = tpu.concatenate %132, %132, %132, %132 in 1 : vector<16x16xf32>, vector<16x16xf32>, vector<16x16xf32>, vector<16x16xf32> -> vector<16x64xf32>
    %c0_54 = arith.constant 0 : index
    %c0_55 = arith.constant 0 : index
    %c0_56 = arith.constant 0 : index
    %135 = vector.load %arg5[%c0_54, %c0_55, %c0_56] : memref<3x16x64xf32, #tpu.memory_space<vmem>>, vector<1x16x64xf32>
    %136 = vector.shape_cast %135 : vector<1x16x64xf32> to vector<16x64xf32>
    %c0_57 = arith.constant 0 : index
    %c0_58 = arith.constant 0 : index
    %c0_59 = arith.constant 0 : index
    %137 = vector.load %arg2[%c0_57, %c0_58, %c0_59] : memref<24x32x32xf32, #tpu.memory_space<vmem>>, vector<1x32x32xf32>
    %138 = vector.shape_cast %137 : vector<1x32x32xf32> to vector<32x32xf32>
    %cst_60 = arith.constant dense<0.000000e+00> : vector<16x32xf32>
    %139 = tpu.matmul %1, %138, %cst_60 {dimension_numbers = #tpu.dot_dimension_numbers<[1], [0], [0], [1], [0, 0, 1, 1], [], []>} : vector<16x32xf32>, vector<32x32xf32>, vector<16x32xf32> -> vector<16x32xf32>
    %140 = vector.extract_strided_slice %136 {offsets = [0, 0], sizes = [1, 32], strides = [1, 1]} : vector<16x64xf32> to vector<1x32xf32>
    %141 = vector.broadcast %140 : vector<1x32xf32> to vector<16x32xf32>
    %142 = arith.addf %139, %141 : vector<16x32xf32>
    %c1_61 = arith.constant 1 : index
    %c0_62 = arith.constant 0 : index
    %c0_63 = arith.constant 0 : index
    %143 = vector.load %arg2[%c1_61, %c0_62, %c0_63] : memref<24x32x32xf32, #tpu.memory_space<vmem>>, vector<1x32x32xf32>
    %144 = vector.shape_cast %143 : vector<1x32x32xf32> to vector<32x32xf32>
    %cst_64 = arith.constant dense<0.000000e+00> : vector<16x32xf32>
    %145 = tpu.matmul %1, %144, %cst_64 {dimension_numbers = #tpu.dot_dimension_numbers<[1], [0], [0], [1], [0, 0, 1, 1], [], []>} : vector<16x32xf32>, vector<32x32xf32>, vector<16x32xf32> -> vector<16x32xf32>
    %146 = vector.extract_strided_slice %136 {offsets = [1, 0], sizes = [1, 32], strides = [1, 1]} : vector<16x64xf32> to vector<1x32xf32>
    %147 = vector.broadcast %146 : vector<1x32xf32> to vector<16x32xf32>
    %148 = arith.addf %145, %147 : vector<16x32xf32>
    %c2 = arith.constant 2 : index
    %c0_65 = arith.constant 0 : index
    %c0_66 = arith.constant 0 : index
    %149 = vector.load %arg2[%c2, %c0_65, %c0_66] : memref<24x32x32xf32, #tpu.memory_space<vmem>>, vector<1x32x32xf32>
    %150 = vector.shape_cast %149 : vector<1x32x32xf32> to vector<32x32xf32>
    %cst_67 = arith.constant dense<0.000000e+00> : vector<16x32xf32>
    %151 = tpu.matmul %1, %150, %cst_67 {dimension_numbers = #tpu.dot_dimension_numbers<[1], [0], [0], [1], [0, 0, 1, 1], [], []>} : vector<16x32xf32>, vector<32x32xf32>, vector<16x32xf32> -> vector<16x32xf32>
    %152 = vector.extract_strided_slice %136 {offsets = [2, 0], sizes = [1, 32], strides = [1, 1]} : vector<16x64xf32> to vector<1x32xf32>
    %153 = vector.broadcast %152 : vector<1x32xf32> to vector<16x32xf32>
    %154 = arith.addf %151, %153 : vector<16x32xf32>
    %c3 = arith.constant 3 : index
    %c0_68 = arith.constant 0 : index
    %c0_69 = arith.constant 0 : index
    %155 = vector.load %arg2[%c3, %c0_68, %c0_69] : memref<24x32x32xf32, #tpu.memory_space<vmem>>, vector<1x32x32xf32>
    %156 = vector.shape_cast %155 : vector<1x32x32xf32> to vector<32x32xf32>
    %157 = vector.extract_strided_slice %136 {offsets = [3, 0], sizes = [1, 32], strides = [1, 1]} : vector<16x64xf32> to vector<1x32xf32>
    %158 = tpu.transpose %148, [1, 0] : vector<16x32xf32> -> vector<32x16xf32>
    %159 = tpu.concatenate %158, %158, %158, %158 in 1 : vector<32x16xf32>, vector<32x16xf32>, vector<32x16xf32>, vector<32x16xf32> -> vector<32x64xf32>
    %160 = arith.mulf %159, %71 : vector<32x64xf32>
    %161 = tpu.concatenate %154, %154, %154, %154 in 0 : vector<16x32xf32>, vector<16x32xf32>, vector<16x32xf32>, vector<16x32xf32> -> vector<64x32xf32>
    %162 = arith.mulf %161, %37 : vector<64x32xf32>
    %cst_70 = arith.constant 0.353553385 : f32
    %163 = vector.broadcast %cst_70 : f32 to vector<16x32xf32>
    %164 = arith.mulf %142, %163 : vector<16x32xf32>
    %cst_71 = arith.constant dense<0.000000e+00> : vector<16x64xf32>
    %165 = tpu.matmul %164, %160, %cst_71 {dimension_numbers = #tpu.dot_dimension_numbers<[1], [0], [0], [1], [0, 0, 1, 1], [], []>} : vector<16x32xf32>, vector<32x64xf32>, vector<16x64xf32> -> vector<16x64xf32>
    %166 = arith.addf %165, %133 : vector<16x64xf32>
    %167 = math.exp %166 : vector<16x64xf32>
    %cst_72 = arith.constant dense<0.000000e+00> : vector<16x64xf32>
    %168 = tpu.matmul %167, %105, %cst_72 {dimension_numbers = #tpu.dot_dimension_numbers<[1], [0], [0], [1], [0, 0, 1, 1], [], []>} : vector<16x64xf32>, vector<64x64xf32>, vector<16x64xf32> -> vector<16x64xf32>
    %169 = tpu.reciprocal %168 {approx = true} : vector<16x64xf32> -> vector<16x64xf32>
    %170 = arith.mulf %168, %169 : vector<16x64xf32>
    %cst_73 = arith.constant 2.000000e+00 : f32
    %171 = vector.broadcast %cst_73 : f32 to vector<16x64xf32>
    %172 = arith.subf %171, %170 : vector<16x64xf32>
    %173 = arith.mulf %169, %172 : vector<16x64xf32>
    %174 = arith.mulf %167, %173 : vector<16x64xf32>
    %cst_74 = arith.constant dense<0.000000e+00> : vector<16x32xf32>
    %175 = tpu.matmul %174, %162, %cst_74 {dimension_numbers = #tpu.dot_dimension_numbers<[1], [0], [0], [1], [0, 0, 1, 1], [], []>} : vector<16x64xf32>, vector<64x32xf32>, vector<16x32xf32> -> vector<16x32xf32>
    %cst_75 = arith.constant dense<0.000000e+00> : vector<16x32xf32>
    %176 = tpu.matmul %175, %156, %cst_75 {dimension_numbers = #tpu.dot_dimension_numbers<[1], [0], [0], [1], [0, 0, 1, 1], [], []>} : vector<16x32xf32>, vector<32x32xf32>, vector<16x32xf32> -> vector<16x32xf32>
    %177 = vector.broadcast %157 : vector<1x32xf32> to vector<16x32xf32>
    %178 = arith.addf %176, %177 : vector<16x32xf32>
    %179 = arith.addf %1, %178 : vector<16x32xf32>
    %180 = vector.extract_strided_slice %136 {offsets = [10, 0], sizes = [1, 32], strides = [1, 1]} : vector<16x64xf32> to vector<1x32xf32>
    %181 = vector.extract_strided_slice %136 {offsets = [11, 0], sizes = [1, 32], strides = [1, 1]} : vector<16x64xf32> to vector<1x32xf32>
    %cst_76 = arith.constant dense<0.000000e+00> : vector<16xf32>
    %182 = vector.multi_reduction <add>, %179, %cst_76 [1] : vector<16x32xf32> to vector<16xf32>
    %183 = vector.shape_cast %182 : vector<16xf32> to vector<16x1xf32>
    %cst_77 = arith.constant 3.200000e+01 : f32
    %184 = vector.broadcast %cst_77 : f32 to vector<16x1xf32>
    %185 = arith.divf %183, %184 : vector<16x1xf32>
    %186 = vector.broadcast %185 : vector<16x1xf32> to vector<16x32xf32>
    %187 = arith.subf %179, %186 : vector<16x32xf32>
    %188 = arith.mulf %187, %187 : vector<16x32xf32>
    %cst_78 = arith.constant dense<0.000000e+00> : vector<16xf32>
    %189 = vector.multi_reduction <add>, %188, %cst_78 [1] : vector<16x32xf32> to vector<16xf32>
    %190 = vector.shape_cast %189 : vector<16xf32> to vector<16x1xf32>
    %cst_79 = arith.constant 3.200000e+01 : f32
    %191 = vector.broadcast %cst_79 : f32 to vector<16x1xf32>
    %192 = arith.divf %190, %191 : vector<16x1xf32>
    %193 = vector.broadcast %185 : vector<16x1xf32> to vector<16x32xf32>
    %194 = arith.subf %179, %193 : vector<16x32xf32>
    %cst_80 = arith.constant 9.99999974E-6 : f32
    %195 = vector.broadcast %cst_80 : f32 to vector<16x1xf32>
    %196 = arith.addf %192, %195 : vector<16x1xf32>
    %197 = math.rsqrt %196 : vector<16x1xf32>
    %198 = vector.broadcast %197 : vector<16x1xf32> to vector<16x32xf32>
    %199 = arith.mulf %194, %198 : vector<16x32xf32>
    %200 = vector.broadcast %180 : vector<1x32xf32> to vector<16x32xf32>
    %201 = arith.mulf %199, %200 : vector<16x32xf32>
    %202 = vector.broadcast %181 : vector<1x32xf32> to vector<16x32xf32>
    %203 = arith.addf %201, %202 : vector<16x32xf32>
    %c4 = arith.constant 4 : index
    %c0_81 = arith.constant 0 : index
    %c0_82 = arith.constant 0 : index
    %204 = vector.load %arg2[%c4, %c0_81, %c0_82] : memref<24x32x32xf32, #tpu.memory_space<vmem>>, vector<1x32x32xf32>
    %205 = vector.shape_cast %204 : vector<1x32x32xf32> to vector<32x32xf32>
    %cst_83 = arith.constant dense<0.000000e+00> : vector<16x32xf32>
    %206 = tpu.matmul %203, %205, %cst_83 {dimension_numbers = #tpu.dot_dimension_numbers<[1], [0], [0], [1], [0, 0, 1, 1], [], []>} : vector<16x32xf32>, vector<32x32xf32>, vector<16x32xf32> -> vector<16x32xf32>
    %207 = vector.extract_strided_slice %136 {offsets = [4, 0], sizes = [1, 32], strides = [1, 1]} : vector<16x64xf32> to vector<1x32xf32>
    %208 = vector.broadcast %207 : vector<1x32xf32> to vector<16x32xf32>
    %209 = arith.addf %206, %208 : vector<16x32xf32>
    %c5 = arith.constant 5 : index
    %c0_84 = arith.constant 0 : index
    %c0_85 = arith.constant 0 : index
    %210 = vector.load %arg2[%c5, %c0_84, %c0_85] : memref<24x32x32xf32, #tpu.memory_space<vmem>>, vector<1x32x32xf32>
    %211 = vector.shape_cast %210 : vector<1x32x32xf32> to vector<32x32xf32>
    %cst_86 = arith.constant dense<0.000000e+00> : vector<16x32xf32>
    %212 = tpu.matmul %3, %211, %cst_86 {dimension_numbers = #tpu.dot_dimension_numbers<[1], [0], [0], [1], [0, 0, 1, 1], [], []>} : vector<16x32xf32>, vector<32x32xf32>, vector<16x32xf32> -> vector<16x32xf32>
    %213 = vector.extract_strided_slice %136 {offsets = [5, 0], sizes = [1, 32], strides = [1, 1]} : vector<16x64xf32> to vector<1x32xf32>
    %214 = vector.broadcast %213 : vector<1x32xf32> to vector<16x32xf32>
    %215 = arith.addf %212, %214 : vector<16x32xf32>
    %c6 = arith.constant 6 : index
    %c0_87 = arith.constant 0 : index
    %c0_88 = arith.constant 0 : index
    %216 = vector.load %arg2[%c6, %c0_87, %c0_88] : memref<24x32x32xf32, #tpu.memory_space<vmem>>, vector<1x32x32xf32>
    %217 = vector.shape_cast %216 : vector<1x32x32xf32> to vector<32x32xf32>
    %cst_89 = arith.constant dense<0.000000e+00> : vector<16x32xf32>
    %218 = tpu.matmul %3, %217, %cst_89 {dimension_numbers = #tpu.dot_dimension_numbers<[1], [0], [0], [1], [0, 0, 1, 1], [], []>} : vector<16x32xf32>, vector<32x32xf32>, vector<16x32xf32> -> vector<16x32xf32>
    %219 = vector.extract_strided_slice %136 {offsets = [6, 0], sizes = [1, 32], strides = [1, 1]} : vector<16x64xf32> to vector<1x32xf32>
    %220 = vector.broadcast %219 : vector<1x32xf32> to vector<16x32xf32>
    %221 = arith.addf %218, %220 : vector<16x32xf32>
    %c7 = arith.constant 7 : index
    %c0_90 = arith.constant 0 : index
    %c0_91 = arith.constant 0 : index
    %222 = vector.load %arg2[%c7, %c0_90, %c0_91] : memref<24x32x32xf32, #tpu.memory_space<vmem>>, vector<1x32x32xf32>
    %223 = vector.shape_cast %222 : vector<1x32x32xf32> to vector<32x32xf32>
    %224 = vector.extract_strided_slice %136 {offsets = [7, 0], sizes = [1, 32], strides = [1, 1]} : vector<16x64xf32> to vector<1x32xf32>
    %225 = tpu.transpose %215, [1, 0] : vector<16x32xf32> -> vector<32x16xf32>
    %226 = tpu.concatenate %225, %225, %225, %225 in 1 : vector<32x16xf32>, vector<32x16xf32>, vector<32x16xf32>, vector<32x16xf32> -> vector<32x64xf32>
    %227 = arith.mulf %226, %71 : vector<32x64xf32>
    %228 = tpu.concatenate %221, %221, %221, %221 in 0 : vector<16x32xf32>, vector<16x32xf32>, vector<16x32xf32>, vector<16x32xf32> -> vector<64x32xf32>
    %229 = arith.mulf %228, %37 : vector<64x32xf32>
    %cst_92 = arith.constant 0.353553385 : f32
    %230 = vector.broadcast %cst_92 : f32 to vector<16x32xf32>
    %231 = arith.mulf %209, %230 : vector<16x32xf32>
    %cst_93 = arith.constant dense<0.000000e+00> : vector<16x64xf32>
    %232 = tpu.matmul %231, %227, %cst_93 {dimension_numbers = #tpu.dot_dimension_numbers<[1], [0], [0], [1], [0, 0, 1, 1], [], []>} : vector<16x32xf32>, vector<32x64xf32>, vector<16x64xf32> -> vector<16x64xf32>
    %233 = arith.addf %232, %134 : vector<16x64xf32>
    %234 = math.exp %233 : vector<16x64xf32>
    %cst_94 = arith.constant dense<0.000000e+00> : vector<16x64xf32>
    %235 = tpu.matmul %234, %105, %cst_94 {dimension_numbers = #tpu.dot_dimension_numbers<[1], [0], [0], [1], [0, 0, 1, 1], [], []>} : vector<16x64xf32>, vector<64x64xf32>, vector<16x64xf32> -> vector<16x64xf32>
    %236 = tpu.reciprocal %235 {approx = true} : vector<16x64xf32> -> vector<16x64xf32>
    %237 = arith.mulf %235, %236 : vector<16x64xf32>
    %cst_95 = arith.constant 2.000000e+00 : f32
    %238 = vector.broadcast %cst_95 : f32 to vector<16x64xf32>
    %239 = arith.subf %238, %237 : vector<16x64xf32>
    %240 = arith.mulf %236, %239 : vector<16x64xf32>
    %241 = arith.mulf %234, %240 : vector<16x64xf32>
    %cst_96 = arith.constant dense<0.000000e+00> : vector<16x32xf32>
    %242 = tpu.matmul %241, %229, %cst_96 {dimension_numbers = #tpu.dot_dimension_numbers<[1], [0], [0], [1], [0, 0, 1, 1], [], []>} : vector<16x64xf32>, vector<64x32xf32>, vector<16x32xf32> -> vector<16x32xf32>
    %cst_97 = arith.constant dense<0.000000e+00> : vector<16x32xf32>
    %243 = tpu.matmul %242, %223, %cst_97 {dimension_numbers = #tpu.dot_dimension_numbers<[1], [0], [0], [1], [0, 0, 1, 1], [], []>} : vector<16x32xf32>, vector<32x32xf32>, vector<16x32xf32> -> vector<16x32xf32>
    %244 = vector.broadcast %224 : vector<1x32xf32> to vector<16x32xf32>
    %245 = arith.addf %243, %244 : vector<16x32xf32>
    %246 = arith.addf %203, %245 : vector<16x32xf32>
    %247 = vector.extract_strided_slice %136 {offsets = [12, 0], sizes = [1, 32], strides = [1, 1]} : vector<16x64xf32> to vector<1x32xf32>
    %248 = vector.extract_strided_slice %136 {offsets = [13, 0], sizes = [1, 32], strides = [1, 1]} : vector<16x64xf32> to vector<1x32xf32>
    %cst_98 = arith.constant dense<0.000000e+00> : vector<16xf32>
    %249 = vector.multi_reduction <add>, %246, %cst_98 [1] : vector<16x32xf32> to vector<16xf32>
    %250 = vector.shape_cast %249 : vector<16xf32> to vector<16x1xf32>
    %cst_99 = arith.constant 3.200000e+01 : f32
    %251 = vector.broadcast %cst_99 : f32 to vector<16x1xf32>
    %252 = arith.divf %250, %251 : vector<16x1xf32>
    %253 = vector.broadcast %252 : vector<16x1xf32> to vector<16x32xf32>
    %254 = arith.subf %246, %253 : vector<16x32xf32>
    %255 = arith.mulf %254, %254 : vector<16x32xf32>
    %cst_100 = arith.constant dense<0.000000e+00> : vector<16xf32>
    %256 = vector.multi_reduction <add>, %255, %cst_100 [1] : vector<16x32xf32> to vector<16xf32>
    %257 = vector.shape_cast %256 : vector<16xf32> to vector<16x1xf32>
    %cst_101 = arith.constant 3.200000e+01 : f32
    %258 = vector.broadcast %cst_101 : f32 to vector<16x1xf32>
    %259 = arith.divf %257, %258 : vector<16x1xf32>
    %260 = vector.broadcast %252 : vector<16x1xf32> to vector<16x32xf32>
    %261 = arith.subf %246, %260 : vector<16x32xf32>
    %cst_102 = arith.constant 9.99999974E-6 : f32
    %262 = vector.broadcast %cst_102 : f32 to vector<16x1xf32>
    %263 = arith.addf %259, %262 : vector<16x1xf32>
    %264 = math.rsqrt %263 : vector<16x1xf32>
    %265 = vector.broadcast %264 : vector<16x1xf32> to vector<16x32xf32>
    %266 = arith.mulf %261, %265 : vector<16x32xf32>
    %267 = vector.broadcast %247 : vector<1x32xf32> to vector<16x32xf32>
    %268 = arith.mulf %266, %267 : vector<16x32xf32>
    %269 = vector.broadcast %248 : vector<1x32xf32> to vector<16x32xf32>
    %270 = arith.addf %268, %269 : vector<16x32xf32>
    %c0_103 = arith.constant 0 : index
    %c0_104 = arith.constant 0 : index
    %c0_105 = arith.constant 0 : index
    %271 = vector.load %arg3[%c0_103, %c0_104, %c0_105] : memref<3x32x64xf32, #tpu.memory_space<vmem>>, vector<1x32x64xf32>
    %272 = vector.shape_cast %271 : vector<1x32x64xf32> to vector<32x64xf32>
    %cst_106 = arith.constant dense<0.000000e+00> : vector<16x64xf32>
    %273 = tpu.matmul %270, %272, %cst_106 {dimension_numbers = #tpu.dot_dimension_numbers<[1], [0], [0], [1], [0, 0, 1, 1], [], []>} : vector<16x32xf32>, vector<32x64xf32>, vector<16x64xf32> -> vector<16x64xf32>
    %274 = vector.extract_strided_slice %136 {offsets = [8, 0], sizes = [1, 64], strides = [1, 1]} : vector<16x64xf32> to vector<1x64xf32>
    %275 = vector.broadcast %274 : vector<1x64xf32> to vector<16x64xf32>
    %276 = arith.addf %273, %275 : vector<16x64xf32>
    %cst_107 = arith.constant 0.000000e+00 : f32
    %277 = vector.broadcast %cst_107 : f32 to vector<16x64xf32>
    %278 = arith.maximumf %276, %277 : vector<16x64xf32>
    %c0_108 = arith.constant 0 : index
    %c0_109 = arith.constant 0 : index
    %c0_110 = arith.constant 0 : index
    %279 = vector.load %arg4[%c0_108, %c0_109, %c0_110] : memref<3x64x32xf32, #tpu.memory_space<vmem>>, vector<1x64x32xf32>
    %280 = vector.shape_cast %279 : vector<1x64x32xf32> to vector<64x32xf32>
    %cst_111 = arith.constant dense<0.000000e+00> : vector<16x32xf32>
    %281 = tpu.matmul %278, %280, %cst_111 {dimension_numbers = #tpu.dot_dimension_numbers<[1], [0], [0], [1], [0, 0, 1, 1], [], []>} : vector<16x64xf32>, vector<64x32xf32>, vector<16x32xf32> -> vector<16x32xf32>
    %282 = vector.extract_strided_slice %136 {offsets = [9, 0], sizes = [1, 32], strides = [1, 1]} : vector<16x64xf32> to vector<1x32xf32>
    %283 = vector.broadcast %282 : vector<1x32xf32> to vector<16x32xf32>
    %284 = arith.addf %281, %283 : vector<16x32xf32>
    %285 = arith.addf %270, %284 : vector<16x32xf32>
    %286 = vector.extract_strided_slice %136 {offsets = [14, 0], sizes = [1, 32], strides = [1, 1]} : vector<16x64xf32> to vector<1x32xf32>
    %287 = vector.extract_strided_slice %136 {offsets = [15, 0], sizes = [1, 32], strides = [1, 1]} : vector<16x64xf32> to vector<1x32xf32>
    %cst_112 = arith.constant dense<0.000000e+00> : vector<16xf32>
    %288 = vector.multi_reduction <add>, %285, %cst_112 [1] : vector<16x32xf32> to vector<16xf32>
    %289 = vector.shape_cast %288 : vector<16xf32> to vector<16x1xf32>
    %cst_113 = arith.constant 3.200000e+01 : f32
    %290 = vector.broadcast %cst_113 : f32 to vector<16x1xf32>
    %291 = arith.divf %289, %290 : vector<16x1xf32>
    %292 = vector.broadcast %291 : vector<16x1xf32> to vector<16x32xf32>
    %293 = arith.subf %285, %292 : vector<16x32xf32>
    %294 = arith.mulf %293, %293 : vector<16x32xf32>
    %cst_114 = arith.constant dense<0.000000e+00> : vector<16xf32>
    %295 = vector.multi_reduction <add>, %294, %cst_114 [1] : vector<16x32xf32> to vector<16xf32>
    %296 = vector.shape_cast %295 : vector<16xf32> to vector<16x1xf32>
    %cst_115 = arith.constant 3.200000e+01 : f32
    %297 = vector.broadcast %cst_115 : f32 to vector<16x1xf32>
    %298 = arith.divf %296, %297 : vector<16x1xf32>
    %299 = vector.broadcast %291 : vector<16x1xf32> to vector<16x32xf32>
    %300 = arith.subf %285, %299 : vector<16x32xf32>
    %cst_116 = arith.constant 9.99999974E-6 : f32
    %301 = vector.broadcast %cst_116 : f32 to vector<16x1xf32>
    %302 = arith.addf %298, %301 : vector<16x1xf32>
    %303 = math.rsqrt %302 : vector<16x1xf32>
    %304 = vector.broadcast %303 : vector<16x1xf32> to vector<16x32xf32>
    %305 = arith.mulf %300, %304 : vector<16x32xf32>
    %306 = vector.broadcast %286 : vector<1x32xf32> to vector<16x32xf32>
    %307 = arith.mulf %305, %306 : vector<16x32xf32>
    %308 = vector.broadcast %287 : vector<1x32xf32> to vector<16x32xf32>
    %309 = arith.addf %307, %308 : vector<16x32xf32>
    %c1_117 = arith.constant 1 : index
    %c0_118 = arith.constant 0 : index
    %c0_119 = arith.constant 0 : index
    %310 = vector.load %arg5[%c1_117, %c0_118, %c0_119] : memref<3x16x64xf32, #tpu.memory_space<vmem>>, vector<1x16x64xf32>
    %311 = vector.shape_cast %310 : vector<1x16x64xf32> to vector<16x64xf32>
    %c8 = arith.constant 8 : index
    %c0_120 = arith.constant 0 : index
    %c0_121 = arith.constant 0 : index
    %312 = vector.load %arg2[%c8, %c0_120, %c0_121] : memref<24x32x32xf32, #tpu.memory_space<vmem>>, vector<1x32x32xf32>
    %313 = vector.shape_cast %312 : vector<1x32x32xf32> to vector<32x32xf32>
    %cst_122 = arith.constant dense<0.000000e+00> : vector<16x32xf32>
    %314 = tpu.matmul %309, %313, %cst_122 {dimension_numbers = #tpu.dot_dimension_numbers<[1], [0], [0], [1], [0, 0, 1, 1], [], []>} : vector<16x32xf32>, vector<32x32xf32>, vector<16x32xf32> -> vector<16x32xf32>
    %315 = vector.extract_strided_slice %311 {offsets = [0, 0], sizes = [1, 32], strides = [1, 1]} : vector<16x64xf32> to vector<1x32xf32>
    %316 = vector.broadcast %315 : vector<1x32xf32> to vector<16x32xf32>
    %317 = arith.addf %314, %316 : vector<16x32xf32>
    %c9 = arith.constant 9 : index
    %c0_123 = arith.constant 0 : index
    %c0_124 = arith.constant 0 : index
    %318 = vector.load %arg2[%c9, %c0_123, %c0_124] : memref<24x32x32xf32, #tpu.memory_space<vmem>>, vector<1x32x32xf32>
    %319 = vector.shape_cast %318 : vector<1x32x32xf32> to vector<32x32xf32>
    %cst_125 = arith.constant dense<0.000000e+00> : vector<16x32xf32>
    %320 = tpu.matmul %309, %319, %cst_125 {dimension_numbers = #tpu.dot_dimension_numbers<[1], [0], [0], [1], [0, 0, 1, 1], [], []>} : vector<16x32xf32>, vector<32x32xf32>, vector<16x32xf32> -> vector<16x32xf32>
    %321 = vector.extract_strided_slice %311 {offsets = [1, 0], sizes = [1, 32], strides = [1, 1]} : vector<16x64xf32> to vector<1x32xf32>
    %322 = vector.broadcast %321 : vector<1x32xf32> to vector<16x32xf32>
    %323 = arith.addf %320, %322 : vector<16x32xf32>
    %c10 = arith.constant 10 : index
    %c0_126 = arith.constant 0 : index
    %c0_127 = arith.constant 0 : index
    %324 = vector.load %arg2[%c10, %c0_126, %c0_127] : memref<24x32x32xf32, #tpu.memory_space<vmem>>, vector<1x32x32xf32>
    %325 = vector.shape_cast %324 : vector<1x32x32xf32> to vector<32x32xf32>
    %cst_128 = arith.constant dense<0.000000e+00> : vector<16x32xf32>
    %326 = tpu.matmul %309, %325, %cst_128 {dimension_numbers = #tpu.dot_dimension_numbers<[1], [0], [0], [1], [0, 0, 1, 1], [], []>} : vector<16x32xf32>, vector<32x32xf32>, vector<16x32xf32> -> vector<16x32xf32>
    %327 = vector.extract_strided_slice %311 {offsets = [2, 0], sizes = [1, 32], strides = [1, 1]} : vector<16x64xf32> to vector<1x32xf32>
    %328 = vector.broadcast %327 : vector<1x32xf32> to vector<16x32xf32>
    %329 = arith.addf %326, %328 : vector<16x32xf32>
    %c11 = arith.constant 11 : index
    %c0_129 = arith.constant 0 : index
    %c0_130 = arith.constant 0 : index
    %330 = vector.load %arg2[%c11, %c0_129, %c0_130] : memref<24x32x32xf32, #tpu.memory_space<vmem>>, vector<1x32x32xf32>
    %331 = vector.shape_cast %330 : vector<1x32x32xf32> to vector<32x32xf32>
    %332 = vector.extract_strided_slice %311 {offsets = [3, 0], sizes = [1, 32], strides = [1, 1]} : vector<16x64xf32> to vector<1x32xf32>
    %333 = tpu.transpose %323, [1, 0] : vector<16x32xf32> -> vector<32x16xf32>
    %334 = tpu.concatenate %333, %333, %333, %333 in 1 : vector<32x16xf32>, vector<32x16xf32>, vector<32x16xf32>, vector<32x16xf32> -> vector<32x64xf32>
    %335 = arith.mulf %334, %71 : vector<32x64xf32>
    %336 = tpu.concatenate %329, %329, %329, %329 in 0 : vector<16x32xf32>, vector<16x32xf32>, vector<16x32xf32>, vector<16x32xf32> -> vector<64x32xf32>
    %337 = arith.mulf %336, %37 : vector<64x32xf32>
    %cst_131 = arith.constant 0.353553385 : f32
    %338 = vector.broadcast %cst_131 : f32 to vector<16x32xf32>
    %339 = arith.mulf %317, %338 : vector<16x32xf32>
    %cst_132 = arith.constant dense<0.000000e+00> : vector<16x64xf32>
    %340 = tpu.matmul %339, %335, %cst_132 {dimension_numbers = #tpu.dot_dimension_numbers<[1], [0], [0], [1], [0, 0, 1, 1], [], []>} : vector<16x32xf32>, vector<32x64xf32>, vector<16x64xf32> -> vector<16x64xf32>
    %341 = arith.addf %340, %133 : vector<16x64xf32>
    %342 = math.exp %341 : vector<16x64xf32>
    %cst_133 = arith.constant dense<0.000000e+00> : vector<16x64xf32>
    %343 = tpu.matmul %342, %105, %cst_133 {dimension_numbers = #tpu.dot_dimension_numbers<[1], [0], [0], [1], [0, 0, 1, 1], [], []>} : vector<16x64xf32>, vector<64x64xf32>, vector<16x64xf32> -> vector<16x64xf32>
    %344 = tpu.reciprocal %343 {approx = true} : vector<16x64xf32> -> vector<16x64xf32>
    %345 = arith.mulf %343, %344 : vector<16x64xf32>
    %cst_134 = arith.constant 2.000000e+00 : f32
    %346 = vector.broadcast %cst_134 : f32 to vector<16x64xf32>
    %347 = arith.subf %346, %345 : vector<16x64xf32>
    %348 = arith.mulf %344, %347 : vector<16x64xf32>
    %349 = arith.mulf %342, %348 : vector<16x64xf32>
    %cst_135 = arith.constant dense<0.000000e+00> : vector<16x32xf32>
    %350 = tpu.matmul %349, %337, %cst_135 {dimension_numbers = #tpu.dot_dimension_numbers<[1], [0], [0], [1], [0, 0, 1, 1], [], []>} : vector<16x64xf32>, vector<64x32xf32>, vector<16x32xf32> -> vector<16x32xf32>
    %cst_136 = arith.constant dense<0.000000e+00> : vector<16x32xf32>
    %351 = tpu.matmul %350, %331, %cst_136 {dimension_numbers = #tpu.dot_dimension_numbers<[1], [0], [0], [1], [0, 0, 1, 1], [], []>} : vector<16x32xf32>, vector<32x32xf32>, vector<16x32xf32> -> vector<16x32xf32>
    %352 = vector.broadcast %332 : vector<1x32xf32> to vector<16x32xf32>
    %353 = arith.addf %351, %352 : vector<16x32xf32>
    %354 = arith.addf %309, %353 : vector<16x32xf32>
    %355 = vector.extract_strided_slice %311 {offsets = [10, 0], sizes = [1, 32], strides = [1, 1]} : vector<16x64xf32> to vector<1x32xf32>
    %356 = vector.extract_strided_slice %311 {offsets = [11, 0], sizes = [1, 32], strides = [1, 1]} : vector<16x64xf32> to vector<1x32xf32>
    %cst_137 = arith.constant dense<0.000000e+00> : vector<16xf32>
    %357 = vector.multi_reduction <add>, %354, %cst_137 [1] : vector<16x32xf32> to vector<16xf32>
    %358 = vector.shape_cast %357 : vector<16xf32> to vector<16x1xf32>
    %cst_138 = arith.constant 3.200000e+01 : f32
    %359 = vector.broadcast %cst_138 : f32 to vector<16x1xf32>
    %360 = arith.divf %358, %359 : vector<16x1xf32>
    %361 = vector.broadcast %360 : vector<16x1xf32> to vector<16x32xf32>
    %362 = arith.subf %354, %361 : vector<16x32xf32>
    %363 = arith.mulf %362, %362 : vector<16x32xf32>
    %cst_139 = arith.constant dense<0.000000e+00> : vector<16xf32>
    %364 = vector.multi_reduction <add>, %363, %cst_139 [1] : vector<16x32xf32> to vector<16xf32>
    %365 = vector.shape_cast %364 : vector<16xf32> to vector<16x1xf32>
    %cst_140 = arith.constant 3.200000e+01 : f32
    %366 = vector.broadcast %cst_140 : f32 to vector<16x1xf32>
    %367 = arith.divf %365, %366 : vector<16x1xf32>
    %368 = vector.broadcast %360 : vector<16x1xf32> to vector<16x32xf32>
    %369 = arith.subf %354, %368 : vector<16x32xf32>
    %cst_141 = arith.constant 9.99999974E-6 : f32
    %370 = vector.broadcast %cst_141 : f32 to vector<16x1xf32>
    %371 = arith.addf %367, %370 : vector<16x1xf32>
    %372 = math.rsqrt %371 : vector<16x1xf32>
    %373 = vector.broadcast %372 : vector<16x1xf32> to vector<16x32xf32>
    %374 = arith.mulf %369, %373 : vector<16x32xf32>
    %375 = vector.broadcast %355 : vector<1x32xf32> to vector<16x32xf32>
    %376 = arith.mulf %374, %375 : vector<16x32xf32>
    %377 = vector.broadcast %356 : vector<1x32xf32> to vector<16x32xf32>
    %378 = arith.addf %376, %377 : vector<16x32xf32>
    %c12 = arith.constant 12 : index
    %c0_142 = arith.constant 0 : index
    %c0_143 = arith.constant 0 : index
    %379 = vector.load %arg2[%c12, %c0_142, %c0_143] : memref<24x32x32xf32, #tpu.memory_space<vmem>>, vector<1x32x32xf32>
    %380 = vector.shape_cast %379 : vector<1x32x32xf32> to vector<32x32xf32>
    %cst_144 = arith.constant dense<0.000000e+00> : vector<16x32xf32>
    %381 = tpu.matmul %378, %380, %cst_144 {dimension_numbers = #tpu.dot_dimension_numbers<[1], [0], [0], [1], [0, 0, 1, 1], [], []>} : vector<16x32xf32>, vector<32x32xf32>, vector<16x32xf32> -> vector<16x32xf32>
    %382 = vector.extract_strided_slice %311 {offsets = [4, 0], sizes = [1, 32], strides = [1, 1]} : vector<16x64xf32> to vector<1x32xf32>
    %383 = vector.broadcast %382 : vector<1x32xf32> to vector<16x32xf32>
    %384 = arith.addf %381, %383 : vector<16x32xf32>
    %c13 = arith.constant 13 : index
    %c0_145 = arith.constant 0 : index
    %c0_146 = arith.constant 0 : index
    %385 = vector.load %arg2[%c13, %c0_145, %c0_146] : memref<24x32x32xf32, #tpu.memory_space<vmem>>, vector<1x32x32xf32>
    %386 = vector.shape_cast %385 : vector<1x32x32xf32> to vector<32x32xf32>
    %cst_147 = arith.constant dense<0.000000e+00> : vector<16x32xf32>
    %387 = tpu.matmul %3, %386, %cst_147 {dimension_numbers = #tpu.dot_dimension_numbers<[1], [0], [0], [1], [0, 0, 1, 1], [], []>} : vector<16x32xf32>, vector<32x32xf32>, vector<16x32xf32> -> vector<16x32xf32>
    %388 = vector.extract_strided_slice %311 {offsets = [5, 0], sizes = [1, 32], strides = [1, 1]} : vector<16x64xf32> to vector<1x32xf32>
    %389 = vector.broadcast %388 : vector<1x32xf32> to vector<16x32xf32>
    %390 = arith.addf %387, %389 : vector<16x32xf32>
    %c14 = arith.constant 14 : index
    %c0_148 = arith.constant 0 : index
    %c0_149 = arith.constant 0 : index
    %391 = vector.load %arg2[%c14, %c0_148, %c0_149] : memref<24x32x32xf32, #tpu.memory_space<vmem>>, vector<1x32x32xf32>
    %392 = vector.shape_cast %391 : vector<1x32x32xf32> to vector<32x32xf32>
    %cst_150 = arith.constant dense<0.000000e+00> : vector<16x32xf32>
    %393 = tpu.matmul %3, %392, %cst_150 {dimension_numbers = #tpu.dot_dimension_numbers<[1], [0], [0], [1], [0, 0, 1, 1], [], []>} : vector<16x32xf32>, vector<32x32xf32>, vector<16x32xf32> -> vector<16x32xf32>
    %394 = vector.extract_strided_slice %311 {offsets = [6, 0], sizes = [1, 32], strides = [1, 1]} : vector<16x64xf32> to vector<1x32xf32>
    %395 = vector.broadcast %394 : vector<1x32xf32> to vector<16x32xf32>
    %396 = arith.addf %393, %395 : vector<16x32xf32>
    %c15 = arith.constant 15 : index
    %c0_151 = arith.constant 0 : index
    %c0_152 = arith.constant 0 : index
    %397 = vector.load %arg2[%c15, %c0_151, %c0_152] : memref<24x32x32xf32, #tpu.memory_space<vmem>>, vector<1x32x32xf32>
    %398 = vector.shape_cast %397 : vector<1x32x32xf32> to vector<32x32xf32>
    %399 = vector.extract_strided_slice %311 {offsets = [7, 0], sizes = [1, 32], strides = [1, 1]} : vector<16x64xf32> to vector<1x32xf32>
    %400 = tpu.transpose %390, [1, 0] : vector<16x32xf32> -> vector<32x16xf32>
    %401 = tpu.concatenate %400, %400, %400, %400 in 1 : vector<32x16xf32>, vector<32x16xf32>, vector<32x16xf32>, vector<32x16xf32> -> vector<32x64xf32>
    %402 = arith.mulf %401, %71 : vector<32x64xf32>
    %403 = tpu.concatenate %396, %396, %396, %396 in 0 : vector<16x32xf32>, vector<16x32xf32>, vector<16x32xf32>, vector<16x32xf32> -> vector<64x32xf32>
    %404 = arith.mulf %403, %37 : vector<64x32xf32>
    %cst_153 = arith.constant 0.353553385 : f32
    %405 = vector.broadcast %cst_153 : f32 to vector<16x32xf32>
    %406 = arith.mulf %384, %405 : vector<16x32xf32>
    %cst_154 = arith.constant dense<0.000000e+00> : vector<16x64xf32>
    %407 = tpu.matmul %406, %402, %cst_154 {dimension_numbers = #tpu.dot_dimension_numbers<[1], [0], [0], [1], [0, 0, 1, 1], [], []>} : vector<16x32xf32>, vector<32x64xf32>, vector<16x64xf32> -> vector<16x64xf32>
    %408 = arith.addf %407, %134 : vector<16x64xf32>
    %409 = math.exp %408 : vector<16x64xf32>
    %cst_155 = arith.constant dense<0.000000e+00> : vector<16x64xf32>
    %410 = tpu.matmul %409, %105, %cst_155 {dimension_numbers = #tpu.dot_dimension_numbers<[1], [0], [0], [1], [0, 0, 1, 1], [], []>} : vector<16x64xf32>, vector<64x64xf32>, vector<16x64xf32> -> vector<16x64xf32>
    %411 = tpu.reciprocal %410 {approx = true} : vector<16x64xf32> -> vector<16x64xf32>
    %412 = arith.mulf %410, %411 : vector<16x64xf32>
    %cst_156 = arith.constant 2.000000e+00 : f32
    %413 = vector.broadcast %cst_156 : f32 to vector<16x64xf32>
    %414 = arith.subf %413, %412 : vector<16x64xf32>
    %415 = arith.mulf %411, %414 : vector<16x64xf32>
    %416 = arith.mulf %409, %415 : vector<16x64xf32>
    %cst_157 = arith.constant dense<0.000000e+00> : vector<16x32xf32>
    %417 = tpu.matmul %416, %404, %cst_157 {dimension_numbers = #tpu.dot_dimension_numbers<[1], [0], [0], [1], [0, 0, 1, 1], [], []>} : vector<16x64xf32>, vector<64x32xf32>, vector<16x32xf32> -> vector<16x32xf32>
    %cst_158 = arith.constant dense<0.000000e+00> : vector<16x32xf32>
    %418 = tpu.matmul %417, %398, %cst_158 {dimension_numbers = #tpu.dot_dimension_numbers<[1], [0], [0], [1], [0, 0, 1, 1], [], []>} : vector<16x32xf32>, vector<32x32xf32>, vector<16x32xf32> -> vector<16x32xf32>
    %419 = vector.broadcast %399 : vector<1x32xf32> to vector<16x32xf32>
    %420 = arith.addf %418, %419 : vector<16x32xf32>
    %421 = arith.addf %378, %420 : vector<16x32xf32>
    %422 = vector.extract_strided_slice %311 {offsets = [12, 0], sizes = [1, 32], strides = [1, 1]} : vector<16x64xf32> to vector<1x32xf32>
    %423 = vector.extract_strided_slice %311 {offsets = [13, 0], sizes = [1, 32], strides = [1, 1]} : vector<16x64xf32> to vector<1x32xf32>
    %cst_159 = arith.constant dense<0.000000e+00> : vector<16xf32>
    %424 = vector.multi_reduction <add>, %421, %cst_159 [1] : vector<16x32xf32> to vector<16xf32>
    %425 = vector.shape_cast %424 : vector<16xf32> to vector<16x1xf32>
    %cst_160 = arith.constant 3.200000e+01 : f32
    %426 = vector.broadcast %cst_160 : f32 to vector<16x1xf32>
    %427 = arith.divf %425, %426 : vector<16x1xf32>
    %428 = vector.broadcast %427 : vector<16x1xf32> to vector<16x32xf32>
    %429 = arith.subf %421, %428 : vector<16x32xf32>
    %430 = arith.mulf %429, %429 : vector<16x32xf32>
    %cst_161 = arith.constant dense<0.000000e+00> : vector<16xf32>
    %431 = vector.multi_reduction <add>, %430, %cst_161 [1] : vector<16x32xf32> to vector<16xf32>
    %432 = vector.shape_cast %431 : vector<16xf32> to vector<16x1xf32>
    %cst_162 = arith.constant 3.200000e+01 : f32
    %433 = vector.broadcast %cst_162 : f32 to vector<16x1xf32>
    %434 = arith.divf %432, %433 : vector<16x1xf32>
    %435 = vector.broadcast %427 : vector<16x1xf32> to vector<16x32xf32>
    %436 = arith.subf %421, %435 : vector<16x32xf32>
    %cst_163 = arith.constant 9.99999974E-6 : f32
    %437 = vector.broadcast %cst_163 : f32 to vector<16x1xf32>
    %438 = arith.addf %434, %437 : vector<16x1xf32>
    %439 = math.rsqrt %438 : vector<16x1xf32>
    %440 = vector.broadcast %439 : vector<16x1xf32> to vector<16x32xf32>
    %441 = arith.mulf %436, %440 : vector<16x32xf32>
    %442 = vector.broadcast %422 : vector<1x32xf32> to vector<16x32xf32>
    %443 = arith.mulf %441, %442 : vector<16x32xf32>
    %444 = vector.broadcast %423 : vector<1x32xf32> to vector<16x32xf32>
    %445 = arith.addf %443, %444 : vector<16x32xf32>
    %c1_164 = arith.constant 1 : index
    %c0_165 = arith.constant 0 : index
    %c0_166 = arith.constant 0 : index
    %446 = vector.load %arg3[%c1_164, %c0_165, %c0_166] : memref<3x32x64xf32, #tpu.memory_space<vmem>>, vector<1x32x64xf32>
    %447 = vector.shape_cast %446 : vector<1x32x64xf32> to vector<32x64xf32>
    %cst_167 = arith.constant dense<0.000000e+00> : vector<16x64xf32>
    %448 = tpu.matmul %445, %447, %cst_167 {dimension_numbers = #tpu.dot_dimension_numbers<[1], [0], [0], [1], [0, 0, 1, 1], [], []>} : vector<16x32xf32>, vector<32x64xf32>, vector<16x64xf32> -> vector<16x64xf32>
    %449 = vector.extract_strided_slice %311 {offsets = [8, 0], sizes = [1, 64], strides = [1, 1]} : vector<16x64xf32> to vector<1x64xf32>
    %450 = vector.broadcast %449 : vector<1x64xf32> to vector<16x64xf32>
    %451 = arith.addf %448, %450 : vector<16x64xf32>
    %cst_168 = arith.constant 0.000000e+00 : f32
    %452 = vector.broadcast %cst_168 : f32 to vector<16x64xf32>
    %453 = arith.maximumf %451, %452 : vector<16x64xf32>
    %c1_169 = arith.constant 1 : index
    %c0_170 = arith.constant 0 : index
    %c0_171 = arith.constant 0 : index
    %454 = vector.load %arg4[%c1_169, %c0_170, %c0_171] : memref<3x64x32xf32, #tpu.memory_space<vmem>>, vector<1x64x32xf32>
    %455 = vector.shape_cast %454 : vector<1x64x32xf32> to vector<64x32xf32>
    %cst_172 = arith.constant dense<0.000000e+00> : vector<16x32xf32>
    %456 = tpu.matmul %453, %455, %cst_172 {dimension_numbers = #tpu.dot_dimension_numbers<[1], [0], [0], [1], [0, 0, 1, 1], [], []>} : vector<16x64xf32>, vector<64x32xf32>, vector<16x32xf32> -> vector<16x32xf32>
    %457 = vector.extract_strided_slice %311 {offsets = [9, 0], sizes = [1, 32], strides = [1, 1]} : vector<16x64xf32> to vector<1x32xf32>
    %458 = vector.broadcast %457 : vector<1x32xf32> to vector<16x32xf32>
    %459 = arith.addf %456, %458 : vector<16x32xf32>
    %460 = arith.addf %445, %459 : vector<16x32xf32>
    %461 = vector.extract_strided_slice %311 {offsets = [14, 0], sizes = [1, 32], strides = [1, 1]} : vector<16x64xf32> to vector<1x32xf32>
    %462 = vector.extract_strided_slice %311 {offsets = [15, 0], sizes = [1, 32], strides = [1, 1]} : vector<16x64xf32> to vector<1x32xf32>
    %cst_173 = arith.constant dense<0.000000e+00> : vector<16xf32>
    %463 = vector.multi_reduction <add>, %460, %cst_173 [1] : vector<16x32xf32> to vector<16xf32>
    %464 = vector.shape_cast %463 : vector<16xf32> to vector<16x1xf32>
    %cst_174 = arith.constant 3.200000e+01 : f32
    %465 = vector.broadcast %cst_174 : f32 to vector<16x1xf32>
    %466 = arith.divf %464, %465 : vector<16x1xf32>
    %467 = vector.broadcast %466 : vector<16x1xf32> to vector<16x32xf32>
    %468 = arith.subf %460, %467 : vector<16x32xf32>
    %469 = arith.mulf %468, %468 : vector<16x32xf32>
    %cst_175 = arith.constant dense<0.000000e+00> : vector<16xf32>
    %470 = vector.multi_reduction <add>, %469, %cst_175 [1] : vector<16x32xf32> to vector<16xf32>
    %471 = vector.shape_cast %470 : vector<16xf32> to vector<16x1xf32>
    %cst_176 = arith.constant 3.200000e+01 : f32
    %472 = vector.broadcast %cst_176 : f32 to vector<16x1xf32>
    %473 = arith.divf %471, %472 : vector<16x1xf32>
    %474 = vector.broadcast %466 : vector<16x1xf32> to vector<16x32xf32>
    %475 = arith.subf %460, %474 : vector<16x32xf32>
    %cst_177 = arith.constant 9.99999974E-6 : f32
    %476 = vector.broadcast %cst_177 : f32 to vector<16x1xf32>
    %477 = arith.addf %473, %476 : vector<16x1xf32>
    %478 = math.rsqrt %477 : vector<16x1xf32>
    %479 = vector.broadcast %478 : vector<16x1xf32> to vector<16x32xf32>
    %480 = arith.mulf %475, %479 : vector<16x32xf32>
    %481 = vector.broadcast %461 : vector<1x32xf32> to vector<16x32xf32>
    %482 = arith.mulf %480, %481 : vector<16x32xf32>
    %483 = vector.broadcast %462 : vector<1x32xf32> to vector<16x32xf32>
    %484 = arith.addf %482, %483 : vector<16x32xf32>
    %c2_178 = arith.constant 2 : index
    %c0_179 = arith.constant 0 : index
    %c0_180 = arith.constant 0 : index
    %485 = vector.load %arg5[%c2_178, %c0_179, %c0_180] : memref<3x16x64xf32, #tpu.memory_space<vmem>>, vector<1x16x64xf32>
    %486 = vector.shape_cast %485 : vector<1x16x64xf32> to vector<16x64xf32>
    %c16 = arith.constant 16 : index
    %c0_181 = arith.constant 0 : index
    %c0_182 = arith.constant 0 : index
    %487 = vector.load %arg2[%c16, %c0_181, %c0_182] : memref<24x32x32xf32, #tpu.memory_space<vmem>>, vector<1x32x32xf32>
    %488 = vector.shape_cast %487 : vector<1x32x32xf32> to vector<32x32xf32>
    %cst_183 = arith.constant dense<0.000000e+00> : vector<16x32xf32>
    %489 = tpu.matmul %484, %488, %cst_183 {dimension_numbers = #tpu.dot_dimension_numbers<[1], [0], [0], [1], [0, 0, 1, 1], [], []>} : vector<16x32xf32>, vector<32x32xf32>, vector<16x32xf32> -> vector<16x32xf32>
    %490 = vector.extract_strided_slice %486 {offsets = [0, 0], sizes = [1, 32], strides = [1, 1]} : vector<16x64xf32> to vector<1x32xf32>
    %491 = vector.broadcast %490 : vector<1x32xf32> to vector<16x32xf32>
    %492 = arith.addf %489, %491 : vector<16x32xf32>
    %c17 = arith.constant 17 : index
    %c0_184 = arith.constant 0 : index
    %c0_185 = arith.constant 0 : index
    %493 = vector.load %arg2[%c17, %c0_184, %c0_185] : memref<24x32x32xf32, #tpu.memory_space<vmem>>, vector<1x32x32xf32>
    %494 = vector.shape_cast %493 : vector<1x32x32xf32> to vector<32x32xf32>
    %cst_186 = arith.constant dense<0.000000e+00> : vector<16x32xf32>
    %495 = tpu.matmul %484, %494, %cst_186 {dimension_numbers = #tpu.dot_dimension_numbers<[1], [0], [0], [1], [0, 0, 1, 1], [], []>} : vector<16x32xf32>, vector<32x32xf32>, vector<16x32xf32> -> vector<16x32xf32>
    %496 = vector.extract_strided_slice %486 {offsets = [1, 0], sizes = [1, 32], strides = [1, 1]} : vector<16x64xf32> to vector<1x32xf32>
    %497 = vector.broadcast %496 : vector<1x32xf32> to vector<16x32xf32>
    %498 = arith.addf %495, %497 : vector<16x32xf32>
    %c18 = arith.constant 18 : index
    %c0_187 = arith.constant 0 : index
    %c0_188 = arith.constant 0 : index
    %499 = vector.load %arg2[%c18, %c0_187, %c0_188] : memref<24x32x32xf32, #tpu.memory_space<vmem>>, vector<1x32x32xf32>
    %500 = vector.shape_cast %499 : vector<1x32x32xf32> to vector<32x32xf32>
    %cst_189 = arith.constant dense<0.000000e+00> : vector<16x32xf32>
    %501 = tpu.matmul %484, %500, %cst_189 {dimension_numbers = #tpu.dot_dimension_numbers<[1], [0], [0], [1], [0, 0, 1, 1], [], []>} : vector<16x32xf32>, vector<32x32xf32>, vector<16x32xf32> -> vector<16x32xf32>
    %502 = vector.extract_strided_slice %486 {offsets = [2, 0], sizes = [1, 32], strides = [1, 1]} : vector<16x64xf32> to vector<1x32xf32>
    %503 = vector.broadcast %502 : vector<1x32xf32> to vector<16x32xf32>
    %504 = arith.addf %501, %503 : vector<16x32xf32>
    %c19 = arith.constant 19 : index
    %c0_190 = arith.constant 0 : index
    %c0_191 = arith.constant 0 : index
    %505 = vector.load %arg2[%c19, %c0_190, %c0_191] : memref<24x32x32xf32, #tpu.memory_space<vmem>>, vector<1x32x32xf32>
    %506 = vector.shape_cast %505 : vector<1x32x32xf32> to vector<32x32xf32>
    %507 = vector.extract_strided_slice %486 {offsets = [3, 0], sizes = [1, 32], strides = [1, 1]} : vector<16x64xf32> to vector<1x32xf32>
    %508 = tpu.transpose %498, [1, 0] : vector<16x32xf32> -> vector<32x16xf32>
    %509 = tpu.concatenate %508, %508, %508, %508 in 1 : vector<32x16xf32>, vector<32x16xf32>, vector<32x16xf32>, vector<32x16xf32> -> vector<32x64xf32>
    %510 = arith.mulf %509, %71 : vector<32x64xf32>
    %511 = tpu.concatenate %504, %504, %504, %504 in 0 : vector<16x32xf32>, vector<16x32xf32>, vector<16x32xf32>, vector<16x32xf32> -> vector<64x32xf32>
    %512 = arith.mulf %511, %37 : vector<64x32xf32>
    %cst_192 = arith.constant 0.353553385 : f32
    %513 = vector.broadcast %cst_192 : f32 to vector<16x32xf32>
    %514 = arith.mulf %492, %513 : vector<16x32xf32>
    %cst_193 = arith.constant dense<0.000000e+00> : vector<16x64xf32>
    %515 = tpu.matmul %514, %510, %cst_193 {dimension_numbers = #tpu.dot_dimension_numbers<[1], [0], [0], [1], [0, 0, 1, 1], [], []>} : vector<16x32xf32>, vector<32x64xf32>, vector<16x64xf32> -> vector<16x64xf32>
    %516 = arith.addf %515, %133 : vector<16x64xf32>
    %517 = math.exp %516 : vector<16x64xf32>
    %cst_194 = arith.constant dense<0.000000e+00> : vector<16x64xf32>
    %518 = tpu.matmul %517, %105, %cst_194 {dimension_numbers = #tpu.dot_dimension_numbers<[1], [0], [0], [1], [0, 0, 1, 1], [], []>} : vector<16x64xf32>, vector<64x64xf32>, vector<16x64xf32> -> vector<16x64xf32>
    %519 = tpu.reciprocal %518 {approx = true} : vector<16x64xf32> -> vector<16x64xf32>
    %520 = arith.mulf %518, %519 : vector<16x64xf32>
    %cst_195 = arith.constant 2.000000e+00 : f32
    %521 = vector.broadcast %cst_195 : f32 to vector<16x64xf32>
    %522 = arith.subf %521, %520 : vector<16x64xf32>
    %523 = arith.mulf %519, %522 : vector<16x64xf32>
    %524 = arith.mulf %517, %523 : vector<16x64xf32>
    %cst_196 = arith.constant dense<0.000000e+00> : vector<16x32xf32>
    %525 = tpu.matmul %524, %512, %cst_196 {dimension_numbers = #tpu.dot_dimension_numbers<[1], [0], [0], [1], [0, 0, 1, 1], [], []>} : vector<16x64xf32>, vector<64x32xf32>, vector<16x32xf32> -> vector<16x32xf32>
    %cst_197 = arith.constant dense<0.000000e+00> : vector<16x32xf32>
    %526 = tpu.matmul %525, %506, %cst_197 {dimension_numbers = #tpu.dot_dimension_numbers<[1], [0], [0], [1], [0, 0, 1, 1], [], []>} : vector<16x32xf32>, vector<32x32xf32>, vector<16x32xf32> -> vector<16x32xf32>
    %527 = vector.broadcast %507 : vector<1x32xf32> to vector<16x32xf32>
    %528 = arith.addf %526, %527 : vector<16x32xf32>
    %529 = arith.addf %484, %528 : vector<16x32xf32>
    %530 = vector.extract_strided_slice %486 {offsets = [10, 0], sizes = [1, 32], strides = [1, 1]} : vector<16x64xf32> to vector<1x32xf32>
    %531 = vector.extract_strided_slice %486 {offsets = [11, 0], sizes = [1, 32], strides = [1, 1]} : vector<16x64xf32> to vector<1x32xf32>
    %cst_198 = arith.constant dense<0.000000e+00> : vector<16xf32>
    %532 = vector.multi_reduction <add>, %529, %cst_198 [1] : vector<16x32xf32> to vector<16xf32>
    %533 = vector.shape_cast %532 : vector<16xf32> to vector<16x1xf32>
    %cst_199 = arith.constant 3.200000e+01 : f32
    %534 = vector.broadcast %cst_199 : f32 to vector<16x1xf32>
    %535 = arith.divf %533, %534 : vector<16x1xf32>
    %536 = vector.broadcast %535 : vector<16x1xf32> to vector<16x32xf32>
    %537 = arith.subf %529, %536 : vector<16x32xf32>
    %538 = arith.mulf %537, %537 : vector<16x32xf32>
    %cst_200 = arith.constant dense<0.000000e+00> : vector<16xf32>
    %539 = vector.multi_reduction <add>, %538, %cst_200 [1] : vector<16x32xf32> to vector<16xf32>
    %540 = vector.shape_cast %539 : vector<16xf32> to vector<16x1xf32>
    %cst_201 = arith.constant 3.200000e+01 : f32
    %541 = vector.broadcast %cst_201 : f32 to vector<16x1xf32>
    %542 = arith.divf %540, %541 : vector<16x1xf32>
    %543 = vector.broadcast %535 : vector<16x1xf32> to vector<16x32xf32>
    %544 = arith.subf %529, %543 : vector<16x32xf32>
    %cst_202 = arith.constant 9.99999974E-6 : f32
    %545 = vector.broadcast %cst_202 : f32 to vector<16x1xf32>
    %546 = arith.addf %542, %545 : vector<16x1xf32>
    %547 = math.rsqrt %546 : vector<16x1xf32>
    %548 = vector.broadcast %547 : vector<16x1xf32> to vector<16x32xf32>
    %549 = arith.mulf %544, %548 : vector<16x32xf32>
    %550 = vector.broadcast %530 : vector<1x32xf32> to vector<16x32xf32>
    %551 = arith.mulf %549, %550 : vector<16x32xf32>
    %552 = vector.broadcast %531 : vector<1x32xf32> to vector<16x32xf32>
    %553 = arith.addf %551, %552 : vector<16x32xf32>
    %c20 = arith.constant 20 : index
    %c0_203 = arith.constant 0 : index
    %c0_204 = arith.constant 0 : index
    %554 = vector.load %arg2[%c20, %c0_203, %c0_204] : memref<24x32x32xf32, #tpu.memory_space<vmem>>, vector<1x32x32xf32>
    %555 = vector.shape_cast %554 : vector<1x32x32xf32> to vector<32x32xf32>
    %cst_205 = arith.constant dense<0.000000e+00> : vector<16x32xf32>
    %556 = tpu.matmul %553, %555, %cst_205 {dimension_numbers = #tpu.dot_dimension_numbers<[1], [0], [0], [1], [0, 0, 1, 1], [], []>} : vector<16x32xf32>, vector<32x32xf32>, vector<16x32xf32> -> vector<16x32xf32>
    %557 = vector.extract_strided_slice %486 {offsets = [4, 0], sizes = [1, 32], strides = [1, 1]} : vector<16x64xf32> to vector<1x32xf32>
    %558 = vector.broadcast %557 : vector<1x32xf32> to vector<16x32xf32>
    %559 = arith.addf %556, %558 : vector<16x32xf32>
    %c21 = arith.constant 21 : index
    %c0_206 = arith.constant 0 : index
    %c0_207 = arith.constant 0 : index
    %560 = vector.load %arg2[%c21, %c0_206, %c0_207] : memref<24x32x32xf32, #tpu.memory_space<vmem>>, vector<1x32x32xf32>
    %561 = vector.shape_cast %560 : vector<1x32x32xf32> to vector<32x32xf32>
    %cst_208 = arith.constant dense<0.000000e+00> : vector<16x32xf32>
    %562 = tpu.matmul %3, %561, %cst_208 {dimension_numbers = #tpu.dot_dimension_numbers<[1], [0], [0], [1], [0, 0, 1, 1], [], []>} : vector<16x32xf32>, vector<32x32xf32>, vector<16x32xf32> -> vector<16x32xf32>
    %563 = vector.extract_strided_slice %486 {offsets = [5, 0], sizes = [1, 32], strides = [1, 1]} : vector<16x64xf32> to vector<1x32xf32>
    %564 = vector.broadcast %563 : vector<1x32xf32> to vector<16x32xf32>
    %565 = arith.addf %562, %564 : vector<16x32xf32>
    %c22 = arith.constant 22 : index
    %c0_209 = arith.constant 0 : index
    %c0_210 = arith.constant 0 : index
    %566 = vector.load %arg2[%c22, %c0_209, %c0_210] : memref<24x32x32xf32, #tpu.memory_space<vmem>>, vector<1x32x32xf32>
    %567 = vector.shape_cast %566 : vector<1x32x32xf32> to vector<32x32xf32>
    %cst_211 = arith.constant dense<0.000000e+00> : vector<16x32xf32>
    %568 = tpu.matmul %3, %567, %cst_211 {dimension_numbers = #tpu.dot_dimension_numbers<[1], [0], [0], [1], [0, 0, 1, 1], [], []>} : vector<16x32xf32>, vector<32x32xf32>, vector<16x32xf32> -> vector<16x32xf32>
    %569 = vector.extract_strided_slice %486 {offsets = [6, 0], sizes = [1, 32], strides = [1, 1]} : vector<16x64xf32> to vector<1x32xf32>
    %570 = vector.broadcast %569 : vector<1x32xf32> to vector<16x32xf32>
    %571 = arith.addf %568, %570 : vector<16x32xf32>
    %c23 = arith.constant 23 : index
    %c0_212 = arith.constant 0 : index
    %c0_213 = arith.constant 0 : index
    %572 = vector.load %arg2[%c23, %c0_212, %c0_213] : memref<24x32x32xf32, #tpu.memory_space<vmem>>, vector<1x32x32xf32>
    %573 = vector.shape_cast %572 : vector<1x32x32xf32> to vector<32x32xf32>
    %574 = vector.extract_strided_slice %486 {offsets = [7, 0], sizes = [1, 32], strides = [1, 1]} : vector<16x64xf32> to vector<1x32xf32>
    %575 = tpu.transpose %565, [1, 0] : vector<16x32xf32> -> vector<32x16xf32>
    %576 = tpu.concatenate %575, %575, %575, %575 in 1 : vector<32x16xf32>, vector<32x16xf32>, vector<32x16xf32>, vector<32x16xf32> -> vector<32x64xf32>
    %577 = arith.mulf %576, %71 : vector<32x64xf32>
    %578 = tpu.concatenate %571, %571, %571, %571 in 0 : vector<16x32xf32>, vector<16x32xf32>, vector<16x32xf32>, vector<16x32xf32> -> vector<64x32xf32>
    %579 = arith.mulf %578, %37 : vector<64x32xf32>
    %cst_214 = arith.constant 0.353553385 : f32
    %580 = vector.broadcast %cst_214 : f32 to vector<16x32xf32>
    %581 = arith.mulf %559, %580 : vector<16x32xf32>
    %cst_215 = arith.constant dense<0.000000e+00> : vector<16x64xf32>
    %582 = tpu.matmul %581, %577, %cst_215 {dimension_numbers = #tpu.dot_dimension_numbers<[1], [0], [0], [1], [0, 0, 1, 1], [], []>} : vector<16x32xf32>, vector<32x64xf32>, vector<16x64xf32> -> vector<16x64xf32>
    %583 = arith.addf %582, %134 : vector<16x64xf32>
    %584 = math.exp %583 : vector<16x64xf32>
    %cst_216 = arith.constant dense<0.000000e+00> : vector<16x64xf32>
    %585 = tpu.matmul %584, %105, %cst_216 {dimension_numbers = #tpu.dot_dimension_numbers<[1], [0], [0], [1], [0, 0, 1, 1], [], []>} : vector<16x64xf32>, vector<64x64xf32>, vector<16x64xf32> -> vector<16x64xf32>
    %586 = tpu.reciprocal %585 {approx = true} : vector<16x64xf32> -> vector<16x64xf32>
    %587 = arith.mulf %585, %586 : vector<16x64xf32>
    %cst_217 = arith.constant 2.000000e+00 : f32
    %588 = vector.broadcast %cst_217 : f32 to vector<16x64xf32>
    %589 = arith.subf %588, %587 : vector<16x64xf32>
    %590 = arith.mulf %586, %589 : vector<16x64xf32>
    %591 = arith.mulf %584, %590 : vector<16x64xf32>
    %cst_218 = arith.constant dense<0.000000e+00> : vector<16x32xf32>
    %592 = tpu.matmul %591, %579, %cst_218 {dimension_numbers = #tpu.dot_dimension_numbers<[1], [0], [0], [1], [0, 0, 1, 1], [], []>} : vector<16x64xf32>, vector<64x32xf32>, vector<16x32xf32> -> vector<16x32xf32>
    %cst_219 = arith.constant dense<0.000000e+00> : vector<16x32xf32>
    %593 = tpu.matmul %592, %573, %cst_219 {dimension_numbers = #tpu.dot_dimension_numbers<[1], [0], [0], [1], [0, 0, 1, 1], [], []>} : vector<16x32xf32>, vector<32x32xf32>, vector<16x32xf32> -> vector<16x32xf32>
    %594 = vector.broadcast %574 : vector<1x32xf32> to vector<16x32xf32>
    %595 = arith.addf %593, %594 : vector<16x32xf32>
    %596 = arith.addf %553, %595 : vector<16x32xf32>
    %597 = vector.extract_strided_slice %486 {offsets = [12, 0], sizes = [1, 32], strides = [1, 1]} : vector<16x64xf32> to vector<1x32xf32>
    %598 = vector.extract_strided_slice %486 {offsets = [13, 0], sizes = [1, 32], strides = [1, 1]} : vector<16x64xf32> to vector<1x32xf32>
    %cst_220 = arith.constant dense<0.000000e+00> : vector<16xf32>
    %599 = vector.multi_reduction <add>, %596, %cst_220 [1] : vector<16x32xf32> to vector<16xf32>
    %600 = vector.shape_cast %599 : vector<16xf32> to vector<16x1xf32>
    %cst_221 = arith.constant 3.200000e+01 : f32
    %601 = vector.broadcast %cst_221 : f32 to vector<16x1xf32>
    %602 = arith.divf %600, %601 : vector<16x1xf32>
    %603 = vector.broadcast %602 : vector<16x1xf32> to vector<16x32xf32>
    %604 = arith.subf %596, %603 : vector<16x32xf32>
    %605 = arith.mulf %604, %604 : vector<16x32xf32>
    %cst_222 = arith.constant dense<0.000000e+00> : vector<16xf32>
    %606 = vector.multi_reduction <add>, %605, %cst_222 [1] : vector<16x32xf32> to vector<16xf32>
    %607 = vector.shape_cast %606 : vector<16xf32> to vector<16x1xf32>
    %cst_223 = arith.constant 3.200000e+01 : f32
    %608 = vector.broadcast %cst_223 : f32 to vector<16x1xf32>
    %609 = arith.divf %607, %608 : vector<16x1xf32>
    %610 = vector.broadcast %602 : vector<16x1xf32> to vector<16x32xf32>
    %611 = arith.subf %596, %610 : vector<16x32xf32>
    %cst_224 = arith.constant 9.99999974E-6 : f32
    %612 = vector.broadcast %cst_224 : f32 to vector<16x1xf32>
    %613 = arith.addf %609, %612 : vector<16x1xf32>
    %614 = math.rsqrt %613 : vector<16x1xf32>
    %615 = vector.broadcast %614 : vector<16x1xf32> to vector<16x32xf32>
    %616 = arith.mulf %611, %615 : vector<16x32xf32>
    %617 = vector.broadcast %597 : vector<1x32xf32> to vector<16x32xf32>
    %618 = arith.mulf %616, %617 : vector<16x32xf32>
    %619 = vector.broadcast %598 : vector<1x32xf32> to vector<16x32xf32>
    %620 = arith.addf %618, %619 : vector<16x32xf32>
    %c2_225 = arith.constant 2 : index
    %c0_226 = arith.constant 0 : index
    %c0_227 = arith.constant 0 : index
    %621 = vector.load %arg3[%c2_225, %c0_226, %c0_227] : memref<3x32x64xf32, #tpu.memory_space<vmem>>, vector<1x32x64xf32>
    %622 = vector.shape_cast %621 : vector<1x32x64xf32> to vector<32x64xf32>
    %cst_228 = arith.constant dense<0.000000e+00> : vector<16x64xf32>
    %623 = tpu.matmul %620, %622, %cst_228 {dimension_numbers = #tpu.dot_dimension_numbers<[1], [0], [0], [1], [0, 0, 1, 1], [], []>} : vector<16x32xf32>, vector<32x64xf32>, vector<16x64xf32> -> vector<16x64xf32>
    %624 = vector.extract_strided_slice %486 {offsets = [8, 0], sizes = [1, 64], strides = [1, 1]} : vector<16x64xf32> to vector<1x64xf32>
    %625 = vector.broadcast %624 : vector<1x64xf32> to vector<16x64xf32>
    %626 = arith.addf %623, %625 : vector<16x64xf32>
    %cst_229 = arith.constant 0.000000e+00 : f32
    %627 = vector.broadcast %cst_229 : f32 to vector<16x64xf32>
    %628 = arith.maximumf %626, %627 : vector<16x64xf32>
    %c2_230 = arith.constant 2 : index
    %c0_231 = arith.constant 0 : index
    %c0_232 = arith.constant 0 : index
    %629 = vector.load %arg4[%c2_230, %c0_231, %c0_232] : memref<3x64x32xf32, #tpu.memory_space<vmem>>, vector<1x64x32xf32>
    %630 = vector.shape_cast %629 : vector<1x64x32xf32> to vector<64x32xf32>
    %cst_233 = arith.constant dense<0.000000e+00> : vector<16x32xf32>
    %631 = tpu.matmul %628, %630, %cst_233 {dimension_numbers = #tpu.dot_dimension_numbers<[1], [0], [0], [1], [0, 0, 1, 1], [], []>} : vector<16x64xf32>, vector<64x32xf32>, vector<16x32xf32> -> vector<16x32xf32>
    %632 = vector.extract_strided_slice %486 {offsets = [9, 0], sizes = [1, 32], strides = [1, 1]} : vector<16x64xf32> to vector<1x32xf32>
    %633 = vector.broadcast %632 : vector<1x32xf32> to vector<16x32xf32>
    %634 = arith.addf %631, %633 : vector<16x32xf32>
    %635 = arith.addf %620, %634 : vector<16x32xf32>
    %636 = vector.extract_strided_slice %486 {offsets = [14, 0], sizes = [1, 32], strides = [1, 1]} : vector<16x64xf32> to vector<1x32xf32>
    %637 = vector.extract_strided_slice %486 {offsets = [15, 0], sizes = [1, 32], strides = [1, 1]} : vector<16x64xf32> to vector<1x32xf32>
    %cst_234 = arith.constant dense<0.000000e+00> : vector<16xf32>
    %638 = vector.multi_reduction <add>, %635, %cst_234 [1] : vector<16x32xf32> to vector<16xf32>
    %639 = vector.shape_cast %638 : vector<16xf32> to vector<16x1xf32>
    %cst_235 = arith.constant 3.200000e+01 : f32
    %640 = vector.broadcast %cst_235 : f32 to vector<16x1xf32>
    %641 = arith.divf %639, %640 : vector<16x1xf32>
    %642 = vector.broadcast %641 : vector<16x1xf32> to vector<16x32xf32>
    %643 = arith.subf %635, %642 : vector<16x32xf32>
    %644 = arith.mulf %643, %643 : vector<16x32xf32>
    %cst_236 = arith.constant dense<0.000000e+00> : vector<16xf32>
    %645 = vector.multi_reduction <add>, %644, %cst_236 [1] : vector<16x32xf32> to vector<16xf32>
    %646 = vector.shape_cast %645 : vector<16xf32> to vector<16x1xf32>
    %cst_237 = arith.constant 3.200000e+01 : f32
    %647 = vector.broadcast %cst_237 : f32 to vector<16x1xf32>
    %648 = arith.divf %646, %647 : vector<16x1xf32>
    %649 = vector.broadcast %641 : vector<16x1xf32> to vector<16x32xf32>
    %650 = arith.subf %635, %649 : vector<16x32xf32>
    %cst_238 = arith.constant 9.99999974E-6 : f32
    %651 = vector.broadcast %cst_238 : f32 to vector<16x1xf32>
    %652 = arith.addf %648, %651 : vector<16x1xf32>
    %653 = math.rsqrt %652 : vector<16x1xf32>
    %654 = vector.broadcast %653 : vector<16x1xf32> to vector<16x32xf32>
    %655 = arith.mulf %650, %654 : vector<16x32xf32>
    %656 = vector.broadcast %636 : vector<1x32xf32> to vector<16x32xf32>
    %657 = arith.mulf %655, %656 : vector<16x32xf32>
    %658 = vector.broadcast %637 : vector<1x32xf32> to vector<16x32xf32>
    %659 = arith.addf %657, %658 : vector<16x32xf32>
    %c0_239 = arith.constant 0 : index
    %c0_240 = arith.constant 0 : index
    %660 = vector.load %arg6[%c0_239, %c0_240] : memref<32x128xf32, #tpu.memory_space<vmem>>, vector<32x128xf32>
    %cst_241 = arith.constant dense<0.000000e+00> : vector<16x128xf32>
    %661 = tpu.matmul %659, %660, %cst_241 {dimension_numbers = #tpu.dot_dimension_numbers<[1], [0], [0], [1], [0, 0, 1, 1], [], []>} : vector<16x32xf32>, vector<32x128xf32>, vector<16x128xf32> -> vector<16x128xf32>
    %c0_242 = arith.constant 0 : index
    %c0_243 = arith.constant 0 : index
    %662 = vector.load %arg7[%c0_242, %c0_243] : memref<16x128xf32, #tpu.memory_space<vmem>>, vector<16x128xf32>
    tpu.vector_store %arg7[%c0_242, %c0_243], %661 {strides = array<i32>} : memref<16x128xf32, #tpu.memory_space<vmem>>, vector<16x128xf32>,
    return
  }
  func.func @transform_0(%arg0: i32) -> (i32, i32, i32) {
    %c0_i32 = arith.constant 0 : i32
    %c0_i32_0 = arith.constant 0 : i32
    %c0_i32_1 = arith.constant 0 : i32
    return %c0_i32, %arg0, %c0_i32_0 : i32, i32, i32
  }
  func.func @transform_1(%arg0: i32) -> (i32, i32, i32) {
    %c0_i32 = arith.constant 0 : i32
    %c0_i32_0 = arith.constant 0 : i32
    %c0_i32_1 = arith.constant 0 : i32
    %c0_i32_2 = arith.constant 0 : i32
    return %c0_i32, %c0_i32_0, %c0_i32_1 : i32, i32, i32
  }
  func.func @transform_2(%arg0: i32) -> (i32, i32, i32) {
    %c0_i32 = arith.constant 0 : i32
    %c0_i32_0 = arith.constant 0 : i32
    %c0_i32_1 = arith.constant 0 : i32
    %c0_i32_2 = arith.constant 0 : i32
    return %c0_i32, %c0_i32_0, %c0_i32_1 : i32, i32, i32
  }
  func.func @transform_3(%arg0: i32) -> (i32, i32, i32) {
    %c0_i32 = arith.constant 0 : i32
    %c0_i32_0 = arith.constant 0 : i32
    %c0_i32_1 = arith.constant 0 : i32
    %c0_i32_2 = arith.constant 0 : i32
    return %c0_i32, %c0_i32_0, %c0_i32_1 : i32, i32, i32
  }
  func.func @transform_4(%arg0: i32) -> (i32, i32, i32) {
    %c0_i32 = arith.constant 0 : i32
    %c0_i32_0 = arith.constant 0 : i32
    %c0_i32_1 = arith.constant 0 : i32
    %c0_i32_2 = arith.constant 0 : i32
    return %c0_i32, %c0_i32_0, %c0_i32_1 : i32, i32, i32
  }
  func.func @transform_5(%arg0: i32) -> (i32, i32) {
    %c0_i32 = arith.constant 0 : i32
    %c0_i32_0 = arith.constant 0 : i32
    %c0_i32_1 = arith.constant 0 : i32
    return %c0_i32, %c0_i32_0 : i32, i32
  }
  func.func @transform_6(%arg0: i32) -> (i32, i32) {
    %c0_i32 = arith.constant 0 : i32
    %c0_i32_0 = arith.constant 0 : i32
    return %arg0, %c0_i32 : i32, i32
  }
}

</mosaic_0001>

<llo_original>
// kernel: tpu_custom_call.1
$region0: #{tpu_custom_call.1}
  #allocation0 [shape = 'u32[]', space=smem, size = 0x4, offset = 0x4, fixed_abs, tag = 'smem constant byte address 0x4 - core index']
  #allocation1 [shape = 'u32[144,128]{1,0:T(1,128)}', space=vmem, size = 0x12000, scoped, tag = 'internal scratch']
  %s0 = inlined_call_operand.vmem [shape: f32[2,16,32], index: 0, kind: input, shape index: {}]
  %s1 = inlined_call_operand.hbm [shape: f32[24,32,32], index: 1, kind: input, shape index: {}]
  %s2 = inlined_call_operand.vmem [shape: f32[3,32,64], index: 2, kind: input, shape index: {}]
  %s3 = inlined_call_operand.vmem [shape: f32[3,64,32], index: 3, kind: input, shape index: {}]
  %s4 = inlined_call_operand.vmem [shape: f32[3,16,64], index: 4, kind: input, shape index: {}]
  %s5 = inlined_call_operand.vmem [shape: f32[32,128], index: 5, kind: input, shape index: {}]
  %s6 = inlined_call_operand.hbm [shape: f32[16,128], index: 6, kind: output, shape index: {}]
  %s7 = sld [smem:[#allocation0]]
  $region38: #{tpu_custom_call.1} parent=0
    _
  %s9 = ssub.s32 1, %s7
  %s10 = scalar_select 0, %s9, %s7
  $region1: #{tpu_custom_call.1} parent=0
    #allocation2 [shape = 'u8[393216]{0}', space=vmem, size = 0x60000, scoped, tag = 'input window, operand 1, single buffered']
    #allocation3 [shape = 's32[1]{0}', space=sflag, size = 0x4, scoped, tag = 'scoped memory for tpu_custom_call.1']
    #allocation4 [shape = 's32[1]{0}', space=sflag, size = 0x4, scoped, tag = 'scoped memory for tpu_custom_call.1']
    #allocation5 [shape = 'u8[8192]{0}', space=vmem, size = 0x2000, scoped, tag = 'output window, operand 0, single buffered']
    %11 = vsyncpa [#allocation3], 0
    %12 = vsyncpa [#allocation4], 0
    // Predicated region
    $region2: #{tpu_custom_call.1} parent=1 // pred_check
      _
    $region3: #{tpu_custom_call.1} parent=1 // pred_check_branch
      %14 = sbr.rel (0) target = $region5
    $region4: #{tpu_custom_call.1} parent=1 // pred_region
      _
    $region5: #{tpu_custom_call.1} parent=1 // pred_fallthru
      _
    // Predicated region
    $region6: #{tpu_custom_call.1} parent=1 // pred_check
      _
    $region7: #{tpu_custom_call.1} parent=1 // pred_check_branch
      %16 = sbr.rel (0) target = $region9
    $region8: #{tpu_custom_call.1} parent=1 // pred_region
      %s18 = ssub.s32 12288, 12288
      %19 = vsyncadd [#allocation3], %s18
      %s20 = sshll.u32 [#allocation2], 4
      %s21 = int_to_ptr.vmem [resolvable:$true] %s20
      %26 = dma.hbm_to_vmem [thread:$0]  %s1, 12288, %s21, [#allocation3], 128, 128, 8
    $region9: #{tpu_custom_call.1} parent=1 // pred_fallthru
      _
    // Predicated region
    $region10: #{tpu_custom_call.1} parent=1 // pred_check
      _
    $region11: #{tpu_custom_call.1} parent=1 // pred_check_branch
      %28 = sbr.rel (0) target = $region13
    $region12: #{tpu_custom_call.1} parent=1 // pred_region
      _
    $region13: #{tpu_custom_call.1} parent=1 // pred_fallthru
      _
    // Predicated region
    $region14: #{tpu_custom_call.1} parent=1 // pred_check
      _
    $region15: #{tpu_custom_call.1} parent=1 // pred_check_branch
      %30 = sbr.rel (0) target = $region17
    $region16: #{tpu_custom_call.1} parent=1 // pred_region
      _
    $region17: #{tpu_custom_call.1} parent=1 // pred_fallthru
      _
    // Predicated region
    $region18: #{tpu_custom_call.1} parent=1 // pred_check
      _
    $region19: #{tpu_custom_call.1} parent=1 // pred_check_branch
      %32 = sbr.rel (0) target = $region21
    $region20: #{tpu_custom_call.1} parent=1 // pred_region
      _
    $region21: #{tpu_custom_call.1} parent=1 // pred_fallthru
      _
    // Predicated region
    $region22: #{tpu_custom_call.1} parent=1 // pred_check
      _
    $region23: #{tpu_custom_call.1} parent=1 // pred_check_branch
      %34 = sbr.rel (0) target = $region25
    $region24: #{tpu_custom_call.1} parent=1 // pred_region
      _
    $region25: #{tpu_custom_call.1} parent=1 // pred_fallthru
      _
    // Predicated region
    $region26: #{tpu_custom_call.1} parent=1 // pred_check
      _
    $region27: #{tpu_custom_call.1} parent=1 // pred_check_branch
      %36 = sbr.rel (0) target = $region29
    $region28: #{tpu_custom_call.1} parent=1 // pred_region
      %37 = dma.done [#allocation3], 12288
    $region29: #{tpu_custom_call.1} parent=1 // pred_fallthru
      _
    %v38 = vld [vmem:[%s0] sm:$0xff]
    %v39 = vld [vmem:[%s0 + $0x8] sm:$0xff]
    %s40 = scalar_lea.vmem %s0, 16
    %v41 = vld [vmem:[%s40] sm:$0xff]
    %v42 = vld [vmem:[%s40 + $0x8] sm:$0xff]
    %v43 = vlaneseq
    %v44 = vand.u32 %v43, 127
    %vm45 = vcmp.ge.s32.totalorder %v44, 0
    %vm46 = vcmp.lt.s32.totalorder %v44, 8
    %vm47 = vmand %vm45, %vm46
    %v48 = vsel %vm47, 1.0, 0.0
    %vm49 = vcmp.ge.s32.totalorder %v44, 8
    %vm50 = vcmp.lt.s32.totalorder %v44, 16
    %vm51 = vmand %vm49, %vm50
    %v52 = vsel %vm51, 1.0, 0.0
    %vm53 = vcmp.ge.s32.totalorder %v44, 16
    %vm54 = vcmp.lt.s32.totalorder %v44, 24
    %vm55 = vmand %vm53, %vm54
    %v56 = vsel %vm55, 1.0, 0.0
    %vm57 = vcmp.ge.s32.totalorder %v44, 24
    %vm58 = vcmp.lt.s32.totalorder %v44, 32
    %vm59 = vmand %vm57, %vm58
    %v60 = vsel %vm59, 1.0, 0.0
    %v61 = vlaneseq
    %v62 = vshrl.u32 %v61, 7
    %v63 = vadd.s32 %v62, 8
    %v64 = vadd.s32 %v62, 16
    %v65 = vadd.s32 %v62, 24
    %vm66 = vcmp.ge.s32.totalorder %v62, 0
    %vm67 = vcmp.ge.s32.totalorder %v63, 0
    %vm68 = vcmp.ge.s32.totalorder %v64, 0
    %vm69 = vcmp.ge.s32.totalorder %v65, 0
    %vm70 = vcmp.lt.s32.totalorder %v62, 8
    %vm71 = vcmp.lt.s32.totalorder %v63, 8
    %vm72 = vcmp.lt.s32.totalorder %v64, 8
    %vm73 = vcmp.lt.s32.totalorder %v65, 8
    %vm74 = vmand %vm66, %vm70
    %vm75 = vmand %vm67, %vm71
    %vm76 = vmand %vm68, %vm72
    %vm77 = vmand %vm69, %vm73
    %v78 = vsel %vm74, 1.0, 0.0
    %v79 = vsel %vm75, 1.0, 0.0
    %v80 = vsel %vm76, 1.0, 0.0
    %v81 = vsel %vm77, 1.0, 0.0
    %vm82 = vcmp.ge.s32.totalorder %v62, 8
    %vm83 = vcmp.ge.s32.totalorder %v63, 8
    %vm84 = vcmp.ge.s32.totalorder %v64, 8
    %vm85 = vcmp.ge.s32.totalorder %v65, 8
    %vm86 = vcmp.lt.s32.totalorder %v62, 16
    %vm87 = vcmp.lt.s32.totalorder %v63, 16
    %vm88 = vcmp.lt.s32.totalorder %v64, 16
    %vm89 = vcmp.lt.s32.totalorder %v65, 16
    %vm90 = vmand %vm82, %vm86
    %vm91 = vmand %vm83, %vm87
    %vm92 = vmand %vm84, %vm88
    %vm93 = vmand %vm85, %vm89
    %v94 = vsel %vm90, 1.0, 0.0
    %v95 = vsel %vm91, 1.0, 0.0
    %v96 = vsel %vm92, 1.0, 0.0
    %v97 = vsel %vm93, 1.0, 0.0
    %vm98 = vcmp.ge.s32.totalorder %v62, 16
    %vm99 = vcmp.ge.s32.totalorder %v63, 16
    %vm100 = vcmp.ge.s32.totalorder %v64, 16
    %vm101 = vcmp.ge.s32.totalorder %v65, 16
    %vm102 = vcmp.lt.s32.totalorder %v62, 24
    %vm103 = vcmp.lt.s32.totalorder %v63, 24
    %vm104 = vcmp.lt.s32.totalorder %v64, 24
    %vm105 = vcmp.lt.s32.totalorder %v65, 24
    %vm106 = vmand %vm98, %vm102
    %vm107 = vmand %vm99, %vm103
    %vm108 = vmand %vm100, %vm104
    %vm109 = vmand %vm101, %vm105
    %v110 = vsel %vm106, 1.0, 0.0
    %v111 = vsel %vm107, 1.0, 0.0
    %v112 = vsel %vm108, 1.0, 0.0
    %v113 = vsel %vm109, 1.0, 0.0
    %vm114 = vcmp.ge.s32.totalorder %v62, 24
    %vm115 = vcmp.ge.s32.totalorder %v63, 24
    %vm116 = vcmp.ge.s32.totalorder %v64, 24
    %vm117 = vcmp.ge.s32.totalorder %v65, 24
    %vm118 = vcmp.lt.s32.totalorder %v62, 32
    %vm119 = vcmp.lt.s32.totalorder %v63, 32
    %vm120 = vcmp.lt.s32.totalorder %v64, 32
    %vm121 = vcmp.lt.s32.totalorder %v65, 32
    %vm122 = vmand %vm114, %vm118
    %vm123 = vmand %vm115, %vm119
    %vm124 = vmand %vm116, %vm120
    %vm125 = vmand %vm117, %vm121
    %v126 = vsel %vm122, 1.0, 0.0
    %v127 = vsel %vm123, 1.0, 0.0
    %v128 = vsel %vm124, 1.0, 0.0
    %v129 = vsel %vm125, 1.0, 0.0
    %vm130 = vcmask 130048
    %v131 = vsel %vm130, %v78, %v94
    %v132 = vsel %vm130, %v79, %v95
    %v133 = vsel %vm130, %v80, %v96
    %v134 = vsel %vm130, %v81, %v97
    %vm135 = vcmask 261120
    %v136 = vsel %vm135, %v131, %v110
    %v137 = vsel %vm135, %v132, %v111
    %v138 = vsel %vm135, %v133, %v112
    %v139 = vsel %vm135, %v134, %v113
    %vm140 = vcmask 392192
    %v141 = vsel %vm140, %v136, %v126
    %v142 = vsel %vm140, %v137, %v127
    %v143 = vsel %vm140, %v138, %v128
    %v144 = vsel %vm140, %v139, %v129
    %vm145 = vmand %vm45, %vm50
    %v146 = vsel %vm145, 1.0, 0.0
    %vm147 = vmand %vm53, %vm58
    %v148 = vsel %vm147, 1.0, 0.0
    %vm149 = vcmp.ge.s32.totalorder %v44, 32
    %vm150 = vcmp.lt.s32.totalorder %v44, 48
    %vm151 = vmand %vm149, %vm150
    %v152 = vsel %vm151, 1.0, 0.0
    %vm153 = vcmp.ge.s32.totalorder %v44, 48
    %vm154 = vcmp.lt.s32.totalorder %v44, 64
    %vm155 = vmand %vm153, %vm154
    %v156 = vsel %vm155, 1.0, 0.0
    %vm157 = vmand %vm70, %vm46
    %vm158 = vmand %vm71, %vm46
    %vm159 = vmand %vm90, %vm49
    %vm160 = vmand %vm91, %vm49
    %vm161 = vmand %vm159, %vm50
    %vm162 = vmand %vm160, %vm50
    %vm163 = vmor %vm157, %vm161
    %vm164 = vmor %vm158, %vm162
    %vm165 = vcmp.ge.s32.totalorder %v62, %v44
    %vm166 = vcmp.ge.s32.totalorder %v63, %v44
    %vm167 = vmand %vm163, %vm165
    %vm168 = vmand %vm164, %vm166
    %v169 = vsel %vm167, 0.0, -1e+30
    %v170 = vsel %vm168, 0.0, -1e+30
    %v171 = vsel %vm163, 0.0, -1e+30
    %v172 = vsel %vm164, 0.0, -1e+30
    %175 = vrot.lane.b32.xlu0 %v169, 16
    %v176 = vpop.permute.xlu0 %175
    %177 = vrot.lane.b32.xlu0 %v170, 16
    %v178 = vpop.permute.xlu0 %177
    %181 = vrot.lane.b32.xlu0 %v169, 32
    %v182 = vpop.permute.xlu0 %181
    %183 = vrot.lane.b32.xlu0 %v170, 32
    %v184 = vpop.permute.xlu0 %183
    %187 = vrot.lane.b32.xlu0 %v169, 48
    %v188 = vpop.permute.xlu0 %187
    %189 = vrot.lane.b32.xlu0 %v170, 48
    %v190 = vpop.permute.xlu0 %189
    %v193 = vsel %vm130, %v169, %v176
    %v194 = vsel %vm130, %v170, %v178
    %v195 = vsel %vm135, %v193, %v182
    %v196 = vsel %vm135, %v194, %v184
    %v197 = vsel %vm140, %v195, %v188
    %v198 = vsel %vm140, %v196, %v190
    %201 = vrot.lane.b32.xlu0 %v171, 16
    %v202 = vpop.permute.xlu0 %201
    %203 = vrot.lane.b32.xlu0 %v172, 16
    %v204 = vpop.permute.xlu0 %203
    %207 = vrot.lane.b32.xlu0 %v171, 32
    %v208 = vpop.permute.xlu0 %207
    %209 = vrot.lane.b32.xlu0 %v172, 32
    %v210 = vpop.permute.xlu0 %209
    %213 = vrot.lane.b32.xlu0 %v171, 48
    %v214 = vpop.permute.xlu0 %213
    %215 = vrot.lane.b32.xlu0 %v172, 48
    %v216 = vpop.permute.xlu0 %215
    %v219 = vsel %vm130, %v171, %v202
    %v220 = vsel %vm130, %v172, %v204
    %v221 = vsel %vm135, %v219, %v208
    %v222 = vsel %vm135, %v220, %v210
    %v223 = vsel %vm140, %v221, %v214
    %v224 = vsel %vm140, %v222, %v216
    %v225 = vld [vmem:[%s4] sm:$0xff]
    %v226 = vld [vmem:[%s4 + $0x8] sm:$0xff]
    %v227 = vld [vmem:[#allocation2] sm:$0xff]
    %v228 = vld [vmem:[#allocation2 + $0x8] sm:$0xff]
    %v229 = vld [vmem:[#allocation2 + $0x10] sm:$0xff]
    %v230 = vld [vmem:[#allocation2 + $0x18] sm:$0xff]
    %v231 = vlaneseq
    %v232 = vshrl.u32 %v231, 7
    %v233 = vsub.s32 0, %v232
    %v234 = vrot.slane %v225, %v233
    %v236 = vsel %vm135, %v38, 0
    %v239 = vsel %vm135, %v39, 0
    %241 = vmatprep.subr.mxu0 0.0
    %242 = vmatpush1.msra.mxu0 0.0
    %243 = vmatprep.subr.mxu0 0.0
    %244 = vmatpush1.msra.mxu0 0.0
    %245 = vmatprep.subr.mxu0 0.0
    %246 = vmatpush1.msra.mxu0 0.0
    %247 = vmatprep.subr.mxu0 0.0
    %248 = vmatpush1.msra.mxu0 0.0
    %249 = vmatprep.subr.mxu0 0.0
    %250 = vmatpush1.msra.mxu0 0.0
    %251 = vmatprep.subr.mxu0 0.0
    %252 = vmatpush1.msra.mxu0 0.0
    %253 = vmatprep.subr.mxu0 0.0
    %254 = vmatpush1.msra.mxu0 0.0
    %255 = vmatprep.subr.mxu0 0.0
    %256 = vmatpush1.msra.mxu0 0.0
    %257 = vmatprep.subr.mxu0 0.0
    %258 = vmatpush1.msra.mxu0 0.0
    %259 = vmatprep.subr.mxu0 0.0
    %260 = vmatpush1.msra.mxu0 0.0
    %261 = vmatprep.subr.mxu0 0.0
    %262 = vmatpush1.msra.mxu0 0.0
    %263 = vmatprep.subr.mxu0 0.0
    %264 = vmatpush1.msra.mxu0 0.0
    %265 = vmatprep.subr.mxu0 0.0
    %266 = vmatpush1.msra.mxu0 %v230
    %267 = vmatprep.subr.mxu0 0.0
    %268 = vmatpush1.msra.mxu0 %v229
    %269 = vmatprep.subr.mxu0 0.0
    %270 = vmatpush1.msra.mxu0 %v228
    %271 = vmatprep.subr.mxu0 0.0
    %272 = vmatpush1.msra.mxu0 %v227
    %273 = vmatprep.subr.mxu0 0.0
    %274 = vmatpush2.msra.mxu0 0.0
    %275 = vmatprep.subr.mxu0 0.0
    %276 = vmatpush2.msra.mxu0 0.0
    %277 = vmatprep.subr.mxu0 0.0
    %278 = vmatpush2.msra.mxu0 0.0
    %279 = vmatprep.subr.mxu0 0.0
    %280 = vmatpush2.msra.mxu0 0.0
    %281 = vmatprep.subr.mxu0 0.0
    %282 = vmatpush2.msra.mxu0 0.0
    %283 = vmatprep.subr.mxu0 0.0
    %284 = vmatpush2.msra.mxu0 0.0
    %285 = vmatprep.subr.mxu0 0.0
    %286 = vmatpush2.msra.mxu0 0.0
    %287 = vmatprep.subr.mxu0 0.0
    %288 = vmatpush2.msra.mxu0 0.0
    %289 = vmatprep.subr.mxu0 0.0
    %290 = vmatpush2.msra.mxu0 0.0
    %291 = vmatprep.subr.mxu0 0.0
    %292 = vmatpush2.msra.mxu0 0.0
    %293 = vmatprep.subr.mxu0 0.0
    %294 = vmatpush2.msra.mxu0 0.0
    %295 = vmatprep.subr.mxu0 0.0
    %296 = vmatpush2.msra.mxu0 0.0
    %297 = vmatprep.subr.mxu0 0.0
    %298 = vmatpush2.msra.mxu0 0.0
    %299 = vmatprep.subr.mxu0 0.0
    %300 = vmatpush2.msra.mxu0 0.0
    %301 = vmatprep.subr.mxu0 0.0
    %302 = vmatpush2.msra.mxu0 0.0
    %303 = vmatprep.subr.mxu0 0.0
    %304 = vmatpush2.msra.mxu0 0.0
    %305 = vmatprep.mubr.f32.mxu0 0.0
    %306 = vmatmul.mubr.f32.gmra.mxu0 %v236
    %v307 = vpop.f32.mrf.mxu0
    %v308 = vadd.f32 %v234, %v307
    %v309 = vpop.f32.mrf.mxu0
    %310 = vmatprep.mubr.f32.mxu0 0.0
    %311 = vmatmul.mubr.f32.gmra.mxu0 %v239
    %v312 = vpop.f32.mrf.mxu0
    %v313 = vadd.f32 %v234, %v312
    %v314 = vpop.f32.mrf.mxu0
    %315 = vdwg.mxu0
    %s316 = scalar_lea.vmem [#allocation2], 32
    %v317 = vld [vmem:[%s316] sm:$0xff]
    %v318 = vld [vmem:[%s316 + $0x8] sm:$0xff]
    %v319 = vld [vmem:[%s316 + $0x10] sm:$0xff]
    %v320 = vld [vmem:[%s316 + $0x18] sm:$0xff]
    %v321 = vlaneseq
    %v322 = vshrl.u32 %v321, 7
    %v323 = vsub.s32 1, %v322
    %v324 = vrot.slane %v225, %v323
    %325 = vmatprep.subr.mxu0 0.0
    %326 = vmatpush1.msra.mxu0 0.0
    %327 = vmatprep.subr.mxu0 0.0
    %328 = vmatpush1.msra.mxu0 0.0
    %329 = vmatprep.subr.mxu0 0.0
    %330 = vmatpush1.msra.mxu0 0.0
    %331 = vmatprep.subr.mxu0 0.0
    %332 = vmatpush1.msra.mxu0 0.0
    %333 = vmatprep.subr.mxu0 0.0
    %334 = vmatpush1.msra.mxu0 0.0
    %335 = vmatprep.subr.mxu0 0.0
    %336 = vmatpush1.msra.mxu0 0.0
    %337 = vmatprep.subr.mxu0 0.0
    %338 = vmatpush1.msra.mxu0 0.0
    %339 = vmatprep.subr.mxu0 0.0
    %340 = vmatpush1.msra.mxu0 0.0
    %341 = vmatprep.subr.mxu0 0.0
    %342 = vmatpush1.msra.mxu0 0.0
    %343 = vmatprep.subr.mxu0 0.0
    %344 = vmatpush1.msra.mxu0 0.0
    %345 = vmatprep.subr.mxu0 0.0
    %346 = vmatpush1.msra.mxu0 0.0
    %347 = vmatprep.subr.mxu0 0.0
    %348 = vmatpush1.msra.mxu0 0.0
    %349 = vmatprep.subr.mxu0 0.0
    %350 = vmatpush1.msra.mxu0 %v320
    %351 = vmatprep.subr.mxu0 0.0
    %352 = vmatpush1.msra.mxu0 %v319
    %353 = vmatprep.subr.mxu0 0.0
    %354 = vmatpush1.msra.mxu0 %v318
    %355 = vmatprep.subr.mxu0 0.0
    %356 = vmatpush1.msra.mxu0 %v317
    %357 = vmatprep.subr.mxu0 0.0
    %358 = vmatpush2.msra.mxu0 0.0
    %359 = vmatprep.subr.mxu0 0.0
    %360 = vmatpush2.msra.mxu0 0.0
    %361 = vmatprep.subr.mxu0 0.0
    %362 = vmatpush2.msra.mxu0 0.0
    %363 = vmatprep.subr.mxu0 0.0
    %364 = vmatpush2.msra.mxu0 0.0
    %365 = vmatprep.subr.mxu0 0.0
    %366 = vmatpush2.msra.mxu0 0.0
    %367 = vmatprep.subr.mxu0 0.0
    %368 = vmatpush2.msra.mxu0 0.0
    %369 = vmatprep.subr.mxu0 0.0
    %370 = vmatpush2.msra.mxu0 0.0
    %371 = vmatprep.subr.mxu0 0.0
    %372 = vmatpush2.msra.mxu0 0.0
    %373 = vmatprep.subr.mxu0 0.0
    %374 = vmatpush2.msra.mxu0 0.0
    %375 = vmatprep.subr.mxu0 0.0
    %376 = vmatpush2.msra.mxu0 0.0
    %377 = vmatprep.subr.mxu0 0.0
    %378 = vmatpush2.msra.mxu0 0.0
    %379 = vmatprep.subr.mxu0 0.0
    %380 = vmatpush2.msra.mxu0 0.0
    %381 = vmatprep.subr.mxu0 0.0
    %382 = vmatpush2.msra.mxu0 0.0
    %383 = vmatprep.subr.mxu0 0.0
    %384 = vmatpush2.msra.mxu0 0.0
    %385 = vmatprep.subr.mxu0 0.0
    %386 = vmatpush2.msra.mxu0 0.0
    %387 = vmatprep.subr.mxu0 0.0
    %388 = vmatpush2.msra.mxu0 0.0
    %389 = vmatprep.mubr.f32.mxu0 0.0
    %390 = vmatmul.mubr.f32.gmra.mxu0 %v236
    %v391 = vpop.f32.mrf.mxu0
    %v392 = vadd.f32 %v324, %v391
    %v393 = vpop.f32.mrf.mxu0
    %394 = vmatprep.mubr.f32.mxu0 0.0
    %395 = vmatmul.mubr.f32.gmra.mxu0 %v239
    %v396 = vpop.f32.mrf.mxu0
    %v397 = vadd.f32 %v324, %v396
    %v398 = vpop.f32.mrf.mxu0
    %399 = vdwg.mxu0
    %s400 = scalar_lea.vmem [#allocation2], 64
    %v401 = vld [vmem:[%s400] sm:$0xff]
    %v402 = vld [vmem:[%s400 + $0x8] sm:$0xff]
    %v403 = vld [vmem:[%s400 + $0x10] sm:$0xff]
    %v404 = vld [vmem:[%s400 + $0x18] sm:$0xff]
    %v405 = vlaneseq
    %v406 = vshrl.u32 %v405, 7
    %v407 = vsub.s32 2, %v406
    %v408 = vrot.slane %v225, %v407
    %409 = vmatprep.subr.mxu0 0.0
    %410 = vmatpush1.msra.mxu0 0.0
    %411 = vmatprep.subr.mxu0 0.0
    %412 = vmatpush1.msra.mxu0 0.0
    %413 = vmatprep.subr.mxu0 0.0
    %414 = vmatpush1.msra.mxu0 0.0
    %415 = vmatprep.subr.mxu0 0.0
    %416 = vmatpush1.msra.mxu0 0.0
    %417 = vmatprep.subr.mxu0 0.0
    %418 = vmatpush1.msra.mxu0 0.0
    %419 = vmatprep.subr.mxu0 0.0
    %420 = vmatpush1.msra.mxu0 0.0
    %421 = vmatprep.subr.mxu0 0.0
    %422 = vmatpush1.msra.mxu0 0.0
    %423 = vmatprep.subr.mxu0 0.0
    %424 = vmatpush1.msra.mxu0 0.0
    %425 = vmatprep.subr.mxu0 0.0
    %426 = vmatpush1.msra.mxu0 0.0
    %427 = vmatprep.subr.mxu0 0.0
    %428 = vmatpush1.msra.mxu0 0.0
    %429 = vmatprep.subr.mxu0 0.0
    %430 = vmatpush1.msra.mxu0 0.0
    %431 = vmatprep.subr.mxu0 0.0
    %432 = vmatpush1.msra.mxu0 0.0
    %433 = vmatprep.subr.mxu0 0.0
    %434 = vmatpush1.msra.mxu0 %v404
    %435 = vmatprep.subr.mxu0 0.0
    %436 = vmatpush1.msra.mxu0 %v403
    %437 = vmatprep.subr.mxu0 0.0
    %438 = vmatpush1.msra.mxu0 %v402
    %439 = vmatprep.subr.mxu0 0.0
    %440 = vmatpush1.msra.mxu0 %v401
    %441 = vmatprep.subr.mxu0 0.0
    %442 = vmatpush2.msra.mxu0 0.0
    %443 = vmatprep.subr.mxu0 0.0
    %444 = vmatpush2.msra.mxu0 0.0
    %445 = vmatprep.subr.mxu0 0.0
    %446 = vmatpush2.msra.mxu0 0.0
    %447 = vmatprep.subr.mxu0 0.0
    %448 = vmatpush2.msra.mxu0 0.0
    %449 = vmatprep.subr.mxu0 0.0
    %450 = vmatpush2.msra.mxu0 0.0
    %451 = vmatprep.subr.mxu0 0.0
    %452 = vmatpush2.msra.mxu0 0.0
    %453 = vmatprep.subr.mxu0 0.0
    %454 = vmatpush2.msra.mxu0 0.0
    %455 = vmatprep.subr.mxu0 0.0
    %456 = vmatpush2.msra.mxu0 0.0
    %457 = vmatprep.subr.mxu0 0.0
    %458 = vmatpush2.msra.mxu0 0.0
    %459 = vmatprep.subr.mxu0 0.0
    %460 = vmatpush2.msra.mxu0 0.0
    %461 = vmatprep.subr.mxu0 0.0
    %462 = vmatpush2.msra.mxu0 0.0
    %463 = vmatprep.subr.mxu0 0.0
    %464 = vmatpush2.msra.mxu0 0.0
    %465 = vmatprep.subr.mxu0 0.0
    %466 = vmatpush2.msra.mxu0 0.0
    %467 = vmatprep.subr.mxu0 0.0
    %468 = vmatpush2.msra.mxu0 0.0
    %469 = vmatprep.subr.mxu0 0.0
    %470 = vmatpush2.msra.mxu0 0.0
    %471 = vmatprep.subr.mxu0 0.0
    %472 = vmatpush2.msra.mxu0 0.0
    %473 = vmatprep.mubr.f32.mxu0 0.0
    %474 = vmatmul.mubr.f32.gmra.mxu0 %v236
    %v475 = vpop.f32.mrf.mxu0
    %v476 = vadd.f32 %v408, %v475
    %v477 = vpop.f32.mrf.mxu0
    %478 = vmatprep.mubr.f32.mxu0 0.0
    %479 = vmatmul.mubr.f32.gmra.mxu0 %v239
    %v480 = vpop.f32.mrf.mxu0
    %v481 = vadd.f32 %v408, %v480
    %v482 = vpop.f32.mrf.mxu0
    %483 = vdwg.mxu0
    %s484 = scalar_lea.vmem [#allocation2], 96
    %v485 = vld [vmem:[%s484] sm:$0xff]
    %v486 = vld [vmem:[%s484 + $0x8] sm:$0xff]
    %v487 = vld [vmem:[%s484 + $0x10] sm:$0xff]
    %v488 = vld [vmem:[%s484 + $0x18] sm:$0xff]
    %489 = vxpose.xlu0.b32.start [1/16] %v392, 128
    %490 = vxpose.xlu0.b32.cont [2/16] %v397, 128
    %491 = vxpose.xlu0.b32.cont [3/16] 0.0, 128
    %492 = vxpose.xlu0.b32.cont [4/16] 0.0, 128
    %493 = vxpose.xlu0.b32.cont [5/16] 0.0, 128
    %494 = vxpose.xlu0.b32.cont [6/16] 0.0, 128
    %495 = vxpose.xlu0.b32.cont [7/16] 0.0, 128
    %496 = vxpose.xlu0.b32.cont [8/16] 0.0, 128
    %497 = vxpose.xlu0.b32.cont [9/16] 0.0, 128
    %498 = vxpose.xlu0.b32.cont [10/16] 0.0, 128
    %499 = vxpose.xlu0.b32.cont [11/16] 0.0, 128
    %500 = vxpose.xlu0.b32.cont [12/16] 0.0, 128
    %501 = vxpose.xlu0.b32.cont [13/16] 0.0, 128
    %502 = vxpose.xlu0.b32.cont [14/16] 0.0, 128
    %503 = vxpose.xlu0.b32.cont [15/16] 0.0, 128
    %504 = vxpose.xlu0.b32.end [16/16] 0.0, 128
    %v505 = vpop.trf.xlu0
    %v506 = vpop.trf.xlu0
    %v507 = vpop.trf.xlu0
    %v508 = vpop.trf.xlu0
    %v509 = vpop.trf.xlu0
    %v510 = vpop.trf.xlu0
    %v511 = vpop.trf.xlu0
    %v512 = vpop.trf.xlu0
    %v513 = vpop.trf.xlu0
    %v514 = vpop.trf.xlu0
    %v515 = vpop.trf.xlu0
    %v516 = vpop.trf.xlu0
    %v517 = vpop.trf.xlu0
    %v518 = vpop.trf.xlu0
    %v519 = vpop.trf.xlu0
    %v520 = vpop.trf.xlu0
    %525 = vrot.lane.b32.xlu0 %v505, 16
    %v526 = vpop.permute.xlu0 %525
    %527 = vrot.lane.b32.xlu0 %v506, 16
    %v528 = vpop.permute.xlu0 %527
    %529 = vrot.lane.b32.xlu0 %v507, 16
    %v530 = vpop.permute.xlu0 %529
    %531 = vrot.lane.b32.xlu0 %v508, 16
    %v532 = vpop.permute.xlu0 %531
    %537 = vrot.lane.b32.xlu0 %v505, 32
    %v538 = vpop.permute.xlu0 %537
    %539 = vrot.lane.b32.xlu0 %v506, 32
    %v540 = vpop.permute.xlu0 %539
    %541 = vrot.lane.b32.xlu0 %v507, 32
    %v542 = vpop.permute.xlu0 %541
    %543 = vrot.lane.b32.xlu0 %v508, 32
    %v544 = vpop.permute.xlu0 %543
    %549 = vrot.lane.b32.xlu0 %v505, 48
    %v550 = vpop.permute.xlu0 %549
    %551 = vrot.lane.b32.xlu0 %v506, 48
    %v552 = vpop.permute.xlu0 %551
    %553 = vrot.lane.b32.xlu0 %v507, 48
    %v554 = vpop.permute.xlu0 %553
    %555 = vrot.lane.b32.xlu0 %v508, 48
    %v556 = vpop.permute.xlu0 %555
    %v561 = vsel %vm130, %v505, %v526
    %v562 = vsel %vm130, %v506, %v528
    %v563 = vsel %vm130, %v507, %v530
    %v564 = vsel %vm130, %v508, %v532
    %v565 = vsel %vm135, %v561, %v538
    %v566 = vsel %vm135, %v562, %v540
    %v567 = vsel %vm135, %v563, %v542
    %v568 = vsel %vm135, %v564, %v544
    %v569 = vsel %vm140, %v565, %v550
    %v570 = vsel %vm140, %v566, %v552
    %v571 = vsel %vm140, %v567, %v554
    %v572 = vsel %vm140, %v568, %v556
    %v573 = vmul.f32 %v569, %v141
    %v574 = vmul.f32 %v570, %v142
    %v575 = vmul.f32 %v571, %v143
    %v576 = vmul.f32 %v572, %v144
    %v577 = vmul.f32 %v476, %v48
    %v578 = vmul.f32 %v481, %v48
    %v579 = vmul.f32 %v476, %v52
    %v580 = vmul.f32 %v481, %v52
    %v581 = vmul.f32 %v476, %v56
    %v582 = vmul.f32 %v481, %v56
    %v583 = vmul.f32 %v476, %v60
    %v584 = vmul.f32 %v481, %v60
    %v585 = vmul.f32 %v308, 0.35355338
    %v586 = vmul.f32 %v313, 0.35355338
    %v588 = vsel %vm135, %v585, 0
    %v591 = vsel %vm135, %v586, 0
    %593 = vmatprep.subr.mxu0 0.0
    %594 = vmatpush1.msra.mxu0 0.0
    %595 = vmatprep.subr.mxu0 0.0
    %596 = vmatpush1.msra.mxu0 0.0
    %597 = vmatprep.subr.mxu0 0.0
    %598 = vmatpush1.msra.mxu0 0.0
    %599 = vmatprep.subr.mxu0 0.0
    %600 = vmatpush1.msra.mxu0 0.0
    %601 = vmatprep.subr.mxu0 0.0
    %602 = vmatpush1.msra.mxu0 0.0
    %603 = vmatprep.subr.mxu0 0.0
    %604 = vmatpush1.msra.mxu0 0.0
    %605 = vmatprep.subr.mxu0 0.0
    %606 = vmatpush1.msra.mxu0 0.0
    %607 = vmatprep.subr.mxu0 0.0
    %608 = vmatpush1.msra.mxu0 0.0
    %609 = vmatprep.subr.mxu0 0.0
    %610 = vmatpush1.msra.mxu0 0.0
    %611 = vmatprep.subr.mxu0 0.0
    %612 = vmatpush1.msra.mxu0 0.0
    %613 = vmatprep.subr.mxu0 0.0
    %614 = vmatpush1.msra.mxu0 0.0
    %615 = vmatprep.subr.mxu0 0.0
    %616 = vmatpush1.msra.mxu0 0.0
    %617 = vmatprep.subr.mxu0 0.0
    %618 = vmatpush1.msra.mxu0 %v576
    %619 = vmatprep.subr.mxu0 0.0
    %620 = vmatpush1.msra.mxu0 %v575
    %621 = vmatprep.subr.mxu0 0.0
    %622 = vmatpush1.msra.mxu0 %v574
    %623 = vmatprep.subr.mxu0 0.0
    %624 = vmatpush1.msra.mxu0 %v573
    %625 = vmatprep.subr.mxu0 0.0
    %626 = vmatpush2.msra.mxu0 0.0
    %627 = vmatprep.subr.mxu0 0.0
    %628 = vmatpush2.msra.mxu0 0.0
    %629 = vmatprep.subr.mxu0 0.0
    %630 = vmatpush2.msra.mxu0 0.0
    %631 = vmatprep.subr.mxu0 0.0
    %632 = vmatpush2.msra.mxu0 0.0
    %633 = vmatprep.subr.mxu0 0.0
    %634 = vmatpush2.msra.mxu0 0.0
    %635 = vmatprep.subr.mxu0 0.0
    %636 = vmatpush2.msra.mxu0 0.0
    %637 = vmatprep.subr.mxu0 0.0
    %638 = vmatpush2.msra.mxu0 0.0
    %639 = vmatprep.subr.mxu0 0.0
    %640 = vmatpush2.msra.mxu0 0.0
    %641 = vmatprep.subr.mxu0 0.0
    %642 = vmatpush2.msra.mxu0 0.0
    %643 = vmatprep.subr.mxu0 0.0
    %644 = vmatpush2.msra.mxu0 0.0
    %645 = vmatprep.subr.mxu0 0.0
    %646 = vmatpush2.msra.mxu0 0.0
    %647 = vmatprep.subr.mxu0 0.0
    %648 = vmatpush2.msra.mxu0 0.0
    %649 = vmatprep.subr.mxu0 0.0
    %650 = vmatpush2.msra.mxu0 0.0
    %651 = vmatprep.subr.mxu0 0.0
    %652 = vmatpush2.msra.mxu0 0.0
    %653 = vmatprep.subr.mxu0 0.0
    %654 = vmatpush2.msra.mxu0 0.0
    %655 = vmatprep.subr.mxu0 0.0
    %656 = vmatpush2.msra.mxu0 0.0
    %657 = vmatprep.mubr.f32.mxu0 0.0
    %658 = vmatmul.mubr.f32.gmra.mxu0 %v588
    %v659 = vpop.f32.mrf.mxu0
    %v660 = vadd.f32 %v197, %v659
    %v661 = vpop.f32.mrf.mxu0
    %662 = vmatprep.mubr.f32.mxu0 0.0
    %663 = vmatmul.mubr.f32.gmra.mxu0 %v591
    %v664 = vpop.f32.mrf.mxu0
    %v665 = vadd.f32 %v198, %v664
    %v666 = vpop.f32.mrf.mxu0
    %667 = vdwg.mxu0
    %v668 = vmul.f32 %v660, 1.442695
    %v669 = vpow.pop %v668
    %v670 = vmul.f32 %v665, 1.442695
    %v671 = vpow.pop %v670
    %vm672 = vcmask 523264
    %v674 = vsel %vm672, %v669, 0
    %v677 = vsel %vm672, %v671, 0
    %679 = vmatprep.subr.mxu0 0.0
    %680 = vmatpush1.msra.mxu0 0.0
    %681 = vmatprep.subr.mxu0 0.0
    %682 = vmatpush1.msra.mxu0 0.0
    %683 = vmatprep.subr.mxu0 0.0
    %684 = vmatpush1.msra.mxu0 0.0
    %685 = vmatprep.subr.mxu0 0.0
    %686 = vmatpush1.msra.mxu0 0.0
    %687 = vmatprep.subr.mxu0 0.0
    %688 = vmatpush1.msra.mxu0 0.0
    %689 = vmatprep.subr.mxu0 0.0
    %690 = vmatpush1.msra.mxu0 0.0
    %691 = vmatprep.subr.mxu0 0.0
    %692 = vmatpush1.msra.mxu0 0.0
    %693 = vmatprep.subr.mxu0 0.0
    %694 = vmatpush1.msra.mxu0 0.0
    %695 = vmatprep.subr.mxu0 0.0
    %696 = vmatpush1.msra.mxu0 %v156
    %697 = vmatprep.subr.mxu0 0.0
    %698 = vmatpush1.msra.mxu0 %v156
    %699 = vmatprep.subr.mxu0 0.0
    %700 = vmatpush1.msra.mxu0 %v152
    %701 = vmatprep.subr.mxu0 0.0
    %702 = vmatpush1.msra.mxu0 %v152
    %703 = vmatprep.subr.mxu0 0.0
    %704 = vmatpush1.msra.mxu0 %v148
    %705 = vmatprep.subr.mxu0 0.0
    %706 = vmatpush1.msra.mxu0 %v148
    %707 = vmatprep.subr.mxu0 0.0
    %708 = vmatpush1.msra.mxu0 %v146
    %709 = vmatprep.subr.mxu0 0.0
    %710 = vmatpush1.msra.mxu0 %v146
    %711 = vmatprep.subr.mxu0 0.0
    %712 = vmatpush2.msra.mxu0 0.0
    %713 = vmatprep.subr.mxu0 0.0
    %714 = vmatpush2.msra.mxu0 0.0
    %715 = vmatprep.subr.mxu0 0.0
    %716 = vmatpush2.msra.mxu0 0.0
    %717 = vmatprep.subr.mxu0 0.0
    %718 = vmatpush2.msra.mxu0 0.0
    %719 = vmatprep.subr.mxu0 0.0
    %720 = vmatpush2.msra.mxu0 0.0
    %721 = vmatprep.subr.mxu0 0.0
    %722 = vmatpush2.msra.mxu0 0.0
    %723 = vmatprep.subr.mxu0 0.0
    %724 = vmatpush2.msra.mxu0 0.0
    %725 = vmatprep.subr.mxu0 0.0
    %726 = vmatpush2.msra.mxu0 0.0
    %727 = vmatprep.subr.mxu0 0.0
    %728 = vmatpush2.msra.mxu0 0.0
    %729 = vmatprep.subr.mxu0 0.0
    %730 = vmatpush2.msra.mxu0 0.0
    %731 = vmatprep.subr.mxu0 0.0
    %732 = vmatpush2.msra.mxu0 0.0
    %733 = vmatprep.subr.mxu0 0.0
    %734 = vmatpush2.msra.mxu0 0.0
    %735 = vmatprep.subr.mxu0 0.0
    %736 = vmatpush2.msra.mxu0 0.0
    %737 = vmatprep.subr.mxu0 0.0
    %738 = vmatpush2.msra.mxu0 0.0
    %739 = vmatprep.subr.mxu0 0.0
    %740 = vmatpush2.msra.mxu0 0.0
    %741 = vmatprep.subr.mxu0 0.0
    %742 = vmatpush2.msra.mxu0 0.0
    %743 = vmatprep.mubr.f32.mxu0 0.0
    %744 = vmatmul.mubr.f32.gmra.mxu0 %v674
    %v745 = vpop.f32.mrf.mxu0
    %v746 = vadd.f32 0.0, %v745
    %v747 = vpop.f32.mrf.mxu0
    %748 = vmatprep.mubr.f32.mxu0 0.0
    %749 = vmatmul.mubr.f32.gmra.mxu0 %v677
    %v750 = vpop.f32.mrf.mxu0
    %v751 = vadd.f32 0.0, %v750
    %v752 = vpop.f32.mrf.mxu0
    %753 = vdwg.mxu0
    %v754 = vrcp.pop %v746
    %v755 = vrcp.pop %v751
    %v756 = vmul.f32 %v746, %v754
    %v757 = vmul.f32 %v751, %v755
    %v758 = vsub.f32 2.0, %v756
    %v759 = vsub.f32 2.0, %v757
    %v760 = vmul.f32 %v754, %v758
    %v761 = vmul.f32 %v755, %v759
    %v762 = vmul.f32 %v669, %v760
    %v763 = vmul.f32 %v671, %v761
    %v765 = vsel %vm672, %v762, 0
    %v768 = vsel %vm672, %v763, 0
    %770 = vmatprep.subr.mxu0 0.0
    %771 = vmatpush1.msra.mxu0 0.0
    %772 = vmatprep.subr.mxu0 0.0
    %773 = vmatpush1.msra.mxu0 0.0
    %774 = vmatprep.subr.mxu0 0.0
    %775 = vmatpush1.msra.mxu0 0.0
    %776 = vmatprep.subr.mxu0 0.0
    %777 = vmatpush1.msra.mxu0 0.0
    %778 = vmatprep.subr.mxu0 0.0
    %779 = vmatpush1.msra.mxu0 0.0
    %780 = vmatprep.subr.mxu0 0.0
    %781 = vmatpush1.msra.mxu0 0.0
    %782 = vmatprep.subr.mxu0 0.0
    %783 = vmatpush1.msra.mxu0 0.0
    %784 = vmatprep.subr.mxu0 0.0
    %785 = vmatpush1.msra.mxu0 0.0
    %786 = vmatprep.subr.mxu0 0.0
    %787 = vmatpush1.msra.mxu0 %v584
    %788 = vmatprep.subr.mxu0 0.0
    %789 = vmatpush1.msra.mxu0 %v583
    %790 = vmatprep.subr.mxu0 0.0
    %791 = vmatpush1.msra.mxu0 %v582
    %792 = vmatprep.subr.mxu0 0.0
    %793 = vmatpush1.msra.mxu0 %v581
    %794 = vmatprep.subr.mxu0 0.0
    %795 = vmatpush1.msra.mxu0 %v580
    %796 = vmatprep.subr.mxu0 0.0
    %797 = vmatpush1.msra.mxu0 %v579
    %798 = vmatprep.subr.mxu0 0.0
    %799 = vmatpush1.msra.mxu0 %v578
    %800 = vmatprep.subr.mxu0 0.0
    %801 = vmatpush1.msra.mxu0 %v577
    %802 = vmatprep.subr.mxu0 0.0
    %803 = vmatpush2.msra.mxu0 0.0
    %804 = vmatprep.subr.mxu0 0.0
    %805 = vmatpush2.msra.mxu0 0.0
    %806 = vmatprep.subr.mxu0 0.0
    %807 = vmatpush2.msra.mxu0 0.0
    %808 = vmatprep.subr.mxu0 0.0
    %809 = vmatpush2.msra.mxu0 0.0
    %810 = vmatprep.subr.mxu0 0.0
    %811 = vmatpush2.msra.mxu0 0.0
    %812 = vmatprep.subr.mxu0 0.0
    %813 = vmatpush2.msra.mxu0 0.0
    %814 = vmatprep.subr.mxu0 0.0
    %815 = vmatpush2.msra.mxu0 0.0
    %816 = vmatprep.subr.mxu0 0.0
    %817 = vmatpush2.msra.mxu0 0.0
    %818 = vmatprep.subr.mxu0 0.0
    %819 = vmatpush2.msra.mxu0 0.0
    %820 = vmatprep.subr.mxu0 0.0
    %821 = vmatpush2.msra.mxu0 0.0
    %822 = vmatprep.subr.mxu0 0.0
    %823 = vmatpush2.msra.mxu0 0.0
    %824 = vmatprep.subr.mxu0 0.0
    %825 = vmatpush2.msra.mxu0 0.0
    %826 = vmatprep.subr.mxu0 0.0
    %827 = vmatpush2.msra.mxu0 0.0
    %828 = vmatprep.subr.mxu0 0.0
    %829 = vmatpush2.msra.mxu0 0.0
    %830 = vmatprep.subr.mxu0 0.0
    %831 = vmatpush2.msra.mxu0 0.0
    %832 = vmatprep.subr.mxu0 0.0
    %833 = vmatpush2.msra.mxu0 0.0
    %834 = vmatprep.mubr.f32.mxu0 0.0
    %835 = vmatmul.mubr.f32.gmra.mxu0 %v765
    %v836 = vpop.f32.mrf.mxu0
    %v837 = vadd.f32 0.0, %v836
    %v838 = vpop.f32.mrf.mxu0
    %839 = vmatprep.mubr.f32.mxu0 0.0
    %840 = vmatmul.mubr.f32.gmra.mxu0 %v768
    %v841 = vpop.f32.mrf.mxu0
    %v842 = vadd.f32 0.0, %v841
    %v843 = vpop.f32.mrf.mxu0
    %844 = vdwg.mxu0
    %v845 = vlaneseq
    %v846 = vshrl.u32 %v845, 7
    %v847 = vsub.s32 3, %v846
    %v848 = vrot.slane %v225, %v847
    %v850 = vsel %vm135, %v837, 0
    %v853 = vsel %vm135, %v842, 0
    %855 = vmatprep.subr.mxu0 0.0
    %856 = vmatpush1.msra.mxu0 0.0
    %857 = vmatprep.subr.mxu0 0.0
    %858 = vmatpush1.msra.mxu0 0.0
    %859 = vmatprep.subr.mxu0 0.0
    %860 = vmatpush1.msra.mxu0 0.0
    %861 = vmatprep.subr.mxu0 0.0
    %862 = vmatpush1.msra.mxu0 0.0
    %863 = vmatprep.subr.mxu0 0.0
    %864 = vmatpush1.msra.mxu0 0.0
    %865 = vmatprep.subr.mxu0 0.0
    %866 = vmatpush1.msra.mxu0 0.0
    %867 = vmatprep.subr.mxu0 0.0
    %868 = vmatpush1.msra.mxu0 0.0
    %869 = vmatprep.subr.mxu0 0.0
    %870 = vmatpush1.msra.mxu0 0.0
    %871 = vmatprep.subr.mxu0 0.0
    %872 = vmatpush1.msra.mxu0 0.0
    %873 = vmatprep.subr.mxu0 0.0
    %874 = vmatpush1.msra.mxu0 0.0
    %875 = vmatprep.subr.mxu0 0.0
    %876 = vmatpush1.msra.mxu0 0.0
    %877 = vmatprep.subr.mxu0 0.0
    %878 = vmatpush1.msra.mxu0 0.0
    %879 = vmatprep.subr.mxu0 0.0
    %880 = vmatpush1.msra.mxu0 %v488
    %881 = vmatprep.subr.mxu0 0.0
    %882 = vmatpush1.msra.mxu0 %v487
    %883 = vmatprep.subr.mxu0 0.0
    %884 = vmatpush1.msra.mxu0 %v486
    %885 = vmatprep.subr.mxu0 0.0
    %886 = vmatpush1.msra.mxu0 %v485
    %887 = vmatprep.subr.mxu0 0.0
    %888 = vmatpush2.msra.mxu0 0.0
    %889 = vmatprep.subr.mxu0 0.0
    %890 = vmatpush2.msra.mxu0 0.0
    %891 = vmatprep.subr.mxu0 0.0
    %892 = vmatpush2.msra.mxu0 0.0
    %893 = vmatprep.subr.mxu0 0.0
    %894 = vmatpush2.msra.mxu0 0.0
    %895 = vmatprep.subr.mxu0 0.0
    %896 = vmatpush2.msra.mxu0 0.0
    %897 = vmatprep.subr.mxu0 0.0
    %898 = vmatpush2.msra.mxu0 0.0
    %899 = vmatprep.subr.mxu0 0.0
    %900 = vmatpush2.msra.mxu0 0.0
    %901 = vmatprep.subr.mxu0 0.0
    %902 = vmatpush2.msra.mxu0 0.0
    %903 = vmatprep.subr.mxu0 0.0
    %904 = vmatpush2.msra.mxu0 0.0
    %905 = vmatprep.subr.mxu0 0.0
    %906 = vmatpush2.msra.mxu0 0.0
    %907 = vmatprep.subr.mxu0 0.0
    %908 = vmatpush2.msra.mxu0 0.0
    %909 = vmatprep.subr.mxu0 0.0
    %910 = vmatpush2.msra.mxu0 0.0
    %911 = vmatprep.subr.mxu0 0.0
    %912 = vmatpush2.msra.mxu0 0.0
    %913 = vmatprep.subr.mxu0 0.0
    %914 = vmatpush2.msra.mxu0 0.0
    %915 = vmatprep.subr.mxu0 0.0
    %916 = vmatpush2.msra.mxu0 0.0
    %917 = vmatprep.subr.mxu0 0.0
    %918 = vmatpush2.msra.mxu0 0.0
    %919 = vmatprep.mubr.f32.mxu0 0.0
    %920 = vmatmul.mubr.f32.gmra.mxu0 %v850
    %v921 = vpop.f32.mrf.mxu0
    %v922 = vadd.f32 %v848, %v921
    %v923 = vpop.f32.mrf.mxu0
    %924 = vmatprep.mubr.f32.mxu0 0.0
    %925 = vmatmul.mubr.f32.gmra.mxu0 %v853
    %v926 = vpop.f32.mrf.mxu0
    %v927 = vadd.f32 %v848, %v926
    %v928 = vpop.f32.mrf.mxu0
    %929 = vdwg.mxu0
    %v930 = vadd.f32 %v38, %v922
    %v931 = vadd.f32 %v39, %v927
    %v932 = vsel %vm135, %v930, 0.0
    %933 = vadd.xlane.f32.xlu0 %v932
    %v934 = vpop.xlane.xlu0 %933
    %v935 = vsel %vm135, %v931, 0.0
    %936 = vadd.xlane.f32.xlu0 %v935
    %v937 = vpop.xlane.xlu0 %936
    %v938 = vrcp.pop 32.0
    %v939 = vmul.f32 %v934, %v938
    %v940 = vmul.f32 %v937, %v938
    %v941 = vsub.f32 %v930, %v939
    %v942 = vsub.f32 %v931, %v940
    %v943 = vmul.f32 %v941, %v941
    %v944 = vmul.f32 %v942, %v942
    %v945 = vsel %vm135, %v943, 0.0
    %946 = vadd.xlane.f32.xlu0 %v945
    %v947 = vpop.xlane.xlu0 %946
    %v948 = vsel %vm135, %v944, 0.0
    %949 = vadd.xlane.f32.xlu0 %v948
    %v950 = vpop.xlane.xlu0 %949
    %v951 = vmul.f32 %v947, %v938
    %v952 = vmul.f32 %v950, %v938
    %v953 = vadd.f32 %v951, 1e-05
    %v954 = vadd.f32 %v952, 1e-05
    %v955 = vrsqrt.pop %v953
    %v956 = vrsqrt.pop %v954
    %v957 = vmul.f32 %v941, %v955
    %v958 = vmul.f32 %v942, %v956
    %v959 = vlaneseq
    %v960 = vshrl.u32 %v959, 7
    %v961 = vsub.s32 2, %v960
    %v962 = vrot.slane %v226, %v961
    %v963 = vmul.f32 %v957, %v962
    %v964 = vmul.f32 %v958, %v962
    %v965 = vlaneseq
    %v966 = vshrl.u32 %v965, 7
    %v967 = vsub.s32 3, %v966
    %v968 = vrot.slane %v226, %v967
    %v969 = vadd.f32 %v963, %v968
    %v970 = vadd.f32 %v964, %v968
    %s971 = scalar_lea.vmem [#allocation2], 128
    %v972 = vld [vmem:[%s971] sm:$0xff]
    %v973 = vld [vmem:[%s971 + $0x8] sm:$0xff]
    %v974 = vld [vmem:[%s971 + $0x10] sm:$0xff]
    %v975 = vld [vmem:[%s971 + $0x18] sm:$0xff]
    %v976 = vlaneseq
    %v977 = vshrl.u32 %v976, 7
    %v978 = vsub.s32 4, %v977
    %v979 = vrot.slane %v225, %v978
    %v981 = vsel %vm135, %v969, 0
    %v984 = vsel %vm135, %v970, 0
    %986 = vmatprep.subr.mxu0 0.0
    %987 = vmatpush1.msra.mxu0 0.0
    %988 = vmatprep.subr.mxu0 0.0
    %989 = vmatpush1.msra.mxu0 0.0
    %990 = vmatprep.subr.mxu0 0.0
    %991 = vmatpush1.msra.mxu0 0.0
    %992 = vmatprep.subr.mxu0 0.0
    %993 = vmatpush1.msra.mxu0 0.0
    %994 = vmatprep.subr.mxu0 0.0
    %995 = vmatpush1.msra.mxu0 0.0
    %996 = vmatprep.subr.mxu0 0.0
    %997 = vmatpush1.msra.mxu0 0.0
    %998 = vmatprep.subr.mxu0 0.0
    %999 = vmatpush1.msra.mxu0 0.0
    %1000 = vmatprep.subr.mxu0 0.0
    %1001 = vmatpush1.msra.mxu0 0.0
    %1002 = vmatprep.subr.mxu0 0.0
    %1003 = vmatpush1.msra.mxu0 0.0
    %1004 = vmatprep.subr.mxu0 0.0
    %1005 = vmatpush1.msra.mxu0 0.0
    %1006 = vmatprep.subr.mxu0 0.0
    %1007 = vmatpush1.msra.mxu0 0.0
    %1008 = vmatprep.subr.mxu0 0.0
    %1009 = vmatpush1.msra.mxu0 0.0
    %1010 = vmatprep.subr.mxu0 0.0
    %1011 = vmatpush1.msra.mxu0 %v975
    %1012 = vmatprep.subr.mxu0 0.0
    %1013 = vmatpush1.msra.mxu0 %v974
    %1014 = vmatprep.subr.mxu0 0.0
    %1015 = vmatpush1.msra.mxu0 %v973
    %1016 = vmatprep.subr.mxu0 0.0
    %1017 = vmatpush1.msra.mxu0 %v972
    %1018 = vmatprep.subr.mxu0 0.0
    %1019 = vmatpush2.msra.mxu0 0.0
    %1020 = vmatprep.subr.mxu0 0.0
    %1021 = vmatpush2.msra.mxu0 0.0
    %1022 = vmatprep.subr.mxu0 0.0
    %1023 = vmatpush2.msra.mxu0 0.0
    %1024 = vmatprep.subr.mxu0 0.0
    %1025 = vmatpush2.msra.mxu0 0.0
    %1026 = vmatprep.subr.mxu0 0.0
    %1027 = vmatpush2.msra.mxu0 0.0
    %1028 = vmatprep.subr.mxu0 0.0
    %1029 = vmatpush2.msra.mxu0 0.0
    %1030 = vmatprep.subr.mxu0 0.0
    %1031 = vmatpush2.msra.mxu0 0.0
    %1032 = vmatprep.subr.mxu0 0.0
    %1033 = vmatpush2.msra.mxu0 0.0
    %1034 = vmatprep.subr.mxu0 0.0
    %1035 = vmatpush2.msra.mxu0 0.0
    %1036 = vmatprep.subr.mxu0 0.0
    %1037 = vmatpush2.msra.mxu0 0.0
    %1038 = vmatprep.subr.mxu0 0.0
    %1039 = vmatpush2.msra.mxu0 0.0
    %1040 = vmatprep.subr.mxu0 0.0
    %1041 = vmatpush2.msra.mxu0 0.0
    %1042 = vmatprep.subr.mxu0 0.0
    %1043 = vmatpush2.msra.mxu0 0.0
    %1044 = vmatprep.subr.mxu0 0.0
    %1045 = vmatpush2.msra.mxu0 0.0
    %1046 = vmatprep.subr.mxu0 0.0
    %1047 = vmatpush2.msra.mxu0 0.0
    %1048 = vmatprep.subr.mxu0 0.0
    %1049 = vmatpush2.msra.mxu0 0.0
    %1050 = vmatprep.mubr.f32.mxu0 0.0
    %1051 = vmatmul.mubr.f32.gmra.mxu0 %v981
    %v1052 = vpop.f32.mrf.mxu0
    %v1053 = vadd.f32 %v979, %v1052
    %v1054 = vpop.f32.mrf.mxu0
    %1055 = vmatprep.mubr.f32.mxu0 0.0
    %1056 = vmatmul.mubr.f32.gmra.mxu0 %v984
    %v1057 = vpop.f32.mrf.mxu0
    %v1058 = vadd.f32 %v979, %v1057
    %v1059 = vpop.f32.mrf.mxu0
    %1060 = vdwg.mxu0
    %s1061 = scalar_lea.vmem [#allocation2], 160
    %v1062 = vld [vmem:[%s1061] sm:$0xff]
    %v1063 = vld [vmem:[%s1061 + $0x8] sm:$0xff]
    %v1064 = vld [vmem:[%s1061 + $0x10] sm:$0xff]
    %v1065 = vld [vmem:[%s1061 + $0x18] sm:$0xff]
    %v1066 = vlaneseq
    %v1067 = vshrl.u32 %v1066, 7
    %v1068 = vsub.s32 5, %v1067
    %v1069 = vrot.slane %v225, %v1068
    %v1071 = vsel %vm135, %v41, 0
    %v1074 = vsel %vm135, %v42, 0
    %1076 = vmatprep.subr.mxu0 0.0
    %1077 = vmatpush1.msra.mxu0 0.0
    %1078 = vmatprep.subr.mxu0 0.0
    %1079 = vmatpush1.msra.mxu0 0.0
    %1080 = vmatprep.subr.mxu0 0.0
    %1081 = vmatpush1.msra.mxu0 0.0
    %1082 = vmatprep.subr.mxu0 0.0
    %1083 = vmatpush1.msra.mxu0 0.0
    %1084 = vmatprep.subr.mxu0 0.0
    %1085 = vmatpush1.msra.mxu0 0.0
    %1086 = vmatprep.subr.mxu0 0.0
    %1087 = vmatpush1.msra.mxu0 0.0
    %1088 = vmatprep.subr.mxu0 0.0
    %1089 = vmatpush1.msra.mxu0 0.0
    %1090 = vmatprep.subr.mxu0 0.0
    %1091 = vmatpush1.msra.mxu0 0.0
    %1092 = vmatprep.subr.mxu0 0.0
    %1093 = vmatpush1.msra.mxu0 0.0
    %1094 = vmatprep.subr.mxu0 0.0
    %1095 = vmatpush1.msra.mxu0 0.0
    %1096 = vmatprep.subr.mxu0 0.0
    %1097 = vmatpush1.msra.mxu0 0.0
    %1098 = vmatprep.subr.mxu0 0.0
    %1099 = vmatpush1.msra.mxu0 0.0
    %1100 = vmatprep.subr.mxu0 0.0
    %1101 = vmatpush1.msra.mxu0 %v1065
    %1102 = vmatprep.subr.mxu0 0.0
    %1103 = vmatpush1.msra.mxu0 %v1064
    %1104 = vmatprep.subr.mxu0 0.0
    %1105 = vmatpush1.msra.mxu0 %v1063
    %1106 = vmatprep.subr.mxu0 0.0
    %1107 = vmatpush1.msra.mxu0 %v1062
    %1108 = vmatprep.subr.mxu0 0.0
    %1109 = vmatpush2.msra.mxu0 0.0
    %1110 = vmatprep.subr.mxu0 0.0
    %1111 = vmatpush2.msra.mxu0 0.0
    %1112 = vmatprep.subr.mxu0 0.0
    %1113 = vmatpush2.msra.mxu0 0.0
    %1114 = vmatprep.subr.mxu0 0.0
    %1115 = vmatpush2.msra.mxu0 0.0
    %1116 = vmatprep.subr.mxu0 0.0
    %1117 = vmatpush2.msra.mxu0 0.0
    %1118 = vmatprep.subr.mxu0 0.0
    %1119 = vmatpush2.msra.mxu0 0.0
    %1120 = vmatprep.subr.mxu0 0.0
    %1121 = vmatpush2.msra.mxu0 0.0
    %1122 = vmatprep.subr.mxu0 0.0
    %1123 = vmatpush2.msra.mxu0 0.0
    %1124 = vmatprep.subr.mxu0 0.0
    %1125 = vmatpush2.msra.mxu0 0.0
    %1126 = vmatprep.subr.mxu0 0.0
    %1127 = vmatpush2.msra.mxu0 0.0
    %1128 = vmatprep.subr.mxu0 0.0
    %1129 = vmatpush2.msra.mxu0 0.0
    %1130 = vmatprep.subr.mxu0 0.0
    %1131 = vmatpush2.msra.mxu0 0.0
    %1132 = vmatprep.subr.mxu0 0.0
    %1133 = vmatpush2.msra.mxu0 0.0
    %1134 = vmatprep.subr.mxu0 0.0
    %1135 = vmatpush2.msra.mxu0 0.0
    %1136 = vmatprep.subr.mxu0 0.0
    %1137 = vmatpush2.msra.mxu0 0.0
    %1138 = vmatprep.subr.mxu0 0.0
    %1139 = vmatpush2.msra.mxu0 0.0
    %1140 = vmatprep.mubr.f32.mxu0 0.0
    %1141 = vmatmul.mubr.f32.gmra.mxu0 %v1071
    %v1142 = vpop.f32.mrf.mxu0
    %v1143 = vadd.f32 %v1069, %v1142
    %v1144 = vpop.f32.mrf.mxu0
    %1145 = vmatprep.mubr.f32.mxu0 0.0
    %1146 = vmatmul.mubr.f32.gmra.mxu0 %v1074
    %v1147 = vpop.f32.mrf.mxu0
    %v1148 = vadd.f32 %v1069, %v1147
    %v1149 = vpop.f32.mrf.mxu0
    %1150 = vdwg.mxu0
    %s1151 = scalar_lea.vmem [#allocation2], 192
    %v1152 = vld [vmem:[%s1151] sm:$0xff]
    %v1153 = vld [vmem:[%s1151 + $0x8] sm:$0xff]
    %v1154 = vld [vmem:[%s1151 + $0x10] sm:$0xff]
    %v1155 = vld [vmem:[%s1151 + $0x18] sm:$0xff]
    %v1156 = vlaneseq
    %v1157 = vshrl.u32 %v1156, 7
    %v1158 = vsub.s32 6, %v1157
    %v1159 = vrot.slane %v225, %v1158
    %1160 = vmatprep.subr.mxu0 0.0
    %1161 = vmatpush1.msra.mxu0 0.0
    %1162 = vmatprep.subr.mxu0 0.0
    %1163 = vmatpush1.msra.mxu0 0.0
    %1164 = vmatprep.subr.mxu0 0.0
    %1165 = vmatpush1.msra.mxu0 0.0
    %1166 = vmatprep.subr.mxu0 0.0
    %1167 = vmatpush1.msra.mxu0 0.0
    %1168 = vmatprep.subr.mxu0 0.0
    %1169 = vmatpush1.msra.mxu0 0.0
    %1170 = vmatprep.subr.mxu0 0.0
    %1171 = vmatpush1.msra.mxu0 0.0
    %1172 = vmatprep.subr.mxu0 0.0
    %1173 = vmatpush1.msra.mxu0 0.0
    %1174 = vmatprep.subr.mxu0 0.0
    %1175 = vmatpush1.msra.mxu0 0.0
    %1176 = vmatprep.subr.mxu0 0.0
    %1177 = vmatpush1.msra.mxu0 0.0
    %1178 = vmatprep.subr.mxu0 0.0
    %1179 = vmatpush1.msra.mxu0 0.0
    %1180 = vmatprep.subr.mxu0 0.0
    %1181 = vmatpush1.msra.mxu0 0.0
    %1182 = vmatprep.subr.mxu0 0.0
    %1183 = vmatpush1.msra.mxu0 0.0
    %1184 = vmatprep.subr.mxu0 0.0
    %1185 = vmatpush1.msra.mxu0 %v1155
    %1186 = vmatprep.subr.mxu0 0.0
    %1187 = vmatpush1.msra.mxu0 %v1154
    %1188 = vmatprep.subr.mxu0 0.0
    %1189 = vmatpush1.msra.mxu0 %v1153
    %1190 = vmatprep.subr.mxu0 0.0
    %1191 = vmatpush1.msra.mxu0 %v1152
    %1192 = vmatprep.subr.mxu0 0.0
    %1193 = vmatpush2.msra.mxu0 0.0
    %1194 = vmatprep.subr.mxu0 0.0
    %1195 = vmatpush2.msra.mxu0 0.0
    %1196 = vmatprep.subr.mxu0 0.0
    %1197 = vmatpush2.msra.mxu0 0.0
    %1198 = vmatprep.subr.mxu0 0.0
    %1199 = vmatpush2.msra.mxu0 0.0
    %1200 = vmatprep.subr.mxu0 0.0
    %1201 = vmatpush2.msra.mxu0 0.0
    %1202 = vmatprep.subr.mxu0 0.0
    %1203 = vmatpush2.msra.mxu0 0.0
    %1204 = vmatprep.subr.mxu0 0.0
    %1205 = vmatpush2.msra.mxu0 0.0
    %1206 = vmatprep.subr.mxu0 0.0
    %1207 = vmatpush2.msra.mxu0 0.0
    %1208 = vmatprep.subr.mxu0 0.0
    %1209 = vmatpush2.msra.mxu0 0.0
    %1210 = vmatprep.subr.mxu0 0.0
    %1211 = vmatpush2.msra.mxu0 0.0
    %1212 = vmatprep.subr.mxu0 0.0
    %1213 = vmatpush2.msra.mxu0 0.0
    %1214 = vmatprep.subr.mxu0 0.0
    %1215 = vmatpush2.msra.mxu0 0.0
    %1216 = vmatprep.subr.mxu0 0.0
    %1217 = vmatpush2.msra.mxu0 0.0
    %1218 = vmatprep.subr.mxu0 0.0
    %1219 = vmatpush2.msra.mxu0 0.0
    %1220 = vmatprep.subr.mxu0 0.0
    %1221 = vmatpush2.msra.mxu0 0.0
    %1222 = vmatprep.subr.mxu0 0.0
    %1223 = vmatpush2.msra.mxu0 0.0
    %1224 = vmatprep.mubr.f32.mxu0 0.0
    %1225 = vmatmul.mubr.f32.gmra.mxu0 %v1071
    %v1226 = vpop.f32.mrf.mxu0
    %v1227 = vadd.f32 %v1159, %v1226
    %v1228 = vpop.f32.mrf.mxu0
    %1229 = vmatprep.mubr.f32.mxu0 0.0
    %1230 = vmatmul.mubr.f32.gmra.mxu0 %v1074
    %v1231 = vpop.f32.mrf.mxu0
    %v1232 = vadd.f32 %v1159, %v1231
    %v1233 = vpop.f32.mrf.mxu0
    %1234 = vdwg.mxu0
    %s1235 = scalar_lea.vmem [#allocation2], 224
    %v1236 = vld [vmem:[%s1235] sm:$0xff]
    %v1237 = vld [vmem:[%s1235 + $0x8] sm:$0xff]
    %v1238 = vld [vmem:[%s1235 + $0x10] sm:$0xff]
    %v1239 = vld [vmem:[%s1235 + $0x18] sm:$0xff]
    %1240 = vxpose.xlu0.b32.start [1/16] %v1143, 128
    %1241 = vxpose.xlu0.b32.cont [2/16] %v1148, 128
    %1242 = vxpose.xlu0.b32.cont [3/16] 0.0, 128
    %1243 = vxpose.xlu0.b32.cont [4/16] 0.0, 128
    %1244 = vxpose.xlu0.b32.cont [5/16] 0.0, 128
    %1245 = vxpose.xlu0.b32.cont [6/16] 0.0, 128
    %1246 = vxpose.xlu0.b32.cont [7/16] 0.0, 128
    %1247 = vxpose.xlu0.b32.cont [8/16] 0.0, 128
    %1248 = vxpose.xlu0.b32.cont [9/16] 0.0, 128
    %1249 = vxpose.xlu0.b32.cont [10/16] 0.0, 128
    %1250 = vxpose.xlu0.b32.cont [11/16] 0.0, 128
    %1251 = vxpose.xlu0.b32.cont [12/16] 0.0, 128
    %1252 = vxpose.xlu0.b32.cont [13/16] 0.0, 128
    %1253 = vxpose.xlu0.b32.cont [14/16] 0.0, 128
    %1254 = vxpose.xlu0.b32.cont [15/16] 0.0, 128
    %1255 = vxpose.xlu0.b32.end [16/16] 0.0, 128
    %v1256 = vpop.trf.xlu0
    %v1257 = vpop.trf.xlu0
    %v1258 = vpop.trf.xlu0
    %v1259 = vpop.trf.xlu0
    %v1260 = vpop.trf.xlu0
    %v1261 = vpop.trf.xlu0
    %v1262 = vpop.trf.xlu0
    %v1263 = vpop.trf.xlu0
    %v1264 = vpop.trf.xlu0
    %v1265 = vpop.trf.xlu0
    %v1266 = vpop.trf.xlu0
    %v1267 = vpop.trf.xlu0
    %v1268 = vpop.trf.xlu0
    %v1269 = vpop.trf.xlu0
    %v1270 = vpop.trf.xlu0
    %v1271 = vpop.trf.xlu0
    %1276 = vrot.lane.b32.xlu0 %v1256, 16
    %v1277 = vpop.permute.xlu0 %1276
    %1278 = vrot.lane.b32.xlu0 %v1257, 16
    %v1279 = vpop.permute.xlu0 %1278
    %1280 = vrot.lane.b32.xlu0 %v1258, 16
    %v1281 = vpop.permute.xlu0 %1280
    %1282 = vrot.lane.b32.xlu0 %v1259, 16
    %v1283 = vpop.permute.xlu0 %1282
    %1288 = vrot.lane.b32.xlu0 %v1256, 32
    %v1289 = vpop.permute.xlu0 %1288
    %1290 = vrot.lane.b32.xlu0 %v1257, 32
    %v1291 = vpop.permute.xlu0 %1290
    %1292 = vrot.lane.b32.xlu0 %v1258, 32
    %v1293 = vpop.permute.xlu0 %1292
    %1294 = vrot.lane.b32.xlu0 %v1259, 32
    %v1295 = vpop.permute.xlu0 %1294
    %1300 = vrot.lane.b32.xlu0 %v1256, 48
    %v1301 = vpop.permute.xlu0 %1300
    %1302 = vrot.lane.b32.xlu0 %v1257, 48
    %v1303 = vpop.permute.xlu0 %1302
    %1304 = vrot.lane.b32.xlu0 %v1258, 48
    %v1305 = vpop.permute.xlu0 %1304
    %1306 = vrot.lane.b32.xlu0 %v1259, 48
    %v1307 = vpop.permute.xlu0 %1306
    %v1312 = vsel %vm130, %v1256, %v1277
    %v1313 = vsel %vm130, %v1257, %v1279
    %v1314 = vsel %vm130, %v1258, %v1281
    %v1315 = vsel %vm130, %v1259, %v1283
    %v1316 = vsel %vm135, %v1312, %v1289
    %v1317 = vsel %vm135, %v1313, %v1291
    %v1318 = vsel %vm135, %v1314, %v1293
    %v1319 = vsel %vm135, %v1315, %v1295
    %v1320 = vsel %vm140, %v1316, %v1301
    %v1321 = vsel %vm140, %v1317, %v1303
    %v1322 = vsel %vm140, %v1318, %v1305
    %v1323 = vsel %vm140, %v1319, %v1307
    %v1324 = vmul.f32 %v1320, %v141
    %v1325 = vmul.f32 %v1321, %v142
    %v1326 = vmul.f32 %v1322, %v143
    %v1327 = vmul.f32 %v1323, %v144
    %v1328 = vmul.f32 %v1227, %v48
    %v1329 = vmul.f32 %v1232, %v48
    %v1330 = vmul.f32 %v1227, %v52
    %v1331 = vmul.f32 %v1232, %v52
    %v1332 = vmul.f32 %v1227, %v56
    %v1333 = vmul.f32 %v1232, %v56
    %v1334 = vmul.f32 %v1227, %v60
    %v1335 = vmul.f32 %v1232, %v60
    %v1336 = vmul.f32 %v1053, 0.35355338
    %v1337 = vmul.f32 %v1058, 0.35355338
    %v1339 = vsel %vm135, %v1336, 0
    %v1342 = vsel %vm135, %v1337, 0
    %1344 = vmatprep.subr.mxu0 0.0
    %1345 = vmatpush1.msra.mxu0 0.0
    %1346 = vmatprep.subr.mxu0 0.0
    %1347 = vmatpush1.msra.mxu0 0.0
    %1348 = vmatprep.subr.mxu0 0.0
    %1349 = vmatpush1.msra.mxu0 0.0
    %1350 = vmatprep.subr.mxu0 0.0
    %1351 = vmatpush1.msra.mxu0 0.0
    %1352 = vmatprep.subr.mxu0 0.0
    %1353 = vmatpush1.msra.mxu0 0.0
    %1354 = vmatprep.subr.mxu0 0.0
    %1355 = vmatpush1.msra.mxu0 0.0
    %1356 = vmatprep.subr.mxu0 0.0
    %1357 = vmatpush1.msra.mxu0 0.0
    %1358 = vmatprep.subr.mxu0 0.0
    %1359 = vmatpush1.msra.mxu0 0.0
    %1360 = vmatprep.subr.mxu0 0.0
    %1361 = vmatpush1.msra.mxu0 0.0
    %1362 = vmatprep.subr.mxu0 0.0
    %1363 = vmatpush1.msra.mxu0 0.0
    %1364 = vmatprep.subr.mxu0 0.0
    %1365 = vmatpush1.msra.mxu0 0.0
    %1366 = vmatprep.subr.mxu0 0.0
    %1367 = vmatpush1.msra.mxu0 0.0
    %1368 = vmatprep.subr.mxu0 0.0
    %1369 = vmatpush1.msra.mxu0 %v1327
    %1370 = vmatprep.subr.mxu0 0.0
    %1371 = vmatpush1.msra.mxu0 %v1326
    %1372 = vmatprep.subr.mxu0 0.0
    %1373 = vmatpush1.msra.mxu0 %v1325
    %1374 = vmatprep.subr.mxu0 0.0
    %1375 = vmatpush1.msra.mxu0 %v1324
    %1376 = vmatprep.subr.mxu0 0.0
    %1377 = vmatpush2.msra.mxu0 0.0
    %1378 = vmatprep.subr.mxu0 0.0
    %1379 = vmatpush2.msra.mxu0 0.0
    %1380 = vmatprep.subr.mxu0 0.0
    %1381 = vmatpush2.msra.mxu0 0.0
    %1382 = vmatprep.subr.mxu0 0.0
    %1383 = vmatpush2.msra.mxu0 0.0
    %1384 = vmatprep.subr.mxu0 0.0
    %1385 = vmatpush2.msra.mxu0 0.0
    %1386 = vmatprep.subr.mxu0 0.0
    %1387 = vmatpush2.msra.mxu0 0.0
    %1388 = vmatprep.subr.mxu0 0.0
    %1389 = vmatpush2.msra.mxu0 0.0
    %1390 = vmatprep.subr.mxu0 0.0
    %1391 = vmatpush2.msra.mxu0 0.0
    %1392 = vmatprep.subr.mxu0 0.0
    %1393 = vmatpush2.msra.mxu0 0.0
    %1394 = vmatprep.subr.mxu0 0.0
    %1395 = vmatpush2.msra.mxu0 0.0
    %1396 = vmatprep.subr.mxu0 0.0
    %1397 = vmatpush2.msra.mxu0 0.0
    %1398 = vmatprep.subr.mxu0 0.0
    %1399 = vmatpush2.msra.mxu0 0.0
    %1400 = vmatprep.subr.mxu0 0.0
    %1401 = vmatpush2.msra.mxu0 0.0
    %1402 = vmatprep.subr.mxu0 0.0
    %1403 = vmatpush2.msra.mxu0 0.0
    %1404 = vmatprep.subr.mxu0 0.0
    %1405 = vmatpush2.msra.mxu0 0.0
    %1406 = vmatprep.subr.mxu0 0.0
    %1407 = vmatpush2.msra.mxu0 0.0
    %1408 = vmatprep.mubr.f32.mxu0 0.0
    %1409 = vmatmul.mubr.f32.gmra.mxu0 %v1339
    %v1410 = vpop.f32.mrf.mxu0
    %v1411 = vadd.f32 %v223, %v1410
    %v1412 = vpop.f32.mrf.mxu0
    %1413 = vmatprep.mubr.f32.mxu0 0.0
    %1414 = vmatmul.mubr.f32.gmra.mxu0 %v1342
    %v1415 = vpop.f32.mrf.mxu0
    %v1416 = vadd.f32 %v224, %v1415
    %v1417 = vpop.f32.mrf.mxu0
    %1418 = vdwg.mxu0
    %v1419 = vmul.f32 %v1411, 1.442695
    %v1420 = vpow.pop %v1419
    %v1421 = vmul.f32 %v1416, 1.442695
    %v1422 = vpow.pop %v1421
    %v1424 = vsel %vm672, %v1420, 0
    %v1427 = vsel %vm672, %v1422, 0
    %1429 = vmatprep.subr.mxu0 0.0
    %1430 = vmatpush1.msra.mxu0 0.0
    %1431 = vmatprep.subr.mxu0 0.0
    %1432 = vmatpush1.msra.mxu0 0.0
    %1433 = vmatprep.subr.mxu0 0.0
    %1434 = vmatpush1.msra.mxu0 0.0
    %1435 = vmatprep.subr.mxu0 0.0
    %1436 = vmatpush1.msra.mxu0 0.0
    %1437 = vmatprep.subr.mxu0 0.0
    %1438 = vmatpush1.msra.mxu0 0.0
    %1439 = vmatprep.subr.mxu0 0.0
    %1440 = vmatpush1.msra.mxu0 0.0
    %1441 = vmatprep.subr.mxu0 0.0
    %1442 = vmatpush1.msra.mxu0 0.0
    %1443 = vmatprep.subr.mxu0 0.0
    %1444 = vmatpush1.msra.mxu0 0.0
    %1445 = vmatprep.subr.mxu0 0.0
    %1446 = vmatpush1.msra.mxu0 %v156
    %1447 = vmatprep.subr.mxu0 0.0
    %1448 = vmatpush1.msra.mxu0 %v156
    %1449 = vmatprep.subr.mxu0 0.0
    %1450 = vmatpush1.msra.mxu0 %v152
    %1451 = vmatprep.subr.mxu0 0.0
    %1452 = vmatpush1.msra.mxu0 %v152
    %1453 = vmatprep.subr.mxu0 0.0
    %1454 = vmatpush1.msra.mxu0 %v148
    %1455 = vmatprep.subr.mxu0 0.0
    %1456 = vmatpush1.msra.mxu0 %v148
    %1457 = vmatprep.subr.mxu0 0.0
    %1458 = vmatpush1.msra.mxu0 %v146
    %1459 = vmatprep.subr.mxu0 0.0
    %1460 = vmatpush1.msra.mxu0 %v146
    %1461 = vmatprep.subr.mxu0 0.0
    %1462 = vmatpush2.msra.mxu0 0.0
    %1463 = vmatprep.subr.mxu0 0.0
    %1464 = vmatpush2.msra.mxu0 0.0
    %1465 = vmatprep.subr.mxu0 0.0
    %1466 = vmatpush2.msra.mxu0 0.0
    %1467 = vmatprep.subr.mxu0 0.0
    %1468 = vmatpush2.msra.mxu0 0.0
    %1469 = vmatprep.subr.mxu0 0.0
    %1470 = vmatpush2.msra.mxu0 0.0
    %1471 = vmatprep.subr.mxu0 0.0
    %1472 = vmatpush2.msra.mxu0 0.0
    %1473 = vmatprep.subr.mxu0 0.0
    %1474 = vmatpush2.msra.mxu0 0.0
    %1475 = vmatprep.subr.mxu0 0.0
    %1476 = vmatpush2.msra.mxu0 0.0
    %1477 = vmatprep.subr.mxu0 0.0
    %1478 = vmatpush2.msra.mxu0 0.0
    %1479 = vmatprep.subr.mxu0 0.0
    %1480 = vmatpush2.msra.mxu0 0.0
    %1481 = vmatprep.subr.mxu0 0.0
    %1482 = vmatpush2.msra.mxu0 0.0
    %1483 = vmatprep.subr.mxu0 0.0
    %1484 = vmatpush2.msra.mxu0 0.0
    %1485 = vmatprep.subr.mxu0 0.0
    %1486 = vmatpush2.msra.mxu0 0.0
    %1487 = vmatprep.subr.mxu0 0.0
    %1488 = vmatpush2.msra.mxu0 0.0
    %1489 = vmatprep.subr.mxu0 0.0
    %1490 = vmatpush2.msra.mxu0 0.0
    %1491 = vmatprep.subr.mxu0 0.0
    %1492 = vmatpush2.msra.mxu0 0.0
    %1493 = vmatprep.mubr.f32.mxu0 0.0
    %1494 = vmatmul.mubr.f32.gmra.mxu0 %v1424
    %v1495 = vpop.f32.mrf.mxu0
    %v1496 = vadd.f32 0.0, %v1495
    %v1497 = vpop.f32.mrf.mxu0
    %1498 = vmatprep.mubr.f32.mxu0 0.0
    %1499 = vmatmul.mubr.f32.gmra.mxu0 %v1427
    %v1500 = vpop.f32.mrf.mxu0
    %v1501 = vadd.f32 0.0, %v1500
    %v1502 = vpop.f32.mrf.mxu0
    %1503 = vdwg.mxu0
    %v1504 = vrcp.pop %v1496
    %v1505 = vrcp.pop %v1501
    %v1506 = vmul.f32 %v1496, %v1504
    %v1507 = vmul.f32 %v1501, %v1505
    %v1508 = vsub.f32 2.0, %v1506
    %v1509 = vsub.f32 2.0, %v1507
    %v1510 = vmul.f32 %v1504, %v1508
    %v1511 = vmul.f32 %v1505, %v1509
    %v1512 = vmul.f32 %v1420, %v1510
    %v1513 = vmul.f32 %v1422, %v1511
    %v1515 = vsel %vm672, %v1512, 0
    %v1518 = vsel %vm672, %v1513, 0
    %1520 = vmatprep.subr.mxu0 0.0
    %1521 = vmatpush1.msra.mxu0 0.0
    %1522 = vmatprep.subr.mxu0 0.0
    %1523 = vmatpush1.msra.mxu0 0.0
    %1524 = vmatprep.subr.mxu0 0.0
    %1525 = vmatpush1.msra.mxu0 0.0
    %1526 = vmatprep.subr.mxu0 0.0
    %1527 = vmatpush1.msra.mxu0 0.0
    %1528 = vmatprep.subr.mxu0 0.0
    %1529 = vmatpush1.msra.mxu0 0.0
    %1530 = vmatprep.subr.mxu0 0.0
    %1531 = vmatpush1.msra.mxu0 0.0
    %1532 = vmatprep.subr.mxu0 0.0
    %1533 = vmatpush1.msra.mxu0 0.0
    %1534 = vmatprep.subr.mxu0 0.0
    %1535 = vmatpush1.msra.mxu0 0.0
    %1536 = vmatprep.subr.mxu0 0.0
    %1537 = vmatpush1.msra.mxu0 %v1335
    %1538 = vmatprep.subr.mxu0 0.0
    %1539 = vmatpush1.msra.mxu0 %v1334
    %1540 = vmatprep.subr.mxu0 0.0
    %1541 = vmatpush1.msra.mxu0 %v1333
    %1542 = vmatprep.subr.mxu0 0.0
    %1543 = vmatpush1.msra.mxu0 %v1332
    %1544 = vmatprep.subr.mxu0 0.0
    %1545 = vmatpush1.msra.mxu0 %v1331
    %1546 = vmatprep.subr.mxu0 0.0
    %1547 = vmatpush1.msra.mxu0 %v1330
    %1548 = vmatprep.subr.mxu0 0.0
    %1549 = vmatpush1.msra.mxu0 %v1329
    %1550 = vmatprep.subr.mxu0 0.0
    %1551 = vmatpush1.msra.mxu0 %v1328
    %1552 = vmatprep.subr.mxu0 0.0
    %1553 = vmatpush2.msra.mxu0 0.0
    %1554 = vmatprep.subr.mxu0 0.0
    %1555 = vmatpush2.msra.mxu0 0.0
    %1556 = vmatprep.subr.mxu0 0.0
    %1557 = vmatpush2.msra.mxu0 0.0
    %1558 = vmatprep.subr.mxu0 0.0
    %1559 = vmatpush2.msra.mxu0 0.0
    %1560 = vmatprep.subr.mxu0 0.0
    %1561 = vmatpush2.msra.mxu0 0.0
    %1562 = vmatprep.subr.mxu0 0.0
    %1563 = vmatpush2.msra.mxu0 0.0
    %1564 = vmatprep.subr.mxu0 0.0
    %1565 = vmatpush2.msra.mxu0 0.0
    %1566 = vmatprep.subr.mxu0 0.0
    %1567 = vmatpush2.msra.mxu0 0.0
    %1568 = vmatprep.subr.mxu0 0.0
    %1569 = vmatpush2.msra.mxu0 0.0
    %1570 = vmatprep.subr.mxu0 0.0
    %1571 = vmatpush2.msra.mxu0 0.0
    %1572 = vmatprep.subr.mxu0 0.0
    %1573 = vmatpush2.msra.mxu0 0.0
    %1574 = vmatprep.subr.mxu0 0.0
    %1575 = vmatpush2.msra.mxu0 0.0
    %1576 = vmatprep.subr.mxu0 0.0
    %1577 = vmatpush2.msra.mxu0 0.0
    %1578 = vmatprep.subr.mxu0 0.0
    %1579 = vmatpush2.msra.mxu0 0.0
    %1580 = vmatprep.subr.mxu0 0.0
    %1581 = vmatpush2.msra.mxu0 0.0
    %1582 = vmatprep.subr.mxu0 0.0
    %1583 = vmatpush2.msra.mxu0 0.0
    %1584 = vmatprep.mubr.f32.mxu0 0.0
    %1585 = vmatmul.mubr.f32.gmra.mxu0 %v1515
    %v1586 = vpop.f32.mrf.mxu0
    %v1587 = vadd.f32 0.0, %v1586
    %v1588 = vpop.f32.mrf.mxu0
    %1589 = vmatprep.mubr.f32.mxu0 0.0
    %1590 = vmatmul.mubr.f32.gmra.mxu0 %v1518
    %v1591 = vpop.f32.mrf.mxu0
    %v1592 = vadd.f32 0.0, %v1591
    %v1593 = vpop.f32.mrf.mxu0
    %1594 = vdwg.mxu0
    %v1595 = vlaneseq
    %v1596 = vshrl.u32 %v1595, 7
    %v1597 = vsub.s32 7, %v1596
    %v1598 = vrot.slane %v225, %v1597
    %v1600 = vsel %vm135, %v1587, 0
    %v1603 = vsel %vm135, %v1592, 0
    %1605 = vmatprep.subr.mxu0 0.0
    %1606 = vmatpush1.msra.mxu0 0.0
    %1607 = vmatprep.subr.mxu0 0.0
    %1608 = vmatpush1.msra.mxu0 0.0
    %1609 = vmatprep.subr.mxu0 0.0
    %1610 = vmatpush1.msra.mxu0 0.0
    %1611 = vmatprep.subr.mxu0 0.0
    %1612 = vmatpush1.msra.mxu0 0.0
    %1613 = vmatprep.subr.mxu0 0.0
    %1614 = vmatpush1.msra.mxu0 0.0
    %1615 = vmatprep.subr.mxu0 0.0
    %1616 = vmatpush1.msra.mxu0 0.0
    %1617 = vmatprep.subr.mxu0 0.0
    %1618 = vmatpush1.msra.mxu0 0.0
    %1619 = vmatprep.subr.mxu0 0.0
    %1620 = vmatpush1.msra.mxu0 0.0
    %1621 = vmatprep.subr.mxu0 0.0
    %1622 = vmatpush1.msra.mxu0 0.0
    %1623 = vmatprep.subr.mxu0 0.0
    %1624 = vmatpush1.msra.mxu0 0.0
    %1625 = vmatprep.subr.mxu0 0.0
    %1626 = vmatpush1.msra.mxu0 0.0
    %1627 = vmatprep.subr.mxu0 0.0
    %1628 = vmatpush1.msra.mxu0 0.0
    %1629 = vmatprep.subr.mxu0 0.0
    %1630 = vmatpush1.msra.mxu0 %v1239
    %1631 = vmatprep.subr.mxu0 0.0
    %1632 = vmatpush1.msra.mxu0 %v1238
    %1633 = vmatprep.subr.mxu0 0.0
    %1634 = vmatpush1.msra.mxu0 %v1237
    %1635 = vmatprep.subr.mxu0 0.0
    %1636 = vmatpush1.msra.mxu0 %v1236
    %1637 = vmatprep.subr.mxu0 0.0
    %1638 = vmatpush2.msra.mxu0 0.0
    %1639 = vmatprep.subr.mxu0 0.0
    %1640 = vmatpush2.msra.mxu0 0.0
    %1641 = vmatprep.subr.mxu0 0.0
    %1642 = vmatpush2.msra.mxu0 0.0
    %1643 = vmatprep.subr.mxu0 0.0
    %1644 = vmatpush2.msra.mxu0 0.0
    %1645 = vmatprep.subr.mxu0 0.0
    %1646 = vmatpush2.msra.mxu0 0.0
    %1647 = vmatprep.subr.mxu0 0.0
    %1648 = vmatpush2.msra.mxu0 0.0
    %1649 = vmatprep.subr.mxu0 0.0
    %1650 = vmatpush2.msra.mxu0 0.0
    %1651 = vmatprep.subr.mxu0 0.0
    %1652 = vmatpush2.msra.mxu0 0.0
    %1653 = vmatprep.subr.mxu0 0.0
    %1654 = vmatpush2.msra.mxu0 0.0
    %1655 = vmatprep.subr.mxu0 0.0
    %1656 = vmatpush2.msra.mxu0 0.0
    %1657 = vmatprep.subr.mxu0 0.0
    %1658 = vmatpush2.msra.mxu0 0.0
    %1659 = vmatprep.subr.mxu0 0.0
    %1660 = vmatpush2.msra.mxu0 0.0
    %1661 = vmatprep.subr.mxu0 0.0
    %1662 = vmatpush2.msra.mxu0 0.0
    %1663 = vmatprep.subr.mxu0 0.0
    %1664 = vmatpush2.msra.mxu0 0.0
    %1665 = vmatprep.subr.mxu0 0.0
    %1666 = vmatpush2.msra.mxu0 0.0
    %1667 = vmatprep.subr.mxu0 0.0
    %1668 = vmatpush2.msra.mxu0 0.0
    %1669 = vmatprep.mubr.f32.mxu0 0.0
    %1670 = vmatmul.mubr.f32.gmra.mxu0 %v1600
    %v1671 = vpop.f32.mrf.mxu0
    %v1672 = vadd.f32 %v1598, %v1671
    %v1673 = vpop.f32.mrf.mxu0
    %1674 = vmatprep.mubr.f32.mxu0 0.0
    %1675 = vmatmul.mubr.f32.gmra.mxu0 %v1603
    %v1676 = vpop.f32.mrf.mxu0
    %v1677 = vadd.f32 %v1598, %v1676
    %v1678 = vpop.f32.mrf.mxu0
    %1679 = vdwg.mxu0
    %v1680 = vadd.f32 %v969, %v1672
    %v1681 = vadd.f32 %v970, %v1677
    %v1682 = vsel %vm135, %v1680, 0.0
    %1683 = vadd.xlane.f32.xlu0 %v1682
    %v1684 = vpop.xlane.xlu0 %1683
    %v1685 = vsel %vm135, %v1681, 0.0
    %1686 = vadd.xlane.f32.xlu0 %v1685
    %v1687 = vpop.xlane.xlu0 %1686
    %v1688 = vmul.f32 %v1684, %v938
    %v1689 = vmul.f32 %v1687, %v938
    %v1690 = vsub.f32 %v1680, %v1688
    %v1691 = vsub.f32 %v1681, %v1689
    %v1692 = vmul.f32 %v1690, %v1690
    %v1693 = vmul.f32 %v1691, %v1691
    %v1694 = vsel %vm135, %v1692, 0.0
    %1695 = vadd.xlane.f32.xlu0 %v1694
    %v1696 = vpop.xlane.xlu0 %1695
    %v1697 = vsel %vm135, %v1693, 0.0
    %1698 = vadd.xlane.f32.xlu0 %v1697
    %v1699 = vpop.xlane.xlu0 %1698
    %v1700 = vmul.f32 %v1696, %v938
    %v1701 = vmul.f32 %v1699, %v938
    %v1702 = vadd.f32 %v1700, 1e-05
    %v1703 = vadd.f32 %v1701, 1e-05
    %v1704 = vrsqrt.pop %v1702
    %v1705 = vrsqrt.pop %v1703
    %v1706 = vmul.f32 %v1690, %v1704
    %v1707 = vmul.f32 %v1691, %v1705
    %v1708 = vlaneseq
    %v1709 = vshrl.u32 %v1708, 7
    %v1710 = vsub.s32 4, %v1709
    %v1711 = vrot.slane %v226, %v1710
    %v1712 = vmul.f32 %v1706, %v1711
    %v1713 = vmul.f32 %v1707, %v1711
    %v1714 = vlaneseq
    %v1715 = vshrl.u32 %v1714, 7
    %v1716 = vsub.s32 5, %v1715
    %v1717 = vrot.slane %v226, %v1716
    %v1718 = vadd.f32 %v1712, %v1717
    %v1719 = vadd.f32 %v1713, %v1717
    %v1720 = vld [vmem:[%s2] sm:$0xff]
    %v1721 = vld [vmem:[%s2 + $0x8] sm:$0xff]
    %v1722 = vld [vmem:[%s2 + $0x10] sm:$0xff]
    %v1723 = vld [vmem:[%s2 + $0x18] sm:$0xff]
    %v1724 = vlaneseq
    %v1725 = vshrl.u32 %v1724, 7
    %v1726 = vsub.s32 0, %v1725
    %v1727 = vrot.slane %v226, %v1726
    %v1729 = vsel %vm135, %v1718, 0
    %v1732 = vsel %vm135, %v1719, 0
    %1734 = vmatprep.subr.mxu0 0.0
    %1735 = vmatpush1.msra.mxu0 0.0
    %1736 = vmatprep.subr.mxu0 0.0
    %1737 = vmatpush1.msra.mxu0 0.0
    %1738 = vmatprep.subr.mxu0 0.0
    %1739 = vmatpush1.msra.mxu0 0.0
    %1740 = vmatprep.subr.mxu0 0.0
    %1741 = vmatpush1.msra.mxu0 0.0
    %1742 = vmatprep.subr.mxu0 0.0
    %1743 = vmatpush1.msra.mxu0 0.0
    %1744 = vmatprep.subr.mxu0 0.0
    %1745 = vmatpush1.msra.mxu0 0.0
    %1746 = vmatprep.subr.mxu0 0.0
    %1747 = vmatpush1.msra.mxu0 0.0
    %1748 = vmatprep.subr.mxu0 0.0
    %1749 = vmatpush1.msra.mxu0 0.0
    %1750 = vmatprep.subr.mxu0 0.0
    %1751 = vmatpush1.msra.mxu0 0.0
    %1752 = vmatprep.subr.mxu0 0.0
    %1753 = vmatpush1.msra.mxu0 0.0
    %1754 = vmatprep.subr.mxu0 0.0
    %1755 = vmatpush1.msra.mxu0 0.0
    %1756 = vmatprep.subr.mxu0 0.0
    %1757 = vmatpush1.msra.mxu0 0.0
    %1758 = vmatprep.subr.mxu0 0.0
    %1759 = vmatpush1.msra.mxu0 %v1723
    %1760 = vmatprep.subr.mxu0 0.0
    %1761 = vmatpush1.msra.mxu0 %v1722
    %1762 = vmatprep.subr.mxu0 0.0
    %1763 = vmatpush1.msra.mxu0 %v1721
    %1764 = vmatprep.subr.mxu0 0.0
    %1765 = vmatpush1.msra.mxu0 %v1720
    %1766 = vmatprep.subr.mxu0 0.0
    %1767 = vmatpush2.msra.mxu0 0.0
    %1768 = vmatprep.subr.mxu0 0.0
    %1769 = vmatpush2.msra.mxu0 0.0
    %1770 = vmatprep.subr.mxu0 0.0
    %1771 = vmatpush2.msra.mxu0 0.0
    %1772 = vmatprep.subr.mxu0 0.0
    %1773 = vmatpush2.msra.mxu0 0.0
    %1774 = vmatprep.subr.mxu0 0.0
    %1775 = vmatpush2.msra.mxu0 0.0
    %1776 = vmatprep.subr.mxu0 0.0
    %1777 = vmatpush2.msra.mxu0 0.0
    %1778 = vmatprep.subr.mxu0 0.0
    %1779 = vmatpush2.msra.mxu0 0.0
    %1780 = vmatprep.subr.mxu0 0.0
    %1781 = vmatpush2.msra.mxu0 0.0
    %1782 = vmatprep.subr.mxu0 0.0
    %1783 = vmatpush2.msra.mxu0 0.0
    %1784 = vmatprep.subr.mxu0 0.0
    %1785 = vmatpush2.msra.mxu0 0.0
    %1786 = vmatprep.subr.mxu0 0.0
    %1787 = vmatpush2.msra.mxu0 0.0
    %1788 = vmatprep.subr.mxu0 0.0
    %1789 = vmatpush2.msra.mxu0 0.0
    %1790 = vmatprep.subr.mxu0 0.0
    %1791 = vmatpush2.msra.mxu0 0.0
    %1792 = vmatprep.subr.mxu0 0.0
    %1793 = vmatpush2.msra.mxu0 0.0
    %1794 = vmatprep.subr.mxu0 0.0
    %1795 = vmatpush2.msra.mxu0 0.0
    %1796 = vmatprep.subr.mxu0 0.0
    %1797 = vmatpush2.msra.mxu0 0.0
    %1798 = vmatprep.mubr.f32.mxu0 0.0
    %1799 = vmatmul.mubr.f32.gmra.mxu0 %v1729
    %v1800 = vpop.f32.mrf.mxu0
    %v1801 = vadd.f32 %v1727, %v1800
    %v1802 = vpop.f32.mrf.mxu0
    %1803 = vmatprep.mubr.f32.mxu0 0.0
    %1804 = vmatmul.mubr.f32.gmra.mxu0 %v1732
    %v1805 = vpop.f32.mrf.mxu0
    %v1806 = vadd.f32 %v1727, %v1805
    %v1807 = vpop.f32.mrf.mxu0
    %1808 = vdwg.mxu0
    %v1809 = vmax.f32 %v1801, 0.0
    %v1810 = vmax.f32 %v1806, 0.0
    %v1811 = vld [vmem:[%s3] sm:$0xff]
    %v1812 = vld [vmem:[%s3 + $0x8] sm:$0xff]
    %v1813 = vld [vmem:[%s3 + $0x10] sm:$0xff]
    %v1814 = vld [vmem:[%s3 + $0x18] sm:$0xff]
    %v1815 = vld [vmem:[%s3 + $0x20] sm:$0xff]
    %v1816 = vld [vmem:[%s3 + $0x28] sm:$0xff]
    %v1817 = vld [vmem:[%s3 + $0x30] sm:$0xff]
    %v1818 = vld [vmem:[%s3 + $0x38] sm:$0xff]
    %v1819 = vlaneseq
    %v1820 = vshrl.u32 %v1819, 7
    %v1821 = vsub.s32 1, %v1820
    %v1822 = vrot.slane %v226, %v1821
    %v1824 = vsel %vm672, %v1809, 0
    %v1827 = vsel %vm672, %v1810, 0
    %1829 = vmatprep.subr.mxu0 0.0
    %1830 = vmatpush1.msra.mxu0 0.0
    %1831 = vmatprep.subr.mxu0 0.0
    %1832 = vmatpush1.msra.mxu0 0.0
    %1833 = vmatprep.subr.mxu0 0.0
    %1834 = vmatpush1.msra.mxu0 0.0
    %1835 = vmatprep.subr.mxu0 0.0
    %1836 = vmatpush1.msra.mxu0 0.0
    %1837 = vmatprep.subr.mxu0 0.0
    %1838 = vmatpush1.msra.mxu0 0.0
    %1839 = vmatprep.subr.mxu0 0.0
    %1840 = vmatpush1.msra.mxu0 0.0
    %1841 = vmatprep.subr.mxu0 0.0
    %1842 = vmatpush1.msra.mxu0 0.0
    %1843 = vmatprep.subr.mxu0 0.0
    %1844 = vmatpush1.msra.mxu0 0.0
    %1845 = vmatprep.subr.mxu0 0.0
    %1846 = vmatpush1.msra.mxu0 %v1818
    %1847 = vmatprep.subr.mxu0 0.0
    %1848 = vmatpush1.msra.mxu0 %v1817
    %1849 = vmatprep.subr.mxu0 0.0
    %1850 = vmatpush1.msra.mxu0 %v1816
    %1851 = vmatprep.subr.mxu0 0.0
    %1852 = vmatpush1.msra.mxu0 %v1815
    %1853 = vmatprep.subr.mxu0 0.0
    %1854 = vmatpush1.msra.mxu0 %v1814
    %1855 = vmatprep.subr.mxu0 0.0
    %1856 = vmatpush1.msra.mxu0 %v1813
    %1857 = vmatprep.subr.mxu0 0.0
    %1858 = vmatpush1.msra.mxu0 %v1812
    %1859 = vmatprep.subr.mxu0 0.0
    %1860 = vmatpush1.msra.mxu0 %v1811
    %1861 = vmatprep.subr.mxu0 0.0
    %1862 = vmatpush2.msra.mxu0 0.0
    %1863 = vmatprep.subr.mxu0 0.0
    %1864 = vmatpush2.msra.mxu0 0.0
    %1865 = vmatprep.subr.mxu0 0.0
    %1866 = vmatpush2.msra.mxu0 0.0
    %1867 = vmatprep.subr.mxu0 0.0
    %1868 = vmatpush2.msra.mxu0 0.0
    %1869 = vmatprep.subr.mxu0 0.0
    %1870 = vmatpush2.msra.mxu0 0.0
    %1871 = vmatprep.subr.mxu0 0.0
    %1872 = vmatpush2.msra.mxu0 0.0
    %1873 = vmatprep.subr.mxu0 0.0
    %1874 = vmatpush2.msra.mxu0 0.0
    %1875 = vmatprep.subr.mxu0 0.0
    %1876 = vmatpush2.msra.mxu0 0.0
    %1877 = vmatprep.subr.mxu0 0.0
    %1878 = vmatpush2.msra.mxu0 0.0
    %1879 = vmatprep.subr.mxu0 0.0
    %1880 = vmatpush2.msra.mxu0 0.0
    %1881 = vmatprep.subr.mxu0 0.0
    %1882 = vmatpush2.msra.mxu0 0.0
    %1883 = vmatprep.subr.mxu0 0.0
    %1884 = vmatpush2.msra.mxu0 0.0
    %1885 = vmatprep.subr.mxu0 0.0
    %1886 = vmatpush2.msra.mxu0 0.0
    %1887 = vmatprep.subr.mxu0 0.0
    %1888 = vmatpush2.msra.mxu0 0.0
    %1889 = vmatprep.subr.mxu0 0.0
    %1890 = vmatpush2.msra.mxu0 0.0
    %1891 = vmatprep.subr.mxu0 0.0
    %1892 = vmatpush2.msra.mxu0 0.0
    %1893 = vmatprep.mubr.f32.mxu0 0.0
    %1894 = vmatmul.mubr.f32.gmra.mxu0 %v1824
    %v1895 = vpop.f32.mrf.mxu0
    %v1896 = vadd.f32 %v1822, %v1895
    %v1897 = vpop.f32.mrf.mxu0
    %1898 = vmatprep.mubr.f32.mxu0 0.0
    %1899 = vmatmul.mubr.f32.gmra.mxu0 %v1827
    %v1900 = vpop.f32.mrf.mxu0
    %v1901 = vadd.f32 %v1822, %v1900
    %v1902 = vpop.f32.mrf.mxu0
    %1903 = vdwg.mxu0
    %v1904 = vadd.f32 %v1718, %v1896
    %v1905 = vadd.f32 %v1719, %v1901
    %v1906 = vsel %vm135, %v1904, 0.0
    %1907 = vadd.xlane.f32.xlu0 %v1906
    %v1908 = vpop.xlane.xlu0 %1907
    %v1909 = vsel %vm135, %v1905, 0.0
    %1910 = vadd.xlane.f32.xlu0 %v1909
    %v1911 = vpop.xlane.xlu0 %1910
    %v1912 = vmul.f32 %v1908, %v938
    %v1913 = vmul.f32 %v1911, %v938
    %v1914 = vsub.f32 %v1904, %v1912
    %v1915 = vsub.f32 %v1905, %v1913
    %v1916 = vmul.f32 %v1914, %v1914
    %v1917 = vmul.f32 %v1915, %v1915
    %v1918 = vsel %vm135, %v1916, 0.0
    %1919 = vadd.xlane.f32.xlu0 %v1918
    %v1920 = vpop.xlane.xlu0 %1919
    %v1921 = vsel %vm135, %v1917, 0.0
    %1922 = vadd.xlane.f32.xlu0 %v1921
    %v1923 = vpop.xlane.xlu0 %1922
    %v1924 = vmul.f32 %v1920, %v938
    %v1925 = vmul.f32 %v1923, %v938
    %v1926 = vadd.f32 %v1924, 1e-05
    %v1927 = vadd.f32 %v1925, 1e-05
    %v1928 = vrsqrt.pop %v1926
    %v1929 = vrsqrt.pop %v1927
    %v1930 = vmul.f32 %v1914, %v1928
    %v1931 = vmul.f32 %v1915, %v1929
    %v1932 = vlaneseq
    %v1933 = vshrl.u32 %v1932, 7
    %v1934 = vsub.s32 6, %v1933
    %v1935 = vrot.slane %v226, %v1934
    %v1936 = vmul.f32 %v1930, %v1935
    %v1937 = vmul.f32 %v1931, %v1935
    %v1938 = vlaneseq
    %v1939 = vshrl.u32 %v1938, 7
    %v1940 = vsub.s32 7, %v1939
    %v1941 = vrot.slane %v226, %v1940
    %v1942 = vadd.f32 %v1936, %v1941
    %v1943 = vadd.f32 %v1937, %v1941
    %s1944 = scalar_lea.vmem %s4, 16
    %v1945 = vld [vmem:[%s1944] sm:$0xff]
    %v1946 = vld [vmem:[%s1944 + $0x8] sm:$0xff]
    %s1947 = scalar_lea.vmem [#allocation2], 256
    %v1948 = vld [vmem:[%s1947] sm:$0xff]
    %v1949 = vld [vmem:[%s1947 + $0x8] sm:$0xff]
    %v1950 = vld [vmem:[%s1947 + $0x10] sm:$0xff]
    %v1951 = vld [vmem:[%s1947 + $0x18] sm:$0xff]
    %v1952 = vlaneseq
    %v1953 = vshrl.u32 %v1952, 7
    %v1954 = vsub.s32 0, %v1953
    %v1955 = vrot.slane %v1945, %v1954
    %v1957 = vsel %vm135, %v1942, 0
    %v1960 = vsel %vm135, %v1943, 0
    %1962 = vmatprep.subr.mxu0 0.0
    %1963 = vmatpush1.msra.mxu0 0.0
    %1964 = vmatprep.subr.mxu0 0.0
    %1965 = vmatpush1.msra.mxu0 0.0
    %1966 = vmatprep.subr.mxu0 0.0
    %1967 = vmatpush1.msra.mxu0 0.0
    %1968 = vmatprep.subr.mxu0 0.0
    %1969 = vmatpush1.msra.mxu0 0.0
    %1970 = vmatprep.subr.mxu0 0.0
    %1971 = vmatpush1.msra.mxu0 0.0
    %1972 = vmatprep.subr.mxu0 0.0
    %1973 = vmatpush1.msra.mxu0 0.0
    %1974 = vmatprep.subr.mxu0 0.0
    %1975 = vmatpush1.msra.mxu0 0.0
    %1976 = vmatprep.subr.mxu0 0.0
    %1977 = vmatpush1.msra.mxu0 0.0
    %1978 = vmatprep.subr.mxu0 0.0
    %1979 = vmatpush1.msra.mxu0 0.0
    %1980 = vmatprep.subr.mxu0 0.0
    %1981 = vmatpush1.msra.mxu0 0.0
    %1982 = vmatprep.subr.mxu0 0.0
    %1983 = vmatpush1.msra.mxu0 0.0
    %1984 = vmatprep.subr.mxu0 0.0
    %1985 = vmatpush1.msra.mxu0 0.0
    %1986 = vmatprep.subr.mxu0 0.0
    %1987 = vmatpush1.msra.mxu0 %v1951
    %1988 = vmatprep.subr.mxu0 0.0
    %1989 = vmatpush1.msra.mxu0 %v1950
    %1990 = vmatprep.subr.mxu0 0.0
    %1991 = vmatpush1.msra.mxu0 %v1949
    %1992 = vmatprep.subr.mxu0 0.0
    %1993 = vmatpush1.msra.mxu0 %v1948
    %1994 = vmatprep.subr.mxu0 0.0
    %1995 = vmatpush2.msra.mxu0 0.0
    %1996 = vmatprep.subr.mxu0 0.0
    %1997 = vmatpush2.msra.mxu0 0.0
    %1998 = vmatprep.subr.mxu0 0.0
    %1999 = vmatpush2.msra.mxu0 0.0
    %2000 = vmatprep.subr.mxu0 0.0
    %2001 = vmatpush2.msra.mxu0 0.0
    %2002 = vmatprep.subr.mxu0 0.0
    %2003 = vmatpush2.msra.mxu0 0.0
    %2004 = vmatprep.subr.mxu0 0.0
    %2005 = vmatpush2.msra.mxu0 0.0
    %2006 = vmatprep.subr.mxu0 0.0
    %2007 = vmatpush2.msra.mxu0 0.0
    %2008 = vmatprep.subr.mxu0 0.0
    %2009 = vmatpush2.msra.mxu0 0.0
    %2010 = vmatprep.subr.mxu0 0.0
    %2011 = vmatpush2.msra.mxu0 0.0
    %2012 = vmatprep.subr.mxu0 0.0
    %2013 = vmatpush2.msra.mxu0 0.0
    %2014 = vmatprep.subr.mxu0 0.0
    %2015 = vmatpush2.msra.mxu0 0.0
    %2016 = vmatprep.subr.mxu0 0.0
    %2017 = vmatpush2.msra.mxu0 0.0
    %2018 = vmatprep.subr.mxu0 0.0
    %2019 = vmatpush2.msra.mxu0 0.0
    %2020 = vmatprep.subr.mxu0 0.0
    %2021 = vmatpush2.msra.mxu0 0.0
    %2022 = vmatprep.subr.mxu0 0.0
    %2023 = vmatpush2.msra.mxu0 0.0
    %2024 = vmatprep.subr.mxu0 0.0
    %2025 = vmatpush2.msra.mxu0 0.0
    %2026 = vmatprep.mubr.f32.mxu0 0.0
    %2027 = vmatmul.mubr.f32.gmra.mxu0 %v1957
    %v2028 = vpop.f32.mrf.mxu0
    %v2029 = vadd.f32 %v1955, %v2028
    %v2030 = vpop.f32.mrf.mxu0
    %2031 = vmatprep.mubr.f32.mxu0 0.0
    %2032 = vmatmul.mubr.f32.gmra.mxu0 %v1960
    %v2033 = vpop.f32.mrf.mxu0
    %v2034 = vadd.f32 %v1955, %v2033
    %v2035 = vpop.f32.mrf.mxu0
    %2036 = vdwg.mxu0
    %s2037 = scalar_lea.vmem [#allocation2], 288
    %v2038 = vld [vmem:[%s2037] sm:$0xff]
    %v2039 = vld [vmem:[%s2037 + $0x8] sm:$0xff]
    %v2040 = vld [vmem:[%s2037 + $0x10] sm:$0xff]
    %v2041 = vld [vmem:[%s2037 + $0x18] sm:$0xff]
    %v2042 = vlaneseq
    %v2043 = vshrl.u32 %v2042, 7
    %v2044 = vsub.s32 1, %v2043
    %v2045 = vrot.slane %v1945, %v2044
    %2046 = vmatprep.subr.mxu0 0.0
    %2047 = vmatpush1.msra.mxu0 0.0
    %2048 = vmatprep.subr.mxu0 0.0
    %2049 = vmatpush1.msra.mxu0 0.0
    %2050 = vmatprep.subr.mxu0 0.0
    %2051 = vmatpush1.msra.mxu0 0.0
    %2052 = vmatprep.subr.mxu0 0.0
    %2053 = vmatpush1.msra.mxu0 0.0
    %2054 = vmatprep.subr.mxu0 0.0
    %2055 = vmatpush1.msra.mxu0 0.0
    %2056 = vmatprep.subr.mxu0 0.0
    %2057 = vmatpush1.msra.mxu0 0.0
    %2058 = vmatprep.subr.mxu0 0.0
    %2059 = vmatpush1.msra.mxu0 0.0
    %2060 = vmatprep.subr.mxu0 0.0
    %2061 = vmatpush1.msra.mxu0 0.0
    %2062 = vmatprep.subr.mxu0 0.0
    %2063 = vmatpush1.msra.mxu0 0.0
    %2064 = vmatprep.subr.mxu0 0.0
    %2065 = vmatpush1.msra.mxu0 0.0
    %2066 = vmatprep.subr.mxu0 0.0
    %2067 = vmatpush1.msra.mxu0 0.0
    %2068 = vmatprep.subr.mxu0 0.0
    %2069 = vmatpush1.msra.mxu0 0.0
    %2070 = vmatprep.subr.mxu0 0.0
    %2071 = vmatpush1.msra.mxu0 %v2041
    %2072 = vmatprep.subr.mxu0 0.0
    %2073 = vmatpush1.msra.mxu0 %v2040
    %2074 = vmatprep.subr.mxu0 0.0
    %2075 = vmatpush1.msra.mxu0 %v2039
    %2076 = vmatprep.subr.mxu0 0.0
    %2077 = vmatpush1.msra.mxu0 %v2038
    %2078 = vmatprep.subr.mxu0 0.0
    %2079 = vmatpush2.msra.mxu0 0.0
    %2080 = vmatprep.subr.mxu0 0.0
    %2081 = vmatpush2.msra.mxu0 0.0
    %2082 = vmatprep.subr.mxu0 0.0
    %2083 = vmatpush2.msra.mxu0 0.0
    %2084 = vmatprep.subr.mxu0 0.0
    %2085 = vmatpush2.msra.mxu0 0.0
    %2086 = vmatprep.subr.mxu0 0.0
    %2087 = vmatpush2.msra.mxu0 0.0
    %2088 = vmatprep.subr.mxu0 0.0
    %2089 = vmatpush2.msra.mxu0 0.0
    %2090 = vmatprep.subr.mxu0 0.0
    %2091 = vmatpush2.msra.mxu0 0.0
    %2092 = vmatprep.subr.mxu0 0.0
    %2093 = vmatpush2.msra.mxu0 0.0
    %2094 = vmatprep.subr.mxu0 0.0
    %2095 = vmatpush2.msra.mxu0 0.0
    %2096 = vmatprep.subr.mxu0 0.0
    %2097 = vmatpush2.msra.mxu0 0.0
    %2098 = vmatprep.subr.mxu0 0.0
    %2099 = vmatpush2.msra.mxu0 0.0
    %2100 = vmatprep.subr.mxu0 0.0
    %2101 = vmatpush2.msra.mxu0 0.0
    %2102 = vmatprep.subr.mxu0 0.0
    %2103 = vmatpush2.msra.mxu0 0.0
    %2104 = vmatprep.subr.mxu0 0.0
    %2105 = vmatpush2.msra.mxu0 0.0
    %2106 = vmatprep.subr.mxu0 0.0
    %2107 = vmatpush2.msra.mxu0 0.0
    %2108 = vmatprep.subr.mxu0 0.0
    %2109 = vmatpush2.msra.mxu0 0.0
    %2110 = vmatprep.mubr.f32.mxu0 0.0
    %2111 = vmatmul.mubr.f32.gmra.mxu0 %v1957
    %v2112 = vpop.f32.mrf.mxu0
    %v2113 = vadd.f32 %v2045, %v2112
    %v2114 = vpop.f32.mrf.mxu0
    %2115 = vmatprep.mubr.f32.mxu0 0.0
    %2116 = vmatmul.mubr.f32.gmra.mxu0 %v1960
    %v2117 = vpop.f32.mrf.mxu0
    %v2118 = vadd.f32 %v2045, %v2117
    %v2119 = vpop.f32.mrf.mxu0
    %2120 = vdwg.mxu0
    %s2121 = scalar_lea.vmem [#allocation2], 320
    %v2122 = vld [vmem:[%s2121] sm:$0xff]
    %v2123 = vld [vmem:[%s2121 + $0x8] sm:$0xff]
    %v2124 = vld [vmem:[%s2121 + $0x10] sm:$0xff]
    %v2125 = vld [vmem:[%s2121 + $0x18] sm:$0xff]
    %v2126 = vlaneseq
    %v2127 = vshrl.u32 %v2126, 7
    %v2128 = vsub.s32 2, %v2127
    %v2129 = vrot.slane %v1945, %v2128
    %2130 = vmatprep.subr.mxu0 0.0
    %2131 = vmatpush1.msra.mxu0 0.0
    %2132 = vmatprep.subr.mxu0 0.0
    %2133 = vmatpush1.msra.mxu0 0.0
    %2134 = vmatprep.subr.mxu0 0.0
    %2135 = vmatpush1.msra.mxu0 0.0
    %2136 = vmatprep.subr.mxu0 0.0
    %2137 = vmatpush1.msra.mxu0 0.0
    %2138 = vmatprep.subr.mxu0 0.0
    %2139 = vmatpush1.msra.mxu0 0.0
    %2140 = vmatprep.subr.mxu0 0.0
    %2141 = vmatpush1.msra.mxu0 0.0
    %2142 = vmatprep.subr.mxu0 0.0
    %2143 = vmatpush1.msra.mxu0 0.0
    %2144 = vmatprep.subr.mxu0 0.0
    %2145 = vmatpush1.msra.mxu0 0.0
    %2146 = vmatprep.subr.mxu0 0.0
    %2147 = vmatpush1.msra.mxu0 0.0
    %2148 = vmatprep.subr.mxu0 0.0
    %2149 = vmatpush1.msra.mxu0 0.0
    %2150 = vmatprep.subr.mxu0 0.0
    %2151 = vmatpush1.msra.mxu0 0.0
    %2152 = vmatprep.subr.mxu0 0.0
    %2153 = vmatpush1.msra.mxu0 0.0
    %2154 = vmatprep.subr.mxu0 0.0
    %2155 = vmatpush1.msra.mxu0 %v2125
    %2156 = vmatprep.subr.mxu0 0.0
    %2157 = vmatpush1.msra.mxu0 %v2124
    %2158 = vmatprep.subr.mxu0 0.0
    %2159 = vmatpush1.msra.mxu0 %v2123
    %2160 = vmatprep.subr.mxu0 0.0
    %2161 = vmatpush1.msra.mxu0 %v2122
    %2162 = vmatprep.subr.mxu0 0.0
    %2163 = vmatpush2.msra.mxu0 0.0
    %2164 = vmatprep.subr.mxu0 0.0
    %2165 = vmatpush2.msra.mxu0 0.0
    %2166 = vmatprep.subr.mxu0 0.0
    %2167 = vmatpush2.msra.mxu0 0.0
    %2168 = vmatprep.subr.mxu0 0.0
    %2169 = vmatpush2.msra.mxu0 0.0
    %2170 = vmatprep.subr.mxu0 0.0
    %2171 = vmatpush2.msra.mxu0 0.0
    %2172 = vmatprep.subr.mxu0 0.0
    %2173 = vmatpush2.msra.mxu0 0.0
    %2174 = vmatprep.subr.mxu0 0.0
    %2175 = vmatpush2.msra.mxu0 0.0
    %2176 = vmatprep.subr.mxu0 0.0
    %2177 = vmatpush2.msra.mxu0 0.0
    %2178 = vmatprep.subr.mxu0 0.0
    %2179 = vmatpush2.msra.mxu0 0.0
    %2180 = vmatprep.subr.mxu0 0.0
    %2181 = vmatpush2.msra.mxu0 0.0
    %2182 = vmatprep.subr.mxu0 0.0
    %2183 = vmatpush2.msra.mxu0 0.0
    %2184 = vmatprep.subr.mxu0 0.0
    %2185 = vmatpush2.msra.mxu0 0.0
    %2186 = vmatprep.subr.mxu0 0.0
    %2187 = vmatpush2.msra.mxu0 0.0
    %2188 = vmatprep.subr.mxu0 0.0
    %2189 = vmatpush2.msra.mxu0 0.0
    %2190 = vmatprep.subr.mxu0 0.0
    %2191 = vmatpush2.msra.mxu0 0.0
    %2192 = vmatprep.subr.mxu0 0.0
    %2193 = vmatpush2.msra.mxu0 0.0
    %2194 = vmatprep.mubr.f32.mxu0 0.0
    %2195 = vmatmul.mubr.f32.gmra.mxu0 %v1957
    %v2196 = vpop.f32.mrf.mxu0
    %v2197 = vadd.f32 %v2129, %v2196
    %v2198 = vpop.f32.mrf.mxu0
    %2199 = vmatprep.mubr.f32.mxu0 0.0
    %2200 = vmatmul.mubr.f32.gmra.mxu0 %v1960
    %v2201 = vpop.f32.mrf.mxu0
    %v2202 = vadd.f32 %v2129, %v2201
    %v2203 = vpop.f32.mrf.mxu0
    %2204 = vdwg.mxu0
    %s2205 = scalar_lea.vmem [#allocation2], 352
    %v2206 = vld [vmem:[%s2205] sm:$0xff]
    %v2207 = vld [vmem:[%s2205 + $0x8] sm:$0xff]
    %v2208 = vld [vmem:[%s2205 + $0x10] sm:$0xff]
    %v2209 = vld [vmem:[%s2205 + $0x18] sm:$0xff]
    %2210 = vxpose.xlu0.b32.start [1/16] %v2113, 128
    %2211 = vxpose.xlu0.b32.cont [2/16] %v2118, 128
    %2212 = vxpose.xlu0.b32.cont [3/16] 0.0, 128
    %2213 = vxpose.xlu0.b32.cont [4/16] 0.0, 128
    %2214 = vxpose.xlu0.b32.cont [5/16] 0.0, 128
    %2215 = vxpose.xlu0.b32.cont [6/16] 0.0, 128
    %2216 = vxpose.xlu0.b32.cont [7/16] 0.0, 128
    %2217 = vxpose.xlu0.b32.cont [8/16] 0.0, 128
    %2218 = vxpose.xlu0.b32.cont [9/16] 0.0, 128
    %2219 = vxpose.xlu0.b32.cont [10/16] 0.0, 128
    %2220 = vxpose.xlu0.b32.cont [11/16] 0.0, 128
    %2221 = vxpose.xlu0.b32.cont [12/16] 0.0, 128
    %2222 = vxpose.xlu0.b32.cont [13/16] 0.0, 128
    %2223 = vxpose.xlu0.b32.cont [14/16] 0.0, 128
    %2224 = vxpose.xlu0.b32.cont [15/16] 0.0, 128
    %2225 = vxpose.xlu0.b32.end [16/16] 0.0, 128
    %v2226 = vpop.trf.xlu0
    %v2227 = vpop.trf.xlu0
    %v2228 = vpop.trf.xlu0
    %v2229 = vpop.trf.xlu0
    %v2230 = vpop.trf.xlu0
    %v2231 = vpop.trf.xlu0
    %v2232 = vpop.trf.xlu0
    %v2233 = vpop.trf.xlu0
    %v2234 = vpop.trf.xlu0
    %v2235 = vpop.trf.xlu0
    %v2236 = vpop.trf.xlu0
    %v2237 = vpop.trf.xlu0
    %v2238 = vpop.trf.xlu0
    %v2239 = vpop.trf.xlu0
    %v2240 = vpop.trf.xlu0
    %v2241 = vpop.trf.xlu0
    %2246 = vrot.lane.b32.xlu0 %v2226, 16
    %v2247 = vpop.permute.xlu0 %2246
    %2248 = vrot.lane.b32.xlu0 %v2227, 16
    %v2249 = vpop.permute.xlu0 %2248
    %2250 = vrot.lane.b32.xlu0 %v2228, 16
    %v2251 = vpop.permute.xlu0 %2250
    %2252 = vrot.lane.b32.xlu0 %v2229, 16
    %v2253 = vpop.permute.xlu0 %2252
    %2258 = vrot.lane.b32.xlu0 %v2226, 32
    %v2259 = vpop.permute.xlu0 %2258
    %2260 = vrot.lane.b32.xlu0 %v2227, 32
    %v2261 = vpop.permute.xlu0 %2260
    %2262 = vrot.lane.b32.xlu0 %v2228, 32
    %v2263 = vpop.permute.xlu0 %2262
    %2264 = vrot.lane.b32.xlu0 %v2229, 32
    %v2265 = vpop.permute.xlu0 %2264
    %2270 = vrot.lane.b32.xlu0 %v2226, 48
    %v2271 = vpop.permute.xlu0 %2270
    %2272 = vrot.lane.b32.xlu0 %v2227, 48
    %v2273 = vpop.permute.xlu0 %2272
    %2274 = vrot.lane.b32.xlu0 %v2228, 48
    %v2275 = vpop.permute.xlu0 %2274
    %2276 = vrot.lane.b32.xlu0 %v2229, 48
    %v2277 = vpop.permute.xlu0 %2276
    %v2282 = vsel %vm130, %v2226, %v2247
    %v2283 = vsel %vm130, %v2227, %v2249
    %v2284 = vsel %vm130, %v2228, %v2251
    %v2285 = vsel %vm130, %v2229, %v2253
    %v2286 = vsel %vm135, %v2282, %v2259
    %v2287 = vsel %vm135, %v2283, %v2261
    %v2288 = vsel %vm135, %v2284, %v2263
    %v2289 = vsel %vm135, %v2285, %v2265
    %v2290 = vsel %vm140, %v2286, %v2271
    %v2291 = vsel %vm140, %v2287, %v2273
    %v2292 = vsel %vm140, %v2288, %v2275
    %v2293 = vsel %vm140, %v2289, %v2277
    %v2294 = vmul.f32 %v2290, %v141
    %v2295 = vmul.f32 %v2291, %v142
    %v2296 = vmul.f32 %v2292, %v143
    %v2297 = vmul.f32 %v2293, %v144
    %v2298 = vmul.f32 %v2197, %v48
    %v2299 = vmul.f32 %v2202, %v48
    %v2300 = vmul.f32 %v2197, %v52
    %v2301 = vmul.f32 %v2202, %v52
    %v2302 = vmul.f32 %v2197, %v56
    %v2303 = vmul.f32 %v2202, %v56
    %v2304 = vmul.f32 %v2197, %v60
    %v2305 = vmul.f32 %v2202, %v60
    %v2306 = vmul.f32 %v2029, 0.35355338
    %v2307 = vmul.f32 %v2034, 0.35355338
    %v2309 = vsel %vm135, %v2306, 0
    %v2312 = vsel %vm135, %v2307, 0
    %2314 = vmatprep.subr.mxu0 0.0
    %2315 = vmatpush1.msra.mxu0 0.0
    %2316 = vmatprep.subr.mxu0 0.0
    %2317 = vmatpush1.msra.mxu0 0.0
    %2318 = vmatprep.subr.mxu0 0.0
    %2319 = vmatpush1.msra.mxu0 0.0
    %2320 = vmatprep.subr.mxu0 0.0
    %2321 = vmatpush1.msra.mxu0 0.0
    %2322 = vmatprep.subr.mxu0 0.0
    %2323 = vmatpush1.msra.mxu0 0.0
    %2324 = vmatprep.subr.mxu0 0.0
    %2325 = vmatpush1.msra.mxu0 0.0
    %2326 = vmatprep.subr.mxu0 0.0
    %2327 = vmatpush1.msra.mxu0 0.0
    %2328 = vmatprep.subr.mxu0 0.0
    %2329 = vmatpush1.msra.mxu0 0.0
    %2330 = vmatprep.subr.mxu0 0.0
    %2331 = vmatpush1.msra.mxu0 0.0
    %2332 = vmatprep.subr.mxu0 0.0
    %2333 = vmatpush1.msra.mxu0 0.0
    %2334 = vmatprep.subr.mxu0 0.0
    %2335 = vmatpush1.msra.mxu0 0.0
    %2336 = vmatprep.subr.mxu0 0.0
    %2337 = vmatpush1.msra.mxu0 0.0
    %2338 = vmatprep.subr.mxu0 0.0
    %2339 = vmatpush1.msra.mxu0 %v2297
    %2340 = vmatprep.subr.mxu0 0.0
    %2341 = vmatpush1.msra.mxu0 %v2296
    %2342 = vmatprep.subr.mxu0 0.0
    %2343 = vmatpush1.msra.mxu0 %v2295
    %2344 = vmatprep.subr.mxu0 0.0
    %2345 = vmatpush1.msra.mxu0 %v2294
    %2346 = vmatprep.subr.mxu0 0.0
    %2347 = vmatpush2.msra.mxu0 0.0
    %2348 = vmatprep.subr.mxu0 0.0
    %2349 = vmatpush2.msra.mxu0 0.0
    %2350 = vmatprep.subr.mxu0 0.0
    %2351 = vmatpush2.msra.mxu0 0.0
    %2352 = vmatprep.subr.mxu0 0.0
    %2353 = vmatpush2.msra.mxu0 0.0
    %2354 = vmatprep.subr.mxu0 0.0
    %2355 = vmatpush2.msra.mxu0 0.0
    %2356 = vmatprep.subr.mxu0 0.0
    %2357 = vmatpush2.msra.mxu0 0.0
    %2358 = vmatprep.subr.mxu0 0.0
    %2359 = vmatpush2.msra.mxu0 0.0
    %2360 = vmatprep.subr.mxu0 0.0
    %2361 = vmatpush2.msra.mxu0 0.0
    %2362 = vmatprep.subr.mxu0 0.0
    %2363 = vmatpush2.msra.mxu0 0.0
    %2364 = vmatprep.subr.mxu0 0.0
    %2365 = vmatpush2.msra.mxu0 0.0
    %2366 = vmatprep.subr.mxu0 0.0
    %2367 = vmatpush2.msra.mxu0 0.0
    %2368 = vmatprep.subr.mxu0 0.0
    %2369 = vmatpush2.msra.mxu0 0.0
    %2370 = vmatprep.subr.mxu0 0.0
    %2371 = vmatpush2.msra.mxu0 0.0
    %2372 = vmatprep.subr.mxu0 0.0
    %2373 = vmatpush2.msra.mxu0 0.0
    %2374 = vmatprep.subr.mxu0 0.0
    %2375 = vmatpush2.msra.mxu0 0.0
    %2376 = vmatprep.subr.mxu0 0.0
    %2377 = vmatpush2.msra.mxu0 0.0
    %2378 = vmatprep.mubr.f32.mxu0 0.0
    %2379 = vmatmul.mubr.f32.gmra.mxu0 %v2309
    %v2380 = vpop.f32.mrf.mxu0
    %v2381 = vadd.f32 %v197, %v2380
    %v2382 = vpop.f32.mrf.mxu0
    %2383 = vmatprep.mubr.f32.mxu0 0.0
    %2384 = vmatmul.mubr.f32.gmra.mxu0 %v2312
    %v2385 = vpop.f32.mrf.mxu0
    %v2386 = vadd.f32 %v198, %v2385
    %v2387 = vpop.f32.mrf.mxu0
    %2388 = vdwg.mxu0
    %v2389 = vmul.f32 %v2381, 1.442695
    %v2390 = vpow.pop %v2389
    %v2391 = vmul.f32 %v2386, 1.442695
    %v2392 = vpow.pop %v2391
    %v2394 = vsel %vm672, %v2390, 0
    %v2397 = vsel %vm672, %v2392, 0
    %2399 = vmatprep.subr.mxu0 0.0
    %2400 = vmatpush1.msra.mxu0 0.0
    %2401 = vmatprep.subr.mxu0 0.0
    %2402 = vmatpush1.msra.mxu0 0.0
    %2403 = vmatprep.subr.mxu0 0.0
    %2404 = vmatpush1.msra.mxu0 0.0
    %2405 = vmatprep.subr.mxu0 0.0
    %2406 = vmatpush1.msra.mxu0 0.0
    %2407 = vmatprep.subr.mxu0 0.0
    %2408 = vmatpush1.msra.mxu0 0.0
    %2409 = vmatprep.subr.mxu0 0.0
    %2410 = vmatpush1.msra.mxu0 0.0
    %2411 = vmatprep.subr.mxu0 0.0
    %2412 = vmatpush1.msra.mxu0 0.0
    %2413 = vmatprep.subr.mxu0 0.0
    %2414 = vmatpush1.msra.mxu0 0.0
    %2415 = vmatprep.subr.mxu0 0.0
    %2416 = vmatpush1.msra.mxu0 %v156
    %2417 = vmatprep.subr.mxu0 0.0
    %2418 = vmatpush1.msra.mxu0 %v156
    %2419 = vmatprep.subr.mxu0 0.0
    %2420 = vmatpush1.msra.mxu0 %v152
    %2421 = vmatprep.subr.mxu0 0.0
    %2422 = vmatpush1.msra.mxu0 %v152
    %2423 = vmatprep.subr.mxu0 0.0
    %2424 = vmatpush1.msra.mxu0 %v148
    %2425 = vmatprep.subr.mxu0 0.0
    %2426 = vmatpush1.msra.mxu0 %v148
    %2427 = vmatprep.subr.mxu0 0.0
    %2428 = vmatpush1.msra.mxu0 %v146
    %2429 = vmatprep.subr.mxu0 0.0
    %2430 = vmatpush1.msra.mxu0 %v146
    %2431 = vmatprep.subr.mxu0 0.0
    %2432 = vmatpush2.msra.mxu0 0.0
    %2433 = vmatprep.subr.mxu0 0.0
    %2434 = vmatpush2.msra.mxu0 0.0
    %2435 = vmatprep.subr.mxu0 0.0
    %2436 = vmatpush2.msra.mxu0 0.0
    %2437 = vmatprep.subr.mxu0 0.0
    %2438 = vmatpush2.msra.mxu0 0.0
    %2439 = vmatprep.subr.mxu0 0.0
    %2440 = vmatpush2.msra.mxu0 0.0
    %2441 = vmatprep.subr.mxu0 0.0
    %2442 = vmatpush2.msra.mxu0 0.0
    %2443 = vmatprep.subr.mxu0 0.0
    %2444 = vmatpush2.msra.mxu0 0.0
    %2445 = vmatprep.subr.mxu0 0.0
    %2446 = vmatpush2.msra.mxu0 0.0
    %2447 = vmatprep.subr.mxu0 0.0
    %2448 = vmatpush2.msra.mxu0 0.0
    %2449 = vmatprep.subr.mxu0 0.0
    %2450 = vmatpush2.msra.mxu0 0.0
    %2451 = vmatprep.subr.mxu0 0.0
    %2452 = vmatpush2.msra.mxu0 0.0
    %2453 = vmatprep.subr.mxu0 0.0
    %2454 = vmatpush2.msra.mxu0 0.0
    %2455 = vmatprep.subr.mxu0 0.0
    %2456 = vmatpush2.msra.mxu0 0.0
    %2457 = vmatprep.subr.mxu0 0.0
    %2458 = vmatpush2.msra.mxu0 0.0
    %2459 = vmatprep.subr.mxu0 0.0
    %2460 = vmatpush2.msra.mxu0 0.0
    %2461 = vmatprep.subr.mxu0 0.0
    %2462 = vmatpush2.msra.mxu0 0.0
    %2463 = vmatprep.mubr.f32.mxu0 0.0
    %2464 = vmatmul.mubr.f32.gmra.mxu0 %v2394
    %v2465 = vpop.f32.mrf.mxu0
    %v2466 = vadd.f32 0.0, %v2465
    %v2467 = vpop.f32.mrf.mxu0
    %2468 = vmatprep.mubr.f32.mxu0 0.0
    %2469 = vmatmul.mubr.f32.gmra.mxu0 %v2397
    %v2470 = vpop.f32.mrf.mxu0
    %v2471 = vadd.f32 0.0, %v2470
    %v2472 = vpop.f32.mrf.mxu0
    %2473 = vdwg.mxu0
    %v2474 = vrcp.pop %v2466
    %v2475 = vrcp.pop %v2471
    %v2476 = vmul.f32 %v2466, %v2474
    %v2477 = vmul.f32 %v2471, %v2475
    %v2478 = vsub.f32 2.0, %v2476
    %v2479 = vsub.f32 2.0, %v2477
    %v2480 = vmul.f32 %v2474, %v2478
    %v2481 = vmul.f32 %v2475, %v2479
    %v2482 = vmul.f32 %v2390, %v2480
    %v2483 = vmul.f32 %v2392, %v2481
    %v2485 = vsel %vm672, %v2482, 0
    %v2488 = vsel %vm672, %v2483, 0
    %2490 = vmatprep.subr.mxu0 0.0
    %2491 = vmatpush1.msra.mxu0 0.0
    %2492 = vmatprep.subr.mxu0 0.0
    %2493 = vmatpush1.msra.mxu0 0.0
    %2494 = vmatprep.subr.mxu0 0.0
    %2495 = vmatpush1.msra.mxu0 0.0
    %2496 = vmatprep.subr.mxu0 0.0
    %2497 = vmatpush1.msra.mxu0 0.0
    %2498 = vmatprep.subr.mxu0 0.0
    %2499 = vmatpush1.msra.mxu0 0.0
    %2500 = vmatprep.subr.mxu0 0.0
    %2501 = vmatpush1.msra.mxu0 0.0
    %2502 = vmatprep.subr.mxu0 0.0
    %2503 = vmatpush1.msra.mxu0 0.0
    %2504 = vmatprep.subr.mxu0 0.0
    %2505 = vmatpush1.msra.mxu0 0.0
    %2506 = vmatprep.subr.mxu0 0.0
    %2507 = vmatpush1.msra.mxu0 %v2305
    %2508 = vmatprep.subr.mxu0 0.0
    %2509 = vmatpush1.msra.mxu0 %v2304
    %2510 = vmatprep.subr.mxu0 0.0
    %2511 = vmatpush1.msra.mxu0 %v2303
    %2512 = vmatprep.subr.mxu0 0.0
    %2513 = vmatpush1.msra.mxu0 %v2302
    %2514 = vmatprep.subr.mxu0 0.0
    %2515 = vmatpush1.msra.mxu0 %v2301
    %2516 = vmatprep.subr.mxu0 0.0
    %2517 = vmatpush1.msra.mxu0 %v2300
    %2518 = vmatprep.subr.mxu0 0.0
    %2519 = vmatpush1.msra.mxu0 %v2299
    %2520 = vmatprep.subr.mxu0 0.0
    %2521 = vmatpush1.msra.mxu0 %v2298
    %2522 = vmatprep.subr.mxu0 0.0
    %2523 = vmatpush2.msra.mxu0 0.0
    %2524 = vmatprep.subr.mxu0 0.0
    %2525 = vmatpush2.msra.mxu0 0.0
    %2526 = vmatprep.subr.mxu0 0.0
    %2527 = vmatpush2.msra.mxu0 0.0
    %2528 = vmatprep.subr.mxu0 0.0
    %2529 = vmatpush2.msra.mxu0 0.0
    %2530 = vmatprep.subr.mxu0 0.0
    %2531 = vmatpush2.msra.mxu0 0.0
    %2532 = vmatprep.subr.mxu0 0.0
    %2533 = vmatpush2.msra.mxu0 0.0
    %2534 = vmatprep.subr.mxu0 0.0
    %2535 = vmatpush2.msra.mxu0 0.0
    %2536 = vmatprep.subr.mxu0 0.0
    %2537 = vmatpush2.msra.mxu0 0.0
    %2538 = vmatprep.subr.mxu0 0.0
    %2539 = vmatpush2.msra.mxu0 0.0
    %2540 = vmatprep.subr.mxu0 0.0
    %2541 = vmatpush2.msra.mxu0 0.0
    %2542 = vmatprep.subr.mxu0 0.0
    %2543 = vmatpush2.msra.mxu0 0.0
    %2544 = vmatprep.subr.mxu0 0.0
    %2545 = vmatpush2.msra.mxu0 0.0
    %2546 = vmatprep.subr.mxu0 0.0
    %2547 = vmatpush2.msra.mxu0 0.0
    %2548 = vmatprep.subr.mxu0 0.0
    %2549 = vmatpush2.msra.mxu0 0.0
    %2550 = vmatprep.subr.mxu0 0.0
    %2551 = vmatpush2.msra.mxu0 0.0
    %2552 = vmatprep.subr.mxu0 0.0
    %2553 = vmatpush2.msra.mxu0 0.0
    %2554 = vmatprep.mubr.f32.mxu0 0.0
    %2555 = vmatmul.mubr.f32.gmra.mxu0 %v2485
    %v2556 = vpop.f32.mrf.mxu0
    %v2557 = vadd.f32 0.0, %v2556
    %v2558 = vpop.f32.mrf.mxu0
    %2559 = vmatprep.mubr.f32.mxu0 0.0
    %2560 = vmatmul.mubr.f32.gmra.mxu0 %v2488
    %v2561 = vpop.f32.mrf.mxu0
    %v2562 = vadd.f32 0.0, %v2561
    %v2563 = vpop.f32.mrf.mxu0
    %2564 = vdwg.mxu0
    %v2565 = vlaneseq
    %v2566 = vshrl.u32 %v2565, 7
    %v2567 = vsub.s32 3, %v2566
    %v2568 = vrot.slane %v1945, %v2567
    %v2570 = vsel %vm135, %v2557, 0
    %v2573 = vsel %vm135, %v2562, 0
    %2575 = vmatprep.subr.mxu0 0.0
    %2576 = vmatpush1.msra.mxu0 0.0
    %2577 = vmatprep.subr.mxu0 0.0
    %2578 = vmatpush1.msra.mxu0 0.0
    %2579 = vmatprep.subr.mxu0 0.0
    %2580 = vmatpush1.msra.mxu0 0.0
    %2581 = vmatprep.subr.mxu0 0.0
    %2582 = vmatpush1.msra.mxu0 0.0
    %2583 = vmatprep.subr.mxu0 0.0
    %2584 = vmatpush1.msra.mxu0 0.0
    %2585 = vmatprep.subr.mxu0 0.0
    %2586 = vmatpush1.msra.mxu0 0.0
    %2587 = vmatprep.subr.mxu0 0.0
    %2588 = vmatpush1.msra.mxu0 0.0
    %2589 = vmatprep.subr.mxu0 0.0
    %2590 = vmatpush1.msra.mxu0 0.0
    %2591 = vmatprep.subr.mxu0 0.0
    %2592 = vmatpush1.msra.mxu0 0.0
    %2593 = vmatprep.subr.mxu0 0.0
    %2594 = vmatpush1.msra.mxu0 0.0
    %2595 = vmatprep.subr.mxu0 0.0
    %2596 = vmatpush1.msra.mxu0 0.0
    %2597 = vmatprep.subr.mxu0 0.0
    %2598 = vmatpush1.msra.mxu0 0.0
    %2599 = vmatprep.subr.mxu0 0.0
    %2600 = vmatpush1.msra.mxu0 %v2209
    %2601 = vmatprep.subr.mxu0 0.0
    %2602 = vmatpush1.msra.mxu0 %v2208
    %2603 = vmatprep.subr.mxu0 0.0
    %2604 = vmatpush1.msra.mxu0 %v2207
    %2605 = vmatprep.subr.mxu0 0.0
    %2606 = vmatpush1.msra.mxu0 %v2206
    %2607 = vmatprep.subr.mxu0 0.0
    %2608 = vmatpush2.msra.mxu0 0.0
    %2609 = vmatprep.subr.mxu0 0.0
    %2610 = vmatpush2.msra.mxu0 0.0
    %2611 = vmatprep.subr.mxu0 0.0
    %2612 = vmatpush2.msra.mxu0 0.0
    %2613 = vmatprep.subr.mxu0 0.0
    %2614 = vmatpush2.msra.mxu0 0.0
    %2615 = vmatprep.subr.mxu0 0.0
    %2616 = vmatpush2.msra.mxu0 0.0
    %2617 = vmatprep.subr.mxu0 0.0
    %2618 = vmatpush2.msra.mxu0 0.0
    %2619 = vmatprep.subr.mxu0 0.0
    %2620 = vmatpush2.msra.mxu0 0.0
    %2621 = vmatprep.subr.mxu0 0.0
    %2622 = vmatpush2.msra.mxu0 0.0
    %2623 = vmatprep.subr.mxu0 0.0
    %2624 = vmatpush2.msra.mxu0 0.0
    %2625 = vmatprep.subr.mxu0 0.0
    %2626 = vmatpush2.msra.mxu0 0.0
    %2627 = vmatprep.subr.mxu0 0.0
    %2628 = vmatpush2.msra.mxu0 0.0
    %2629 = vmatprep.subr.mxu0 0.0
    %2630 = vmatpush2.msra.mxu0 0.0
    %2631 = vmatprep.subr.mxu0 0.0
    %2632 = vmatpush2.msra.mxu0 0.0
    %2633 = vmatprep.subr.mxu0 0.0
    %2634 = vmatpush2.msra.mxu0 0.0
    %2635 = vmatprep.subr.mxu0 0.0
    %2636 = vmatpush2.msra.mxu0 0.0
    %2637 = vmatprep.subr.mxu0 0.0
    %2638 = vmatpush2.msra.mxu0 0.0
    %2639 = vmatprep.mubr.f32.mxu0 0.0
    %2640 = vmatmul.mubr.f32.gmra.mxu0 %v2570
    %v2641 = vpop.f32.mrf.mxu0
    %v2642 = vadd.f32 %v2568, %v2641
    %v2643 = vpop.f32.mrf.mxu0
    %2644 = vmatprep.mubr.f32.mxu0 0.0
    %2645 = vmatmul.mubr.f32.gmra.mxu0 %v2573
    %v2646 = vpop.f32.mrf.mxu0
    %v2647 = vadd.f32 %v2568, %v2646
    %v2648 = vpop.f32.mrf.mxu0
    %2649 = vdwg.mxu0
    %v2650 = vadd.f32 %v1942, %v2642
    %v2651 = vadd.f32 %v1943, %v2647
    %v2652 = vsel %vm135, %v2650, 0.0
    %2653 = vadd.xlane.f32.xlu0 %v2652
    %v2654 = vpop.xlane.xlu0 %2653
    %v2655 = vsel %vm135, %v2651, 0.0
    %2656 = vadd.xlane.f32.xlu0 %v2655
    %v2657 = vpop.xlane.xlu0 %2656
    %v2658 = vmul.f32 %v2654, %v938
    %v2659 = vmul.f32 %v2657, %v938
    %v2660 = vsub.f32 %v2650, %v2658
    %v2661 = vsub.f32 %v2651, %v2659
    %v2662 = vmul.f32 %v2660, %v2660
    %v2663 = vmul.f32 %v2661, %v2661
    %v2664 = vsel %vm135, %v2662, 0.0
    %2665 = vadd.xlane.f32.xlu0 %v2664
    %v2666 = vpop.xlane.xlu0 %2665
    %v2667 = vsel %vm135, %v2663, 0.0
    %2668 = vadd.xlane.f32.xlu0 %v2667
    %v2669 = vpop.xlane.xlu0 %2668
    %v2670 = vmul.f32 %v2666, %v938
    %v2671 = vmul.f32 %v2669, %v938
    %v2672 = vadd.f32 %v2670, 1e-05
    %v2673 = vadd.f32 %v2671, 1e-05
    %v2674 = vrsqrt.pop %v2672
    %v2675 = vrsqrt.pop %v2673
    %v2676 = vmul.f32 %v2660, %v2674
    %v2677 = vmul.f32 %v2661, %v2675
    %v2678 = vlaneseq
    %v2679 = vshrl.u32 %v2678, 7
    %v2680 = vsub.s32 2, %v2679
    %v2681 = vrot.slane %v1946, %v2680
    %v2682 = vmul.f32 %v2676, %v2681
    %v2683 = vmul.f32 %v2677, %v2681
    %v2684 = vlaneseq
    %v2685 = vshrl.u32 %v2684, 7
    %v2686 = vsub.s32 3, %v2685
    %v2687 = vrot.slane %v1946, %v2686
    %v2688 = vadd.f32 %v2682, %v2687
    %v2689 = vadd.f32 %v2683, %v2687
    %s2690 = scalar_lea.vmem [#allocation2], 384
    %v2691 = vld [vmem:[%s2690] sm:$0xff]
    %v2692 = vld [vmem:[%s2690 + $0x8] sm:$0xff]
    %v2693 = vld [vmem:[%s2690 + $0x10] sm:$0xff]
    %v2694 = vld [vmem:[%s2690 + $0x18] sm:$0xff]
    %v2695 = vlaneseq
    %v2696 = vshrl.u32 %v2695, 7
    %v2697 = vsub.s32 4, %v2696
    %v2698 = vrot.slane %v1945, %v2697
    %v2700 = vsel %vm135, %v2688, 0
    %v2703 = vsel %vm135, %v2689, 0
    %2705 = vmatprep.subr.mxu0 0.0
    %2706 = vmatpush1.msra.mxu0 0.0
    %2707 = vmatprep.subr.mxu0 0.0
    %2708 = vmatpush1.msra.mxu0 0.0
    %2709 = vmatprep.subr.mxu0 0.0
    %2710 = vmatpush1.msra.mxu0 0.0
    %2711 = vmatprep.subr.mxu0 0.0
    %2712 = vmatpush1.msra.mxu0 0.0
    %2713 = vmatprep.subr.mxu0 0.0
    %2714 = vmatpush1.msra.mxu0 0.0
    %2715 = vmatprep.subr.mxu0 0.0
    %2716 = vmatpush1.msra.mxu0 0.0
    %2717 = vmatprep.subr.mxu0 0.0
    %2718 = vmatpush1.msra.mxu0 0.0
    %2719 = vmatprep.subr.mxu0 0.0
    %2720 = vmatpush1.msra.mxu0 0.0
    %2721 = vmatprep.subr.mxu0 0.0
    %2722 = vmatpush1.msra.mxu0 0.0
    %2723 = vmatprep.subr.mxu0 0.0
    %2724 = vmatpush1.msra.mxu0 0.0
    %2725 = vmatprep.subr.mxu0 0.0
    %2726 = vmatpush1.msra.mxu0 0.0
    %2727 = vmatprep.subr.mxu0 0.0
    %2728 = vmatpush1.msra.mxu0 0.0
    %2729 = vmatprep.subr.mxu0 0.0
    %2730 = vmatpush1.msra.mxu0 %v2694
    %2731 = vmatprep.subr.mxu0 0.0
    %2732 = vmatpush1.msra.mxu0 %v2693
    %2733 = vmatprep.subr.mxu0 0.0
    %2734 = vmatpush1.msra.mxu0 %v2692
    %2735 = vmatprep.subr.mxu0 0.0
    %2736 = vmatpush1.msra.mxu0 %v2691
    %2737 = vmatprep.subr.mxu0 0.0
    %2738 = vmatpush2.msra.mxu0 0.0
    %2739 = vmatprep.subr.mxu0 0.0
    %2740 = vmatpush2.msra.mxu0 0.0
    %2741 = vmatprep.subr.mxu0 0.0
    %2742 = vmatpush2.msra.mxu0 0.0
    %2743 = vmatprep.subr.mxu0 0.0
    %2744 = vmatpush2.msra.mxu0 0.0
    %2745 = vmatprep.subr.mxu0 0.0
    %2746 = vmatpush2.msra.mxu0 0.0
    %2747 = vmatprep.subr.mxu0 0.0
    %2748 = vmatpush2.msra.mxu0 0.0
    %2749 = vmatprep.subr.mxu0 0.0
    %2750 = vmatpush2.msra.mxu0 0.0
    %2751 = vmatprep.subr.mxu0 0.0
    %2752 = vmatpush2.msra.mxu0 0.0
    %2753 = vmatprep.subr.mxu0 0.0
    %2754 = vmatpush2.msra.mxu0 0.0
    %2755 = vmatprep.subr.mxu0 0.0
    %2756 = vmatpush2.msra.mxu0 0.0
    %2757 = vmatprep.subr.mxu0 0.0
    %2758 = vmatpush2.msra.mxu0 0.0
    %2759 = vmatprep.subr.mxu0 0.0
    %2760 = vmatpush2.msra.mxu0 0.0
    %2761 = vmatprep.subr.mxu0 0.0
    %2762 = vmatpush2.msra.mxu0 0.0
    %2763 = vmatprep.subr.mxu0 0.0
    %2764 = vmatpush2.msra.mxu0 0.0
    %2765 = vmatprep.subr.mxu0 0.0
    %2766 = vmatpush2.msra.mxu0 0.0
    %2767 = vmatprep.subr.mxu0 0.0
    %2768 = vmatpush2.msra.mxu0 0.0
    %2769 = vmatprep.mubr.f32.mxu0 0.0
    %2770 = vmatmul.mubr.f32.gmra.mxu0 %v2700
    %v2771 = vpop.f32.mrf.mxu0
    %v2772 = vadd.f32 %v2698, %v2771
    %v2773 = vpop.f32.mrf.mxu0
    %2774 = vmatprep.mubr.f32.mxu0 0.0
    %2775 = vmatmul.mubr.f32.gmra.mxu0 %v2703
    %v2776 = vpop.f32.mrf.mxu0
    %v2777 = vadd.f32 %v2698, %v2776
    %v2778 = vpop.f32.mrf.mxu0
    %2779 = vdwg.mxu0
    %s2780 = scalar_lea.vmem [#allocation2], 416
    %v2781 = vld [vmem:[%s2780] sm:$0xff]
    %v2782 = vld [vmem:[%s2780 + $0x8] sm:$0xff]
    %v2783 = vld [vmem:[%s2780 + $0x10] sm:$0xff]
    %v2784 = vld [vmem:[%s2780 + $0x18] sm:$0xff]
    %v2785 = vlaneseq
    %v2786 = vshrl.u32 %v2785, 7
    %v2787 = vsub.s32 5, %v2786
    %v2788 = vrot.slane %v1945, %v2787
    %2789 = vmatprep.subr.mxu0 0.0
    %2790 = vmatpush1.msra.mxu0 0.0
    %2791 = vmatprep.subr.mxu0 0.0
    %2792 = vmatpush1.msra.mxu0 0.0
    %2793 = vmatprep.subr.mxu0 0.0
    %2794 = vmatpush1.msra.mxu0 0.0
    %2795 = vmatprep.subr.mxu0 0.0
    %2796 = vmatpush1.msra.mxu0 0.0
    %2797 = vmatprep.subr.mxu0 0.0
    %2798 = vmatpush1.msra.mxu0 0.0
    %2799 = vmatprep.subr.mxu0 0.0
    %2800 = vmatpush1.msra.mxu0 0.0
    %2801 = vmatprep.subr.mxu0 0.0
    %2802 = vmatpush1.msra.mxu0 0.0
    %2803 = vmatprep.subr.mxu0 0.0
    %2804 = vmatpush1.msra.mxu0 0.0
    %2805 = vmatprep.subr.mxu0 0.0
    %2806 = vmatpush1.msra.mxu0 0.0
    %2807 = vmatprep.subr.mxu0 0.0
    %2808 = vmatpush1.msra.mxu0 0.0
    %2809 = vmatprep.subr.mxu0 0.0
    %2810 = vmatpush1.msra.mxu0 0.0
    %2811 = vmatprep.subr.mxu0 0.0
    %2812 = vmatpush1.msra.mxu0 0.0
    %2813 = vmatprep.subr.mxu0 0.0
    %2814 = vmatpush1.msra.mxu0 %v2784
    %2815 = vmatprep.subr.mxu0 0.0
    %2816 = vmatpush1.msra.mxu0 %v2783
    %2817 = vmatprep.subr.mxu0 0.0
    %2818 = vmatpush1.msra.mxu0 %v2782
    %2819 = vmatprep.subr.mxu0 0.0
    %2820 = vmatpush1.msra.mxu0 %v2781
    %2821 = vmatprep.subr.mxu0 0.0
    %2822 = vmatpush2.msra.mxu0 0.0
    %2823 = vmatprep.subr.mxu0 0.0
    %2824 = vmatpush2.msra.mxu0 0.0
    %2825 = vmatprep.subr.mxu0 0.0
    %2826 = vmatpush2.msra.mxu0 0.0
    %2827 = vmatprep.subr.mxu0 0.0
    %2828 = vmatpush2.msra.mxu0 0.0
    %2829 = vmatprep.subr.mxu0 0.0
    %2830 = vmatpush2.msra.mxu0 0.0
    %2831 = vmatprep.subr.mxu0 0.0
    %2832 = vmatpush2.msra.mxu0 0.0
    %2833 = vmatprep.subr.mxu0 0.0
    %2834 = vmatpush2.msra.mxu0 0.0
    %2835 = vmatprep.subr.mxu0 0.0
    %2836 = vmatpush2.msra.mxu0 0.0
    %2837 = vmatprep.subr.mxu0 0.0
    %2838 = vmatpush2.msra.mxu0 0.0
    %2839 = vmatprep.subr.mxu0 0.0
    %2840 = vmatpush2.msra.mxu0 0.0
    %2841 = vmatprep.subr.mxu0 0.0
    %2842 = vmatpush2.msra.mxu0 0.0
    %2843 = vmatprep.subr.mxu0 0.0
    %2844 = vmatpush2.msra.mxu0 0.0
    %2845 = vmatprep.subr.mxu0 0.0
    %2846 = vmatpush2.msra.mxu0 0.0
    %2847 = vmatprep.subr.mxu0 0.0
    %2848 = vmatpush2.msra.mxu0 0.0
    %2849 = vmatprep.subr.mxu0 0.0
    %2850 = vmatpush2.msra.mxu0 0.0
    %2851 = vmatprep.subr.mxu0 0.0
    %2852 = vmatpush2.msra.mxu0 0.0
    %2853 = vmatprep.mubr.f32.mxu0 0.0
    %2854 = vmatmul.mubr.f32.gmra.mxu0 %v1071
    %v2855 = vpop.f32.mrf.mxu0
    %v2856 = vadd.f32 %v2788, %v2855
    %v2857 = vpop.f32.mrf.mxu0
    %2858 = vmatprep.mubr.f32.mxu0 0.0
    %2859 = vmatmul.mubr.f32.gmra.mxu0 %v1074
    %v2860 = vpop.f32.mrf.mxu0
    %v2861 = vadd.f32 %v2788, %v2860
    %v2862 = vpop.f32.mrf.mxu0
    %2863 = vdwg.mxu0
    %s2864 = scalar_lea.vmem [#allocation2], 448
    %v2865 = vld [vmem:[%s2864] sm:$0xff]
    %v2866 = vld [vmem:[%s2864 + $0x8] sm:$0xff]
    %v2867 = vld [vmem:[%s2864 + $0x10] sm:$0xff]
    %v2868 = vld [vmem:[%s2864 + $0x18] sm:$0xff]
    %v2869 = vlaneseq
    %v2870 = vshrl.u32 %v2869, 7
    %v2871 = vsub.s32 6, %v2870
    %v2872 = vrot.slane %v1945, %v2871
    %2873 = vmatprep.subr.mxu0 0.0
    %2874 = vmatpush1.msra.mxu0 0.0
    %2875 = vmatprep.subr.mxu0 0.0
    %2876 = vmatpush1.msra.mxu0 0.0
    %2877 = vmatprep.subr.mxu0 0.0
    %2878 = vmatpush1.msra.mxu0 0.0
    %2879 = vmatprep.subr.mxu0 0.0
    %2880 = vmatpush1.msra.mxu0 0.0
    %2881 = vmatprep.subr.mxu0 0.0
    %2882 = vmatpush1.msra.mxu0 0.0
    %2883 = vmatprep.subr.mxu0 0.0
    %2884 = vmatpush1.msra.mxu0 0.0
    %2885 = vmatprep.subr.mxu0 0.0
    %2886 = vmatpush1.msra.mxu0 0.0
    %2887 = vmatprep.subr.mxu0 0.0
    %2888 = vmatpush1.msra.mxu0 0.0
    %2889 = vmatprep.subr.mxu0 0.0
    %2890 = vmatpush1.msra.mxu0 0.0
    %2891 = vmatprep.subr.mxu0 0.0
    %2892 = vmatpush1.msra.mxu0 0.0
    %2893 = vmatprep.subr.mxu0 0.0
    %2894 = vmatpush1.msra.mxu0 0.0
    %2895 = vmatprep.subr.mxu0 0.0
    %2896 = vmatpush1.msra.mxu0 0.0
    %2897 = vmatprep.subr.mxu0 0.0
    %2898 = vmatpush1.msra.mxu0 %v2868
    %2899 = vmatprep.subr.mxu0 0.0
    %2900 = vmatpush1.msra.mxu0 %v2867
    %2901 = vmatprep.subr.mxu0 0.0
    %2902 = vmatpush1.msra.mxu0 %v2866
    %2903 = vmatprep.subr.mxu0 0.0
    %2904 = vmatpush1.msra.mxu0 %v2865
    %2905 = vmatprep.subr.mxu0 0.0
    %2906 = vmatpush2.msra.mxu0 0.0
    %2907 = vmatprep.subr.mxu0 0.0
    %2908 = vmatpush2.msra.mxu0 0.0
    %2909 = vmatprep.subr.mxu0 0.0
    %2910 = vmatpush2.msra.mxu0 0.0
    %2911 = vmatprep.subr.mxu0 0.0
    %2912 = vmatpush2.msra.mxu0 0.0
    %2913 = vmatprep.subr.mxu0 0.0
    %2914 = vmatpush2.msra.mxu0 0.0
    %2915 = vmatprep.subr.mxu0 0.0
    %2916 = vmatpush2.msra.mxu0 0.0
    %2917 = vmatprep.subr.mxu0 0.0
    %2918 = vmatpush2.msra.mxu0 0.0
    %2919 = vmatprep.subr.mxu0 0.0
    %2920 = vmatpush2.msra.mxu0 0.0
    %2921 = vmatprep.subr.mxu0 0.0
    %2922 = vmatpush2.msra.mxu0 0.0
    %2923 = vmatprep.subr.mxu0 0.0
    %2924 = vmatpush2.msra.mxu0 0.0
    %2925 = vmatprep.subr.mxu0 0.0
    %2926 = vmatpush2.msra.mxu0 0.0
    %2927 = vmatprep.subr.mxu0 0.0
    %2928 = vmatpush2.msra.mxu0 0.0
    %2929 = vmatprep.subr.mxu0 0.0
    %2930 = vmatpush2.msra.mxu0 0.0
    %2931 = vmatprep.subr.mxu0 0.0
    %2932 = vmatpush2.msra.mxu0 0.0
    %2933 = vmatprep.subr.mxu0 0.0
    %2934 = vmatpush2.msra.mxu0 0.0
    %2935 = vmatprep.subr.mxu0 0.0
    %2936 = vmatpush2.msra.mxu0 0.0
    %2937 = vmatprep.mubr.f32.mxu0 0.0
    %2938 = vmatmul.mubr.f32.gmra.mxu0 %v1071
    %v2939 = vpop.f32.mrf.mxu0
    %v2940 = vadd.f32 %v2872, %v2939
    %v2941 = vpop.f32.mrf.mxu0
    %2942 = vmatprep.mubr.f32.mxu0 0.0
    %2943 = vmatmul.mubr.f32.gmra.mxu0 %v1074
    %v2944 = vpop.f32.mrf.mxu0
    %v2945 = vadd.f32 %v2872, %v2944
    %v2946 = vpop.f32.mrf.mxu0
    %2947 = vdwg.mxu0
    %s2948 = scalar_lea.vmem [#allocation2], 480
    %v2949 = vld [vmem:[%s2948] sm:$0xff]
    %v2950 = vld [vmem:[%s2948 + $0x8] sm:$0xff]
    %v2951 = vld [vmem:[%s2948 + $0x10] sm:$0xff]
    %v2952 = vld [vmem:[%s2948 + $0x18] sm:$0xff]
    %2953 = vxpose.xlu0.b32.start [1/16] %v2856, 128
    %2954 = vxpose.xlu0.b32.cont [2/16] %v2861, 128
    %2955 = vxpose.xlu0.b32.cont [3/16] 0.0, 128
    %2956 = vxpose.xlu0.b32.cont [4/16] 0.0, 128
    %2957 = vxpose.xlu0.b32.cont [5/16] 0.0, 128
    %2958 = vxpose.xlu0.b32.cont [6/16] 0.0, 128
    %2959 = vxpose.xlu0.b32.cont [7/16] 0.0, 128
    %2960 = vxpose.xlu0.b32.cont [8/16] 0.0, 128
    %2961 = vxpose.xlu0.b32.cont [9/16] 0.0, 128
    %2962 = vxpose.xlu0.b32.cont [10/16] 0.0, 128
    %2963 = vxpose.xlu0.b32.cont [11/16] 0.0, 128
    %2964 = vxpose.xlu0.b32.cont [12/16] 0.0, 128
    %2965 = vxpose.xlu0.b32.cont [13/16] 0.0, 128
    %2966 = vxpose.xlu0.b32.cont [14/16] 0.0, 128
    %2967 = vxpose.xlu0.b32.cont [15/16] 0.0, 128
    %2968 = vxpose.xlu0.b32.end [16/16] 0.0, 128
    %v2969 = vpop.trf.xlu0
    %v2970 = vpop.trf.xlu0
    %v2971 = vpop.trf.xlu0
    %v2972 = vpop.trf.xlu0
    %v2973 = vpop.trf.xlu0
    %v2974 = vpop.trf.xlu0
    %v2975 = vpop.trf.xlu0
    %v2976 = vpop.trf.xlu0
    %v2977 = vpop.trf.xlu0
    %v2978 = vpop.trf.xlu0
    %v2979 = vpop.trf.xlu0
    %v2980 = vpop.trf.xlu0
    %v2981 = vpop.trf.xlu0
    %v2982 = vpop.trf.xlu0
    %v2983 = vpop.trf.xlu0
    %v2984 = vpop.trf.xlu0
    %2989 = vrot.lane.b32.xlu0 %v2969, 16
    %v2990 = vpop.permute.xlu0 %2989
    %2991 = vrot.lane.b32.xlu0 %v2970, 16
    %v2992 = vpop.permute.xlu0 %2991
    %2993 = vrot.lane.b32.xlu0 %v2971, 16
    %v2994 = vpop.permute.xlu0 %2993
    %2995 = vrot.lane.b32.xlu0 %v2972, 16
    %v2996 = vpop.permute.xlu0 %2995
    %3001 = vrot.lane.b32.xlu0 %v2969, 32
    %v3002 = vpop.permute.xlu0 %3001
    %3003 = vrot.lane.b32.xlu0 %v2970, 32
    %v3004 = vpop.permute.xlu0 %3003
    %3005 = vrot.lane.b32.xlu0 %v2971, 32
    %v3006 = vpop.permute.xlu0 %3005
    %3007 = vrot.lane.b32.xlu0 %v2972, 32
    %v3008 = vpop.permute.xlu0 %3007
    %3013 = vrot.lane.b32.xlu0 %v2969, 48
    %v3014 = vpop.permute.xlu0 %3013
    %3015 = vrot.lane.b32.xlu0 %v2970, 48
    %v3016 = vpop.permute.xlu0 %3015
    %3017 = vrot.lane.b32.xlu0 %v2971, 48
    %v3018 = vpop.permute.xlu0 %3017
    %3019 = vrot.lane.b32.xlu0 %v2972, 48
    %v3020 = vpop.permute.xlu0 %3019
    %v3025 = vsel %vm130, %v2969, %v2990
    %v3026 = vsel %vm130, %v2970, %v2992
    %v3027 = vsel %vm130, %v2971, %v2994
    %v3028 = vsel %vm130, %v2972, %v2996
    %v3029 = vsel %vm135, %v3025, %v3002
    %v3030 = vsel %vm135, %v3026, %v3004
    %v3031 = vsel %vm135, %v3027, %v3006
    %v3032 = vsel %vm135, %v3028, %v3008
    %v3033 = vsel %vm140, %v3029, %v3014
    %v3034 = vsel %vm140, %v3030, %v3016
    %v3035 = vsel %vm140, %v3031, %v3018
    %v3036 = vsel %vm140, %v3032, %v3020
    %v3037 = vmul.f32 %v3033, %v141
    %v3038 = vmul.f32 %v3034, %v142
    %v3039 = vmul.f32 %v3035, %v143
    %v3040 = vmul.f32 %v3036, %v144
    %v3041 = vmul.f32 %v2940, %v48
    %v3042 = vmul.f32 %v2945, %v48
    %v3043 = vmul.f32 %v2940, %v52
    %v3044 = vmul.f32 %v2945, %v52
    %v3045 = vmul.f32 %v2940, %v56
    %v3046 = vmul.f32 %v2945, %v56
    %v3047 = vmul.f32 %v2940, %v60
    %v3048 = vmul.f32 %v2945, %v60
    %v3049 = vmul.f32 %v2772, 0.35355338
    %v3050 = vmul.f32 %v2777, 0.35355338
    %v3052 = vsel %vm135, %v3049, 0
    %v3055 = vsel %vm135, %v3050, 0
    %3057 = vmatprep.subr.mxu0 0.0
    %3058 = vmatpush1.msra.mxu0 0.0
    %3059 = vmatprep.subr.mxu0 0.0
    %3060 = vmatpush1.msra.mxu0 0.0
    %3061 = vmatprep.subr.mxu0 0.0
    %3062 = vmatpush1.msra.mxu0 0.0
    %3063 = vmatprep.subr.mxu0 0.0
    %3064 = vmatpush1.msra.mxu0 0.0
    %3065 = vmatprep.subr.mxu0 0.0
    %3066 = vmatpush1.msra.mxu0 0.0
    %3067 = vmatprep.subr.mxu0 0.0
    %3068 = vmatpush1.msra.mxu0 0.0
    %3069 = vmatprep.subr.mxu0 0.0
    %3070 = vmatpush1.msra.mxu0 0.0
    %3071 = vmatprep.subr.mxu0 0.0
    %3072 = vmatpush1.msra.mxu0 0.0
    %3073 = vmatprep.subr.mxu0 0.0
    %3074 = vmatpush1.msra.mxu0 0.0
    %3075 = vmatprep.subr.mxu0 0.0
    %3076 = vmatpush1.msra.mxu0 0.0
    %3077 = vmatprep.subr.mxu0 0.0
    %3078 = vmatpush1.msra.mxu0 0.0
    %3079 = vmatprep.subr.mxu0 0.0
    %3080 = vmatpush1.msra.mxu0 0.0
    %3081 = vmatprep.subr.mxu0 0.0
    %3082 = vmatpush1.msra.mxu0 %v3040
    %3083 = vmatprep.subr.mxu0 0.0
    %3084 = vmatpush1.msra.mxu0 %v3039
    %3085 = vmatprep.subr.mxu0 0.0
    %3086 = vmatpush1.msra.mxu0 %v3038
    %3087 = vmatprep.subr.mxu0 0.0
    %3088 = vmatpush1.msra.mxu0 %v3037
    %3089 = vmatprep.subr.mxu0 0.0
    %3090 = vmatpush2.msra.mxu0 0.0
    %3091 = vmatprep.subr.mxu0 0.0
    %3092 = vmatpush2.msra.mxu0 0.0
    %3093 = vmatprep.subr.mxu0 0.0
    %3094 = vmatpush2.msra.mxu0 0.0
    %3095 = vmatprep.subr.mxu0 0.0
    %3096 = vmatpush2.msra.mxu0 0.0
    %3097 = vmatprep.subr.mxu0 0.0
    %3098 = vmatpush2.msra.mxu0 0.0
    %3099 = vmatprep.subr.mxu0 0.0
    %3100 = vmatpush2.msra.mxu0 0.0
    %3101 = vmatprep.subr.mxu0 0.0
    %3102 = vmatpush2.msra.mxu0 0.0
    %3103 = vmatprep.subr.mxu0 0.0
    %3104 = vmatpush2.msra.mxu0 0.0
    %3105 = vmatprep.subr.mxu0 0.0
    %3106 = vmatpush2.msra.mxu0 0.0
    %3107 = vmatprep.subr.mxu0 0.0
    %3108 = vmatpush2.msra.mxu0 0.0
    %3109 = vmatprep.subr.mxu0 0.0
    %3110 = vmatpush2.msra.mxu0 0.0
    %3111 = vmatprep.subr.mxu0 0.0
    %3112 = vmatpush2.msra.mxu0 0.0
    %3113 = vmatprep.subr.mxu0 0.0
    %3114 = vmatpush2.msra.mxu0 0.0
    %3115 = vmatprep.subr.mxu0 0.0
    %3116 = vmatpush2.msra.mxu0 0.0
    %3117 = vmatprep.subr.mxu0 0.0
    %3118 = vmatpush2.msra.mxu0 0.0
    %3119 = vmatprep.subr.mxu0 0.0
    %3120 = vmatpush2.msra.mxu0 0.0
    %3121 = vmatprep.mubr.f32.mxu0 0.0
    %3122 = vmatmul.mubr.f32.gmra.mxu0 %v3052
    %v3123 = vpop.f32.mrf.mxu0
    %v3124 = vadd.f32 %v223, %v3123
    %v3125 = vpop.f32.mrf.mxu0
    %3126 = vmatprep.mubr.f32.mxu0 0.0
    %3127 = vmatmul.mubr.f32.gmra.mxu0 %v3055
    %v3128 = vpop.f32.mrf.mxu0
    %v3129 = vadd.f32 %v224, %v3128
    %v3130 = vpop.f32.mrf.mxu0
    %3131 = vdwg.mxu0
    %v3132 = vmul.f32 %v3124, 1.442695
    %v3133 = vpow.pop %v3132
    %v3134 = vmul.f32 %v3129, 1.442695
    %v3135 = vpow.pop %v3134
    %v3137 = vsel %vm672, %v3133, 0
    %v3140 = vsel %vm672, %v3135, 0
    %3142 = vmatprep.subr.mxu0 0.0
    %3143 = vmatpush1.msra.mxu0 0.0
    %3144 = vmatprep.subr.mxu0 0.0
    %3145 = vmatpush1.msra.mxu0 0.0
    %3146 = vmatprep.subr.mxu0 0.0
    %3147 = vmatpush1.msra.mxu0 0.0
    %3148 = vmatprep.subr.mxu0 0.0
    %3149 = vmatpush1.msra.mxu0 0.0
    %3150 = vmatprep.subr.mxu0 0.0
    %3151 = vmatpush1.msra.mxu0 0.0
    %3152 = vmatprep.subr.mxu0 0.0
    %3153 = vmatpush1.msra.mxu0 0.0
    %3154 = vmatprep.subr.mxu0 0.0
    %3155 = vmatpush1.msra.mxu0 0.0
    %3156 = vmatprep.subr.mxu0 0.0
    %3157 = vmatpush1.msra.mxu0 0.0
    %3158 = vmatprep.subr.mxu0 0.0
    %3159 = vmatpush1.msra.mxu0 %v156
    %3160 = vmatprep.subr.mxu0 0.0
    %3161 = vmatpush1.msra.mxu0 %v156
    %3162 = vmatprep.subr.mxu0 0.0
    %3163 = vmatpush1.msra.mxu0 %v152
    %3164 = vmatprep.subr.mxu0 0.0
    %3165 = vmatpush1.msra.mxu0 %v152
    %3166 = vmatprep.subr.mxu0 0.0
    %3167 = vmatpush1.msra.mxu0 %v148
    %3168 = vmatprep.subr.mxu0 0.0
    %3169 = vmatpush1.msra.mxu0 %v148
    %3170 = vmatprep.subr.mxu0 0.0
    %3171 = vmatpush1.msra.mxu0 %v146
    %3172 = vmatprep.subr.mxu0 0.0
    %3173 = vmatpush1.msra.mxu0 %v146
    %3174 = vmatprep.subr.mxu0 0.0
    %3175 = vmatpush2.msra.mxu0 0.0
    %3176 = vmatprep.subr.mxu0 0.0
    %3177 = vmatpush2.msra.mxu0 0.0
    %3178 = vmatprep.subr.mxu0 0.0
    %3179 = vmatpush2.msra.mxu0 0.0
    %3180 = vmatprep.subr.mxu0 0.0
    %3181 = vmatpush2.msra.mxu0 0.0
    %3182 = vmatprep.subr.mxu0 0.0
    %3183 = vmatpush2.msra.mxu0 0.0
    %3184 = vmatprep.subr.mxu0 0.0
    %3185 = vmatpush2.msra.mxu0 0.0
    %3186 = vmatprep.subr.mxu0 0.0
    %3187 = vmatpush2.msra.mxu0 0.0
    %3188 = vmatprep.subr.mxu0 0.0
    %3189 = vmatpush2.msra.mxu0 0.0
    %3190 = vmatprep.subr.mxu0 0.0
    %3191 = vmatpush2.msra.mxu0 0.0
    %3192 = vmatprep.subr.mxu0 0.0
    %3193 = vmatpush2.msra.mxu0 0.0
    %3194 = vmatprep.subr.mxu0 0.0
    %3195 = vmatpush2.msra.mxu0 0.0
    %3196 = vmatprep.subr.mxu0 0.0
    %3197 = vmatpush2.msra.mxu0 0.0
    %3198 = vmatprep.subr.mxu0 0.0
    %3199 = vmatpush2.msra.mxu0 0.0
    %3200 = vmatprep.subr.mxu0 0.0
    %3201 = vmatpush2.msra.mxu0 0.0
    %3202 = vmatprep.subr.mxu0 0.0
    %3203 = vmatpush2.msra.mxu0 0.0
    %3204 = vmatprep.subr.mxu0 0.0
    %3205 = vmatpush2.msra.mxu0 0.0
    %3206 = vmatprep.mubr.f32.mxu0 0.0
    %3207 = vmatmul.mubr.f32.gmra.mxu0 %v3137
    %v3208 = vpop.f32.mrf.mxu0
    %v3209 = vadd.f32 0.0, %v3208
    %v3210 = vpop.f32.mrf.mxu0
    %3211 = vmatprep.mubr.f32.mxu0 0.0
    %3212 = vmatmul.mubr.f32.gmra.mxu0 %v3140
    %v3213 = vpop.f32.mrf.mxu0
    %v3214 = vadd.f32 0.0, %v3213
    %v3215 = vpop.f32.mrf.mxu0
    %3216 = vdwg.mxu0
    %v3217 = vrcp.pop %v3209
    %v3218 = vrcp.pop %v3214
    %v3219 = vmul.f32 %v3209, %v3217
    %v3220 = vmul.f32 %v3214, %v3218
    %v3221 = vsub.f32 2.0, %v3219
    %v3222 = vsub.f32 2.0, %v3220
    %v3223 = vmul.f32 %v3217, %v3221
    %v3224 = vmul.f32 %v3218, %v3222
    %v3225 = vmul.f32 %v3133, %v3223
    %v3226 = vmul.f32 %v3135, %v3224
    %v3228 = vsel %vm672, %v3225, 0
    %v3231 = vsel %vm672, %v3226, 0
    %3233 = vmatprep.subr.mxu0 0.0
    %3234 = vmatpush1.msra.mxu0 0.0
    %3235 = vmatprep.subr.mxu0 0.0
    %3236 = vmatpush1.msra.mxu0 0.0
    %3237 = vmatprep.subr.mxu0 0.0
    %3238 = vmatpush1.msra.mxu0 0.0
    %3239 = vmatprep.subr.mxu0 0.0
    %3240 = vmatpush1.msra.mxu0 0.0
    %3241 = vmatprep.subr.mxu0 0.0
    %3242 = vmatpush1.msra.mxu0 0.0
    %3243 = vmatprep.subr.mxu0 0.0
    %3244 = vmatpush1.msra.mxu0 0.0
    %3245 = vmatprep.subr.mxu0 0.0
    %3246 = vmatpush1.msra.mxu0 0.0
    %3247 = vmatprep.subr.mxu0 0.0
    %3248 = vmatpush1.msra.mxu0 0.0
    %3249 = vmatprep.subr.mxu0 0.0
    %3250 = vmatpush1.msra.mxu0 %v3048
    %3251 = vmatprep.subr.mxu0 0.0
    %3252 = vmatpush1.msra.mxu0 %v3047
    %3253 = vmatprep.subr.mxu0 0.0
    %3254 = vmatpush1.msra.mxu0 %v3046
    %3255 = vmatprep.subr.mxu0 0.0
    %3256 = vmatpush1.msra.mxu0 %v3045
    %3257 = vmatprep.subr.mxu0 0.0
    %3258 = vmatpush1.msra.mxu0 %v3044
    %3259 = vmatprep.subr.mxu0 0.0
    %3260 = vmatpush1.msra.mxu0 %v3043
    %3261 = vmatprep.subr.mxu0 0.0
    %3262 = vmatpush1.msra.mxu0 %v3042
    %3263 = vmatprep.subr.mxu0 0.0
    %3264 = vmatpush1.msra.mxu0 %v3041
    %3265 = vmatprep.subr.mxu0 0.0
    %3266 = vmatpush2.msra.mxu0 0.0
    %3267 = vmatprep.subr.mxu0 0.0
    %3268 = vmatpush2.msra.mxu0 0.0
    %3269 = vmatprep.subr.mxu0 0.0
    %3270 = vmatpush2.msra.mxu0 0.0
    %3271 = vmatprep.subr.mxu0 0.0
    %3272 = vmatpush2.msra.mxu0 0.0
    %3273 = vmatprep.subr.mxu0 0.0
    %3274 = vmatpush2.msra.mxu0 0.0
    %3275 = vmatprep.subr.mxu0 0.0
    %3276 = vmatpush2.msra.mxu0 0.0
    %3277 = vmatprep.subr.mxu0 0.0
    %3278 = vmatpush2.msra.mxu0 0.0
    %3279 = vmatprep.subr.mxu0 0.0
    %3280 = vmatpush2.msra.mxu0 0.0
    %3281 = vmatprep.subr.mxu0 0.0
    %3282 = vmatpush2.msra.mxu0 0.0
    %3283 = vmatprep.subr.mxu0 0.0
    %3284 = vmatpush2.msra.mxu0 0.0
    %3285 = vmatprep.subr.mxu0 0.0
    %3286 = vmatpush2.msra.mxu0 0.0
    %3287 = vmatprep.subr.mxu0 0.0
    %3288 = vmatpush2.msra.mxu0 0.0
    %3289 = vmatprep.subr.mxu0 0.0
    %3290 = vmatpush2.msra.mxu0 0.0
    %3291 = vmatprep.subr.mxu0 0.0
    %3292 = vmatpush2.msra.mxu0 0.0
    %3293 = vmatprep.subr.mxu0 0.0
    %3294 = vmatpush2.msra.mxu0 0.0
    %3295 = vmatprep.subr.mxu0 0.0
    %3296 = vmatpush2.msra.mxu0 0.0
    %3297 = vmatprep.mubr.f32.mxu0 0.0
    %3298 = vmatmul.mubr.f32.gmra.mxu0 %v3228
    %v3299 = vpop.f32.mrf.mxu0
    %v3300 = vadd.f32 0.0, %v3299
    %v3301 = vpop.f32.mrf.mxu0
    %3302 = vmatprep.mubr.f32.mxu0 0.0
    %3303 = vmatmul.mubr.f32.gmra.mxu0 %v3231
    %v3304 = vpop.f32.mrf.mxu0
    %v3305 = vadd.f32 0.0, %v3304
    %v3306 = vpop.f32.mrf.mxu0
    %3307 = vdwg.mxu0
    %v3308 = vlaneseq
    %v3309 = vshrl.u32 %v3308, 7
    %v3310 = vsub.s32 7, %v3309
    %v3311 = vrot.slane %v1945, %v3310
    %v3313 = vsel %vm135, %v3300, 0
    %v3316 = vsel %vm135, %v3305, 0
    %3318 = vmatprep.subr.mxu0 0.0
    %3319 = vmatpush1.msra.mxu0 0.0
    %3320 = vmatprep.subr.mxu0 0.0
    %3321 = vmatpush1.msra.mxu0 0.0
    %3322 = vmatprep.subr.mxu0 0.0
    %3323 = vmatpush1.msra.mxu0 0.0
    %3324 = vmatprep.subr.mxu0 0.0
    %3325 = vmatpush1.msra.mxu0 0.0
    %3326 = vmatprep.subr.mxu0 0.0
    %3327 = vmatpush1.msra.mxu0 0.0
    %3328 = vmatprep.subr.mxu0 0.0
    %3329 = vmatpush1.msra.mxu0 0.0
    %3330 = vmatprep.subr.mxu0 0.0
    %3331 = vmatpush1.msra.mxu0 0.0
    %3332 = vmatprep.subr.mxu0 0.0
    %3333 = vmatpush1.msra.mxu0 0.0
    %3334 = vmatprep.subr.mxu0 0.0
    %3335 = vmatpush1.msra.mxu0 0.0
    %3336 = vmatprep.subr.mxu0 0.0
    %3337 = vmatpush1.msra.mxu0 0.0
    %3338 = vmatprep.subr.mxu0 0.0
    %3339 = vmatpush1.msra.mxu0 0.0
    %3340 = vmatprep.subr.mxu0 0.0
    %3341 = vmatpush1.msra.mxu0 0.0
    %3342 = vmatprep.subr.mxu0 0.0
    %3343 = vmatpush1.msra.mxu0 %v2952
    %3344 = vmatprep.subr.mxu0 0.0
    %3345 = vmatpush1.msra.mxu0 %v2951
    %3346 = vmatprep.subr.mxu0 0.0
    %3347 = vmatpush1.msra.mxu0 %v2950
    %3348 = vmatprep.subr.mxu0 0.0
    %3349 = vmatpush1.msra.mxu0 %v2949
    %3350 = vmatprep.subr.mxu0 0.0
    %3351 = vmatpush2.msra.mxu0 0.0
    %3352 = vmatprep.subr.mxu0 0.0
    %3353 = vmatpush2.msra.mxu0 0.0
    %3354 = vmatprep.subr.mxu0 0.0
    %3355 = vmatpush2.msra.mxu0 0.0
    %3356 = vmatprep.subr.mxu0 0.0
    %3357 = vmatpush2.msra.mxu0 0.0
    %3358 = vmatprep.subr.mxu0 0.0
    %3359 = vmatpush2.msra.mxu0 0.0
    %3360 = vmatprep.subr.mxu0 0.0
    %3361 = vmatpush2.msra.mxu0 0.0
    %3362 = vmatprep.subr.mxu0 0.0
    %3363 = vmatpush2.msra.mxu0 0.0
    %3364 = vmatprep.subr.mxu0 0.0
    %3365 = vmatpush2.msra.mxu0 0.0
    %3366 = vmatprep.subr.mxu0 0.0
    %3367 = vmatpush2.msra.mxu0 0.0
    %3368 = vmatprep.subr.mxu0 0.0
    %3369 = vmatpush2.msra.mxu0 0.0
    %3370 = vmatprep.subr.mxu0 0.0
    %3371 = vmatpush2.msra.mxu0 0.0
    %3372 = vmatprep.subr.mxu0 0.0
    %3373 = vmatpush2.msra.mxu0 0.0
    %3374 = vmatprep.subr.mxu0 0.0
    %3375 = vmatpush2.msra.mxu0 0.0
    %3376 = vmatprep.subr.mxu0 0.0
    %3377 = vmatpush2.msra.mxu0 0.0
    %3378 = vmatprep.subr.mxu0 0.0
    %3379 = vmatpush2.msra.mxu0 0.0
    %3380 = vmatprep.subr.mxu0 0.0
    %3381 = vmatpush2.msra.mxu0 0.0
    %3382 = vmatprep.mubr.f32.mxu0 0.0
    %3383 = vmatmul.mubr.f32.gmra.mxu0 %v3313
    %v3384 = vpop.f32.mrf.mxu0
    %v3385 = vadd.f32 %v3311, %v3384
    %v3386 = vpop.f32.mrf.mxu0
    %3387 = vmatprep.mubr.f32.mxu0 0.0
    %3388 = vmatmul.mubr.f32.gmra.mxu0 %v3316
    %v3389 = vpop.f32.mrf.mxu0
    %v3390 = vadd.f32 %v3311, %v3389
    %v3391 = vpop.f32.mrf.mxu0
    %3392 = vdwg.mxu0
    %v3393 = vadd.f32 %v2688, %v3385
    %v3394 = vadd.f32 %v2689, %v3390
    %v3395 = vsel %vm135, %v3393, 0.0
    %3396 = vadd.xlane.f32.xlu0 %v3395
    %v3397 = vpop.xlane.xlu0 %3396
    %v3398 = vsel %vm135, %v3394, 0.0
    %3399 = vadd.xlane.f32.xlu0 %v3398
    %v3400 = vpop.xlane.xlu0 %3399
    %v3401 = vmul.f32 %v3397, %v938
    %v3402 = vmul.f32 %v3400, %v938
    %v3403 = vsub.f32 %v3393, %v3401
    %v3404 = vsub.f32 %v3394, %v3402
    %v3405 = vmul.f32 %v3403, %v3403
    %v3406 = vmul.f32 %v3404, %v3404
    %v3407 = vsel %vm135, %v3405, 0.0
    %3408 = vadd.xlane.f32.xlu0 %v3407
    %v3409 = vpop.xlane.xlu0 %3408
    %v3410 = vsel %vm135, %v3406, 0.0
    %3411 = vadd.xlane.f32.xlu0 %v3410
    %v3412 = vpop.xlane.xlu0 %3411
    %v3413 = vmul.f32 %v3409, %v938
    %v3414 = vmul.f32 %v3412, %v938
    %v3415 = vadd.f32 %v3413, 1e-05
    %v3416 = vadd.f32 %v3414, 1e-05
    %v3417 = vrsqrt.pop %v3415
    %v3418 = vrsqrt.pop %v3416
    %v3419 = vmul.f32 %v3403, %v3417
    %v3420 = vmul.f32 %v3404, %v3418
    %v3421 = vlaneseq
    %v3422 = vshrl.u32 %v3421, 7
    %v3423 = vsub.s32 4, %v3422
    %v3424 = vrot.slane %v1946, %v3423
    %v3425 = vmul.f32 %v3419, %v3424
    %v3426 = vmul.f32 %v3420, %v3424
    %v3427 = vlaneseq
    %v3428 = vshrl.u32 %v3427, 7
    %v3429 = vsub.s32 5, %v3428
    %v3430 = vrot.slane %v1946, %v3429
    %v3431 = vadd.f32 %v3425, %v3430
    %v3432 = vadd.f32 %v3426, %v3430
    %s3433 = scalar_lea.vmem %s2, 32
    %v3434 = vld [vmem:[%s3433] sm:$0xff]
    %v3435 = vld [vmem:[%s3433 + $0x8] sm:$0xff]
    %v3436 = vld [vmem:[%s3433 + $0x10] sm:$0xff]
    %v3437 = vld [vmem:[%s3433 + $0x18] sm:$0xff]
    %v3438 = vlaneseq
    %v3439 = vshrl.u32 %v3438, 7
    %v3440 = vsub.s32 0, %v3439
    %v3441 = vrot.slane %v1946, %v3440
    %v3443 = vsel %vm135, %v3431, 0
    %v3446 = vsel %vm135, %v3432, 0
    %3448 = vmatprep.subr.mxu0 0.0
    %3449 = vmatpush1.msra.mxu0 0.0
    %3450 = vmatprep.subr.mxu0 0.0
    %3451 = vmatpush1.msra.mxu0 0.0
    %3452 = vmatprep.subr.mxu0 0.0
    %3453 = vmatpush1.msra.mxu0 0.0
    %3454 = vmatprep.subr.mxu0 0.0
    %3455 = vmatpush1.msra.mxu0 0.0
    %3456 = vmatprep.subr.mxu0 0.0
    %3457 = vmatpush1.msra.mxu0 0.0
    %3458 = vmatprep.subr.mxu0 0.0
    %3459 = vmatpush1.msra.mxu0 0.0
    %3460 = vmatprep.subr.mxu0 0.0
    %3461 = vmatpush1.msra.mxu0 0.0
    %3462 = vmatprep.subr.mxu0 0.0
    %3463 = vmatpush1.msra.mxu0 0.0
    %3464 = vmatprep.subr.mxu0 0.0
    %3465 = vmatpush1.msra.mxu0 0.0
    %3466 = vmatprep.subr.mxu0 0.0
    %3467 = vmatpush1.msra.mxu0 0.0
    %3468 = vmatprep.subr.mxu0 0.0
    %3469 = vmatpush1.msra.mxu0 0.0
    %3470 = vmatprep.subr.mxu0 0.0
    %3471 = vmatpush1.msra.mxu0 0.0
    %3472 = vmatprep.subr.mxu0 0.0
    %3473 = vmatpush1.msra.mxu0 %v3437
    %3474 = vmatprep.subr.mxu0 0.0
    %3475 = vmatpush1.msra.mxu0 %v3436
    %3476 = vmatprep.subr.mxu0 0.0
    %3477 = vmatpush1.msra.mxu0 %v3435
    %3478 = vmatprep.subr.mxu0 0.0
    %3479 = vmatpush1.msra.mxu0 %v3434
    %3480 = vmatprep.subr.mxu0 0.0
    %3481 = vmatpush2.msra.mxu0 0.0
    %3482 = vmatprep.subr.mxu0 0.0
    %3483 = vmatpush2.msra.mxu0 0.0
    %3484 = vmatprep.subr.mxu0 0.0
    %3485 = vmatpush2.msra.mxu0 0.0
    %3486 = vmatprep.subr.mxu0 0.0
    %3487 = vmatpush2.msra.mxu0 0.0
    %3488 = vmatprep.subr.mxu0 0.0
    %3489 = vmatpush2.msra.mxu0 0.0
    %3490 = vmatprep.subr.mxu0 0.0
    %3491 = vmatpush2.msra.mxu0 0.0
    %3492 = vmatprep.subr.mxu0 0.0
    %3493 = vmatpush2.msra.mxu0 0.0
    %3494 = vmatprep.subr.mxu0 0.0
    %3495 = vmatpush2.msra.mxu0 0.0
    %3496 = vmatprep.subr.mxu0 0.0
    %3497 = vmatpush2.msra.mxu0 0.0
    %3498 = vmatprep.subr.mxu0 0.0
    %3499 = vmatpush2.msra.mxu0 0.0
    %3500 = vmatprep.subr.mxu0 0.0
    %3501 = vmatpush2.msra.mxu0 0.0
    %3502 = vmatprep.subr.mxu0 0.0
    %3503 = vmatpush2.msra.mxu0 0.0
    %3504 = vmatprep.subr.mxu0 0.0
    %3505 = vmatpush2.msra.mxu0 0.0
    %3506 = vmatprep.subr.mxu0 0.0
    %3507 = vmatpush2.msra.mxu0 0.0
    %3508 = vmatprep.subr.mxu0 0.0
    %3509 = vmatpush2.msra.mxu0 0.0
    %3510 = vmatprep.subr.mxu0 0.0
    %3511 = vmatpush2.msra.mxu0 0.0
    %3512 = vmatprep.mubr.f32.mxu0 0.0
    %3513 = vmatmul.mubr.f32.gmra.mxu0 %v3443
    %v3514 = vpop.f32.mrf.mxu0
    %v3515 = vadd.f32 %v3441, %v3514
    %v3516 = vpop.f32.mrf.mxu0
    %3517 = vmatprep.mubr.f32.mxu0 0.0
    %3518 = vmatmul.mubr.f32.gmra.mxu0 %v3446
    %v3519 = vpop.f32.mrf.mxu0
    %v3520 = vadd.f32 %v3441, %v3519
    %v3521 = vpop.f32.mrf.mxu0
    %3522 = vdwg.mxu0
    %v3523 = vmax.f32 %v3515, 0.0
    %v3524 = vmax.f32 %v3520, 0.0
    %s3525 = scalar_lea.vmem %s3, 64
    %v3526 = vld [vmem:[%s3525] sm:$0xff]
    %v3527 = vld [vmem:[%s3525 + $0x8] sm:$0xff]
    %v3528 = vld [vmem:[%s3525 + $0x10] sm:$0xff]
    %v3529 = vld [vmem:[%s3525 + $0x18] sm:$0xff]
    %v3530 = vld [vmem:[%s3525 + $0x20] sm:$0xff]
    %v3531 = vld [vmem:[%s3525 + $0x28] sm:$0xff]
    %v3532 = vld [vmem:[%s3525 + $0x30] sm:$0xff]
    %v3533 = vld [vmem:[%s3525 + $0x38] sm:$0xff]
    %v3534 = vlaneseq
    %v3535 = vshrl.u32 %v3534, 7
    %v3536 = vsub.s32 1, %v3535
    %v3537 = vrot.slane %v1946, %v3536
    %v3539 = vsel %vm672, %v3523, 0
    %v3542 = vsel %vm672, %v3524, 0
    %3544 = vmatprep.subr.mxu0 0.0
    %3545 = vmatpush1.msra.mxu0 0.0
    %3546 = vmatprep.subr.mxu0 0.0
    %3547 = vmatpush1.msra.mxu0 0.0
    %3548 = vmatprep.subr.mxu0 0.0
    %3549 = vmatpush1.msra.mxu0 0.0
    %3550 = vmatprep.subr.mxu0 0.0
    %3551 = vmatpush1.msra.mxu0 0.0
    %3552 = vmatprep.subr.mxu0 0.0
    %3553 = vmatpush1.msra.mxu0 0.0
    %3554 = vmatprep.subr.mxu0 0.0
    %3555 = vmatpush1.msra.mxu0 0.0
    %3556 = vmatprep.subr.mxu0 0.0
    %3557 = vmatpush1.msra.mxu0 0.0
    %3558 = vmatprep.subr.mxu0 0.0
    %3559 = vmatpush1.msra.mxu0 0.0
    %3560 = vmatprep.subr.mxu0 0.0
    %3561 = vmatpush1.msra.mxu0 %v3533
    %3562 = vmatprep.subr.mxu0 0.0
    %3563 = vmatpush1.msra.mxu0 %v3532
    %3564 = vmatprep.subr.mxu0 0.0
    %3565 = vmatpush1.msra.mxu0 %v3531
    %3566 = vmatprep.subr.mxu0 0.0
    %3567 = vmatpush1.msra.mxu0 %v3530
    %3568 = vmatprep.subr.mxu0 0.0
    %3569 = vmatpush1.msra.mxu0 %v3529
    %3570 = vmatprep.subr.mxu0 0.0
    %3571 = vmatpush1.msra.mxu0 %v3528
    %3572 = vmatprep.subr.mxu0 0.0
    %3573 = vmatpush1.msra.mxu0 %v3527
    %3574 = vmatprep.subr.mxu0 0.0
    %3575 = vmatpush1.msra.mxu0 %v3526
    %3576 = vmatprep.subr.mxu0 0.0
    %3577 = vmatpush2.msra.mxu0 0.0
    %3578 = vmatprep.subr.mxu0 0.0
    %3579 = vmatpush2.msra.mxu0 0.0
    %3580 = vmatprep.subr.mxu0 0.0
    %3581 = vmatpush2.msra.mxu0 0.0
    %3582 = vmatprep.subr.mxu0 0.0
    %3583 = vmatpush2.msra.mxu0 0.0
    %3584 = vmatprep.subr.mxu0 0.0
    %3585 = vmatpush2.msra.mxu0 0.0
    %3586 = vmatprep.subr.mxu0 0.0
    %3587 = vmatpush2.msra.mxu0 0.0
    %3588 = vmatprep.subr.mxu0 0.0
    %3589 = vmatpush2.msra.mxu0 0.0
    %3590 = vmatprep.subr.mxu0 0.0
    %3591 = vmatpush2.msra.mxu0 0.0
    %3592 = vmatprep.subr.mxu0 0.0
    %3593 = vmatpush2.msra.mxu0 0.0
    %3594 = vmatprep.subr.mxu0 0.0
    %3595 = vmatpush2.msra.mxu0 0.0
    %3596 = vmatprep.subr.mxu0 0.0
    %3597 = vmatpush2.msra.mxu0 0.0
    %3598 = vmatprep.subr.mxu0 0.0
    %3599 = vmatpush2.msra.mxu0 0.0
    %3600 = vmatprep.subr.mxu0 0.0
    %3601 = vmatpush2.msra.mxu0 0.0
    %3602 = vmatprep.subr.mxu0 0.0
    %3603 = vmatpush2.msra.mxu0 0.0
    %3604 = vmatprep.subr.mxu0 0.0
    %3605 = vmatpush2.msra.mxu0 0.0
    %3606 = vmatprep.subr.mxu0 0.0
    %3607 = vmatpush2.msra.mxu0 0.0
    %3608 = vmatprep.mubr.f32.mxu0 0.0
    %3609 = vmatmul.mubr.f32.gmra.mxu0 %v3539
    %v3610 = vpop.f32.mrf.mxu0
    %v3611 = vadd.f32 %v3537, %v3610
    %v3612 = vpop.f32.mrf.mxu0
    %3613 = vmatprep.mubr.f32.mxu0 0.0
    %3614 = vmatmul.mubr.f32.gmra.mxu0 %v3542
    %v3615 = vpop.f32.mrf.mxu0
    %v3616 = vadd.f32 %v3537, %v3615
    %v3617 = vpop.f32.mrf.mxu0
    %3618 = vdwg.mxu0
    %v3619 = vadd.f32 %v3431, %v3611
    %v3620 = vadd.f32 %v3432, %v3616
    %v3621 = vsel %vm135, %v3619, 0.0
    %3622 = vadd.xlane.f32.xlu0 %v3621
    %v3623 = vpop.xlane.xlu0 %3622
    %v3624 = vsel %vm135, %v3620, 0.0
    %3625 = vadd.xlane.f32.xlu0 %v3624
    %v3626 = vpop.xlane.xlu0 %3625
    %v3627 = vmul.f32 %v3623, %v938
    %v3628 = vmul.f32 %v3626, %v938
    %v3629 = vsub.f32 %v3619, %v3627
    %v3630 = vsub.f32 %v3620, %v3628
    %v3631 = vmul.f32 %v3629, %v3629
    %v3632 = vmul.f32 %v3630, %v3630
    %v3633 = vsel %vm135, %v3631, 0.0
    %3634 = vadd.xlane.f32.xlu0 %v3633
    %v3635 = vpop.xlane.xlu0 %3634
    %v3636 = vsel %vm135, %v3632, 0.0
    %3637 = vadd.xlane.f32.xlu0 %v3636
    %v3638 = vpop.xlane.xlu0 %3637
    %v3639 = vmul.f32 %v3635, %v938
    %v3640 = vmul.f32 %v3638, %v938
    %v3641 = vadd.f32 %v3639, 1e-05
    %v3642 = vadd.f32 %v3640, 1e-05
    %v3643 = vrsqrt.pop %v3641
    %v3644 = vrsqrt.pop %v3642
    %v3645 = vmul.f32 %v3629, %v3643
    %v3646 = vmul.f32 %v3630, %v3644
    %v3647 = vlaneseq
    %v3648 = vshrl.u32 %v3647, 7
    %v3649 = vsub.s32 6, %v3648
    %v3650 = vrot.slane %v1946, %v3649
    %v3651 = vmul.f32 %v3645, %v3650
    %v3652 = vmul.f32 %v3646, %v3650
    %v3653 = vlaneseq
    %v3654 = vshrl.u32 %v3653, 7
    %v3655 = vsub.s32 7, %v3654
    %v3656 = vrot.slane %v1946, %v3655
    %v3657 = vadd.f32 %v3651, %v3656
    %v3658 = vadd.f32 %v3652, %v3656
    %s3659 = scalar_lea.vmem %s4, 32
    %v3660 = vld [vmem:[%s3659] sm:$0xff]
    %v3661 = vld [vmem:[%s3659 + $0x8] sm:$0xff]
    %s3662 = scalar_lea.vmem [#allocation2], 512
    %v3663 = vld [vmem:[%s3662] sm:$0xff]
    %v3664 = vld [vmem:[%s3662 + $0x8] sm:$0xff]
    %v3665 = vld [vmem:[%s3662 + $0x10] sm:$0xff]
    %v3666 = vld [vmem:[%s3662 + $0x18] sm:$0xff]
    %v3667 = vlaneseq
    %v3668 = vshrl.u32 %v3667, 7
    %v3669 = vsub.s32 0, %v3668
    %v3670 = vrot.slane %v3660, %v3669
    %v3672 = vsel %vm135, %v3657, 0
    %v3675 = vsel %vm135, %v3658, 0
    %3677 = vmatprep.subr.mxu0 0.0
    %3678 = vmatpush1.msra.mxu0 0.0
    %3679 = vmatprep.subr.mxu0 0.0
    %3680 = vmatpush1.msra.mxu0 0.0
    %3681 = vmatprep.subr.mxu0 0.0
    %3682 = vmatpush1.msra.mxu0 0.0
    %3683 = vmatprep.subr.mxu0 0.0
    %3684 = vmatpush1.msra.mxu0 0.0
    %3685 = vmatprep.subr.mxu0 0.0
    %3686 = vmatpush1.msra.mxu0 0.0
    %3687 = vmatprep.subr.mxu0 0.0
    %3688 = vmatpush1.msra.mxu0 0.0
    %3689 = vmatprep.subr.mxu0 0.0
    %3690 = vmatpush1.msra.mxu0 0.0
    %3691 = vmatprep.subr.mxu0 0.0
    %3692 = vmatpush1.msra.mxu0 0.0
    %3693 = vmatprep.subr.mxu0 0.0
    %3694 = vmatpush1.msra.mxu0 0.0
    %3695 = vmatprep.subr.mxu0 0.0
    %3696 = vmatpush1.msra.mxu0 0.0
    %3697 = vmatprep.subr.mxu0 0.0
    %3698 = vmatpush1.msra.mxu0 0.0
    %3699 = vmatprep.subr.mxu0 0.0
    %3700 = vmatpush1.msra.mxu0 0.0
    %3701 = vmatprep.subr.mxu0 0.0
    %3702 = vmatpush1.msra.mxu0 %v3666
    %3703 = vmatprep.subr.mxu0 0.0
    %3704 = vmatpush1.msra.mxu0 %v3665
    %3705 = vmatprep.subr.mxu0 0.0
    %3706 = vmatpush1.msra.mxu0 %v3664
    %3707 = vmatprep.subr.mxu0 0.0
    %3708 = vmatpush1.msra.mxu0 %v3663
    %3709 = vmatprep.subr.mxu0 0.0
    %3710 = vmatpush2.msra.mxu0 0.0
    %3711 = vmatprep.subr.mxu0 0.0
    %3712 = vmatpush2.msra.mxu0 0.0
    %3713 = vmatprep.subr.mxu0 0.0
    %3714 = vmatpush2.msra.mxu0 0.0
    %3715 = vmatprep.subr.mxu0 0.0
    %3716 = vmatpush2.msra.mxu0 0.0
    %3717 = vmatprep.subr.mxu0 0.0
    %3718 = vmatpush2.msra.mxu0 0.0
    %3719 = vmatprep.subr.mxu0 0.0
    %3720 = vmatpush2.msra.mxu0 0.0
    %3721 = vmatprep.subr.mxu0 0.0
    %3722 = vmatpush2.msra.mxu0 0.0
    %3723 = vmatprep.subr.mxu0 0.0
    %3724 = vmatpush2.msra.mxu0 0.0
    %3725 = vmatprep.subr.mxu0 0.0
    %3726 = vmatpush2.msra.mxu0 0.0
    %3727 = vmatprep.subr.mxu0 0.0
    %3728 = vmatpush2.msra.mxu0 0.0
    %3729 = vmatprep.subr.mxu0 0.0
    %3730 = vmatpush2.msra.mxu0 0.0
    %3731 = vmatprep.subr.mxu0 0.0
    %3732 = vmatpush2.msra.mxu0 0.0
    %3733 = vmatprep.subr.mxu0 0.0
    %3734 = vmatpush2.msra.mxu0 0.0
    %3735 = vmatprep.subr.mxu0 0.0
    %3736 = vmatpush2.msra.mxu0 0.0
    %3737 = vmatprep.subr.mxu0 0.0
    %3738 = vmatpush2.msra.mxu0 0.0
    %3739 = vmatprep.subr.mxu0 0.0
    %3740 = vmatpush2.msra.mxu0 0.0
    %3741 = vmatprep.mubr.f32.mxu0 0.0
    %3742 = vmatmul.mubr.f32.gmra.mxu0 %v3672
    %v3743 = vpop.f32.mrf.mxu0
    %v3744 = vadd.f32 %v3670, %v3743
    %v3745 = vpop.f32.mrf.mxu0
    %3746 = vmatprep.mubr.f32.mxu0 0.0
    %3747 = vmatmul.mubr.f32.gmra.mxu0 %v3675
    %v3748 = vpop.f32.mrf.mxu0
    %v3749 = vadd.f32 %v3670, %v3748
    %v3750 = vpop.f32.mrf.mxu0
    %3751 = vdwg.mxu0
    %s3752 = scalar_lea.vmem [#allocation2], 544
    %v3753 = vld [vmem:[%s3752] sm:$0xff]
    %v3754 = vld [vmem:[%s3752 + $0x8] sm:$0xff]
    %v3755 = vld [vmem:[%s3752 + $0x10] sm:$0xff]
    %v3756 = vld [vmem:[%s3752 + $0x18] sm:$0xff]
    %v3757 = vlaneseq
    %v3758 = vshrl.u32 %v3757, 7
    %v3759 = vsub.s32 1, %v3758
    %v3760 = vrot.slane %v3660, %v3759
    %3761 = vmatprep.subr.mxu0 0.0
    %3762 = vmatpush1.msra.mxu0 0.0
    %3763 = vmatprep.subr.mxu0 0.0
    %3764 = vmatpush1.msra.mxu0 0.0
    %3765 = vmatprep.subr.mxu0 0.0
    %3766 = vmatpush1.msra.mxu0 0.0
    %3767 = vmatprep.subr.mxu0 0.0
    %3768 = vmatpush1.msra.mxu0 0.0
    %3769 = vmatprep.subr.mxu0 0.0
    %3770 = vmatpush1.msra.mxu0 0.0
    %3771 = vmatprep.subr.mxu0 0.0
    %3772 = vmatpush1.msra.mxu0 0.0
    %3773 = vmatprep.subr.mxu0 0.0
    %3774 = vmatpush1.msra.mxu0 0.0
    %3775 = vmatprep.subr.mxu0 0.0
    %3776 = vmatpush1.msra.mxu0 0.0
    %3777 = vmatprep.subr.mxu0 0.0
    %3778 = vmatpush1.msra.mxu0 0.0
    %3779 = vmatprep.subr.mxu0 0.0
    %3780 = vmatpush1.msra.mxu0 0.0
    %3781 = vmatprep.subr.mxu0 0.0
    %3782 = vmatpush1.msra.mxu0 0.0
    %3783 = vmatprep.subr.mxu0 0.0
    %3784 = vmatpush1.msra.mxu0 0.0
    %3785 = vmatprep.subr.mxu0 0.0
    %3786 = vmatpush1.msra.mxu0 %v3756
    %3787 = vmatprep.subr.mxu0 0.0
    %3788 = vmatpush1.msra.mxu0 %v3755
    %3789 = vmatprep.subr.mxu0 0.0
    %3790 = vmatpush1.msra.mxu0 %v3754
    %3791 = vmatprep.subr.mxu0 0.0
    %3792 = vmatpush1.msra.mxu0 %v3753
    %3793 = vmatprep.subr.mxu0 0.0
    %3794 = vmatpush2.msra.mxu0 0.0
    %3795 = vmatprep.subr.mxu0 0.0
    %3796 = vmatpush2.msra.mxu0 0.0
    %3797 = vmatprep.subr.mxu0 0.0
    %3798 = vmatpush2.msra.mxu0 0.0
    %3799 = vmatprep.subr.mxu0 0.0
    %3800 = vmatpush2.msra.mxu0 0.0
    %3801 = vmatprep.subr.mxu0 0.0
    %3802 = vmatpush2.msra.mxu0 0.0
    %3803 = vmatprep.subr.mxu0 0.0
    %3804 = vmatpush2.msra.mxu0 0.0
    %3805 = vmatprep.subr.mxu0 0.0
    %3806 = vmatpush2.msra.mxu0 0.0
    %3807 = vmatprep.subr.mxu0 0.0
    %3808 = vmatpush2.msra.mxu0 0.0
    %3809 = vmatprep.subr.mxu0 0.0
    %3810 = vmatpush2.msra.mxu0 0.0
    %3811 = vmatprep.subr.mxu0 0.0
    %3812 = vmatpush2.msra.mxu0 0.0
    %3813 = vmatprep.subr.mxu0 0.0
    %3814 = vmatpush2.msra.mxu0 0.0
    %3815 = vmatprep.subr.mxu0 0.0
    %3816 = vmatpush2.msra.mxu0 0.0
    %3817 = vmatprep.subr.mxu0 0.0
    %3818 = vmatpush2.msra.mxu0 0.0
    %3819 = vmatprep.subr.mxu0 0.0
    %3820 = vmatpush2.msra.mxu0 0.0
    %3821 = vmatprep.subr.mxu0 0.0
    %3822 = vmatpush2.msra.mxu0 0.0
    %3823 = vmatprep.subr.mxu0 0.0
    %3824 = vmatpush2.msra.mxu0 0.0
    %3825 = vmatprep.mubr.f32.mxu0 0.0
    %3826 = vmatmul.mubr.f32.gmra.mxu0 %v3672
    %v3827 = vpop.f32.mrf.mxu0
    %v3828 = vadd.f32 %v3760, %v3827
    %v3829 = vpop.f32.mrf.mxu0
    %3830 = vmatprep.mubr.f32.mxu0 0.0
    %3831 = vmatmul.mubr.f32.gmra.mxu0 %v3675
    %v3832 = vpop.f32.mrf.mxu0
    %v3833 = vadd.f32 %v3760, %v3832
    %v3834 = vpop.f32.mrf.mxu0
    %3835 = vdwg.mxu0
    %s3836 = scalar_lea.vmem [#allocation2], 576
    %v3837 = vld [vmem:[%s3836] sm:$0xff]
    %v3838 = vld [vmem:[%s3836 + $0x8] sm:$0xff]
    %v3839 = vld [vmem:[%s3836 + $0x10] sm:$0xff]
    %v3840 = vld [vmem:[%s3836 + $0x18] sm:$0xff]
    %v3841 = vlaneseq
    %v3842 = vshrl.u32 %v3841, 7
    %v3843 = vsub.s32 2, %v3842
    %v3844 = vrot.slane %v3660, %v3843
    %3845 = vmatprep.subr.mxu0 0.0
    %3846 = vmatpush1.msra.mxu0 0.0
    %3847 = vmatprep.subr.mxu0 0.0
    %3848 = vmatpush1.msra.mxu0 0.0
    %3849 = vmatprep.subr.mxu0 0.0
    %3850 = vmatpush1.msra.mxu0 0.0
    %3851 = vmatprep.subr.mxu0 0.0
    %3852 = vmatpush1.msra.mxu0 0.0
    %3853 = vmatprep.subr.mxu0 0.0
    %3854 = vmatpush1.msra.mxu0 0.0
    %3855 = vmatprep.subr.mxu0 0.0
    %3856 = vmatpush1.msra.mxu0 0.0
    %3857 = vmatprep.subr.mxu0 0.0
    %3858 = vmatpush1.msra.mxu0 0.0
    %3859 = vmatprep.subr.mxu0 0.0
    %3860 = vmatpush1.msra.mxu0 0.0
    %3861 = vmatprep.subr.mxu0 0.0
    %3862 = vmatpush1.msra.mxu0 0.0
    %3863 = vmatprep.subr.mxu0 0.0
    %3864 = vmatpush1.msra.mxu0 0.0
    %3865 = vmatprep.subr.mxu0 0.0
    %3866 = vmatpush1.msra.mxu0 0.0
    %3867 = vmatprep.subr.mxu0 0.0
    %3868 = vmatpush1.msra.mxu0 0.0
    %3869 = vmatprep.subr.mxu0 0.0
    %3870 = vmatpush1.msra.mxu0 %v3840
    %3871 = vmatprep.subr.mxu0 0.0
    %3872 = vmatpush1.msra.mxu0 %v3839
    %3873 = vmatprep.subr.mxu0 0.0
    %3874 = vmatpush1.msra.mxu0 %v3838
    %3875 = vmatprep.subr.mxu0 0.0
    %3876 = vmatpush1.msra.mxu0 %v3837
    %3877 = vmatprep.subr.mxu0 0.0
    %3878 = vmatpush2.msra.mxu0 0.0
    %3879 = vmatprep.subr.mxu0 0.0
    %3880 = vmatpush2.msra.mxu0 0.0
    %3881 = vmatprep.subr.mxu0 0.0
    %3882 = vmatpush2.msra.mxu0 0.0
    %3883 = vmatprep.subr.mxu0 0.0
    %3884 = vmatpush2.msra.mxu0 0.0
    %3885 = vmatprep.subr.mxu0 0.0
    %3886 = vmatpush2.msra.mxu0 0.0
    %3887 = vmatprep.subr.mxu0 0.0
    %3888 = vmatpush2.msra.mxu0 0.0
    %3889 = vmatprep.subr.mxu0 0.0
    %3890 = vmatpush2.msra.mxu0 0.0
    %3891 = vmatprep.subr.mxu0 0.0
    %3892 = vmatpush2.msra.mxu0 0.0
    %3893 = vmatprep.subr.mxu0 0.0
    %3894 = vmatpush2.msra.mxu0 0.0
    %3895 = vmatprep.subr.mxu0 0.0
    %3896 = vmatpush2.msra.mxu0 0.0
    %3897 = vmatprep.subr.mxu0 0.0
    %3898 = vmatpush2.msra.mxu0 0.0
    %3899 = vmatprep.subr.mxu0 0.0
    %3900 = vmatpush2.msra.mxu0 0.0
    %3901 = vmatprep.subr.mxu0 0.0
    %3902 = vmatpush2.msra.mxu0 0.0
    %3903 = vmatprep.subr.mxu0 0.0
    %3904 = vmatpush2.msra.mxu0 0.0
    %3905 = vmatprep.subr.mxu0 0.0
    %3906 = vmatpush2.msra.mxu0 0.0
    %3907 = vmatprep.subr.mxu0 0.0
    %3908 = vmatpush2.msra.mxu0 0.0
    %3909 = vmatprep.mubr.f32.mxu0 0.0
    %3910 = vmatmul.mubr.f32.gmra.mxu0 %v3672
    %v3911 = vpop.f32.mrf.mxu0
    %v3912 = vadd.f32 %v3844, %v3911
    %v3913 = vpop.f32.mrf.mxu0
    %3914 = vmatprep.mubr.f32.mxu0 0.0
    %3915 = vmatmul.mubr.f32.gmra.mxu0 %v3675
    %v3916 = vpop.f32.mrf.mxu0
    %v3917 = vadd.f32 %v3844, %v3916
    %v3918 = vpop.f32.mrf.mxu0
    %3919 = vdwg.mxu0
    %s3920 = scalar_lea.vmem [#allocation2], 608
    %v3921 = vld [vmem:[%s3920] sm:$0xff]
    %v3922 = vld [vmem:[%s3920 + $0x8] sm:$0xff]
    %v3923 = vld [vmem:[%s3920 + $0x10] sm:$0xff]
    %v3924 = vld [vmem:[%s3920 + $0x18] sm:$0xff]
    %3925 = vxpose.xlu0.b32.start [1/16] %v3828, 128
    %3926 = vxpose.xlu0.b32.cont [2/16] %v3833, 128
    %3927 = vxpose.xlu0.b32.cont [3/16] 0.0, 128
    %3928 = vxpose.xlu0.b32.cont [4/16] 0.0, 128
    %3929 = vxpose.xlu0.b32.cont [5/16] 0.0, 128
    %3930 = vxpose.xlu0.b32.cont [6/16] 0.0, 128
    %3931 = vxpose.xlu0.b32.cont [7/16] 0.0, 128
    %3932 = vxpose.xlu0.b32.cont [8/16] 0.0, 128
    %3933 = vxpose.xlu0.b32.cont [9/16] 0.0, 128
    %3934 = vxpose.xlu0.b32.cont [10/16] 0.0, 128
    %3935 = vxpose.xlu0.b32.cont [11/16] 0.0, 128
    %3936 = vxpose.xlu0.b32.cont [12/16] 0.0, 128
    %3937 = vxpose.xlu0.b32.cont [13/16] 0.0, 128
    %3938 = vxpose.xlu0.b32.cont [14/16] 0.0, 128
    %3939 = vxpose.xlu0.b32.cont [15/16] 0.0, 128
    %3940 = vxpose.xlu0.b32.end [16/16] 0.0, 128
    %v3941 = vpop.trf.xlu0
    %v3942 = vpop.trf.xlu0
    %v3943 = vpop.trf.xlu0
    %v3944 = vpop.trf.xlu0
    %v3945 = vpop.trf.xlu0
    %v3946 = vpop.trf.xlu0
    %v3947 = vpop.trf.xlu0
    %v3948 = vpop.trf.xlu0
    %v3949 = vpop.trf.xlu0
    %v3950 = vpop.trf.xlu0
    %v3951 = vpop.trf.xlu0
    %v3952 = vpop.trf.xlu0
    %v3953 = vpop.trf.xlu0
    %v3954 = vpop.trf.xlu0
    %v3955 = vpop.trf.xlu0
    %v3956 = vpop.trf.xlu0
    %3961 = vrot.lane.b32.xlu0 %v3941, 16
    %v3962 = vpop.permute.xlu0 %3961
    %3963 = vrot.lane.b32.xlu0 %v3942, 16
    %v3964 = vpop.permute.xlu0 %3963
    %3965 = vrot.lane.b32.xlu0 %v3943, 16
    %v3966 = vpop.permute.xlu0 %3965
    %3967 = vrot.lane.b32.xlu0 %v3944, 16
    %v3968 = vpop.permute.xlu0 %3967
    %3973 = vrot.lane.b32.xlu0 %v3941, 32
    %v3974 = vpop.permute.xlu0 %3973
    %3975 = vrot.lane.b32.xlu0 %v3942, 32
    %v3976 = vpop.permute.xlu0 %3975
    %3977 = vrot.lane.b32.xlu0 %v3943, 32
    %v3978 = vpop.permute.xlu0 %3977
    %3979 = vrot.lane.b32.xlu0 %v3944, 32
    %v3980 = vpop.permute.xlu0 %3979
    %3985 = vrot.lane.b32.xlu0 %v3941, 48
    %v3986 = vpop.permute.xlu0 %3985
    %3987 = vrot.lane.b32.xlu0 %v3942, 48
    %v3988 = vpop.permute.xlu0 %3987
    %3989 = vrot.lane.b32.xlu0 %v3943, 48
    %v3990 = vpop.permute.xlu0 %3989
    %3991 = vrot.lane.b32.xlu0 %v3944, 48
    %v3992 = vpop.permute.xlu0 %3991
    %v3997 = vsel %vm130, %v3941, %v3962
    %v3998 = vsel %vm130, %v3942, %v3964
    %v3999 = vsel %vm130, %v3943, %v3966
    %v4000 = vsel %vm130, %v3944, %v3968
    %v4001 = vsel %vm135, %v3997, %v3974
    %v4002 = vsel %vm135, %v3998, %v3976
    %v4003 = vsel %vm135, %v3999, %v3978
    %v4004 = vsel %vm135, %v4000, %v3980
    %v4005 = vsel %vm140, %v4001, %v3986
    %v4006 = vsel %vm140, %v4002, %v3988
    %v4007 = vsel %vm140, %v4003, %v3990
    %v4008 = vsel %vm140, %v4004, %v3992
    %v4009 = vmul.f32 %v4005, %v141
    %v4010 = vmul.f32 %v4006, %v142
    %v4011 = vmul.f32 %v4007, %v143
    %v4012 = vmul.f32 %v4008, %v144
    %v4013 = vmul.f32 %v3912, %v48
    %v4014 = vmul.f32 %v3917, %v48
    %v4015 = vmul.f32 %v3912, %v52
    %v4016 = vmul.f32 %v3917, %v52
    %v4017 = vmul.f32 %v3912, %v56
    %v4018 = vmul.f32 %v3917, %v56
    %v4019 = vmul.f32 %v3912, %v60
    %v4020 = vmul.f32 %v3917, %v60
    %v4021 = vmul.f32 %v3744, 0.35355338
    %v4022 = vmul.f32 %v3749, 0.35355338
    %v4024 = vsel %vm135, %v4021, 0
    %v4027 = vsel %vm135, %v4022, 0
    %4029 = vmatprep.subr.mxu0 0.0
    %4030 = vmatpush1.msra.mxu0 0.0
    %4031 = vmatprep.subr.mxu0 0.0
    %4032 = vmatpush1.msra.mxu0 0.0
    %4033 = vmatprep.subr.mxu0 0.0
    %4034 = vmatpush1.msra.mxu0 0.0
    %4035 = vmatprep.subr.mxu0 0.0
    %4036 = vmatpush1.msra.mxu0 0.0
    %4037 = vmatprep.subr.mxu0 0.0
    %4038 = vmatpush1.msra.mxu0 0.0
    %4039 = vmatprep.subr.mxu0 0.0
    %4040 = vmatpush1.msra.mxu0 0.0
    %4041 = vmatprep.subr.mxu0 0.0
    %4042 = vmatpush1.msra.mxu0 0.0
    %4043 = vmatprep.subr.mxu0 0.0
    %4044 = vmatpush1.msra.mxu0 0.0
    %4045 = vmatprep.subr.mxu0 0.0
    %4046 = vmatpush1.msra.mxu0 0.0
    %4047 = vmatprep.subr.mxu0 0.0
    %4048 = vmatpush1.msra.mxu0 0.0
    %4049 = vmatprep.subr.mxu0 0.0
    %4050 = vmatpush1.msra.mxu0 0.0
    %4051 = vmatprep.subr.mxu0 0.0
    %4052 = vmatpush1.msra.mxu0 0.0
    %4053 = vmatprep.subr.mxu0 0.0
    %4054 = vmatpush1.msra.mxu0 %v4012
    %4055 = vmatprep.subr.mxu0 0.0
    %4056 = vmatpush1.msra.mxu0 %v4011
    %4057 = vmatprep.subr.mxu0 0.0
    %4058 = vmatpush1.msra.mxu0 %v4010
    %4059 = vmatprep.subr.mxu0 0.0
    %4060 = vmatpush1.msra.mxu0 %v4009
    %4061 = vmatprep.subr.mxu0 0.0
    %4062 = vmatpush2.msra.mxu0 0.0
    %4063 = vmatprep.subr.mxu0 0.0
    %4064 = vmatpush2.msra.mxu0 0.0
    %4065 = vmatprep.subr.mxu0 0.0
    %4066 = vmatpush2.msra.mxu0 0.0
    %4067 = vmatprep.subr.mxu0 0.0
    %4068 = vmatpush2.msra.mxu0 0.0
    %4069 = vmatprep.subr.mxu0 0.0
    %4070 = vmatpush2.msra.mxu0 0.0
    %4071 = vmatprep.subr.mxu0 0.0
    %4072 = vmatpush2.msra.mxu0 0.0
    %4073 = vmatprep.subr.mxu0 0.0
    %4074 = vmatpush2.msra.mxu0 0.0
    %4075 = vmatprep.subr.mxu0 0.0
    %4076 = vmatpush2.msra.mxu0 0.0
    %4077 = vmatprep.subr.mxu0 0.0
    %4078 = vmatpush2.msra.mxu0 0.0
    %4079 = vmatprep.subr.mxu0 0.0
    %4080 = vmatpush2.msra.mxu0 0.0
    %4081 = vmatprep.subr.mxu0 0.0
    %4082 = vmatpush2.msra.mxu0 0.0
    %4083 = vmatprep.subr.mxu0 0.0
    %4084 = vmatpush2.msra.mxu0 0.0
    %4085 = vmatprep.subr.mxu0 0.0
    %4086 = vmatpush2.msra.mxu0 0.0
    %4087 = vmatprep.subr.mxu0 0.0
    %4088 = vmatpush2.msra.mxu0 0.0
    %4089 = vmatprep.subr.mxu0 0.0
    %4090 = vmatpush2.msra.mxu0 0.0
    %4091 = vmatprep.subr.mxu0 0.0
    %4092 = vmatpush2.msra.mxu0 0.0
    %4093 = vmatprep.mubr.f32.mxu0 0.0
    %4094 = vmatmul.mubr.f32.gmra.mxu0 %v4024
    %v4095 = vpop.f32.mrf.mxu0
    %v4096 = vadd.f32 %v197, %v4095
    %v4097 = vpop.f32.mrf.mxu0
    %4098 = vmatprep.mubr.f32.mxu0 0.0
    %4099 = vmatmul.mubr.f32.gmra.mxu0 %v4027
    %v4100 = vpop.f32.mrf.mxu0
    %v4101 = vadd.f32 %v198, %v4100
    %v4102 = vpop.f32.mrf.mxu0
    %4103 = vdwg.mxu0
    %v4104 = vmul.f32 %v4096, 1.442695
    %v4105 = vpow.pop %v4104
    %v4106 = vmul.f32 %v4101, 1.442695
    %v4107 = vpow.pop %v4106
    %v4109 = vsel %vm672, %v4105, 0
    %v4112 = vsel %vm672, %v4107, 0
    %4114 = vmatprep.subr.mxu0 0.0
    %4115 = vmatpush1.msra.mxu0 0.0
    %4116 = vmatprep.subr.mxu0 0.0
    %4117 = vmatpush1.msra.mxu0 0.0
    %4118 = vmatprep.subr.mxu0 0.0
    %4119 = vmatpush1.msra.mxu0 0.0
    %4120 = vmatprep.subr.mxu0 0.0
    %4121 = vmatpush1.msra.mxu0 0.0
    %4122 = vmatprep.subr.mxu0 0.0
    %4123 = vmatpush1.msra.mxu0 0.0
    %4124 = vmatprep.subr.mxu0 0.0
    %4125 = vmatpush1.msra.mxu0 0.0
    %4126 = vmatprep.subr.mxu0 0.0
    %4127 = vmatpush1.msra.mxu0 0.0
    %4128 = vmatprep.subr.mxu0 0.0
    %4129 = vmatpush1.msra.mxu0 0.0
    %4130 = vmatprep.subr.mxu0 0.0
    %4131 = vmatpush1.msra.mxu0 %v156
    %4132 = vmatprep.subr.mxu0 0.0
    %4133 = vmatpush1.msra.mxu0 %v156
    %4134 = vmatprep.subr.mxu0 0.0
    %4135 = vmatpush1.msra.mxu0 %v152
    %4136 = vmatprep.subr.mxu0 0.0
    %4137 = vmatpush1.msra.mxu0 %v152
    %4138 = vmatprep.subr.mxu0 0.0
    %4139 = vmatpush1.msra.mxu0 %v148
    %4140 = vmatprep.subr.mxu0 0.0
    %4141 = vmatpush1.msra.mxu0 %v148
    %4142 = vmatprep.subr.mxu0 0.0
    %4143 = vmatpush1.msra.mxu0 %v146
    %4144 = vmatprep.subr.mxu0 0.0
    %4145 = vmatpush1.msra.mxu0 %v146
    %4146 = vmatprep.subr.mxu0 0.0
    %4147 = vmatpush2.msra.mxu0 0.0
    %4148 = vmatprep.subr.mxu0 0.0
    %4149 = vmatpush2.msra.mxu0 0.0
    %4150 = vmatprep.subr.mxu0 0.0
    %4151 = vmatpush2.msra.mxu0 0.0
    %4152 = vmatprep.subr.mxu0 0.0
    %4153 = vmatpush2.msra.mxu0 0.0
    %4154 = vmatprep.subr.mxu0 0.0
    %4155 = vmatpush2.msra.mxu0 0.0
    %4156 = vmatprep.subr.mxu0 0.0
    %4157 = vmatpush2.msra.mxu0 0.0
    %4158 = vmatprep.subr.mxu0 0.0
    %4159 = vmatpush2.msra.mxu0 0.0
    %4160 = vmatprep.subr.mxu0 0.0
    %4161 = vmatpush2.msra.mxu0 0.0
    %4162 = vmatprep.subr.mxu0 0.0
    %4163 = vmatpush2.msra.mxu0 0.0
    %4164 = vmatprep.subr.mxu0 0.0
    %4165 = vmatpush2.msra.mxu0 0.0
    %4166 = vmatprep.subr.mxu0 0.0
    %4167 = vmatpush2.msra.mxu0 0.0
    %4168 = vmatprep.subr.mxu0 0.0
    %4169 = vmatpush2.msra.mxu0 0.0
    %4170 = vmatprep.subr.mxu0 0.0
    %4171 = vmatpush2.msra.mxu0 0.0
    %4172 = vmatprep.subr.mxu0 0.0
    %4173 = vmatpush2.msra.mxu0 0.0
    %4174 = vmatprep.subr.mxu0 0.0
    %4175 = vmatpush2.msra.mxu0 0.0
    %4176 = vmatprep.subr.mxu0 0.0
    %4177 = vmatpush2.msra.mxu0 0.0
    %4178 = vmatprep.mubr.f32.mxu0 0.0
    %4179 = vmatmul.mubr.f32.gmra.mxu0 %v4109
    %v4180 = vpop.f32.mrf.mxu0
    %v4181 = vadd.f32 0.0, %v4180
    %v4182 = vpop.f32.mrf.mxu0
    %4183 = vmatprep.mubr.f32.mxu0 0.0
    %4184 = vmatmul.mubr.f32.gmra.mxu0 %v4112
    %v4185 = vpop.f32.mrf.mxu0
    %v4186 = vadd.f32 0.0, %v4185
    %v4187 = vpop.f32.mrf.mxu0
    %4188 = vdwg.mxu0
    %v4189 = vrcp.pop %v4181
    %v4190 = vrcp.pop %v4186
    %v4191 = vmul.f32 %v4181, %v4189
    %v4192 = vmul.f32 %v4186, %v4190
    %v4193 = vsub.f32 2.0, %v4191
    %v4194 = vsub.f32 2.0, %v4192
    %v4195 = vmul.f32 %v4189, %v4193
    %v4196 = vmul.f32 %v4190, %v4194
    %v4197 = vmul.f32 %v4105, %v4195
    %v4198 = vmul.f32 %v4107, %v4196
    %v4200 = vsel %vm672, %v4197, 0
    %v4203 = vsel %vm672, %v4198, 0
    %4205 = vmatprep.subr.mxu0 0.0
    %4206 = vmatpush1.msra.mxu0 0.0
    %4207 = vmatprep.subr.mxu0 0.0
    %4208 = vmatpush1.msra.mxu0 0.0
    %4209 = vmatprep.subr.mxu0 0.0
    %4210 = vmatpush1.msra.mxu0 0.0
    %4211 = vmatprep.subr.mxu0 0.0
    %4212 = vmatpush1.msra.mxu0 0.0
    %4213 = vmatprep.subr.mxu0 0.0
    %4214 = vmatpush1.msra.mxu0 0.0
    %4215 = vmatprep.subr.mxu0 0.0
    %4216 = vmatpush1.msra.mxu0 0.0
    %4217 = vmatprep.subr.mxu0 0.0
    %4218 = vmatpush1.msra.mxu0 0.0
    %4219 = vmatprep.subr.mxu0 0.0
    %4220 = vmatpush1.msra.mxu0 0.0
    %4221 = vmatprep.subr.mxu0 0.0
    %4222 = vmatpush1.msra.mxu0 %v4020
    %4223 = vmatprep.subr.mxu0 0.0
    %4224 = vmatpush1.msra.mxu0 %v4019
    %4225 = vmatprep.subr.mxu0 0.0
    %4226 = vmatpush1.msra.mxu0 %v4018
    %4227 = vmatprep.subr.mxu0 0.0
    %4228 = vmatpush1.msra.mxu0 %v4017
    %4229 = vmatprep.subr.mxu0 0.0
    %4230 = vmatpush1.msra.mxu0 %v4016
    %4231 = vmatprep.subr.mxu0 0.0
    %4232 = vmatpush1.msra.mxu0 %v4015
    %4233 = vmatprep.subr.mxu0 0.0
    %4234 = vmatpush1.msra.mxu0 %v4014
    %4235 = vmatprep.subr.mxu0 0.0
    %4236 = vmatpush1.msra.mxu0 %v4013
    %4237 = vmatprep.subr.mxu0 0.0
    %4238 = vmatpush2.msra.mxu0 0.0
    %4239 = vmatprep.subr.mxu0 0.0
    %4240 = vmatpush2.msra.mxu0 0.0
    %4241 = vmatprep.subr.mxu0 0.0
    %4242 = vmatpush2.msra.mxu0 0.0
    %4243 = vmatprep.subr.mxu0 0.0
    %4244 = vmatpush2.msra.mxu0 0.0
    %4245 = vmatprep.subr.mxu0 0.0
    %4246 = vmatpush2.msra.mxu0 0.0
    %4247 = vmatprep.subr.mxu0 0.0
    %4248 = vmatpush2.msra.mxu0 0.0
    %4249 = vmatprep.subr.mxu0 0.0
    %4250 = vmatpush2.msra.mxu0 0.0
    %4251 = vmatprep.subr.mxu0 0.0
    %4252 = vmatpush2.msra.mxu0 0.0
    %4253 = vmatprep.subr.mxu0 0.0
    %4254 = vmatpush2.msra.mxu0 0.0
    %4255 = vmatprep.subr.mxu0 0.0
    %4256 = vmatpush2.msra.mxu0 0.0
    %4257 = vmatprep.subr.mxu0 0.0
    %4258 = vmatpush2.msra.mxu0 0.0
    %4259 = vmatprep.subr.mxu0 0.0
    %4260 = vmatpush2.msra.mxu0 0.0
    %4261 = vmatprep.subr.mxu0 0.0
    %4262 = vmatpush2.msra.mxu0 0.0
    %4263 = vmatprep.subr.mxu0 0.0
    %4264 = vmatpush2.msra.mxu0 0.0
    %4265 = vmatprep.subr.mxu0 0.0
    %4266 = vmatpush2.msra.mxu0 0.0
    %4267 = vmatprep.subr.mxu0 0.0
    %4268 = vmatpush2.msra.mxu0 0.0
    %4269 = vmatprep.mubr.f32.mxu0 0.0
    %4270 = vmatmul.mubr.f32.gmra.mxu0 %v4200
    %v4271 = vpop.f32.mrf.mxu0
    %v4272 = vadd.f32 0.0, %v4271
    %v4273 = vpop.f32.mrf.mxu0
    %4274 = vmatprep.mubr.f32.mxu0 0.0
    %4275 = vmatmul.mubr.f32.gmra.mxu0 %v4203
    %v4276 = vpop.f32.mrf.mxu0
    %v4277 = vadd.f32 0.0, %v4276
    %v4278 = vpop.f32.mrf.mxu0
    %4279 = vdwg.mxu0
    %v4280 = vlaneseq
    %v4281 = vshrl.u32 %v4280, 7
    %v4282 = vsub.s32 3, %v4281
    %v4283 = vrot.slane %v3660, %v4282
    %v4285 = vsel %vm135, %v4272, 0
    %v4288 = vsel %vm135, %v4277, 0
    %4290 = vmatprep.subr.mxu0 0.0
    %4291 = vmatpush1.msra.mxu0 0.0
    %4292 = vmatprep.subr.mxu0 0.0
    %4293 = vmatpush1.msra.mxu0 0.0
    %4294 = vmatprep.subr.mxu0 0.0
    %4295 = vmatpush1.msra.mxu0 0.0
    %4296 = vmatprep.subr.mxu0 0.0
    %4297 = vmatpush1.msra.mxu0 0.0
    %4298 = vmatprep.subr.mxu0 0.0
    %4299 = vmatpush1.msra.mxu0 0.0
    %4300 = vmatprep.subr.mxu0 0.0
    %4301 = vmatpush1.msra.mxu0 0.0
    %4302 = vmatprep.subr.mxu0 0.0
    %4303 = vmatpush1.msra.mxu0 0.0
    %4304 = vmatprep.subr.mxu0 0.0
    %4305 = vmatpush1.msra.mxu0 0.0
    %4306 = vmatprep.subr.mxu0 0.0
    %4307 = vmatpush1.msra.mxu0 0.0
    %4308 = vmatprep.subr.mxu0 0.0
    %4309 = vmatpush1.msra.mxu0 0.0
    %4310 = vmatprep.subr.mxu0 0.0
    %4311 = vmatpush1.msra.mxu0 0.0
    %4312 = vmatprep.subr.mxu0 0.0
    %4313 = vmatpush1.msra.mxu0 0.0
    %4314 = vmatprep.subr.mxu0 0.0
    %4315 = vmatpush1.msra.mxu0 %v3924
    %4316 = vmatprep.subr.mxu0 0.0
    %4317 = vmatpush1.msra.mxu0 %v3923
    %4318 = vmatprep.subr.mxu0 0.0
    %4319 = vmatpush1.msra.mxu0 %v3922
    %4320 = vmatprep.subr.mxu0 0.0
    %4321 = vmatpush1.msra.mxu0 %v3921
    %4322 = vmatprep.subr.mxu0 0.0
    %4323 = vmatpush2.msra.mxu0 0.0
    %4324 = vmatprep.subr.mxu0 0.0
    %4325 = vmatpush2.msra.mxu0 0.0
    %4326 = vmatprep.subr.mxu0 0.0
    %4327 = vmatpush2.msra.mxu0 0.0
    %4328 = vmatprep.subr.mxu0 0.0
    %4329 = vmatpush2.msra.mxu0 0.0
    %4330 = vmatprep.subr.mxu0 0.0
    %4331 = vmatpush2.msra.mxu0 0.0
    %4332 = vmatprep.subr.mxu0 0.0
    %4333 = vmatpush2.msra.mxu0 0.0
    %4334 = vmatprep.subr.mxu0 0.0
    %4335 = vmatpush2.msra.mxu0 0.0
    %4336 = vmatprep.subr.mxu0 0.0
    %4337 = vmatpush2.msra.mxu0 0.0
    %4338 = vmatprep.subr.mxu0 0.0
    %4339 = vmatpush2.msra.mxu0 0.0
    %4340 = vmatprep.subr.mxu0 0.0
    %4341 = vmatpush2.msra.mxu0 0.0
    %4342 = vmatprep.subr.mxu0 0.0
    %4343 = vmatpush2.msra.mxu0 0.0
    %4344 = vmatprep.subr.mxu0 0.0
    %4345 = vmatpush2.msra.mxu0 0.0
    %4346 = vmatprep.subr.mxu0 0.0
    %4347 = vmatpush2.msra.mxu0 0.0
    %4348 = vmatprep.subr.mxu0 0.0
    %4349 = vmatpush2.msra.mxu0 0.0
    %4350 = vmatprep.subr.mxu0 0.0
    %4351 = vmatpush2.msra.mxu0 0.0
    %4352 = vmatprep.subr.mxu0 0.0
    %4353 = vmatpush2.msra.mxu0 0.0
    %4354 = vmatprep.mubr.f32.mxu0 0.0
    %4355 = vmatmul.mubr.f32.gmra.mxu0 %v4285
    %v4356 = vpop.f32.mrf.mxu0
    %v4357 = vadd.f32 %v4283, %v4356
    %v4358 = vpop.f32.mrf.mxu0
    %4359 = vmatprep.mubr.f32.mxu0 0.0
    %4360 = vmatmul.mubr.f32.gmra.mxu0 %v4288
    %v4361 = vpop.f32.mrf.mxu0
    %v4362 = vadd.f32 %v4283, %v4361
    %v4363 = vpop.f32.mrf.mxu0
    %4364 = vdwg.mxu0
    %v4365 = vadd.f32 %v3657, %v4357
    %v4366 = vadd.f32 %v3658, %v4362
    %v4367 = vsel %vm135, %v4365, 0.0
    %4368 = vadd.xlane.f32.xlu0 %v4367
    %v4369 = vpop.xlane.xlu0 %4368
    %v4370 = vsel %vm135, %v4366, 0.0
    %4371 = vadd.xlane.f32.xlu0 %v4370
    %v4372 = vpop.xlane.xlu0 %4371
    %v4373 = vmul.f32 %v4369, %v938
    %v4374 = vmul.f32 %v4372, %v938
    %v4375 = vsub.f32 %v4365, %v4373
    %v4376 = vsub.f32 %v4366, %v4374
    %v4377 = vmul.f32 %v4375, %v4375
    %v4378 = vmul.f32 %v4376, %v4376
    %v4379 = vsel %vm135, %v4377, 0.0
    %4380 = vadd.xlane.f32.xlu0 %v4379
    %v4381 = vpop.xlane.xlu0 %4380
    %v4382 = vsel %vm135, %v4378, 0.0
    %4383 = vadd.xlane.f32.xlu0 %v4382
    %v4384 = vpop.xlane.xlu0 %4383
    %v4385 = vmul.f32 %v4381, %v938
    %v4386 = vmul.f32 %v4384, %v938
    %v4387 = vadd.f32 %v4385, 1e-05
    %v4388 = vadd.f32 %v4386, 1e-05
    %v4389 = vrsqrt.pop %v4387
    %v4390 = vrsqrt.pop %v4388
    %v4391 = vmul.f32 %v4375, %v4389
    %v4392 = vmul.f32 %v4376, %v4390
    %v4393 = vlaneseq
    %v4394 = vshrl.u32 %v4393, 7
    %v4395 = vsub.s32 2, %v4394
    %v4396 = vrot.slane %v3661, %v4395
    %v4397 = vmul.f32 %v4391, %v4396
    %v4398 = vmul.f32 %v4392, %v4396
    %v4399 = vlaneseq
    %v4400 = vshrl.u32 %v4399, 7
    %v4401 = vsub.s32 3, %v4400
    %v4402 = vrot.slane %v3661, %v4401
    %v4403 = vadd.f32 %v4397, %v4402
    %v4404 = vadd.f32 %v4398, %v4402
    %s4405 = scalar_lea.vmem [#allocation2], 640
    %v4406 = vld [vmem:[%s4405] sm:$0xff]
    %v4407 = vld [vmem:[%s4405 + $0x8] sm:$0xff]
    %v4408 = vld [vmem:[%s4405 + $0x10] sm:$0xff]
    %v4409 = vld [vmem:[%s4405 + $0x18] sm:$0xff]
    %v4410 = vlaneseq
    %v4411 = vshrl.u32 %v4410, 7
    %v4412 = vsub.s32 4, %v4411
    %v4413 = vrot.slane %v3660, %v4412
    %v4415 = vsel %vm135, %v4403, 0
    %v4418 = vsel %vm135, %v4404, 0
    %4420 = vmatprep.subr.mxu0 0.0
    %4421 = vmatpush1.msra.mxu0 0.0
    %4422 = vmatprep.subr.mxu0 0.0
    %4423 = vmatpush1.msra.mxu0 0.0
    %4424 = vmatprep.subr.mxu0 0.0
    %4425 = vmatpush1.msra.mxu0 0.0
    %4426 = vmatprep.subr.mxu0 0.0
    %4427 = vmatpush1.msra.mxu0 0.0
    %4428 = vmatprep.subr.mxu0 0.0
    %4429 = vmatpush1.msra.mxu0 0.0
    %4430 = vmatprep.subr.mxu0 0.0
    %4431 = vmatpush1.msra.mxu0 0.0
    %4432 = vmatprep.subr.mxu0 0.0
    %4433 = vmatpush1.msra.mxu0 0.0
    %4434 = vmatprep.subr.mxu0 0.0
    %4435 = vmatpush1.msra.mxu0 0.0
    %4436 = vmatprep.subr.mxu0 0.0
    %4437 = vmatpush1.msra.mxu0 0.0
    %4438 = vmatprep.subr.mxu0 0.0
    %4439 = vmatpush1.msra.mxu0 0.0
    %4440 = vmatprep.subr.mxu0 0.0
    %4441 = vmatpush1.msra.mxu0 0.0
    %4442 = vmatprep.subr.mxu0 0.0
    %4443 = vmatpush1.msra.mxu0 0.0
    %4444 = vmatprep.subr.mxu0 0.0
    %4445 = vmatpush1.msra.mxu0 %v4409
    %4446 = vmatprep.subr.mxu0 0.0
    %4447 = vmatpush1.msra.mxu0 %v4408
    %4448 = vmatprep.subr.mxu0 0.0
    %4449 = vmatpush1.msra.mxu0 %v4407
    %4450 = vmatprep.subr.mxu0 0.0
    %4451 = vmatpush1.msra.mxu0 %v4406
    %4452 = vmatprep.subr.mxu0 0.0
    %4453 = vmatpush2.msra.mxu0 0.0
    %4454 = vmatprep.subr.mxu0 0.0
    %4455 = vmatpush2.msra.mxu0 0.0
    %4456 = vmatprep.subr.mxu0 0.0
    %4457 = vmatpush2.msra.mxu0 0.0
    %4458 = vmatprep.subr.mxu0 0.0
    %4459 = vmatpush2.msra.mxu0 0.0
    %4460 = vmatprep.subr.mxu0 0.0
    %4461 = vmatpush2.msra.mxu0 0.0
    %4462 = vmatprep.subr.mxu0 0.0
    %4463 = vmatpush2.msra.mxu0 0.0
    %4464 = vmatprep.subr.mxu0 0.0
    %4465 = vmatpush2.msra.mxu0 0.0
    %4466 = vmatprep.subr.mxu0 0.0
    %4467 = vmatpush2.msra.mxu0 0.0
    %4468 = vmatprep.subr.mxu0 0.0
    %4469 = vmatpush2.msra.mxu0 0.0
    %4470 = vmatprep.subr.mxu0 0.0
    %4471 = vmatpush2.msra.mxu0 0.0
    %4472 = vmatprep.subr.mxu0 0.0
    %4473 = vmatpush2.msra.mxu0 0.0
    %4474 = vmatprep.subr.mxu0 0.0
    %4475 = vmatpush2.msra.mxu0 0.0
    %4476 = vmatprep.subr.mxu0 0.0
    %4477 = vmatpush2.msra.mxu0 0.0
    %4478 = vmatprep.subr.mxu0 0.0
    %4479 = vmatpush2.msra.mxu0 0.0
    %4480 = vmatprep.subr.mxu0 0.0
    %4481 = vmatpush2.msra.mxu0 0.0
    %4482 = vmatprep.subr.mxu0 0.0
    %4483 = vmatpush2.msra.mxu0 0.0
    %4484 = vmatprep.mubr.f32.mxu0 0.0
    %4485 = vmatmul.mubr.f32.gmra.mxu0 %v4415
    %v4486 = vpop.f32.mrf.mxu0
    %v4487 = vadd.f32 %v4413, %v4486
    %v4488 = vpop.f32.mrf.mxu0
    %4489 = vmatprep.mubr.f32.mxu0 0.0
    %4490 = vmatmul.mubr.f32.gmra.mxu0 %v4418
    %v4491 = vpop.f32.mrf.mxu0
    %v4492 = vadd.f32 %v4413, %v4491
    %v4493 = vpop.f32.mrf.mxu0
    %4494 = vdwg.mxu0
    %s4495 = scalar_lea.vmem [#allocation2], 672
    %v4496 = vld [vmem:[%s4495] sm:$0xff]
    %v4497 = vld [vmem:[%s4495 + $0x8] sm:$0xff]
    %v4498 = vld [vmem:[%s4495 + $0x10] sm:$0xff]
    %v4499 = vld [vmem:[%s4495 + $0x18] sm:$0xff]
    %v4500 = vlaneseq
    %v4501 = vshrl.u32 %v4500, 7
    %v4502 = vsub.s32 5, %v4501
    %v4503 = vrot.slane %v3660, %v4502
    %4504 = vmatprep.subr.mxu0 0.0
    %4505 = vmatpush1.msra.mxu0 0.0
    %4506 = vmatprep.subr.mxu0 0.0
    %4507 = vmatpush1.msra.mxu0 0.0
    %4508 = vmatprep.subr.mxu0 0.0
    %4509 = vmatpush1.msra.mxu0 0.0
    %4510 = vmatprep.subr.mxu0 0.0
    %4511 = vmatpush1.msra.mxu0 0.0
    %4512 = vmatprep.subr.mxu0 0.0
    %4513 = vmatpush1.msra.mxu0 0.0
    %4514 = vmatprep.subr.mxu0 0.0
    %4515 = vmatpush1.msra.mxu0 0.0
    %4516 = vmatprep.subr.mxu0 0.0
    %4517 = vmatpush1.msra.mxu0 0.0
    %4518 = vmatprep.subr.mxu0 0.0
    %4519 = vmatpush1.msra.mxu0 0.0
    %4520 = vmatprep.subr.mxu0 0.0
    %4521 = vmatpush1.msra.mxu0 0.0
    %4522 = vmatprep.subr.mxu0 0.0
    %4523 = vmatpush1.msra.mxu0 0.0
    %4524 = vmatprep.subr.mxu0 0.0
    %4525 = vmatpush1.msra.mxu0 0.0
    %4526 = vmatprep.subr.mxu0 0.0
    %4527 = vmatpush1.msra.mxu0 0.0
    %4528 = vmatprep.subr.mxu0 0.0
    %4529 = vmatpush1.msra.mxu0 %v4499
    %4530 = vmatprep.subr.mxu0 0.0
    %4531 = vmatpush1.msra.mxu0 %v4498
    %4532 = vmatprep.subr.mxu0 0.0
    %4533 = vmatpush1.msra.mxu0 %v4497
    %4534 = vmatprep.subr.mxu0 0.0
    %4535 = vmatpush1.msra.mxu0 %v4496
    %4536 = vmatprep.subr.mxu0 0.0
    %4537 = vmatpush2.msra.mxu0 0.0
    %4538 = vmatprep.subr.mxu0 0.0
    %4539 = vmatpush2.msra.mxu0 0.0
    %4540 = vmatprep.subr.mxu0 0.0
    %4541 = vmatpush2.msra.mxu0 0.0
    %4542 = vmatprep.subr.mxu0 0.0
    %4543 = vmatpush2.msra.mxu0 0.0
    %4544 = vmatprep.subr.mxu0 0.0
    %4545 = vmatpush2.msra.mxu0 0.0
    %4546 = vmatprep.subr.mxu0 0.0
    %4547 = vmatpush2.msra.mxu0 0.0
    %4548 = vmatprep.subr.mxu0 0.0
    %4549 = vmatpush2.msra.mxu0 0.0
    %4550 = vmatprep.subr.mxu0 0.0
    %4551 = vmatpush2.msra.mxu0 0.0
    %4552 = vmatprep.subr.mxu0 0.0
    %4553 = vmatpush2.msra.mxu0 0.0
    %4554 = vmatprep.subr.mxu0 0.0
    %4555 = vmatpush2.msra.mxu0 0.0
    %4556 = vmatprep.subr.mxu0 0.0
    %4557 = vmatpush2.msra.mxu0 0.0
    %4558 = vmatprep.subr.mxu0 0.0
    %4559 = vmatpush2.msra.mxu0 0.0
    %4560 = vmatprep.subr.mxu0 0.0
    %4561 = vmatpush2.msra.mxu0 0.0
    %4562 = vmatprep.subr.mxu0 0.0
    %4563 = vmatpush2.msra.mxu0 0.0
    %4564 = vmatprep.subr.mxu0 0.0
    %4565 = vmatpush2.msra.mxu0 0.0
    %4566 = vmatprep.subr.mxu0 0.0
    %4567 = vmatpush2.msra.mxu0 0.0
    %4568 = vmatprep.mubr.f32.mxu0 0.0
    %4569 = vmatmul.mubr.f32.gmra.mxu0 %v1071
    %v4570 = vpop.f32.mrf.mxu0
    %v4571 = vadd.f32 %v4503, %v4570
    %v4572 = vpop.f32.mrf.mxu0
    %4573 = vmatprep.mubr.f32.mxu0 0.0
    %4574 = vmatmul.mubr.f32.gmra.mxu0 %v1074
    %v4575 = vpop.f32.mrf.mxu0
    %v4576 = vadd.f32 %v4503, %v4575
    %v4577 = vpop.f32.mrf.mxu0
    %4578 = vdwg.mxu0
    %s4579 = scalar_lea.vmem [#allocation2], 704
    %v4580 = vld [vmem:[%s4579] sm:$0xff]
    %v4581 = vld [vmem:[%s4579 + $0x8] sm:$0xff]
    %v4582 = vld [vmem:[%s4579 + $0x10] sm:$0xff]
    %v4583 = vld [vmem:[%s4579 + $0x18] sm:$0xff]
    %v4584 = vlaneseq
    %v4585 = vshrl.u32 %v4584, 7
    %v4586 = vsub.s32 6, %v4585
    %v4587 = vrot.slane %v3660, %v4586
    %4588 = vmatprep.subr.mxu0 0.0
    %4589 = vmatpush1.msra.mxu0 0.0
    %4590 = vmatprep.subr.mxu0 0.0
    %4591 = vmatpush1.msra.mxu0 0.0
    %4592 = vmatprep.subr.mxu0 0.0
    %4593 = vmatpush1.msra.mxu0 0.0
    %4594 = vmatprep.subr.mxu0 0.0
    %4595 = vmatpush1.msra.mxu0 0.0
    %4596 = vmatprep.subr.mxu0 0.0
    %4597 = vmatpush1.msra.mxu0 0.0
    %4598 = vmatprep.subr.mxu0 0.0
    %4599 = vmatpush1.msra.mxu0 0.0
    %4600 = vmatprep.subr.mxu0 0.0
    %4601 = vmatpush1.msra.mxu0 0.0
    %4602 = vmatprep.subr.mxu0 0.0
    %4603 = vmatpush1.msra.mxu0 0.0
    %4604 = vmatprep.subr.mxu0 0.0
    %4605 = vmatpush1.msra.mxu0 0.0
    %4606 = vmatprep.subr.mxu0 0.0
    %4607 = vmatpush1.msra.mxu0 0.0
    %4608 = vmatprep.subr.mxu0 0.0
    %4609 = vmatpush1.msra.mxu0 0.0
    %4610 = vmatprep.subr.mxu0 0.0
    %4611 = vmatpush1.msra.mxu0 0.0
    %4612 = vmatprep.subr.mxu0 0.0
    %4613 = vmatpush1.msra.mxu0 %v4583
    %4614 = vmatprep.subr.mxu0 0.0
    %4615 = vmatpush1.msra.mxu0 %v4582
    %4616 = vmatprep.subr.mxu0 0.0
    %4617 = vmatpush1.msra.mxu0 %v4581
    %4618 = vmatprep.subr.mxu0 0.0
    %4619 = vmatpush1.msra.mxu0 %v4580
    %4620 = vmatprep.subr.mxu0 0.0
    %4621 = vmatpush2.msra.mxu0 0.0
    %4622 = vmatprep.subr.mxu0 0.0
    %4623 = vmatpush2.msra.mxu0 0.0
    %4624 = vmatprep.subr.mxu0 0.0
    %4625 = vmatpush2.msra.mxu0 0.0
    %4626 = vmatprep.subr.mxu0 0.0
    %4627 = vmatpush2.msra.mxu0 0.0
    %4628 = vmatprep.subr.mxu0 0.0
    %4629 = vmatpush2.msra.mxu0 0.0
    %4630 = vmatprep.subr.mxu0 0.0
    %4631 = vmatpush2.msra.mxu0 0.0
    %4632 = vmatprep.subr.mxu0 0.0
    %4633 = vmatpush2.msra.mxu0 0.0
    %4634 = vmatprep.subr.mxu0 0.0
    %4635 = vmatpush2.msra.mxu0 0.0
    %4636 = vmatprep.subr.mxu0 0.0
    %4637 = vmatpush2.msra.mxu0 0.0
    %4638 = vmatprep.subr.mxu0 0.0
    %4639 = vmatpush2.msra.mxu0 0.0
    %4640 = vmatprep.subr.mxu0 0.0
    %4641 = vmatpush2.msra.mxu0 0.0
    %4642 = vmatprep.subr.mxu0 0.0
    %4643 = vmatpush2.msra.mxu0 0.0
    %4644 = vmatprep.subr.mxu0 0.0
    %4645 = vmatpush2.msra.mxu0 0.0
    %4646 = vmatprep.subr.mxu0 0.0
    %4647 = vmatpush2.msra.mxu0 0.0
    %4648 = vmatprep.subr.mxu0 0.0
    %4649 = vmatpush2.msra.mxu0 0.0
    %4650 = vmatprep.subr.mxu0 0.0
    %4651 = vmatpush2.msra.mxu0 0.0
    %4652 = vmatprep.mubr.f32.mxu0 0.0
    %4653 = vmatmul.mubr.f32.gmra.mxu0 %v1071
    %v4654 = vpop.f32.mrf.mxu0
    %v4655 = vadd.f32 %v4587, %v4654
    %v4656 = vpop.f32.mrf.mxu0
    %4657 = vmatprep.mubr.f32.mxu0 0.0
    %4658 = vmatmul.mubr.f32.gmra.mxu0 %v1074
    %v4659 = vpop.f32.mrf.mxu0
    %v4660 = vadd.f32 %v4587, %v4659
    %v4661 = vpop.f32.mrf.mxu0
    %4662 = vdwg.mxu0
    %s4663 = scalar_lea.vmem [#allocation2], 736
    %v4664 = vld [vmem:[%s4663] sm:$0xff]
    %v4665 = vld [vmem:[%s4663 + $0x8] sm:$0xff]
    %v4666 = vld [vmem:[%s4663 + $0x10] sm:$0xff]
    %v4667 = vld [vmem:[%s4663 + $0x18] sm:$0xff]
    %4668 = vxpose.xlu0.b32.start [1/16] %v4571, 128
    %4669 = vxpose.xlu0.b32.cont [2/16] %v4576, 128
    %4670 = vxpose.xlu0.b32.cont [3/16] 0.0, 128
    %4671 = vxpose.xlu0.b32.cont [4/16] 0.0, 128
    %4672 = vxpose.xlu0.b32.cont [5/16] 0.0, 128
    %4673 = vxpose.xlu0.b32.cont [6/16] 0.0, 128
    %4674 = vxpose.xlu0.b32.cont [7/16] 0.0, 128
    %4675 = vxpose.xlu0.b32.cont [8/16] 0.0, 128
    %4676 = vxpose.xlu0.b32.cont [9/16] 0.0, 128
    %4677 = vxpose.xlu0.b32.cont [10/16] 0.0, 128
    %4678 = vxpose.xlu0.b32.cont [11/16] 0.0, 128
    %4679 = vxpose.xlu0.b32.cont [12/16] 0.0, 128
    %4680 = vxpose.xlu0.b32.cont [13/16] 0.0, 128
    %4681 = vxpose.xlu0.b32.cont [14/16] 0.0, 128
    %4682 = vxpose.xlu0.b32.cont [15/16] 0.0, 128
    %4683 = vxpose.xlu0.b32.end [16/16] 0.0, 128
    %v4684 = vpop.trf.xlu0
    %v4685 = vpop.trf.xlu0
    %v4686 = vpop.trf.xlu0
    %v4687 = vpop.trf.xlu0
    %v4688 = vpop.trf.xlu0
    %v4689 = vpop.trf.xlu0
    %v4690 = vpop.trf.xlu0
    %v4691 = vpop.trf.xlu0
    %v4692 = vpop.trf.xlu0
    %v4693 = vpop.trf.xlu0
    %v4694 = vpop.trf.xlu0
    %v4695 = vpop.trf.xlu0
    %v4696 = vpop.trf.xlu0
    %v4697 = vpop.trf.xlu0
    %v4698 = vpop.trf.xlu0
    %v4699 = vpop.trf.xlu0
    %4704 = vrot.lane.b32.xlu0 %v4684, 16
    %v4705 = vpop.permute.xlu0 %4704
    %4706 = vrot.lane.b32.xlu0 %v4685, 16
    %v4707 = vpop.permute.xlu0 %4706
    %4708 = vrot.lane.b32.xlu0 %v4686, 16
    %v4709 = vpop.permute.xlu0 %4708
    %4710 = vrot.lane.b32.xlu0 %v4687, 16
    %v4711 = vpop.permute.xlu0 %4710
    %4716 = vrot.lane.b32.xlu0 %v4684, 32
    %v4717 = vpop.permute.xlu0 %4716
    %4718 = vrot.lane.b32.xlu0 %v4685, 32
    %v4719 = vpop.permute.xlu0 %4718
    %4720 = vrot.lane.b32.xlu0 %v4686, 32
    %v4721 = vpop.permute.xlu0 %4720
    %4722 = vrot.lane.b32.xlu0 %v4687, 32
    %v4723 = vpop.permute.xlu0 %4722
    %4728 = vrot.lane.b32.xlu0 %v4684, 48
    %v4729 = vpop.permute.xlu0 %4728
    %4730 = vrot.lane.b32.xlu0 %v4685, 48
    %v4731 = vpop.permute.xlu0 %4730
    %4732 = vrot.lane.b32.xlu0 %v4686, 48
    %v4733 = vpop.permute.xlu0 %4732
    %4734 = vrot.lane.b32.xlu0 %v4687, 48
    %v4735 = vpop.permute.xlu0 %4734
    %v4740 = vsel %vm130, %v4684, %v4705
    %v4741 = vsel %vm130, %v4685, %v4707
    %v4742 = vsel %vm130, %v4686, %v4709
    %v4743 = vsel %vm130, %v4687, %v4711
    %v4744 = vsel %vm135, %v4740, %v4717
    %v4745 = vsel %vm135, %v4741, %v4719
    %v4746 = vsel %vm135, %v4742, %v4721
    %v4747 = vsel %vm135, %v4743, %v4723
    %v4748 = vsel %vm140, %v4744, %v4729
    %v4749 = vsel %vm140, %v4745, %v4731
    %v4750 = vsel %vm140, %v4746, %v4733
    %v4751 = vsel %vm140, %v4747, %v4735
    %v4752 = vmul.f32 %v4748, %v141
    %v4753 = vmul.f32 %v4749, %v142
    %v4754 = vmul.f32 %v4750, %v143
    %v4755 = vmul.f32 %v4751, %v144
    %v4756 = vmul.f32 %v4655, %v48
    %v4757 = vmul.f32 %v4660, %v48
    %v4758 = vmul.f32 %v4655, %v52
    %v4759 = vmul.f32 %v4660, %v52
    %v4760 = vmul.f32 %v4655, %v56
    %v4761 = vmul.f32 %v4660, %v56
    %v4762 = vmul.f32 %v4655, %v60
    %v4763 = vmul.f32 %v4660, %v60
    %v4764 = vmul.f32 %v4487, 0.35355338
    %v4765 = vmul.f32 %v4492, 0.35355338
    %v4767 = vsel %vm135, %v4764, 0
    %v4770 = vsel %vm135, %v4765, 0
    %4772 = vmatprep.subr.mxu0 0.0
    %4773 = vmatpush1.msra.mxu0 0.0
    %4774 = vmatprep.subr.mxu0 0.0
    %4775 = vmatpush1.msra.mxu0 0.0
    %4776 = vmatprep.subr.mxu0 0.0
    %4777 = vmatpush1.msra.mxu0 0.0
    %4778 = vmatprep.subr.mxu0 0.0
    %4779 = vmatpush1.msra.mxu0 0.0
    %4780 = vmatprep.subr.mxu0 0.0
    %4781 = vmatpush1.msra.mxu0 0.0
    %4782 = vmatprep.subr.mxu0 0.0
    %4783 = vmatpush1.msra.mxu0 0.0
    %4784 = vmatprep.subr.mxu0 0.0
    %4785 = vmatpush1.msra.mxu0 0.0
    %4786 = vmatprep.subr.mxu0 0.0
    %4787 = vmatpush1.msra.mxu0 0.0
    %4788 = vmatprep.subr.mxu0 0.0
    %4789 = vmatpush1.msra.mxu0 0.0
    %4790 = vmatprep.subr.mxu0 0.0
    %4791 = vmatpush1.msra.mxu0 0.0
    %4792 = vmatprep.subr.mxu0 0.0
    %4793 = vmatpush1.msra.mxu0 0.0
    %4794 = vmatprep.subr.mxu0 0.0
    %4795 = vmatpush1.msra.mxu0 0.0
    %4796 = vmatprep.subr.mxu0 0.0
    %4797 = vmatpush1.msra.mxu0 %v4755
    %4798 = vmatprep.subr.mxu0 0.0
    %4799 = vmatpush1.msra.mxu0 %v4754
    %4800 = vmatprep.subr.mxu0 0.0
    %4801 = vmatpush1.msra.mxu0 %v4753
    %4802 = vmatprep.subr.mxu0 0.0
    %4803 = vmatpush1.msra.mxu0 %v4752
    %4804 = vmatprep.subr.mxu0 0.0
    %4805 = vmatpush2.msra.mxu0 0.0
    %4806 = vmatprep.subr.mxu0 0.0
    %4807 = vmatpush2.msra.mxu0 0.0
    %4808 = vmatprep.subr.mxu0 0.0
    %4809 = vmatpush2.msra.mxu0 0.0
    %4810 = vmatprep.subr.mxu0 0.0
    %4811 = vmatpush2.msra.mxu0 0.0
    %4812 = vmatprep.subr.mxu0 0.0
    %4813 = vmatpush2.msra.mxu0 0.0
    %4814 = vmatprep.subr.mxu0 0.0
    %4815 = vmatpush2.msra.mxu0 0.0
    %4816 = vmatprep.subr.mxu0 0.0
    %4817 = vmatpush2.msra.mxu0 0.0
    %4818 = vmatprep.subr.mxu0 0.0
    %4819 = vmatpush2.msra.mxu0 0.0
    %4820 = vmatprep.subr.mxu0 0.0
    %4821 = vmatpush2.msra.mxu0 0.0
    %4822 = vmatprep.subr.mxu0 0.0
    %4823 = vmatpush2.msra.mxu0 0.0
    %4824 = vmatprep.subr.mxu0 0.0
    %4825 = vmatpush2.msra.mxu0 0.0
    %4826 = vmatprep.subr.mxu0 0.0
    %4827 = vmatpush2.msra.mxu0 0.0
    %4828 = vmatprep.subr.mxu0 0.0
    %4829 = vmatpush2.msra.mxu0 0.0
    %4830 = vmatprep.subr.mxu0 0.0
    %4831 = vmatpush2.msra.mxu0 0.0
    %4832 = vmatprep.subr.mxu0 0.0
    %4833 = vmatpush2.msra.mxu0 0.0
    %4834 = vmatprep.subr.mxu0 0.0
    %4835 = vmatpush2.msra.mxu0 0.0
    %4836 = vmatprep.mubr.f32.mxu0 0.0
    %4837 = vmatmul.mubr.f32.gmra.mxu0 %v4767
    %v4838 = vpop.f32.mrf.mxu0
    %v4839 = vadd.f32 %v223, %v4838
    %v4840 = vpop.f32.mrf.mxu0
    %4841 = vmatprep.mubr.f32.mxu0 0.0
    %4842 = vmatmul.mubr.f32.gmra.mxu0 %v4770
    %v4843 = vpop.f32.mrf.mxu0
    %v4844 = vadd.f32 %v224, %v4843
    %v4845 = vpop.f32.mrf.mxu0
    %4846 = vdwg.mxu0
    %v4847 = vmul.f32 %v4839, 1.442695
    %v4848 = vpow.pop %v4847
    %v4849 = vmul.f32 %v4844, 1.442695
    %v4850 = vpow.pop %v4849
    %v4852 = vsel %vm672, %v4848, 0
    %v4855 = vsel %vm672, %v4850, 0
    %4857 = vmatprep.subr.mxu0 0.0
    %4858 = vmatpush1.msra.mxu0 0.0
    %4859 = vmatprep.subr.mxu0 0.0
    %4860 = vmatpush1.msra.mxu0 0.0
    %4861 = vmatprep.subr.mxu0 0.0
    %4862 = vmatpush1.msra.mxu0 0.0
    %4863 = vmatprep.subr.mxu0 0.0
    %4864 = vmatpush1.msra.mxu0 0.0
    %4865 = vmatprep.subr.mxu0 0.0
    %4866 = vmatpush1.msra.mxu0 0.0
    %4867 = vmatprep.subr.mxu0 0.0
    %4868 = vmatpush1.msra.mxu0 0.0
    %4869 = vmatprep.subr.mxu0 0.0
    %4870 = vmatpush1.msra.mxu0 0.0
    %4871 = vmatprep.subr.mxu0 0.0
    %4872 = vmatpush1.msra.mxu0 0.0
    %4873 = vmatprep.subr.mxu0 0.0
    %4874 = vmatpush1.msra.mxu0 %v156
    %4875 = vmatprep.subr.mxu0 0.0
    %4876 = vmatpush1.msra.mxu0 %v156
    %4877 = vmatprep.subr.mxu0 0.0
    %4878 = vmatpush1.msra.mxu0 %v152
    %4879 = vmatprep.subr.mxu0 0.0
    %4880 = vmatpush1.msra.mxu0 %v152
    %4881 = vmatprep.subr.mxu0 0.0
    %4882 = vmatpush1.msra.mxu0 %v148
    %4883 = vmatprep.subr.mxu0 0.0
    %4884 = vmatpush1.msra.mxu0 %v148
    %4885 = vmatprep.subr.mxu0 0.0
    %4886 = vmatpush1.msra.mxu0 %v146
    %4887 = vmatprep.subr.mxu0 0.0
    %4888 = vmatpush1.msra.mxu0 %v146
    %4889 = vmatprep.subr.mxu0 0.0
    %4890 = vmatpush2.msra.mxu0 0.0
    %4891 = vmatprep.subr.mxu0 0.0
    %4892 = vmatpush2.msra.mxu0 0.0
    %4893 = vmatprep.subr.mxu0 0.0
    %4894 = vmatpush2.msra.mxu0 0.0
    %4895 = vmatprep.subr.mxu0 0.0
    %4896 = vmatpush2.msra.mxu0 0.0
    %4897 = vmatprep.subr.mxu0 0.0
    %4898 = vmatpush2.msra.mxu0 0.0
    %4899 = vmatprep.subr.mxu0 0.0
    %4900 = vmatpush2.msra.mxu0 0.0
    %4901 = vmatprep.subr.mxu0 0.0
    %4902 = vmatpush2.msra.mxu0 0.0
    %4903 = vmatprep.subr.mxu0 0.0
    %4904 = vmatpush2.msra.mxu0 0.0
    %4905 = vmatprep.subr.mxu0 0.0
    %4906 = vmatpush2.msra.mxu0 0.0
    %4907 = vmatprep.subr.mxu0 0.0
    %4908 = vmatpush2.msra.mxu0 0.0
    %4909 = vmatprep.subr.mxu0 0.0
    %4910 = vmatpush2.msra.mxu0 0.0
    %4911 = vmatprep.subr.mxu0 0.0
    %4912 = vmatpush2.msra.mxu0 0.0
    %4913 = vmatprep.subr.mxu0 0.0
    %4914 = vmatpush2.msra.mxu0 0.0
    %4915 = vmatprep.subr.mxu0 0.0
    %4916 = vmatpush2.msra.mxu0 0.0
    %4917 = vmatprep.subr.mxu0 0.0
    %4918 = vmatpush2.msra.mxu0 0.0
    %4919 = vmatprep.subr.mxu0 0.0
    %4920 = vmatpush2.msra.mxu0 0.0
    %4921 = vmatprep.mubr.f32.mxu0 0.0
    %4922 = vmatmul.mubr.f32.gmra.mxu0 %v4852
    %v4923 = vpop.f32.mrf.mxu0
    %v4924 = vadd.f32 0.0, %v4923
    %v4925 = vpop.f32.mrf.mxu0
    %4926 = vmatprep.mubr.f32.mxu0 0.0
    %4927 = vmatmul.mubr.f32.gmra.mxu0 %v4855
    %v4928 = vpop.f32.mrf.mxu0
    %v4929 = vadd.f32 0.0, %v4928
    %v4930 = vpop.f32.mrf.mxu0
    %4931 = vdwg.mxu0
    %v4932 = vrcp.pop %v4924
    %v4933 = vrcp.pop %v4929
    %v4934 = vmul.f32 %v4924, %v4932
    %v4935 = vmul.f32 %v4929, %v4933
    %v4936 = vsub.f32 2.0, %v4934
    %v4937 = vsub.f32 2.0, %v4935
    %v4938 = vmul.f32 %v4932, %v4936
    %v4939 = vmul.f32 %v4933, %v4937
    %v4940 = vmul.f32 %v4848, %v4938
    %v4941 = vmul.f32 %v4850, %v4939
    %v4943 = vsel %vm672, %v4940, 0
    %v4946 = vsel %vm672, %v4941, 0
    %4948 = vmatprep.subr.mxu0 0.0
    %4949 = vmatpush1.msra.mxu0 0.0
    %4950 = vmatprep.subr.mxu0 0.0
    %4951 = vmatpush1.msra.mxu0 0.0
    %4952 = vmatprep.subr.mxu0 0.0
    %4953 = vmatpush1.msra.mxu0 0.0
    %4954 = vmatprep.subr.mxu0 0.0
    %4955 = vmatpush1.msra.mxu0 0.0
    %4956 = vmatprep.subr.mxu0 0.0
    %4957 = vmatpush1.msra.mxu0 0.0
    %4958 = vmatprep.subr.mxu0 0.0
    %4959 = vmatpush1.msra.mxu0 0.0
    %4960 = vmatprep.subr.mxu0 0.0
    %4961 = vmatpush1.msra.mxu0 0.0
    %4962 = vmatprep.subr.mxu0 0.0
    %4963 = vmatpush1.msra.mxu0 0.0
    %4964 = vmatprep.subr.mxu0 0.0
    %4965 = vmatpush1.msra.mxu0 %v4763
    %4966 = vmatprep.subr.mxu0 0.0
    %4967 = vmatpush1.msra.mxu0 %v4762
    %4968 = vmatprep.subr.mxu0 0.0
    %4969 = vmatpush1.msra.mxu0 %v4761
    %4970 = vmatprep.subr.mxu0 0.0
    %4971 = vmatpush1.msra.mxu0 %v4760
    %4972 = vmatprep.subr.mxu0 0.0
    %4973 = vmatpush1.msra.mxu0 %v4759
    %4974 = vmatprep.subr.mxu0 0.0
    %4975 = vmatpush1.msra.mxu0 %v4758
    %4976 = vmatprep.subr.mxu0 0.0
    %4977 = vmatpush1.msra.mxu0 %v4757
    %4978 = vmatprep.subr.mxu0 0.0
    %4979 = vmatpush1.msra.mxu0 %v4756
    %4980 = vmatprep.subr.mxu0 0.0
    %4981 = vmatpush2.msra.mxu0 0.0
    %4982 = vmatprep.subr.mxu0 0.0
    %4983 = vmatpush2.msra.mxu0 0.0
    %4984 = vmatprep.subr.mxu0 0.0
    %4985 = vmatpush2.msra.mxu0 0.0
    %4986 = vmatprep.subr.mxu0 0.0
    %4987 = vmatpush2.msra.mxu0 0.0
    %4988 = vmatprep.subr.mxu0 0.0
    %4989 = vmatpush2.msra.mxu0 0.0
    %4990 = vmatprep.subr.mxu0 0.0
    %4991 = vmatpush2.msra.mxu0 0.0
    %4992 = vmatprep.subr.mxu0 0.0
    %4993 = vmatpush2.msra.mxu0 0.0
    %4994 = vmatprep.subr.mxu0 0.0
    %4995 = vmatpush2.msra.mxu0 0.0
    %4996 = vmatprep.subr.mxu0 0.0
    %4997 = vmatpush2.msra.mxu0 0.0
    %4998 = vmatprep.subr.mxu0 0.0
    %4999 = vmatpush2.msra.mxu0 0.0
    %5000 = vmatprep.subr.mxu0 0.0
    %5001 = vmatpush2.msra.mxu0 0.0
    %5002 = vmatprep.subr.mxu0 0.0
    %5003 = vmatpush2.msra.mxu0 0.0
    %5004 = vmatprep.subr.mxu0 0.0
    %5005 = vmatpush2.msra.mxu0 0.0
    %5006 = vmatprep.subr.mxu0 0.0
    %5007 = vmatpush2.msra.mxu0 0.0
    %5008 = vmatprep.subr.mxu0 0.0
    %5009 = vmatpush2.msra.mxu0 0.0
    %5010 = vmatprep.subr.mxu0 0.0
    %5011 = vmatpush2.msra.mxu0 0.0
    %5012 = vmatprep.mubr.f32.mxu0 0.0
    %5013 = vmatmul.mubr.f32.gmra.mxu0 %v4943
    %v5014 = vpop.f32.mrf.mxu0
    %v5015 = vadd.f32 0.0, %v5014
    %v5016 = vpop.f32.mrf.mxu0
    %5017 = vmatprep.mubr.f32.mxu0 0.0
    %5018 = vmatmul.mubr.f32.gmra.mxu0 %v4946
    %v5019 = vpop.f32.mrf.mxu0
    %v5020 = vadd.f32 0.0, %v5019
    %v5021 = vpop.f32.mrf.mxu0
    %5022 = vdwg.mxu0
    %v5023 = vlaneseq
    %v5024 = vshrl.u32 %v5023, 7
    %v5025 = vsub.s32 7, %v5024
    %v5026 = vrot.slane %v3660, %v5025
    %v5028 = vsel %vm135, %v5015, 0
    %v5031 = vsel %vm135, %v5020, 0
    %5033 = vmatprep.subr.mxu0 0.0
    %5034 = vmatpush1.msra.mxu0 0.0
    %5035 = vmatprep.subr.mxu0 0.0
    %5036 = vmatpush1.msra.mxu0 0.0
    %5037 = vmatprep.subr.mxu0 0.0
    %5038 = vmatpush1.msra.mxu0 0.0
    %5039 = vmatprep.subr.mxu0 0.0
    %5040 = vmatpush1.msra.mxu0 0.0
    %5041 = vmatprep.subr.mxu0 0.0
    %5042 = vmatpush1.msra.mxu0 0.0
    %5043 = vmatprep.subr.mxu0 0.0
    %5044 = vmatpush1.msra.mxu0 0.0
    %5045 = vmatprep.subr.mxu0 0.0
    %5046 = vmatpush1.msra.mxu0 0.0
    %5047 = vmatprep.subr.mxu0 0.0
    %5048 = vmatpush1.msra.mxu0 0.0
    %5049 = vmatprep.subr.mxu0 0.0
    %5050 = vmatpush1.msra.mxu0 0.0
    %5051 = vmatprep.subr.mxu0 0.0
    %5052 = vmatpush1.msra.mxu0 0.0
    %5053 = vmatprep.subr.mxu0 0.0
    %5054 = vmatpush1.msra.mxu0 0.0
    %5055 = vmatprep.subr.mxu0 0.0
    %5056 = vmatpush1.msra.mxu0 0.0
    %5057 = vmatprep.subr.mxu0 0.0
    %5058 = vmatpush1.msra.mxu0 %v4667
    %5059 = vmatprep.subr.mxu0 0.0
    %5060 = vmatpush1.msra.mxu0 %v4666
    %5061 = vmatprep.subr.mxu0 0.0
    %5062 = vmatpush1.msra.mxu0 %v4665
    %5063 = vmatprep.subr.mxu0 0.0
    %5064 = vmatpush1.msra.mxu0 %v4664
    %5065 = vmatprep.subr.mxu0 0.0
    %5066 = vmatpush2.msra.mxu0 0.0
    %5067 = vmatprep.subr.mxu0 0.0
    %5068 = vmatpush2.msra.mxu0 0.0
    %5069 = vmatprep.subr.mxu0 0.0
    %5070 = vmatpush2.msra.mxu0 0.0
    %5071 = vmatprep.subr.mxu0 0.0
    %5072 = vmatpush2.msra.mxu0 0.0
    %5073 = vmatprep.subr.mxu0 0.0
    %5074 = vmatpush2.msra.mxu0 0.0
    %5075 = vmatprep.subr.mxu0 0.0
    %5076 = vmatpush2.msra.mxu0 0.0
    %5077 = vmatprep.subr.mxu0 0.0
    %5078 = vmatpush2.msra.mxu0 0.0
    %5079 = vmatprep.subr.mxu0 0.0
    %5080 = vmatpush2.msra.mxu0 0.0
    %5081 = vmatprep.subr.mxu0 0.0
    %5082 = vmatpush2.msra.mxu0 0.0
    %5083 = vmatprep.subr.mxu0 0.0
    %5084 = vmatpush2.msra.mxu0 0.0
    %5085 = vmatprep.subr.mxu0 0.0
    %5086 = vmatpush2.msra.mxu0 0.0
    %5087 = vmatprep.subr.mxu0 0.0
    %5088 = vmatpush2.msra.mxu0 0.0
    %5089 = vmatprep.subr.mxu0 0.0
    %5090 = vmatpush2.msra.mxu0 0.0
    %5091 = vmatprep.subr.mxu0 0.0
    %5092 = vmatpush2.msra.mxu0 0.0
    %5093 = vmatprep.subr.mxu0 0.0
    %5094 = vmatpush2.msra.mxu0 0.0
    %5095 = vmatprep.subr.mxu0 0.0
    %5096 = vmatpush2.msra.mxu0 0.0
    %5097 = vmatprep.mubr.f32.mxu0 0.0
    %5098 = vmatmul.mubr.f32.gmra.mxu0 %v5028
    %v5099 = vpop.f32.mrf.mxu0
    %v5100 = vadd.f32 %v5026, %v5099
    %v5101 = vpop.f32.mrf.mxu0
    %5102 = vmatprep.mubr.f32.mxu0 0.0
    %5103 = vmatmul.mubr.f32.gmra.mxu0 %v5031
    %v5104 = vpop.f32.mrf.mxu0
    %v5105 = vadd.f32 %v5026, %v5104
    %v5106 = vpop.f32.mrf.mxu0
    %5107 = vdwg.mxu0
    %v5108 = vadd.f32 %v4403, %v5100
    %v5109 = vadd.f32 %v4404, %v5105
    %v5110 = vsel %vm135, %v5108, 0.0
    %5111 = vadd.xlane.f32.xlu0 %v5110
    %v5112 = vpop.xlane.xlu0 %5111
    %v5113 = vsel %vm135, %v5109, 0.0
    %5114 = vadd.xlane.f32.xlu0 %v5113
    %v5115 = vpop.xlane.xlu0 %5114
    %v5116 = vmul.f32 %v5112, %v938
    %v5117 = vmul.f32 %v5115, %v938
    %v5118 = vsub.f32 %v5108, %v5116
    %v5119 = vsub.f32 %v5109, %v5117
    %v5120 = vmul.f32 %v5118, %v5118
    %v5121 = vmul.f32 %v5119, %v5119
    %v5122 = vsel %vm135, %v5120, 0.0
    %5123 = vadd.xlane.f32.xlu0 %v5122
    %v5124 = vpop.xlane.xlu0 %5123
    %v5125 = vsel %vm135, %v5121, 0.0
    %5126 = vadd.xlane.f32.xlu0 %v5125
    %v5127 = vpop.xlane.xlu0 %5126
    %v5128 = vmul.f32 %v5124, %v938
    %v5129 = vmul.f32 %v5127, %v938
    %v5130 = vadd.f32 %v5128, 1e-05
    %v5131 = vadd.f32 %v5129, 1e-05
    %v5132 = vrsqrt.pop %v5130
    %v5133 = vrsqrt.pop %v5131
    %v5134 = vmul.f32 %v5118, %v5132
    %v5135 = vmul.f32 %v5119, %v5133
    %v5136 = vlaneseq
    %v5137 = vshrl.u32 %v5136, 7
    %v5138 = vsub.s32 4, %v5137
    %v5139 = vrot.slane %v3661, %v5138
    %v5140 = vmul.f32 %v5134, %v5139
    %v5141 = vmul.f32 %v5135, %v5139
    %v5142 = vlaneseq
    %v5143 = vshrl.u32 %v5142, 7
    %v5144 = vsub.s32 5, %v5143
    %v5145 = vrot.slane %v3661, %v5144
    %v5146 = vadd.f32 %v5140, %v5145
    %v5147 = vadd.f32 %v5141, %v5145
    %s5148 = scalar_lea.vmem %s2, 64
    %v5149 = vld [vmem:[%s5148] sm:$0xff]
    %v5150 = vld [vmem:[%s5148 + $0x8] sm:$0xff]
    %v5151 = vld [vmem:[%s5148 + $0x10] sm:$0xff]
    %v5152 = vld [vmem:[%s5148 + $0x18] sm:$0xff]
    %v5153 = vlaneseq
    %v5154 = vshrl.u32 %v5153, 7
    %v5155 = vsub.s32 0, %v5154
    %v5156 = vrot.slane %v3661, %v5155
    %v5158 = vsel %vm135, %v5146, 0
    %v5161 = vsel %vm135, %v5147, 0
    %5163 = vmatprep.subr.mxu0 0.0
    %5164 = vmatpush1.msra.mxu0 0.0
    %5165 = vmatprep.subr.mxu0 0.0
    %5166 = vmatpush1.msra.mxu0 0.0
    %5167 = vmatprep.subr.mxu0 0.0
    %5168 = vmatpush1.msra.mxu0 0.0
    %5169 = vmatprep.subr.mxu0 0.0
    %5170 = vmatpush1.msra.mxu0 0.0
    %5171 = vmatprep.subr.mxu0 0.0
    %5172 = vmatpush1.msra.mxu0 0.0
    %5173 = vmatprep.subr.mxu0 0.0
    %5174 = vmatpush1.msra.mxu0 0.0
    %5175 = vmatprep.subr.mxu0 0.0
    %5176 = vmatpush1.msra.mxu0 0.0
    %5177 = vmatprep.subr.mxu0 0.0
    %5178 = vmatpush1.msra.mxu0 0.0
    %5179 = vmatprep.subr.mxu0 0.0
    %5180 = vmatpush1.msra.mxu0 0.0
    %5181 = vmatprep.subr.mxu0 0.0
    %5182 = vmatpush1.msra.mxu0 0.0
    %5183 = vmatprep.subr.mxu0 0.0
    %5184 = vmatpush1.msra.mxu0 0.0
    %5185 = vmatprep.subr.mxu0 0.0
    %5186 = vmatpush1.msra.mxu0 0.0
    %5187 = vmatprep.subr.mxu0 0.0
    %5188 = vmatpush1.msra.mxu0 %v5152
    %5189 = vmatprep.subr.mxu0 0.0
    %5190 = vmatpush1.msra.mxu0 %v5151
    %5191 = vmatprep.subr.mxu0 0.0
    %5192 = vmatpush1.msra.mxu0 %v5150
    %5193 = vmatprep.subr.mxu0 0.0
    %5194 = vmatpush1.msra.mxu0 %v5149
    %5195 = vmatprep.subr.mxu0 0.0
    %5196 = vmatpush2.msra.mxu0 0.0
    %5197 = vmatprep.subr.mxu0 0.0
    %5198 = vmatpush2.msra.mxu0 0.0
    %5199 = vmatprep.subr.mxu0 0.0
    %5200 = vmatpush2.msra.mxu0 0.0
    %5201 = vmatprep.subr.mxu0 0.0
    %5202 = vmatpush2.msra.mxu0 0.0
    %5203 = vmatprep.subr.mxu0 0.0
    %5204 = vmatpush2.msra.mxu0 0.0
    %5205 = vmatprep.subr.mxu0 0.0
    %5206 = vmatpush2.msra.mxu0 0.0
    %5207 = vmatprep.subr.mxu0 0.0
    %5208 = vmatpush2.msra.mxu0 0.0
    %5209 = vmatprep.subr.mxu0 0.0
    %5210 = vmatpush2.msra.mxu0 0.0
    %5211 = vmatprep.subr.mxu0 0.0
    %5212 = vmatpush2.msra.mxu0 0.0
    %5213 = vmatprep.subr.mxu0 0.0
    %5214 = vmatpush2.msra.mxu0 0.0
    %5215 = vmatprep.subr.mxu0 0.0
    %5216 = vmatpush2.msra.mxu0 0.0
    %5217 = vmatprep.subr.mxu0 0.0
    %5218 = vmatpush2.msra.mxu0 0.0
    %5219 = vmatprep.subr.mxu0 0.0
    %5220 = vmatpush2.msra.mxu0 0.0
    %5221 = vmatprep.subr.mxu0 0.0
    %5222 = vmatpush2.msra.mxu0 0.0
    %5223 = vmatprep.subr.mxu0 0.0
    %5224 = vmatpush2.msra.mxu0 0.0
    %5225 = vmatprep.subr.mxu0 0.0
    %5226 = vmatpush2.msra.mxu0 0.0
    %5227 = vmatprep.mubr.f32.mxu0 0.0
    %5228 = vmatmul.mubr.f32.gmra.mxu0 %v5158
    %v5229 = vpop.f32.mrf.mxu0
    %v5230 = vadd.f32 %v5156, %v5229
    %v5231 = vpop.f32.mrf.mxu0
    %5232 = vmatprep.mubr.f32.mxu0 0.0
    %5233 = vmatmul.mubr.f32.gmra.mxu0 %v5161
    %v5234 = vpop.f32.mrf.mxu0
    %v5235 = vadd.f32 %v5156, %v5234
    %v5236 = vpop.f32.mrf.mxu0
    %5237 = vdwg.mxu0
    %v5238 = vmax.f32 %v5230, 0.0
    %v5239 = vmax.f32 %v5235, 0.0
    %s5240 = scalar_lea.vmem %s3, 128
    %v5241 = vld [vmem:[%s5240] sm:$0xff]
    %v5242 = vld [vmem:[%s5240 + $0x8] sm:$0xff]
    %v5243 = vld [vmem:[%s5240 + $0x10] sm:$0xff]
    %v5244 = vld [vmem:[%s5240 + $0x18] sm:$0xff]
    %v5245 = vld [vmem:[%s5240 + $0x20] sm:$0xff]
    %v5246 = vld [vmem:[%s5240 + $0x28] sm:$0xff]
    %v5247 = vld [vmem:[%s5240 + $0x30] sm:$0xff]
    %v5248 = vld [vmem:[%s5240 + $0x38] sm:$0xff]
    %v5249 = vlaneseq
    %v5250 = vshrl.u32 %v5249, 7
    %v5251 = vsub.s32 1, %v5250
    %v5252 = vrot.slane %v3661, %v5251
    %v5254 = vsel %vm672, %v5238, 0
    %v5257 = vsel %vm672, %v5239, 0
    %5259 = vmatprep.subr.mxu0 0.0
    %5260 = vmatpush1.msra.mxu0 0.0
    %5261 = vmatprep.subr.mxu0 0.0
    %5262 = vmatpush1.msra.mxu0 0.0
    %5263 = vmatprep.subr.mxu0 0.0
    %5264 = vmatpush1.msra.mxu0 0.0
    %5265 = vmatprep.subr.mxu0 0.0
    %5266 = vmatpush1.msra.mxu0 0.0
    %5267 = vmatprep.subr.mxu0 0.0
    %5268 = vmatpush1.msra.mxu0 0.0
    %5269 = vmatprep.subr.mxu0 0.0
    %5270 = vmatpush1.msra.mxu0 0.0
    %5271 = vmatprep.subr.mxu0 0.0
    %5272 = vmatpush1.msra.mxu0 0.0
    %5273 = vmatprep.subr.mxu0 0.0
    %5274 = vmatpush1.msra.mxu0 0.0
    %5275 = vmatprep.subr.mxu0 0.0
    %5276 = vmatpush1.msra.mxu0 %v5248
    %5277 = vmatprep.subr.mxu0 0.0
    %5278 = vmatpush1.msra.mxu0 %v5247
    %5279 = vmatprep.subr.mxu0 0.0
    %5280 = vmatpush1.msra.mxu0 %v5246
    %5281 = vmatprep.subr.mxu0 0.0
    %5282 = vmatpush1.msra.mxu0 %v5245
    %5283 = vmatprep.subr.mxu0 0.0
    %5284 = vmatpush1.msra.mxu0 %v5244
    %5285 = vmatprep.subr.mxu0 0.0
    %5286 = vmatpush1.msra.mxu0 %v5243
    %5287 = vmatprep.subr.mxu0 0.0
    %5288 = vmatpush1.msra.mxu0 %v5242
    %5289 = vmatprep.subr.mxu0 0.0
    %5290 = vmatpush1.msra.mxu0 %v5241
    %5291 = vmatprep.subr.mxu0 0.0
    %5292 = vmatpush2.msra.mxu0 0.0
    %5293 = vmatprep.subr.mxu0 0.0
    %5294 = vmatpush2.msra.mxu0 0.0
    %5295 = vmatprep.subr.mxu0 0.0
    %5296 = vmatpush2.msra.mxu0 0.0
    %5297 = vmatprep.subr.mxu0 0.0
    %5298 = vmatpush2.msra.mxu0 0.0
    %5299 = vmatprep.subr.mxu0 0.0
    %5300 = vmatpush2.msra.mxu0 0.0
    %5301 = vmatprep.subr.mxu0 0.0
    %5302 = vmatpush2.msra.mxu0 0.0
    %5303 = vmatprep.subr.mxu0 0.0
    %5304 = vmatpush2.msra.mxu0 0.0
    %5305 = vmatprep.subr.mxu0 0.0
    %5306 = vmatpush2.msra.mxu0 0.0
    %5307 = vmatprep.subr.mxu0 0.0
    %5308 = vmatpush2.msra.mxu0 0.0
    %5309 = vmatprep.subr.mxu0 0.0
    %5310 = vmatpush2.msra.mxu0 0.0
    %5311 = vmatprep.subr.mxu0 0.0
    %5312 = vmatpush2.msra.mxu0 0.0
    %5313 = vmatprep.subr.mxu0 0.0
    %5314 = vmatpush2.msra.mxu0 0.0
    %5315 = vmatprep.subr.mxu0 0.0
    %5316 = vmatpush2.msra.mxu0 0.0
    %5317 = vmatprep.subr.mxu0 0.0
    %5318 = vmatpush2.msra.mxu0 0.0
    %5319 = vmatprep.subr.mxu0 0.0
    %5320 = vmatpush2.msra.mxu0 0.0
    %5321 = vmatprep.subr.mxu0 0.0
    %5322 = vmatpush2.msra.mxu0 0.0
    %5323 = vmatprep.mubr.f32.mxu0 0.0
    %5324 = vmatmul.mubr.f32.gmra.mxu0 %v5254
    %v5325 = vpop.f32.mrf.mxu0
    %v5326 = vadd.f32 %v5252, %v5325
    %v5327 = vpop.f32.mrf.mxu0
    %5328 = vmatprep.mubr.f32.mxu0 0.0
    %5329 = vmatmul.mubr.f32.gmra.mxu0 %v5257
    %v5330 = vpop.f32.mrf.mxu0
    %v5331 = vadd.f32 %v5252, %v5330
    %v5332 = vpop.f32.mrf.mxu0
    %5333 = vdwg.mxu0
    %v5334 = vadd.f32 %v5146, %v5326
    %v5335 = vadd.f32 %v5147, %v5331
    %v5336 = vsel %vm135, %v5334, 0.0
    %5337 = vadd.xlane.f32.xlu0 %v5336
    %v5338 = vpop.xlane.xlu0 %5337
    %v5339 = vsel %vm135, %v5335, 0.0
    %5340 = vadd.xlane.f32.xlu0 %v5339
    %v5341 = vpop.xlane.xlu0 %5340
    %v5342 = vmul.f32 %v5338, %v938
    %v5343 = vmul.f32 %v5341, %v938
    %v5344 = vsub.f32 %v5334, %v5342
    %v5345 = vsub.f32 %v5335, %v5343
    %v5346 = vmul.f32 %v5344, %v5344
    %v5347 = vmul.f32 %v5345, %v5345
    %v5348 = vsel %vm135, %v5346, 0.0
    %5349 = vadd.xlane.f32.xlu0 %v5348
    %v5350 = vpop.xlane.xlu0 %5349
    %v5351 = vsel %vm135, %v5347, 0.0
    %5352 = vadd.xlane.f32.xlu0 %v5351
    %v5353 = vpop.xlane.xlu0 %5352
    %v5354 = vmul.f32 %v5350, %v938
    %v5355 = vmul.f32 %v5353, %v938
    %v5356 = vadd.f32 %v5354, 1e-05
    %v5357 = vadd.f32 %v5355, 1e-05
    %v5358 = vrsqrt.pop %v5356
    %v5359 = vrsqrt.pop %v5357
    %v5360 = vmul.f32 %v5344, %v5358
    %v5361 = vmul.f32 %v5345, %v5359
    %v5362 = vlaneseq
    %v5363 = vshrl.u32 %v5362, 7
    %v5364 = vsub.s32 6, %v5363
    %v5365 = vrot.slane %v3661, %v5364
    %v5366 = vmul.f32 %v5360, %v5365
    %v5367 = vmul.f32 %v5361, %v5365
    %v5368 = vlaneseq
    %v5369 = vshrl.u32 %v5368, 7
    %v5370 = vsub.s32 7, %v5369
    %v5371 = vrot.slane %v3661, %v5370
    %v5372 = vadd.f32 %v5366, %v5371
    %v5373 = vadd.f32 %v5367, %v5371
    %v5374 = vld [vmem:[%s5] sm:$0xff]
    %v5375 = vld [vmem:[%s5 + $0x8] sm:$0xff]
    %v5376 = vld [vmem:[%s5 + $0x10] sm:$0xff]
    %v5377 = vld [vmem:[%s5 + $0x18] sm:$0xff]
    %v5379 = vsel %vm135, %v5372, 0
    %v5382 = vsel %vm135, %v5373, 0
    %5384 = vmatprep.subr.mxu0 0.0
    %5385 = vmatpush1.msra.mxu0 0.0
    %5386 = vmatprep.subr.mxu0 0.0
    %5387 = vmatpush1.msra.mxu0 0.0
    %5388 = vmatprep.subr.mxu0 0.0
    %5389 = vmatpush1.msra.mxu0 0.0
    %5390 = vmatprep.subr.mxu0 0.0
    %5391 = vmatpush1.msra.mxu0 0.0
    %5392 = vmatprep.subr.mxu0 0.0
    %5393 = vmatpush1.msra.mxu0 0.0
    %5394 = vmatprep.subr.mxu0 0.0
    %5395 = vmatpush1.msra.mxu0 0.0
    %5396 = vmatprep.subr.mxu0 0.0
    %5397 = vmatpush1.msra.mxu0 0.0
    %5398 = vmatprep.subr.mxu0 0.0
    %5399 = vmatpush1.msra.mxu0 0.0
    %5400 = vmatprep.subr.mxu0 0.0
    %5401 = vmatpush1.msra.mxu0 0.0
    %5402 = vmatprep.subr.mxu0 0.0
    %5403 = vmatpush1.msra.mxu0 0.0
    %5404 = vmatprep.subr.mxu0 0.0
    %5405 = vmatpush1.msra.mxu0 0.0
    %5406 = vmatprep.subr.mxu0 0.0
    %5407 = vmatpush1.msra.mxu0 0.0
    %5408 = vmatprep.subr.mxu0 0.0
    %5409 = vmatpush1.msra.mxu0 %v5377
    %5410 = vmatprep.subr.mxu0 0.0
    %5411 = vmatpush1.msra.mxu0 %v5376
    %5412 = vmatprep.subr.mxu0 0.0
    %5413 = vmatpush1.msra.mxu0 %v5375
    %5414 = vmatprep.subr.mxu0 0.0
    %5415 = vmatpush1.msra.mxu0 %v5374
    %5416 = vmatprep.subr.mxu0 0.0
    %5417 = vmatpush2.msra.mxu0 0.0
    %5418 = vmatprep.subr.mxu0 0.0
    %5419 = vmatpush2.msra.mxu0 0.0
    %5420 = vmatprep.subr.mxu0 0.0
    %5421 = vmatpush2.msra.mxu0 0.0
    %5422 = vmatprep.subr.mxu0 0.0
    %5423 = vmatpush2.msra.mxu0 0.0
    %5424 = vmatprep.subr.mxu0 0.0
    %5425 = vmatpush2.msra.mxu0 0.0
    %5426 = vmatprep.subr.mxu0 0.0
    %5427 = vmatpush2.msra.mxu0 0.0
    %5428 = vmatprep.subr.mxu0 0.0
    %5429 = vmatpush2.msra.mxu0 0.0
    %5430 = vmatprep.subr.mxu0 0.0
    %5431 = vmatpush2.msra.mxu0 0.0
    %5432 = vmatprep.subr.mxu0 0.0
    %5433 = vmatpush2.msra.mxu0 0.0
    %5434 = vmatprep.subr.mxu0 0.0
    %5435 = vmatpush2.msra.mxu0 0.0
    %5436 = vmatprep.subr.mxu0 0.0
    %5437 = vmatpush2.msra.mxu0 0.0
    %5438 = vmatprep.subr.mxu0 0.0
    %5439 = vmatpush2.msra.mxu0 0.0
    %5440 = vmatprep.subr.mxu0 0.0
    %5441 = vmatpush2.msra.mxu0 0.0
    %5442 = vmatprep.subr.mxu0 0.0
    %5443 = vmatpush2.msra.mxu0 0.0
    %5444 = vmatprep.subr.mxu0 0.0
    %5445 = vmatpush2.msra.mxu0 0.0
    %5446 = vmatprep.subr.mxu0 0.0
    %5447 = vmatpush2.msra.mxu0 0.0
    %5448 = vmatprep.mubr.f32.mxu0 0.0
    %5449 = vmatmul.mubr.f32.gmra.mxu0 %v5379
    %v5450 = vpop.f32.mrf.mxu0
    %v5451 = vadd.f32 0.0, %v5450
    %v5452 = vpop.f32.mrf.mxu0
    %5453 = vmatprep.mubr.f32.mxu0 0.0
    %5454 = vmatmul.mubr.f32.gmra.mxu0 %v5382
    %v5455 = vpop.f32.mrf.mxu0
    %v5456 = vadd.f32 0.0, %v5455
    %v5457 = vpop.f32.mrf.mxu0
    %5458 = vdwg.mxu0
    %5459 = vst [vmem:[#allocation5] sm:$0xff] %v5451
    %5460 = vst [vmem:[#allocation5 + $0x8] sm:$0xff] %v5456
    // Predicated region
    $region30: #{tpu_custom_call.1} parent=1 // pred_check
      _
    $region31: #{tpu_custom_call.1} parent=1 // pred_check_branch
      %5462 = sbr.rel (0) target = $region33
    $region32: #{tpu_custom_call.1} parent=1 // pred_region
      %s5464 = ssub.s32 256, 256
      %5465 = vsyncadd [#allocation4], %s5464
      %s5466 = sshll.u32 [#allocation5], 4
      %s5467 = int_to_ptr.vmem [resolvable:$true] %s5466
      %5472 = dma.vmem_to_hbm [thread:$0]  %s5467, 256, %s6, [#allocation4], 128, 128, 8
    $region33: #{tpu_custom_call.1} parent=1 // pred_fallthru
      _
    // Predicated region
    $region34: #{tpu_custom_call.1} parent=1 // pred_check
      _
    $region35: #{tpu_custom_call.1} parent=1 // pred_check_branch
      %5474 = sbr.rel (0) target = $region37
    $region36: #{tpu_custom_call.1} parent=1 // pred_region
      %5475 = dma.done [#allocation4], 256
    $region37: #{tpu_custom_call.1} parent=1 // pred_fallthru
      _
    %5476 = vsyncpa [#allocation3], 1
    %5477 = vsyncpa [#allocation4], 1

</llo_original>
